<compile_context>
chip_gen: v7x
topology: tpu7x:2x2x1
jax: 0.10.0
libtpu: 0.0.40
codegen_flags: <defaults>
</compile_context>

<pallas_src>
import math
import jax
import jax.numpy as jnp
from jax.experimental import pallas as pl
from jax.experimental.pallas import tpu as pltpu


def _round_up(x, m):
    return (x + m - 1) // m * m


# --------------- fused embed + wavefront-LSTM-stack + tied-FC kernel ----------------
def _make_fused_kernel(T, B, V, dims_h):
    """Builds the fused kernel body for gather + L-layer LSTM stack + tied FC."""
    L = len(dims_h)
    TB = T * B

    def kernel(*refs):
        # ---- unpack refs: inputs, outputs, scratch (in order) ----
        idx = 0
        ids_ref = refs[idx]; idx += 1                     # (TB, 1) int32
        embw_ref = refs[idx]; idx += 1                    # (V, E)
        layer_in = []
        for _ in range(L):                                # wx, wh, b, h0, c0
            layer_in.append(refs[idx:idx + 5]); idx += 5
        wfc_ref = refs[idx]; bfc_ref = refs[idx + 1]; idx += 2
        scores_ref = refs[idx]; idx += 1                  # (TB, Vpad)
        state_out = [refs[idx + 2 * i: idx + 2 * i + 2] for i in range(L)]
        idx += 2 * L
        gx0_sc = refs[idx]                                # (TB, 4*H0) scratch

        # ---- embedding gather: one-hot matmul (fused, stays in VMEM) ----
        ids = ids_ref[...]                                               # (TB, 1)
        onehot = (ids == jax.lax.broadcasted_iota(jnp.int32, (TB, V), 1)
                  ).astype(jnp.float32)                                  # (TB, V)
        emb = jnp.dot(onehot, embw_ref[...],
                      preferred_element_type=jnp.float32)                # (TB, E)

        # ---- hoisted layer-0 input projection (off the recurrence critical path) ----
        wx0_ref, _, b0_ref, _, _ = layer_in[0]
        gx0_sc[...] = (jnp.dot(emb, wx0_ref[...],
                               preferred_element_type=jnp.float32)
                       + b0_ref[...])

        # ---- hoist loop-invariant weights (loaded once, reused across T steps) ----
        whs = [layer_in[li][1][...] for li in range(L)]
        wxs = [None] + [layer_in[li][0][...] for li in range(1, L)]
        bs = [None] + [layer_in[li][2][...] for li in range(1, L)]
        wfc = wfc_ref[...]
        bfc = bfc_ref[...]

        h = [layer_in[li][3][...] for li in range(L)]
        c = [layer_in[li][4][...] for li in range(L)]
        out_row = [None] * L   # most recent output row of each layer

        def cell(g, h_prev, c_prev, H):
            # sigmoid(x) == 0.5*tanh(0.5*x) + 0.5  -> 1 EUP push instead of 2
            ifo = 0.5 * jnp.tanh(0.5 * g[:, :3 * H]) + 0.5
            i_g = ifo[:, 0:H]
            f_g = ifo[:, H:2 * H]
            o_g = ifo[:, 2 * H:3 * H]
            n_g = jnp.tanh(g[:, 3 * H:4 * H])
            c_new = f_g * c_prev + i_g * n_g
            h_new = o_g * jnp.tanh(c_new)
            return h_new, c_new

        # ---- wavefront schedule over the LSTM stack (fully unrolled, static) ----
        # Layer li computes time t = s - li at super-step s; within a super-step the
        # per-layer chains are data-independent -> ILP for the LLO scheduler.
        # Reverse layer order so out_row[li-1] still holds the previous super-step's
        # value (which is exactly layer li's input at time t).
        for s in range(T + L - 1):
            for li in range(L - 1, -1, -1):
                t = s - li
                if not (0 <= t < T):
                    continue
                H = dims_h[li]
                rec = jnp.dot(h[li], whs[li], preferred_element_type=jnp.float32)
                if li == 0:
                    g = gx0_sc[pl.ds(t * B, B), :] + rec
                else:
                    g = (jnp.dot(out_row[li - 1], wxs[li],
                                 preferred_element_type=jnp.float32)
                         + bs[li] + rec)
                h[li], c[li] = cell(g, h[li], c[li], H)
                out_row[li] = h[li]
                if li == L - 1:
                    # tied FC folded into the recurrence (MXU slack filler)
                    scores_ref[pl.ds(t * B, B), :] = (
                        jnp.dot(h[li], wfc, preferred_element_type=jnp.float32)
                        + bfc)

        # ---- final states ----
        for li in range(L):
            hf_ref, cf_ref = state_out[li]
            hf_ref[...] = h[li]
            cf_ref[...] = c[li]

    return kernel


def fused_forward(prep, x_ids, states, T, B):
    """Whole (embed + LSTM stack + tied FC) forward in ONE pallas_call."""
    TB = T * B
    embed_W = prep["embed_W"]
    V, E = embed_W.shape
    layers = prep["layers"]
    L = len(layers)
    dims_in = [lp["wx"].shape[0] for lp in layers]
    dims_h = [lp["wh"].shape[0] for lp in layers]
    Vpad = prep["fc_W"].shape[1]

    kernel = _make_fused_kernel(T, B, V, dims_h)

    ids2d = x_ids.reshape(TB, 1).astype(jnp.int32)

    inputs = [ids2d, embed_W]
    in_specs = [pl.BlockSpec((TB, 1), lambda i: (0, 0)),
                pl.BlockSpec((V, E), lambda i: (0, 0))]
    for li, lp in enumerate(layers):
        h0, c0 = states[li]
        Din, H = dims_in[li], dims_h[li]
        inputs += [lp["wx"], lp["wh"], lp["b"], h0, c0]
        in_specs += [
            pl.BlockSpec((Din, 4 * H), lambda i: (0, 0)),
            pl.BlockSpec((H, 4 * H), lambda i: (0, 0)),
            pl.BlockSpec((1, 4 * H), lambda i: (0, 0)),
            pl.BlockSpec((B, H), lambda i: (0, 0)),
            pl.BlockSpec((B, H), lambda i: (0, 0)),
        ]
    inputs += [prep["fc_W"], prep["fc_b"]]
    in_specs += [pl.BlockSpec((E, Vpad), lambda i: (0, 0)),
                 pl.BlockSpec((1, Vpad), lambda i: (0, 0))]

    out_shape = [jax.ShapeDtypeStruct((TB, Vpad), jnp.float32)]
    out_specs = [pl.BlockSpec((TB, Vpad), lambda i: (0, 0))]
    for H in dims_h:
        out_shape += [jax.ShapeDtypeStruct((B, H), jnp.float32)] * 2
        out_specs += [pl.BlockSpec((B, H), lambda i: (0, 0))] * 2

    # only the hoisted layer-0 input projection needs a scratch buffer
    scratch = [pltpu.VMEM((TB, 4 * dims_h[0]), jnp.float32)]

    outs = pl.pallas_call(
        kernel,
        out_shape=tuple(out_shape),
        grid_spec=pltpu.PrefetchScalarGridSpec(
            num_scalar_prefetch=0,
            grid=(1,),
            in_specs=in_specs,
            out_specs=tuple(out_specs),
            scratch_shapes=scratch),
        compiler_params=pltpu.CompilerParams(
            dimension_semantics=("arbitrary",)),
    )(*inputs)

    scores_full = outs[0]
    new_states = [(outs[1 + 2 * i], outs[2 + 2 * i]) for i in range(L)]
    return scores_full, new_states


# ------------------------------ parameter prep --------------------------------
def init_params(key, vocab, embed, hidden, num_features, layer_num, winit=0.1):
    """Raw (PyTorch-layout) parameters."""
    ks = list(jax.random.split(key, 4 + 4 * layer_num))
    p = {}
    p["embed_W"] = jax.random.uniform(ks[0], (vocab, embed), jnp.float32,
                                      -winit, winit)
    stdv_fc = 1.0 / math.sqrt(vocab)          # FCTied bias: hidden_size == vocab
    p["fc_b"] = jax.random.uniform(ks[1], (vocab,), jnp.float32, -stdv_fc, stdv_fc)
    # duration regression params (unused in the eval forward output, kept for parity)
    stdv_dr = 1.0 / math.sqrt(embed)
    p["dur_W"] = jax.random.uniform(ks[2], (num_features, embed), jnp.float32,
                                    -stdv_dr, stdv_dr)
    p["dur_b"] = jax.random.uniform(ks[3], (num_features,), jnp.float32,
                                    -stdv_dr, stdv_dr)
    rnns = []
    for i in range(layer_num):
        d_in = embed if i == 0 else hidden
        d_h = embed if i == layer_num - 1 else hidden
        stdv = 1.0 / math.sqrt(d_h)
        k0, k1, k2, k3 = ks[4 + 4 * i: 8 + 4 * i]
        rnns.append({
            "W_x": jax.random.uniform(k0, (4 * d_h, d_in), jnp.float32, -stdv, stdv),
            "W_h": jax.random.uniform(k1, (4 * d_h, d_h), jnp.float32, -stdv, stdv),
            "b_x": jax.random.uniform(k2, (4 * d_h,), jnp.float32, -stdv, stdv),
            "b_h": jax.random.uniform(k3, (4 * d_h,), jnp.float32, -stdv, stdv),
        })
    p["rnns"] = rnns
    return p


def prepare_params(params):
    """One-time kernel-layout prep: pre-transposed weights, fused bias,
    lane-dense-padded tied-FC weight/bias."""
    embed_W = params["embed_W"]
    V, E = embed_W.shape
    Vpad = max(_round_up(V, 128), 128)
    layers = []
    for lp in params["rnns"]:
        H4 = lp["W_x"].shape[0]
        H = H4 // 4
        layers.append({
            "wx": jnp.transpose(lp["W_x"]),                      # (Din, 4H)
            "wh": jnp.transpose(lp["W_h"]),                      # (H,   4H)
            "b": (lp["b_x"] + lp["b_h"]).reshape(1, 4 * H),      # (1,   4H)
        })
    fc_W = jnp.zeros((E, Vpad), jnp.float32).at[:, :V].set(jnp.transpose(embed_W))
    fc_b = jnp.zeros((1, Vpad), jnp.float32).at[0, :V].set(params["fc_b"])
    return {"embed_W": embed_W, "layers": layers, "fc_W": fc_W, "fc_b": fc_b}


def state_init(params, batch_size):
    states = []
    for layer in params["rnns"]:
        H = layer["W_h"].shape[1]
        states.append((jnp.zeros((batch_size, H), jnp.float32),
                       jnp.zeros((batch_size, H), jnp.float32)))
    return states


def model_forward(prep, x_ids, states):
    T, B = x_ids.shape
    V, _ = prep["embed_W"].shape
    # TODO(synk): fix_durations (DurationRegression) is computed but not returned
    # in eval mode by the PyTorch module, so it is skipped here.
    scores_full, new_states = fused_forward(prep, x_ids, states, T, B)
    scores = scores_full[:, :V]                              # drop lane padding
    return scores, new_states


# --------------------------- pure-JAX reference --------------------------------
def _ref_lstm_layer(x, W_x, W_h, b_x, b_h, h0, c0):
    H = h0.shape[-1]

    def step(carry, x_t):
        h, c = carry
        g = x_t @ W_x.T + b_x + h @ W_h.T + b_h
        i_g = jax.nn.sigmoid(g[:, 0:H])
        f_g = jax.nn.sigmoid(g[:, H:2 * H])
        o_g = jax.nn.sigmoid(g[:, 2 * H:3 * H])
        n_g = jnp.tanh(g[:, 3 * H:4 * H])
        c = f_g * c + i_g * n_g
        h = o_g * jnp.tanh(c)
        return (h, c), h

    (h, c), out = jax.lax.scan(step, (h0, c0), x)
    return out, (h, c)


def _ref_forward(params, x_ids, states):
    x = jnp.take(params["embed_W"], x_ids, axis=0)
    new_states = []
    for i, layer in enumerate(params["rnns"]):
        x, st = _ref_lstm_layer(x, layer["W_x"], layer["W_h"],
                                layer["b_x"], layer["b_h"], *states[i])
        new_states.append(st)
    T, B, E = x.shape
    scores = x.reshape(T * B, E) @ params["embed_W"].T + params["fc_b"]
    return scores, new_states


if __name__ == "__main__":
    VOCAB, EMBED, HIDDEN = 32, 128, 256
    NUM_FEATURES, LAYER_NUM = 4, 2
    T, B = 8, 8

    key = jax.random.PRNGKey(0)
    kp, kx = jax.random.split(key)
    params = init_params(kp, VOCAB, EMBED, HIDDEN, NUM_FEATURES, LAYER_NUM)
    prep = prepare_params(params)          # one-time weight layout prep
    x_ids = jax.random.randint(kx, (T, B), 0, VOCAB, dtype=jnp.int32)
    states = state_init(params, B)

    forward = jax.jit(model_forward)
    scores, new_states = forward(prep, x_ids, states)
    scores = jax.block_until_ready(scores)
    for h, c in new_states:
        jax.block_until_ready(h)
        jax.block_until_ready(c)

    # correctness check vs pure-JAX reference
    ref_scores, ref_states = _ref_forward(params, x_ids, states)
    assert scores.shape == (T * B, VOCAB)
    assert jnp.allclose(scores, ref_scores, atol=1e-4, rtol=1e-4)
    for (h, c), (rh, rc) in zip(new_states, ref_states):
        assert jnp.allclose(h, rh, atol=1e-4, rtol=1e-4)
        assert jnp.allclose(c, rc, atol=1e-4, rtol=1e-4)

    print("KERNEL_OK")
</pallas_src>

<mosaic_0001>
module attributes {stable_mosaic.version = 11 : i64} {
  func.func @kernel(%arg0: i32, %arg1: memref<64x1xi32, #tpu.memory_space<vmem>>, %arg2: memref<32x128xf32, #tpu.memory_space<vmem>>, %arg3: memref<128x1024xf32, #tpu.memory_space<vmem>>, %arg4: memref<256x1024xf32, #tpu.memory_space<vmem>>, %arg5: memref<1x1024xf32, #tpu.memory_space<vmem>>, %arg6: memref<8x256xf32, #tpu.memory_space<vmem>>, %arg7: memref<8x256xf32, #tpu.memory_space<vmem>>, %arg8: memref<256x512xf32, #tpu.memory_space<vmem>>, %arg9: memref<128x512xf32, #tpu.memory_space<vmem>>, %arg10: memref<1x512xf32, #tpu.memory_space<vmem>>, %arg11: memref<8x128xf32, #tpu.memory_space<vmem>>, %arg12: memref<8x128xf32, #tpu.memory_space<vmem>>, %arg13: memref<128x128xf32, #tpu.memory_space<vmem>>, %arg14: memref<1x128xf32, #tpu.memory_space<vmem>>, %arg15: memref<64x128xf32, #tpu.memory_space<vmem>>, %arg16: memref<8x256xf32, #tpu.memory_space<vmem>>, %arg17: memref<8x256xf32, #tpu.memory_space<vmem>>, %arg18: memref<8x128xf32, #tpu.memory_space<vmem>>, %arg19: memref<8x128xf32, #tpu.memory_space<vmem>>, %arg20: memref<64x1024xf32, #tpu.memory_space<vmem>>) attributes {dimension_semantics = [#tpu.dimension_semantics<arbitrary>], iteration_bounds = array<i64: 1>, scalar_prefetch = 0 : i64, scratch_operands = 1 : i64, tpu.core_type = #tpu.core_type<tc>, window_params = [{pipeline_mode = #tpu.pipeline_mode<synchronous>, transform_indices = @transform_0, window_bounds = array<i64: 64, 1>}, {pipeline_mode = #tpu.pipeline_mode<synchronous>, transform_indices = @transform_1, window_bounds = array<i64: 32, 128>}, {pipeline_mode = #tpu.pipeline_mode<synchronous>, transform_indices = @transform_2, window_bounds = array<i64: 128, 1024>}, {pipeline_mode = #tpu.pipeline_mode<synchronous>, transform_indices = @transform_3, window_bounds = array<i64: 256, 1024>}, {pipeline_mode = #tpu.pipeline_mode<synchronous>, transform_indices = @transform_4, window_bounds = array<i64: 1, 1024>}, {pipeline_mode = #tpu.pipeline_mode<synchronous>, transform_indices = @transform_5, window_bounds = array<i64: 8, 256>}, {pipeline_mode = #tpu.pipeline_mode<synchronous>, transform_indices = @transform_6, window_bounds = array<i64: 8, 256>}, {pipeline_mode = #tpu.pipeline_mode<synchronous>, transform_indices = @transform_7, window_bounds = array<i64: 256, 512>}, {pipeline_mode = #tpu.pipeline_mode<synchronous>, transform_indices = @transform_8, window_bounds = array<i64: 128, 512>}, {pipeline_mode = #tpu.pipeline_mode<synchronous>, transform_indices = @transform_9, window_bounds = array<i64: 1, 512>}, {pipeline_mode = #tpu.pipeline_mode<synchronous>, transform_indices = @transform_10, window_bounds = array<i64: 8, 128>}, {pipeline_mode = #tpu.pipeline_mode<synchronous>, transform_indices = @transform_11, window_bounds = array<i64: 8, 128>}, {pipeline_mode = #tpu.pipeline_mode<synchronous>, transform_indices = @transform_12, window_bounds = array<i64: 128, 128>}, {pipeline_mode = #tpu.pipeline_mode<synchronous>, transform_indices = @transform_13, window_bounds = array<i64: 1, 128>}, {pipeline_mode = #tpu.pipeline_mode<synchronous>, transform_indices = @transform_14, window_bounds = array<i64: 64, 128>}, {pipeline_mode = #tpu.pipeline_mode<synchronous>, transform_indices = @transform_15, window_bounds = array<i64: 8, 256>}, {pipeline_mode = #tpu.pipeline_mode<synchronous>, transform_indices = @transform_16, window_bounds = array<i64: 8, 256>}, {pipeline_mode = #tpu.pipeline_mode<synchronous>, transform_indices = @transform_17, window_bounds = array<i64: 8, 128>}, {pipeline_mode = #tpu.pipeline_mode<synchronous>, transform_indices = @transform_18, window_bounds = array<i64: 8, 128>}]} {
    %c0 = arith.constant 0 : index
    %c0_0 = arith.constant 0 : index
    %0 = vector.load %arg1[%c0, %c0_0] : memref<64x1xi32, #tpu.memory_space<vmem>>, vector<64x1xi32>
    %1 = tpu.iota {dimensions = array<i32: 1>} : vector<64x32xi32>
    %2 = vector.broadcast %0 : vector<64x1xi32> to vector<64x32xi32>
    %3 = arith.cmpi eq, %2, %1 : vector<64x32xi32>
    %4 = arith.extui %3 : vector<64x32xi1> to vector<64x32xi32>
    %5 = arith.sitofp %4 : vector<64x32xi32> to vector<64x32xf32>
    %c0_1 = arith.constant 0 : index
    %c0_2 = arith.constant 0 : index
    %6 = vector.load %arg2[%c0_1, %c0_2] : memref<32x128xf32, #tpu.memory_space<vmem>>, vector<32x128xf32>
    %cst = arith.constant dense<0.000000e+00> : vector<64x128xf32>
    %7 = tpu.matmul %5, %6, %cst {dimension_numbers = #tpu.dot_dimension_numbers<[1], [0], [0], [1], [0, 0, 1, 1], [], []>} : vector<64x32xf32>, vector<32x128xf32>, vector<64x128xf32> -> vector<64x128xf32>
    %c0_3 = arith.constant 0 : index
    %c0_4 = arith.constant 0 : index
    %8 = vector.load %arg3[%c0_3, %c0_4] : memref<128x1024xf32, #tpu.memory_space<vmem>>, vector<128x1024xf32>
    %cst_5 = arith.constant dense<0.000000e+00> : vector<64x1024xf32>
    %9 = tpu.matmul %7, %8, %cst_5 {dimension_numbers = #tpu.dot_dimension_numbers<[1], [0], [0], [1], [0, 0, 1, 1], [], []>} : vector<64x128xf32>, vector<128x1024xf32>, vector<64x1024xf32> -> vector<64x1024xf32>
    %c0_6 = arith.constant 0 : index
    %c0_7 = arith.constant 0 : index
    %10 = vector.load %arg5[%c0_6, %c0_7] : memref<1x1024xf32, #tpu.memory_space<vmem>>, vector<1x1024xf32>
    %11 = vector.broadcast %10 : vector<1x1024xf32> to vector<64x1024xf32>
    %12 = arith.addf %9, %11 : vector<64x1024xf32>
    %c0_8 = arith.constant 0 : index
    %c0_9 = arith.constant 0 : index
    %13 = vector.load %arg20[%c0_8, %c0_9] : memref<64x1024xf32, #tpu.memory_space<vmem>>, vector<64x1024xf32>
    tpu.vector_store %arg20[%c0_8, %c0_9], %12 {strides = array<i32>} : memref<64x1024xf32, #tpu.memory_space<vmem>>, vector<64x1024xf32>,
    %c0_10 = arith.constant 0 : index
    %c0_11 = arith.constant 0 : index
    %14 = vector.load %arg4[%c0_10, %c0_11] : memref<256x1024xf32, #tpu.memory_space<vmem>>, vector<256x1024xf32>
    %c0_12 = arith.constant 0 : index
    %c0_13 = arith.constant 0 : index
    %15 = vector.load %arg9[%c0_12, %c0_13] : memref<128x512xf32, #tpu.memory_space<vmem>>, vector<128x512xf32>
    %c0_14 = arith.constant 0 : index
    %c0_15 = arith.constant 0 : index
    %16 = vector.load %arg8[%c0_14, %c0_15] : memref<256x512xf32, #tpu.memory_space<vmem>>, vector<256x512xf32>
    %c0_16 = arith.constant 0 : index
    %c0_17 = arith.constant 0 : index
    %17 = vector.load %arg10[%c0_16, %c0_17] : memref<1x512xf32, #tpu.memory_space<vmem>>, vector<1x512xf32>
    %c0_18 = arith.constant 0 : index
    %c0_19 = arith.constant 0 : index
    %18 = vector.load %arg13[%c0_18, %c0_19] : memref<128x128xf32, #tpu.memory_space<vmem>>, vector<128x128xf32>
    %c0_20 = arith.constant 0 : index
    %c0_21 = arith.constant 0 : index
    %19 = vector.load %arg14[%c0_20, %c0_21] : memref<1x128xf32, #tpu.memory_space<vmem>>, vector<1x128xf32>
    %c0_22 = arith.constant 0 : index
    %c0_23 = arith.constant 0 : index
    %20 = vector.load %arg6[%c0_22, %c0_23] : memref<8x256xf32, #tpu.memory_space<vmem>>, vector<8x256xf32>
    %c0_24 = arith.constant 0 : index
    %c0_25 = arith.constant 0 : index
    %21 = vector.load %arg11[%c0_24, %c0_25] : memref<8x128xf32, #tpu.memory_space<vmem>>, vector<8x128xf32>
    %c0_26 = arith.constant 0 : index
    %c0_27 = arith.constant 0 : index
    %22 = vector.load %arg7[%c0_26, %c0_27] : memref<8x256xf32, #tpu.memory_space<vmem>>, vector<8x256xf32>
    %c0_28 = arith.constant 0 : index
    %c0_29 = arith.constant 0 : index
    %23 = vector.load %arg12[%c0_28, %c0_29] : memref<8x128xf32, #tpu.memory_space<vmem>>, vector<8x128xf32>
    %cst_30 = arith.constant dense<0.000000e+00> : vector<8x1024xf32>
    %24 = tpu.matmul %20, %14, %cst_30 {dimension_numbers = #tpu.dot_dimension_numbers<[1], [0], [0], [1], [0, 0, 1, 1], [], []>} : vector<8x256xf32>, vector<256x1024xf32>, vector<8x1024xf32> -> vector<8x1024xf32>
    %c0_31 = arith.constant 0 : index
    %c0_32 = arith.constant 0 : index
    %25 = vector.load %arg20[%c0_31, %c0_32] : memref<64x1024xf32, #tpu.memory_space<vmem>>, vector<8x1024xf32>
    %26 = arith.addf %25, %24 : vector<8x1024xf32>
    %27 = vector.extract_strided_slice %26 {offsets = [0, 0], sizes = [8, 768], strides = [1, 1]} : vector<8x1024xf32> to vector<8x768xf32>
    %cst_33 = arith.constant 5.000000e-01 : f32
    %28 = vector.broadcast %cst_33 : f32 to vector<8x768xf32>
    %29 = arith.mulf %28, %27 : vector<8x768xf32>
    %30 = math.tanh %29 : vector<8x768xf32>
    %cst_34 = arith.constant 5.000000e-01 : f32
    %31 = vector.broadcast %cst_34 : f32 to vector<8x768xf32>
    %32 = arith.mulf %31, %30 : vector<8x768xf32>
    %cst_35 = arith.constant 5.000000e-01 : f32
    %33 = vector.broadcast %cst_35 : f32 to vector<8x768xf32>
    %34 = arith.addf %32, %33 : vector<8x768xf32>
    %35 = vector.extract_strided_slice %34 {offsets = [0, 0], sizes = [8, 256], strides = [1, 1]} : vector<8x768xf32> to vector<8x256xf32>
    %36 = vector.extract_strided_slice %34 {offsets = [0, 256], sizes = [8, 256], strides = [1, 1]} : vector<8x768xf32> to vector<8x256xf32>
    %37 = vector.extract_strided_slice %34 {offsets = [0, 512], sizes = [8, 256], strides = [1, 1]} : vector<8x768xf32> to vector<8x256xf32>
    %38 = vector.extract_strided_slice %26 {offsets = [0, 768], sizes = [8, 256], strides = [1, 1]} : vector<8x1024xf32> to vector<8x256xf32>
    %39 = math.tanh %38 : vector<8x256xf32>
    %40 = arith.mulf %36, %22 : vector<8x256xf32>
    %41 = arith.mulf %35, %39 : vector<8x256xf32>
    %42 = arith.addf %40, %41 : vector<8x256xf32>
    %43 = math.tanh %42 : vector<8x256xf32>
    %44 = arith.mulf %37, %43 : vector<8x256xf32>
    %cst_36 = arith.constant dense<0.000000e+00> : vector<8x512xf32>
    %45 = tpu.matmul %21, %15, %cst_36 {dimension_numbers = #tpu.dot_dimension_numbers<[1], [0], [0], [1], [0, 0, 1, 1], [], []>} : vector<8x128xf32>, vector<128x512xf32>, vector<8x512xf32> -> vector<8x512xf32>
    %cst_37 = arith.constant dense<0.000000e+00> : vector<8x512xf32>
    %46 = tpu.matmul %44, %16, %cst_37 {dimension_numbers = #tpu.dot_dimension_numbers<[1], [0], [0], [1], [0, 0, 1, 1], [], []>} : vector<8x256xf32>, vector<256x512xf32>, vector<8x512xf32> -> vector<8x512xf32>
    %47 = vector.broadcast %17 : vector<1x512xf32> to vector<8x512xf32>
    %48 = arith.addf %46, %47 : vector<8x512xf32>
    %49 = arith.addf %48, %45 : vector<8x512xf32>
    %50 = vector.extract_strided_slice %49 {offsets = [0, 0], sizes = [8, 384], strides = [1, 1]} : vector<8x512xf32> to vector<8x384xf32>
    %cst_38 = arith.constant 5.000000e-01 : f32
    %51 = vector.broadcast %cst_38 : f32 to vector<8x384xf32>
    %52 = arith.mulf %51, %50 : vector<8x384xf32>
    %53 = math.tanh %52 : vector<8x384xf32>
    %cst_39 = arith.constant 5.000000e-01 : f32
    %54 = vector.broadcast %cst_39 : f32 to vector<8x384xf32>
    %55 = arith.mulf %54, %53 : vector<8x384xf32>
    %cst_40 = arith.constant 5.000000e-01 : f32
    %56 = vector.broadcast %cst_40 : f32 to vector<8x384xf32>
    %57 = arith.addf %55, %56 : vector<8x384xf32>
    %58 = vector.extract_strided_slice %57 {offsets = [0, 0], sizes = [8, 128], strides = [1, 1]} : vector<8x384xf32> to vector<8x128xf32>
    %59 = vector.extract_strided_slice %57 {offsets = [0, 128], sizes = [8, 128], strides = [1, 1]} : vector<8x384xf32> to vector<8x128xf32>
    %60 = vector.extract_strided_slice %57 {offsets = [0, 256], sizes = [8, 128], strides = [1, 1]} : vector<8x384xf32> to vector<8x128xf32>
    %61 = vector.extract_strided_slice %49 {offsets = [0, 384], sizes = [8, 128], strides = [1, 1]} : vector<8x512xf32> to vector<8x128xf32>
    %62 = math.tanh %61 : vector<8x128xf32>
    %63 = arith.mulf %59, %23 : vector<8x128xf32>
    %64 = arith.mulf %58, %62 : vector<8x128xf32>
    %65 = arith.addf %63, %64 : vector<8x128xf32>
    %66 = math.tanh %65 : vector<8x128xf32>
    %67 = arith.mulf %60, %66 : vector<8x128xf32>
    %cst_41 = arith.constant dense<0.000000e+00> : vector<8x128xf32>
    %68 = tpu.matmul %67, %18, %cst_41 {dimension_numbers = #tpu.dot_dimension_numbers<[1], [0], [0], [1], [0, 0, 1, 1], [], []>} : vector<8x128xf32>, vector<128x128xf32>, vector<8x128xf32> -> vector<8x128xf32>
    %69 = vector.broadcast %19 : vector<1x128xf32> to vector<8x128xf32>
    %70 = arith.addf %68, %69 : vector<8x128xf32>
    %c0_42 = arith.constant 0 : index
    %c0_43 = arith.constant 0 : index
    %71 = vector.load %arg15[%c0_42, %c0_43] : memref<64x128xf32, #tpu.memory_space<vmem>>, vector<8x128xf32>
    tpu.vector_store %arg15[%c0_42, %c0_43], %70 {strides = array<i32>} : memref<64x128xf32, #tpu.memory_space<vmem>>, vector<8x128xf32>,
    %cst_44 = arith.constant dense<0.000000e+00> : vector<8x1024xf32>
    %72 = tpu.matmul %44, %14, %cst_44 {dimension_numbers = #tpu.dot_dimension_numbers<[1], [0], [0], [1], [0, 0, 1, 1], [], []>} : vector<8x256xf32>, vector<256x1024xf32>, vector<8x1024xf32> -> vector<8x1024xf32>
    %c8 = arith.constant 8 : index
    %c0_45 = arith.constant 0 : index
    %73 = vector.load %arg20[%c8, %c0_45] : memref<64x1024xf32, #tpu.memory_space<vmem>>, vector<8x1024xf32>
    %74 = arith.addf %73, %72 : vector<8x1024xf32>
    %75 = vector.extract_strided_slice %74 {offsets = [0, 0], sizes = [8, 768], strides = [1, 1]} : vector<8x1024xf32> to vector<8x768xf32>
    %cst_46 = arith.constant 5.000000e-01 : f32
    %76 = vector.broadcast %cst_46 : f32 to vector<8x768xf32>
    %77 = arith.mulf %76, %75 : vector<8x768xf32>
    %78 = math.tanh %77 : vector<8x768xf32>
    %cst_47 = arith.constant 5.000000e-01 : f32
    %79 = vector.broadcast %cst_47 : f32 to vector<8x768xf32>
    %80 = arith.mulf %79, %78 : vector<8x768xf32>
    %cst_48 = arith.constant 5.000000e-01 : f32
    %81 = vector.broadcast %cst_48 : f32 to vector<8x768xf32>
    %82 = arith.addf %80, %81 : vector<8x768xf32>
    %83 = vector.extract_strided_slice %82 {offsets = [0, 0], sizes = [8, 256], strides = [1, 1]} : vector<8x768xf32> to vector<8x256xf32>
    %84 = vector.extract_strided_slice %82 {offsets = [0, 256], sizes = [8, 256], strides = [1, 1]} : vector<8x768xf32> to vector<8x256xf32>
    %85 = vector.extract_strided_slice %82 {offsets = [0, 512], sizes = [8, 256], strides = [1, 1]} : vector<8x768xf32> to vector<8x256xf32>
    %86 = vector.extract_strided_slice %74 {offsets = [0, 768], sizes = [8, 256], strides = [1, 1]} : vector<8x1024xf32> to vector<8x256xf32>
    %87 = math.tanh %86 : vector<8x256xf32>
    %88 = arith.mulf %84, %42 : vector<8x256xf32>
    %89 = arith.mulf %83, %87 : vector<8x256xf32>
    %90 = arith.addf %88, %89 : vector<8x256xf32>
    %91 = math.tanh %90 : vector<8x256xf32>
    %92 = arith.mulf %85, %91 : vector<8x256xf32>
    %cst_49 = arith.constant dense<0.000000e+00> : vector<8x512xf32>
    %93 = tpu.matmul %67, %15, %cst_49 {dimension_numbers = #tpu.dot_dimension_numbers<[1], [0], [0], [1], [0, 0, 1, 1], [], []>} : vector<8x128xf32>, vector<128x512xf32>, vector<8x512xf32> -> vector<8x512xf32>
    %cst_50 = arith.constant dense<0.000000e+00> : vector<8x512xf32>
    %94 = tpu.matmul %92, %16, %cst_50 {dimension_numbers = #tpu.dot_dimension_numbers<[1], [0], [0], [1], [0, 0, 1, 1], [], []>} : vector<8x256xf32>, vector<256x512xf32>, vector<8x512xf32> -> vector<8x512xf32>
    %95 = vector.broadcast %17 : vector<1x512xf32> to vector<8x512xf32>
    %96 = arith.addf %94, %95 : vector<8x512xf32>
    %97 = arith.addf %96, %93 : vector<8x512xf32>
    %98 = vector.extract_strided_slice %97 {offsets = [0, 0], sizes = [8, 384], strides = [1, 1]} : vector<8x512xf32> to vector<8x384xf32>
    %cst_51 = arith.constant 5.000000e-01 : f32
    %99 = vector.broadcast %cst_51 : f32 to vector<8x384xf32>
    %100 = arith.mulf %99, %98 : vector<8x384xf32>
    %101 = math.tanh %100 : vector<8x384xf32>
    %cst_52 = arith.constant 5.000000e-01 : f32
    %102 = vector.broadcast %cst_52 : f32 to vector<8x384xf32>
    %103 = arith.mulf %102, %101 : vector<8x384xf32>
    %cst_53 = arith.constant 5.000000e-01 : f32
    %104 = vector.broadcast %cst_53 : f32 to vector<8x384xf32>
    %105 = arith.addf %103, %104 : vector<8x384xf32>
    %106 = vector.extract_strided_slice %105 {offsets = [0, 0], sizes = [8, 128], strides = [1, 1]} : vector<8x384xf32> to vector<8x128xf32>
    %107 = vector.extract_strided_slice %105 {offsets = [0, 128], sizes = [8, 128], strides = [1, 1]} : vector<8x384xf32> to vector<8x128xf32>
    %108 = vector.extract_strided_slice %105 {offsets = [0, 256], sizes = [8, 128], strides = [1, 1]} : vector<8x384xf32> to vector<8x128xf32>
    %109 = vector.extract_strided_slice %97 {offsets = [0, 384], sizes = [8, 128], strides = [1, 1]} : vector<8x512xf32> to vector<8x128xf32>
    %110 = math.tanh %109 : vector<8x128xf32>
    %111 = arith.mulf %107, %65 : vector<8x128xf32>
    %112 = arith.mulf %106, %110 : vector<8x128xf32>
    %113 = arith.addf %111, %112 : vector<8x128xf32>
    %114 = math.tanh %113 : vector<8x128xf32>
    %115 = arith.mulf %108, %114 : vector<8x128xf32>
    %cst_54 = arith.constant dense<0.000000e+00> : vector<8x128xf32>
    %116 = tpu.matmul %115, %18, %cst_54 {dimension_numbers = #tpu.dot_dimension_numbers<[1], [0], [0], [1], [0, 0, 1, 1], [], []>} : vector<8x128xf32>, vector<128x128xf32>, vector<8x128xf32> -> vector<8x128xf32>
    %117 = vector.broadcast %19 : vector<1x128xf32> to vector<8x128xf32>
    %118 = arith.addf %116, %117 : vector<8x128xf32>
    %c8_55 = arith.constant 8 : index
    %c0_56 = arith.constant 0 : index
    %119 = vector.load %arg15[%c8_55, %c0_56] : memref<64x128xf32, #tpu.memory_space<vmem>>, vector<8x128xf32>
    tpu.vector_store %arg15[%c8_55, %c0_56], %118 {strides = array<i32>} : memref<64x128xf32, #tpu.memory_space<vmem>>, vector<8x128xf32>,
    %cst_57 = arith.constant dense<0.000000e+00> : vector<8x1024xf32>
    %120 = tpu.matmul %92, %14, %cst_57 {dimension_numbers = #tpu.dot_dimension_numbers<[1], [0], [0], [1], [0, 0, 1, 1], [], []>} : vector<8x256xf32>, vector<256x1024xf32>, vector<8x1024xf32> -> vector<8x1024xf32>
    %c16 = arith.constant 16 : index
    %c0_58 = arith.constant 0 : index
    %121 = vector.load %arg20[%c16, %c0_58] : memref<64x1024xf32, #tpu.memory_space<vmem>>, vector<8x1024xf32>
    %122 = arith.addf %121, %120 : vector<8x1024xf32>
    %123 = vector.extract_strided_slice %122 {offsets = [0, 0], sizes = [8, 768], strides = [1, 1]} : vector<8x1024xf32> to vector<8x768xf32>
    %cst_59 = arith.constant 5.000000e-01 : f32
    %124 = vector.broadcast %cst_59 : f32 to vector<8x768xf32>
    %125 = arith.mulf %124, %123 : vector<8x768xf32>
    %126 = math.tanh %125 : vector<8x768xf32>
    %cst_60 = arith.constant 5.000000e-01 : f32
    %127 = vector.broadcast %cst_60 : f32 to vector<8x768xf32>
    %128 = arith.mulf %127, %126 : vector<8x768xf32>
    %cst_61 = arith.constant 5.000000e-01 : f32
    %129 = vector.broadcast %cst_61 : f32 to vector<8x768xf32>
    %130 = arith.addf %128, %129 : vector<8x768xf32>
    %131 = vector.extract_strided_slice %130 {offsets = [0, 0], sizes = [8, 256], strides = [1, 1]} : vector<8x768xf32> to vector<8x256xf32>
    %132 = vector.extract_strided_slice %130 {offsets = [0, 256], sizes = [8, 256], strides = [1, 1]} : vector<8x768xf32> to vector<8x256xf32>
    %133 = vector.extract_strided_slice %130 {offsets = [0, 512], sizes = [8, 256], strides = [1, 1]} : vector<8x768xf32> to vector<8x256xf32>
    %134 = vector.extract_strided_slice %122 {offsets = [0, 768], sizes = [8, 256], strides = [1, 1]} : vector<8x1024xf32> to vector<8x256xf32>
    %135 = math.tanh %134 : vector<8x256xf32>
    %136 = arith.mulf %132, %90 : vector<8x256xf32>
    %137 = arith.mulf %131, %135 : vector<8x256xf32>
    %138 = arith.addf %136, %137 : vector<8x256xf32>
    %139 = math.tanh %138 : vector<8x256xf32>
    %140 = arith.mulf %133, %139 : vector<8x256xf32>
    %cst_62 = arith.constant dense<0.000000e+00> : vector<8x512xf32>
    %141 = tpu.matmul %115, %15, %cst_62 {dimension_numbers = #tpu.dot_dimension_numbers<[1], [0], [0], [1], [0, 0, 1, 1], [], []>} : vector<8x128xf32>, vector<128x512xf32>, vector<8x512xf32> -> vector<8x512xf32>
    %cst_63 = arith.constant dense<0.000000e+00> : vector<8x512xf32>
    %142 = tpu.matmul %140, %16, %cst_63 {dimension_numbers = #tpu.dot_dimension_numbers<[1], [0], [0], [1], [0, 0, 1, 1], [], []>} : vector<8x256xf32>, vector<256x512xf32>, vector<8x512xf32> -> vector<8x512xf32>
    %143 = vector.broadcast %17 : vector<1x512xf32> to vector<8x512xf32>
    %144 = arith.addf %142, %143 : vector<8x512xf32>
    %145 = arith.addf %144, %141 : vector<8x512xf32>
    %146 = vector.extract_strided_slice %145 {offsets = [0, 0], sizes = [8, 384], strides = [1, 1]} : vector<8x512xf32> to vector<8x384xf32>
    %cst_64 = arith.constant 5.000000e-01 : f32
    %147 = vector.broadcast %cst_64 : f32 to vector<8x384xf32>
    %148 = arith.mulf %147, %146 : vector<8x384xf32>
    %149 = math.tanh %148 : vector<8x384xf32>
    %cst_65 = arith.constant 5.000000e-01 : f32
    %150 = vector.broadcast %cst_65 : f32 to vector<8x384xf32>
    %151 = arith.mulf %150, %149 : vector<8x384xf32>
    %cst_66 = arith.constant 5.000000e-01 : f32
    %152 = vector.broadcast %cst_66 : f32 to vector<8x384xf32>
    %153 = arith.addf %151, %152 : vector<8x384xf32>
    %154 = vector.extract_strided_slice %153 {offsets = [0, 0], sizes = [8, 128], strides = [1, 1]} : vector<8x384xf32> to vector<8x128xf32>
    %155 = vector.extract_strided_slice %153 {offsets = [0, 128], sizes = [8, 128], strides = [1, 1]} : vector<8x384xf32> to vector<8x128xf32>
    %156 = vector.extract_strided_slice %153 {offsets = [0, 256], sizes = [8, 128], strides = [1, 1]} : vector<8x384xf32> to vector<8x128xf32>
    %157 = vector.extract_strided_slice %145 {offsets = [0, 384], sizes = [8, 128], strides = [1, 1]} : vector<8x512xf32> to vector<8x128xf32>
    %158 = math.tanh %157 : vector<8x128xf32>
    %159 = arith.mulf %155, %113 : vector<8x128xf32>
    %160 = arith.mulf %154, %158 : vector<8x128xf32>
    %161 = arith.addf %159, %160 : vector<8x128xf32>
    %162 = math.tanh %161 : vector<8x128xf32>
    %163 = arith.mulf %156, %162 : vector<8x128xf32>
    %cst_67 = arith.constant dense<0.000000e+00> : vector<8x128xf32>
    %164 = tpu.matmul %163, %18, %cst_67 {dimension_numbers = #tpu.dot_dimension_numbers<[1], [0], [0], [1], [0, 0, 1, 1], [], []>} : vector<8x128xf32>, vector<128x128xf32>, vector<8x128xf32> -> vector<8x128xf32>
    %165 = vector.broadcast %19 : vector<1x128xf32> to vector<8x128xf32>
    %166 = arith.addf %164, %165 : vector<8x128xf32>
    %c16_68 = arith.constant 16 : index
    %c0_69 = arith.constant 0 : index
    %167 = vector.load %arg15[%c16_68, %c0_69] : memref<64x128xf32, #tpu.memory_space<vmem>>, vector<8x128xf32>
    tpu.vector_store %arg15[%c16_68, %c0_69], %166 {strides = array<i32>} : memref<64x128xf32, #tpu.memory_space<vmem>>, vector<8x128xf32>,
    %cst_70 = arith.constant dense<0.000000e+00> : vector<8x1024xf32>
    %168 = tpu.matmul %140, %14, %cst_70 {dimension_numbers = #tpu.dot_dimension_numbers<[1], [0], [0], [1], [0, 0, 1, 1], [], []>} : vector<8x256xf32>, vector<256x1024xf32>, vector<8x1024xf32> -> vector<8x1024xf32>
    %c24 = arith.constant 24 : index
    %c0_71 = arith.constant 0 : index
    %169 = vector.load %arg20[%c24, %c0_71] : memref<64x1024xf32, #tpu.memory_space<vmem>>, vector<8x1024xf32>
    %170 = arith.addf %169, %168 : vector<8x1024xf32>
    %171 = vector.extract_strided_slice %170 {offsets = [0, 0], sizes = [8, 768], strides = [1, 1]} : vector<8x1024xf32> to vector<8x768xf32>
    %cst_72 = arith.constant 5.000000e-01 : f32
    %172 = vector.broadcast %cst_72 : f32 to vector<8x768xf32>
    %173 = arith.mulf %172, %171 : vector<8x768xf32>
    %174 = math.tanh %173 : vector<8x768xf32>
    %cst_73 = arith.constant 5.000000e-01 : f32
    %175 = vector.broadcast %cst_73 : f32 to vector<8x768xf32>
    %176 = arith.mulf %175, %174 : vector<8x768xf32>
    %cst_74 = arith.constant 5.000000e-01 : f32
    %177 = vector.broadcast %cst_74 : f32 to vector<8x768xf32>
    %178 = arith.addf %176, %177 : vector<8x768xf32>
    %179 = vector.extract_strided_slice %178 {offsets = [0, 0], sizes = [8, 256], strides = [1, 1]} : vector<8x768xf32> to vector<8x256xf32>
    %180 = vector.extract_strided_slice %178 {offsets = [0, 256], sizes = [8, 256], strides = [1, 1]} : vector<8x768xf32> to vector<8x256xf32>
    %181 = vector.extract_strided_slice %178 {offsets = [0, 512], sizes = [8, 256], strides = [1, 1]} : vector<8x768xf32> to vector<8x256xf32>
    %182 = vector.extract_strided_slice %170 {offsets = [0, 768], sizes = [8, 256], strides = [1, 1]} : vector<8x1024xf32> to vector<8x256xf32>
    %183 = math.tanh %182 : vector<8x256xf32>
    %184 = arith.mulf %180, %138 : vector<8x256xf32>
    %185 = arith.mulf %179, %183 : vector<8x256xf32>
    %186 = arith.addf %184, %185 : vector<8x256xf32>
    %187 = math.tanh %186 : vector<8x256xf32>
    %188 = arith.mulf %181, %187 : vector<8x256xf32>
    %cst_75 = arith.constant dense<0.000000e+00> : vector<8x512xf32>
    %189 = tpu.matmul %163, %15, %cst_75 {dimension_numbers = #tpu.dot_dimension_numbers<[1], [0], [0], [1], [0, 0, 1, 1], [], []>} : vector<8x128xf32>, vector<128x512xf32>, vector<8x512xf32> -> vector<8x512xf32>
    %cst_76 = arith.constant dense<0.000000e+00> : vector<8x512xf32>
    %190 = tpu.matmul %188, %16, %cst_76 {dimension_numbers = #tpu.dot_dimension_numbers<[1], [0], [0], [1], [0, 0, 1, 1], [], []>} : vector<8x256xf32>, vector<256x512xf32>, vector<8x512xf32> -> vector<8x512xf32>
    %191 = vector.broadcast %17 : vector<1x512xf32> to vector<8x512xf32>
    %192 = arith.addf %190, %191 : vector<8x512xf32>
    %193 = arith.addf %192, %189 : vector<8x512xf32>
    %194 = vector.extract_strided_slice %193 {offsets = [0, 0], sizes = [8, 384], strides = [1, 1]} : vector<8x512xf32> to vector<8x384xf32>
    %cst_77 = arith.constant 5.000000e-01 : f32
    %195 = vector.broadcast %cst_77 : f32 to vector<8x384xf32>
    %196 = arith.mulf %195, %194 : vector<8x384xf32>
    %197 = math.tanh %196 : vector<8x384xf32>
    %cst_78 = arith.constant 5.000000e-01 : f32
    %198 = vector.broadcast %cst_78 : f32 to vector<8x384xf32>
    %199 = arith.mulf %198, %197 : vector<8x384xf32>
    %cst_79 = arith.constant 5.000000e-01 : f32
    %200 = vector.broadcast %cst_79 : f32 to vector<8x384xf32>
    %201 = arith.addf %199, %200 : vector<8x384xf32>
    %202 = vector.extract_strided_slice %201 {offsets = [0, 0], sizes = [8, 128], strides = [1, 1]} : vector<8x384xf32> to vector<8x128xf32>
    %203 = vector.extract_strided_slice %201 {offsets = [0, 128], sizes = [8, 128], strides = [1, 1]} : vector<8x384xf32> to vector<8x128xf32>
    %204 = vector.extract_strided_slice %201 {offsets = [0, 256], sizes = [8, 128], strides = [1, 1]} : vector<8x384xf32> to vector<8x128xf32>
    %205 = vector.extract_strided_slice %193 {offsets = [0, 384], sizes = [8, 128], strides = [1, 1]} : vector<8x512xf32> to vector<8x128xf32>
    %206 = math.tanh %205 : vector<8x128xf32>
    %207 = arith.mulf %203, %161 : vector<8x128xf32>
    %208 = arith.mulf %202, %206 : vector<8x128xf32>
    %209 = arith.addf %207, %208 : vector<8x128xf32>
    %210 = math.tanh %209 : vector<8x128xf32>
    %211 = arith.mulf %204, %210 : vector<8x128xf32>
    %cst_80 = arith.constant dense<0.000000e+00> : vector<8x128xf32>
    %212 = tpu.matmul %211, %18, %cst_80 {dimension_numbers = #tpu.dot_dimension_numbers<[1], [0], [0], [1], [0, 0, 1, 1], [], []>} : vector<8x128xf32>, vector<128x128xf32>, vector<8x128xf32> -> vector<8x128xf32>
    %213 = vector.broadcast %19 : vector<1x128xf32> to vector<8x128xf32>
    %214 = arith.addf %212, %213 : vector<8x128xf32>
    %c24_81 = arith.constant 24 : index
    %c0_82 = arith.constant 0 : index
    %215 = vector.load %arg15[%c24_81, %c0_82] : memref<64x128xf32, #tpu.memory_space<vmem>>, vector<8x128xf32>
    tpu.vector_store %arg15[%c24_81, %c0_82], %214 {strides = array<i32>} : memref<64x128xf32, #tpu.memory_space<vmem>>, vector<8x128xf32>,
    %cst_83 = arith.constant dense<0.000000e+00> : vector<8x1024xf32>
    %216 = tpu.matmul %188, %14, %cst_83 {dimension_numbers = #tpu.dot_dimension_numbers<[1], [0], [0], [1], [0, 0, 1, 1], [], []>} : vector<8x256xf32>, vector<256x1024xf32>, vector<8x1024xf32> -> vector<8x1024xf32>
    %c32 = arith.constant 32 : index
    %c0_84 = arith.constant 0 : index
    %217 = vector.load %arg20[%c32, %c0_84] : memref<64x1024xf32, #tpu.memory_space<vmem>>, vector<8x1024xf32>
    %218 = arith.addf %217, %216 : vector<8x1024xf32>
    %219 = vector.extract_strided_slice %218 {offsets = [0, 0], sizes = [8, 768], strides = [1, 1]} : vector<8x1024xf32> to vector<8x768xf32>
    %cst_85 = arith.constant 5.000000e-01 : f32
    %220 = vector.broadcast %cst_85 : f32 to vector<8x768xf32>
    %221 = arith.mulf %220, %219 : vector<8x768xf32>
    %222 = math.tanh %221 : vector<8x768xf32>
    %cst_86 = arith.constant 5.000000e-01 : f32
    %223 = vector.broadcast %cst_86 : f32 to vector<8x768xf32>
    %224 = arith.mulf %223, %222 : vector<8x768xf32>
    %cst_87 = arith.constant 5.000000e-01 : f32
    %225 = vector.broadcast %cst_87 : f32 to vector<8x768xf32>
    %226 = arith.addf %224, %225 : vector<8x768xf32>
    %227 = vector.extract_strided_slice %226 {offsets = [0, 0], sizes = [8, 256], strides = [1, 1]} : vector<8x768xf32> to vector<8x256xf32>
    %228 = vector.extract_strided_slice %226 {offsets = [0, 256], sizes = [8, 256], strides = [1, 1]} : vector<8x768xf32> to vector<8x256xf32>
    %229 = vector.extract_strided_slice %226 {offsets = [0, 512], sizes = [8, 256], strides = [1, 1]} : vector<8x768xf32> to vector<8x256xf32>
    %230 = vector.extract_strided_slice %218 {offsets = [0, 768], sizes = [8, 256], strides = [1, 1]} : vector<8x1024xf32> to vector<8x256xf32>
    %231 = math.tanh %230 : vector<8x256xf32>
    %232 = arith.mulf %228, %186 : vector<8x256xf32>
    %233 = arith.mulf %227, %231 : vector<8x256xf32>
    %234 = arith.addf %232, %233 : vector<8x256xf32>
    %235 = math.tanh %234 : vector<8x256xf32>
    %236 = arith.mulf %229, %235 : vector<8x256xf32>
    %cst_88 = arith.constant dense<0.000000e+00> : vector<8x512xf32>
    %237 = tpu.matmul %211, %15, %cst_88 {dimension_numbers = #tpu.dot_dimension_numbers<[1], [0], [0], [1], [0, 0, 1, 1], [], []>} : vector<8x128xf32>, vector<128x512xf32>, vector<8x512xf32> -> vector<8x512xf32>
    %cst_89 = arith.constant dense<0.000000e+00> : vector<8x512xf32>
    %238 = tpu.matmul %236, %16, %cst_89 {dimension_numbers = #tpu.dot_dimension_numbers<[1], [0], [0], [1], [0, 0, 1, 1], [], []>} : vector<8x256xf32>, vector<256x512xf32>, vector<8x512xf32> -> vector<8x512xf32>
    %239 = vector.broadcast %17 : vector<1x512xf32> to vector<8x512xf32>
    %240 = arith.addf %238, %239 : vector<8x512xf32>
    %241 = arith.addf %240, %237 : vector<8x512xf32>
    %242 = vector.extract_strided_slice %241 {offsets = [0, 0], sizes = [8, 384], strides = [1, 1]} : vector<8x512xf32> to vector<8x384xf32>
    %cst_90 = arith.constant 5.000000e-01 : f32
    %243 = vector.broadcast %cst_90 : f32 to vector<8x384xf32>
    %244 = arith.mulf %243, %242 : vector<8x384xf32>
    %245 = math.tanh %244 : vector<8x384xf32>
    %cst_91 = arith.constant 5.000000e-01 : f32
    %246 = vector.broadcast %cst_91 : f32 to vector<8x384xf32>
    %247 = arith.mulf %246, %245 : vector<8x384xf32>
    %cst_92 = arith.constant 5.000000e-01 : f32
    %248 = vector.broadcast %cst_92 : f32 to vector<8x384xf32>
    %249 = arith.addf %247, %248 : vector<8x384xf32>
    %250 = vector.extract_strided_slice %249 {offsets = [0, 0], sizes = [8, 128], strides = [1, 1]} : vector<8x384xf32> to vector<8x128xf32>
    %251 = vector.extract_strided_slice %249 {offsets = [0, 128], sizes = [8, 128], strides = [1, 1]} : vector<8x384xf32> to vector<8x128xf32>
    %252 = vector.extract_strided_slice %249 {offsets = [0, 256], sizes = [8, 128], strides = [1, 1]} : vector<8x384xf32> to vector<8x128xf32>
    %253 = vector.extract_strided_slice %241 {offsets = [0, 384], sizes = [8, 128], strides = [1, 1]} : vector<8x512xf32> to vector<8x128xf32>
    %254 = math.tanh %253 : vector<8x128xf32>
    %255 = arith.mulf %251, %209 : vector<8x128xf32>
    %256 = arith.mulf %250, %254 : vector<8x128xf32>
    %257 = arith.addf %255, %256 : vector<8x128xf32>
    %258 = math.tanh %257 : vector<8x128xf32>
    %259 = arith.mulf %252, %258 : vector<8x128xf32>
    %cst_93 = arith.constant dense<0.000000e+00> : vector<8x128xf32>
    %260 = tpu.matmul %259, %18, %cst_93 {dimension_numbers = #tpu.dot_dimension_numbers<[1], [0], [0], [1], [0, 0, 1, 1], [], []>} : vector<8x128xf32>, vector<128x128xf32>, vector<8x128xf32> -> vector<8x128xf32>
    %261 = vector.broadcast %19 : vector<1x128xf32> to vector<8x128xf32>
    %262 = arith.addf %260, %261 : vector<8x128xf32>
    %c32_94 = arith.constant 32 : index
    %c0_95 = arith.constant 0 : index
    %263 = vector.load %arg15[%c32_94, %c0_95] : memref<64x128xf32, #tpu.memory_space<vmem>>, vector<8x128xf32>
    tpu.vector_store %arg15[%c32_94, %c0_95], %262 {strides = array<i32>} : memref<64x128xf32, #tpu.memory_space<vmem>>, vector<8x128xf32>,
    %cst_96 = arith.constant dense<0.000000e+00> : vector<8x1024xf32>
    %264 = tpu.matmul %236, %14, %cst_96 {dimension_numbers = #tpu.dot_dimension_numbers<[1], [0], [0], [1], [0, 0, 1, 1], [], []>} : vector<8x256xf32>, vector<256x1024xf32>, vector<8x1024xf32> -> vector<8x1024xf32>
    %c40 = arith.constant 40 : index
    %c0_97 = arith.constant 0 : index
    %265 = vector.load %arg20[%c40, %c0_97] : memref<64x1024xf32, #tpu.memory_space<vmem>>, vector<8x1024xf32>
    %266 = arith.addf %265, %264 : vector<8x1024xf32>
    %267 = vector.extract_strided_slice %266 {offsets = [0, 0], sizes = [8, 768], strides = [1, 1]} : vector<8x1024xf32> to vector<8x768xf32>
    %cst_98 = arith.constant 5.000000e-01 : f32
    %268 = vector.broadcast %cst_98 : f32 to vector<8x768xf32>
    %269 = arith.mulf %268, %267 : vector<8x768xf32>
    %270 = math.tanh %269 : vector<8x768xf32>
    %cst_99 = arith.constant 5.000000e-01 : f32
    %271 = vector.broadcast %cst_99 : f32 to vector<8x768xf32>
    %272 = arith.mulf %271, %270 : vector<8x768xf32>
    %cst_100 = arith.constant 5.000000e-01 : f32
    %273 = vector.broadcast %cst_100 : f32 to vector<8x768xf32>
    %274 = arith.addf %272, %273 : vector<8x768xf32>
    %275 = vector.extract_strided_slice %274 {offsets = [0, 0], sizes = [8, 256], strides = [1, 1]} : vector<8x768xf32> to vector<8x256xf32>
    %276 = vector.extract_strided_slice %274 {offsets = [0, 256], sizes = [8, 256], strides = [1, 1]} : vector<8x768xf32> to vector<8x256xf32>
    %277 = vector.extract_strided_slice %274 {offsets = [0, 512], sizes = [8, 256], strides = [1, 1]} : vector<8x768xf32> to vector<8x256xf32>
    %278 = vector.extract_strided_slice %266 {offsets = [0, 768], sizes = [8, 256], strides = [1, 1]} : vector<8x1024xf32> to vector<8x256xf32>
    %279 = math.tanh %278 : vector<8x256xf32>
    %280 = arith.mulf %276, %234 : vector<8x256xf32>
    %281 = arith.mulf %275, %279 : vector<8x256xf32>
    %282 = arith.addf %280, %281 : vector<8x256xf32>
    %283 = math.tanh %282 : vector<8x256xf32>
    %284 = arith.mulf %277, %283 : vector<8x256xf32>
    %cst_101 = arith.constant dense<0.000000e+00> : vector<8x512xf32>
    %285 = tpu.matmul %259, %15, %cst_101 {dimension_numbers = #tpu.dot_dimension_numbers<[1], [0], [0], [1], [0, 0, 1, 1], [], []>} : vector<8x128xf32>, vector<128x512xf32>, vector<8x512xf32> -> vector<8x512xf32>
    %cst_102 = arith.constant dense<0.000000e+00> : vector<8x512xf32>
    %286 = tpu.matmul %284, %16, %cst_102 {dimension_numbers = #tpu.dot_dimension_numbers<[1], [0], [0], [1], [0, 0, 1, 1], [], []>} : vector<8x256xf32>, vector<256x512xf32>, vector<8x512xf32> -> vector<8x512xf32>
    %287 = vector.broadcast %17 : vector<1x512xf32> to vector<8x512xf32>
    %288 = arith.addf %286, %287 : vector<8x512xf32>
    %289 = arith.addf %288, %285 : vector<8x512xf32>
    %290 = vector.extract_strided_slice %289 {offsets = [0, 0], sizes = [8, 384], strides = [1, 1]} : vector<8x512xf32> to vector<8x384xf32>
    %cst_103 = arith.constant 5.000000e-01 : f32
    %291 = vector.broadcast %cst_103 : f32 to vector<8x384xf32>
    %292 = arith.mulf %291, %290 : vector<8x384xf32>
    %293 = math.tanh %292 : vector<8x384xf32>
    %cst_104 = arith.constant 5.000000e-01 : f32
    %294 = vector.broadcast %cst_104 : f32 to vector<8x384xf32>
    %295 = arith.mulf %294, %293 : vector<8x384xf32>
    %cst_105 = arith.constant 5.000000e-01 : f32
    %296 = vector.broadcast %cst_105 : f32 to vector<8x384xf32>
    %297 = arith.addf %295, %296 : vector<8x384xf32>
    %298 = vector.extract_strided_slice %297 {offsets = [0, 0], sizes = [8, 128], strides = [1, 1]} : vector<8x384xf32> to vector<8x128xf32>
    %299 = vector.extract_strided_slice %297 {offsets = [0, 128], sizes = [8, 128], strides = [1, 1]} : vector<8x384xf32> to vector<8x128xf32>
    %300 = vector.extract_strided_slice %297 {offsets = [0, 256], sizes = [8, 128], strides = [1, 1]} : vector<8x384xf32> to vector<8x128xf32>
    %301 = vector.extract_strided_slice %289 {offsets = [0, 384], sizes = [8, 128], strides = [1, 1]} : vector<8x512xf32> to vector<8x128xf32>
    %302 = math.tanh %301 : vector<8x128xf32>
    %303 = arith.mulf %299, %257 : vector<8x128xf32>
    %304 = arith.mulf %298, %302 : vector<8x128xf32>
    %305 = arith.addf %303, %304 : vector<8x128xf32>
    %306 = math.tanh %305 : vector<8x128xf32>
    %307 = arith.mulf %300, %306 : vector<8x128xf32>
    %cst_106 = arith.constant dense<0.000000e+00> : vector<8x128xf32>
    %308 = tpu.matmul %307, %18, %cst_106 {dimension_numbers = #tpu.dot_dimension_numbers<[1], [0], [0], [1], [0, 0, 1, 1], [], []>} : vector<8x128xf32>, vector<128x128xf32>, vector<8x128xf32> -> vector<8x128xf32>
    %309 = vector.broadcast %19 : vector<1x128xf32> to vector<8x128xf32>
    %310 = arith.addf %308, %309 : vector<8x128xf32>
    %c40_107 = arith.constant 40 : index
    %c0_108 = arith.constant 0 : index
    %311 = vector.load %arg15[%c40_107, %c0_108] : memref<64x128xf32, #tpu.memory_space<vmem>>, vector<8x128xf32>
    tpu.vector_store %arg15[%c40_107, %c0_108], %310 {strides = array<i32>} : memref<64x128xf32, #tpu.memory_space<vmem>>, vector<8x128xf32>,
    %cst_109 = arith.constant dense<0.000000e+00> : vector<8x1024xf32>
    %312 = tpu.matmul %284, %14, %cst_109 {dimension_numbers = #tpu.dot_dimension_numbers<[1], [0], [0], [1], [0, 0, 1, 1], [], []>} : vector<8x256xf32>, vector<256x1024xf32>, vector<8x1024xf32> -> vector<8x1024xf32>
    %c48 = arith.constant 48 : index
    %c0_110 = arith.constant 0 : index
    %313 = vector.load %arg20[%c48, %c0_110] : memref<64x1024xf32, #tpu.memory_space<vmem>>, vector<8x1024xf32>
    %314 = arith.addf %313, %312 : vector<8x1024xf32>
    %315 = vector.extract_strided_slice %314 {offsets = [0, 0], sizes = [8, 768], strides = [1, 1]} : vector<8x1024xf32> to vector<8x768xf32>
    %cst_111 = arith.constant 5.000000e-01 : f32
    %316 = vector.broadcast %cst_111 : f32 to vector<8x768xf32>
    %317 = arith.mulf %316, %315 : vector<8x768xf32>
    %318 = math.tanh %317 : vector<8x768xf32>
    %cst_112 = arith.constant 5.000000e-01 : f32
    %319 = vector.broadcast %cst_112 : f32 to vector<8x768xf32>
    %320 = arith.mulf %319, %318 : vector<8x768xf32>
    %cst_113 = arith.constant 5.000000e-01 : f32
    %321 = vector.broadcast %cst_113 : f32 to vector<8x768xf32>
    %322 = arith.addf %320, %321 : vector<8x768xf32>
    %323 = vector.extract_strided_slice %322 {offsets = [0, 0], sizes = [8, 256], strides = [1, 1]} : vector<8x768xf32> to vector<8x256xf32>
    %324 = vector.extract_strided_slice %322 {offsets = [0, 256], sizes = [8, 256], strides = [1, 1]} : vector<8x768xf32> to vector<8x256xf32>
    %325 = vector.extract_strided_slice %322 {offsets = [0, 512], sizes = [8, 256], strides = [1, 1]} : vector<8x768xf32> to vector<8x256xf32>
    %326 = vector.extract_strided_slice %314 {offsets = [0, 768], sizes = [8, 256], strides = [1, 1]} : vector<8x1024xf32> to vector<8x256xf32>
    %327 = math.tanh %326 : vector<8x256xf32>
    %328 = arith.mulf %324, %282 : vector<8x256xf32>
    %329 = arith.mulf %323, %327 : vector<8x256xf32>
    %330 = arith.addf %328, %329 : vector<8x256xf32>
    %331 = math.tanh %330 : vector<8x256xf32>
    %332 = arith.mulf %325, %331 : vector<8x256xf32>
    %cst_114 = arith.constant dense<0.000000e+00> : vector<8x512xf32>
    %333 = tpu.matmul %307, %15, %cst_114 {dimension_numbers = #tpu.dot_dimension_numbers<[1], [0], [0], [1], [0, 0, 1, 1], [], []>} : vector<8x128xf32>, vector<128x512xf32>, vector<8x512xf32> -> vector<8x512xf32>
    %cst_115 = arith.constant dense<0.000000e+00> : vector<8x512xf32>
    %334 = tpu.matmul %332, %16, %cst_115 {dimension_numbers = #tpu.dot_dimension_numbers<[1], [0], [0], [1], [0, 0, 1, 1], [], []>} : vector<8x256xf32>, vector<256x512xf32>, vector<8x512xf32> -> vector<8x512xf32>
    %335 = vector.broadcast %17 : vector<1x512xf32> to vector<8x512xf32>
    %336 = arith.addf %334, %335 : vector<8x512xf32>
    %337 = arith.addf %336, %333 : vector<8x512xf32>
    %338 = vector.extract_strided_slice %337 {offsets = [0, 0], sizes = [8, 384], strides = [1, 1]} : vector<8x512xf32> to vector<8x384xf32>
    %cst_116 = arith.constant 5.000000e-01 : f32
    %339 = vector.broadcast %cst_116 : f32 to vector<8x384xf32>
    %340 = arith.mulf %339, %338 : vector<8x384xf32>
    %341 = math.tanh %340 : vector<8x384xf32>
    %cst_117 = arith.constant 5.000000e-01 : f32
    %342 = vector.broadcast %cst_117 : f32 to vector<8x384xf32>
    %343 = arith.mulf %342, %341 : vector<8x384xf32>
    %cst_118 = arith.constant 5.000000e-01 : f32
    %344 = vector.broadcast %cst_118 : f32 to vector<8x384xf32>
    %345 = arith.addf %343, %344 : vector<8x384xf32>
    %346 = vector.extract_strided_slice %345 {offsets = [0, 0], sizes = [8, 128], strides = [1, 1]} : vector<8x384xf32> to vector<8x128xf32>
    %347 = vector.extract_strided_slice %345 {offsets = [0, 128], sizes = [8, 128], strides = [1, 1]} : vector<8x384xf32> to vector<8x128xf32>
    %348 = vector.extract_strided_slice %345 {offsets = [0, 256], sizes = [8, 128], strides = [1, 1]} : vector<8x384xf32> to vector<8x128xf32>
    %349 = vector.extract_strided_slice %337 {offsets = [0, 384], sizes = [8, 128], strides = [1, 1]} : vector<8x512xf32> to vector<8x128xf32>
    %350 = math.tanh %349 : vector<8x128xf32>
    %351 = arith.mulf %347, %305 : vector<8x128xf32>
    %352 = arith.mulf %346, %350 : vector<8x128xf32>
    %353 = arith.addf %351, %352 : vector<8x128xf32>
    %354 = math.tanh %353 : vector<8x128xf32>
    %355 = arith.mulf %348, %354 : vector<8x128xf32>
    %cst_119 = arith.constant dense<0.000000e+00> : vector<8x128xf32>
    %356 = tpu.matmul %355, %18, %cst_119 {dimension_numbers = #tpu.dot_dimension_numbers<[1], [0], [0], [1], [0, 0, 1, 1], [], []>} : vector<8x128xf32>, vector<128x128xf32>, vector<8x128xf32> -> vector<8x128xf32>
    %357 = vector.broadcast %19 : vector<1x128xf32> to vector<8x128xf32>
    %358 = arith.addf %356, %357 : vector<8x128xf32>
    %c48_120 = arith.constant 48 : index
    %c0_121 = arith.constant 0 : index
    %359 = vector.load %arg15[%c48_120, %c0_121] : memref<64x128xf32, #tpu.memory_space<vmem>>, vector<8x128xf32>
    tpu.vector_store %arg15[%c48_120, %c0_121], %358 {strides = array<i32>} : memref<64x128xf32, #tpu.memory_space<vmem>>, vector<8x128xf32>,
    %cst_122 = arith.constant dense<0.000000e+00> : vector<8x1024xf32>
    %360 = tpu.matmul %332, %14, %cst_122 {dimension_numbers = #tpu.dot_dimension_numbers<[1], [0], [0], [1], [0, 0, 1, 1], [], []>} : vector<8x256xf32>, vector<256x1024xf32>, vector<8x1024xf32> -> vector<8x1024xf32>
    %c56 = arith.constant 56 : index
    %c0_123 = arith.constant 0 : index
    %361 = vector.load %arg20[%c56, %c0_123] : memref<64x1024xf32, #tpu.memory_space<vmem>>, vector<8x1024xf32>
    %362 = arith.addf %361, %360 : vector<8x1024xf32>
    %363 = vector.extract_strided_slice %362 {offsets = [0, 0], sizes = [8, 768], strides = [1, 1]} : vector<8x1024xf32> to vector<8x768xf32>
    %cst_124 = arith.constant 5.000000e-01 : f32
    %364 = vector.broadcast %cst_124 : f32 to vector<8x768xf32>
    %365 = arith.mulf %364, %363 : vector<8x768xf32>
    %366 = math.tanh %365 : vector<8x768xf32>
    %cst_125 = arith.constant 5.000000e-01 : f32
    %367 = vector.broadcast %cst_125 : f32 to vector<8x768xf32>
    %368 = arith.mulf %367, %366 : vector<8x768xf32>
    %cst_126 = arith.constant 5.000000e-01 : f32
    %369 = vector.broadcast %cst_126 : f32 to vector<8x768xf32>
    %370 = arith.addf %368, %369 : vector<8x768xf32>
    %371 = vector.extract_strided_slice %370 {offsets = [0, 0], sizes = [8, 256], strides = [1, 1]} : vector<8x768xf32> to vector<8x256xf32>
    %372 = vector.extract_strided_slice %370 {offsets = [0, 256], sizes = [8, 256], strides = [1, 1]} : vector<8x768xf32> to vector<8x256xf32>
    %373 = vector.extract_strided_slice %370 {offsets = [0, 512], sizes = [8, 256], strides = [1, 1]} : vector<8x768xf32> to vector<8x256xf32>
    %374 = vector.extract_strided_slice %362 {offsets = [0, 768], sizes = [8, 256], strides = [1, 1]} : vector<8x1024xf32> to vector<8x256xf32>
    %375 = math.tanh %374 : vector<8x256xf32>
    %376 = arith.mulf %372, %330 : vector<8x256xf32>
    %377 = arith.mulf %371, %375 : vector<8x256xf32>
    %378 = arith.addf %376, %377 : vector<8x256xf32>
    %379 = math.tanh %378 : vector<8x256xf32>
    %380 = arith.mulf %373, %379 : vector<8x256xf32>
    %cst_127 = arith.constant dense<0.000000e+00> : vector<8x512xf32>
    %381 = tpu.matmul %355, %15, %cst_127 {dimension_numbers = #tpu.dot_dimension_numbers<[1], [0], [0], [1], [0, 0, 1, 1], [], []>} : vector<8x128xf32>, vector<128x512xf32>, vector<8x512xf32> -> vector<8x512xf32>
    %cst_128 = arith.constant dense<0.000000e+00> : vector<8x512xf32>
    %382 = tpu.matmul %380, %16, %cst_128 {dimension_numbers = #tpu.dot_dimension_numbers<[1], [0], [0], [1], [0, 0, 1, 1], [], []>} : vector<8x256xf32>, vector<256x512xf32>, vector<8x512xf32> -> vector<8x512xf32>
    %383 = vector.broadcast %17 : vector<1x512xf32> to vector<8x512xf32>
    %384 = arith.addf %382, %383 : vector<8x512xf32>
    %385 = arith.addf %384, %381 : vector<8x512xf32>
    %386 = vector.extract_strided_slice %385 {offsets = [0, 0], sizes = [8, 384], strides = [1, 1]} : vector<8x512xf32> to vector<8x384xf32>
    %cst_129 = arith.constant 5.000000e-01 : f32
    %387 = vector.broadcast %cst_129 : f32 to vector<8x384xf32>
    %388 = arith.mulf %387, %386 : vector<8x384xf32>
    %389 = math.tanh %388 : vector<8x384xf32>
    %cst_130 = arith.constant 5.000000e-01 : f32
    %390 = vector.broadcast %cst_130 : f32 to vector<8x384xf32>
    %391 = arith.mulf %390, %389 : vector<8x384xf32>
    %cst_131 = arith.constant 5.000000e-01 : f32
    %392 = vector.broadcast %cst_131 : f32 to vector<8x384xf32>
    %393 = arith.addf %391, %392 : vector<8x384xf32>
    %394 = vector.extract_strided_slice %393 {offsets = [0, 0], sizes = [8, 128], strides = [1, 1]} : vector<8x384xf32> to vector<8x128xf32>
    %395 = vector.extract_strided_slice %393 {offsets = [0, 128], sizes = [8, 128], strides = [1, 1]} : vector<8x384xf32> to vector<8x128xf32>
    %396 = vector.extract_strided_slice %393 {offsets = [0, 256], sizes = [8, 128], strides = [1, 1]} : vector<8x384xf32> to vector<8x128xf32>
    %397 = vector.extract_strided_slice %385 {offsets = [0, 384], sizes = [8, 128], strides = [1, 1]} : vector<8x512xf32> to vector<8x128xf32>
    %398 = math.tanh %397 : vector<8x128xf32>
    %399 = arith.mulf %395, %353 : vector<8x128xf32>
    %400 = arith.mulf %394, %398 : vector<8x128xf32>
    %401 = arith.addf %399, %400 : vector<8x128xf32>
    %402 = math.tanh %401 : vector<8x128xf32>
    %403 = arith.mulf %396, %402 : vector<8x128xf32>
    %cst_132 = arith.constant dense<0.000000e+00> : vector<8x128xf32>
    %404 = tpu.matmul %403, %18, %cst_132 {dimension_numbers = #tpu.dot_dimension_numbers<[1], [0], [0], [1], [0, 0, 1, 1], [], []>} : vector<8x128xf32>, vector<128x128xf32>, vector<8x128xf32> -> vector<8x128xf32>
    %405 = vector.broadcast %19 : vector<1x128xf32> to vector<8x128xf32>
    %406 = arith.addf %404, %405 : vector<8x128xf32>
    %c56_133 = arith.constant 56 : index
    %c0_134 = arith.constant 0 : index
    %407 = vector.load %arg15[%c56_133, %c0_134] : memref<64x128xf32, #tpu.memory_space<vmem>>, vector<8x128xf32>
    tpu.vector_store %arg15[%c56_133, %c0_134], %406 {strides = array<i32>} : memref<64x128xf32, #tpu.memory_space<vmem>>, vector<8x128xf32>,
    %c0_135 = arith.constant 0 : index
    %c0_136 = arith.constant 0 : index
    %408 = vector.load %arg16[%c0_135, %c0_136] : memref<8x256xf32, #tpu.memory_space<vmem>>, vector<8x256xf32>
    tpu.vector_store %arg16[%c0_135, %c0_136], %380 {strides = array<i32>} : memref<8x256xf32, #tpu.memory_space<vmem>>, vector<8x256xf32>,
    %c0_137 = arith.constant 0 : index
    %c0_138 = arith.constant 0 : index
    %409 = vector.load %arg17[%c0_137, %c0_138] : memref<8x256xf32, #tpu.memory_space<vmem>>, vector<8x256xf32>
    tpu.vector_store %arg17[%c0_137, %c0_138], %378 {strides = array<i32>} : memref<8x256xf32, #tpu.memory_space<vmem>>, vector<8x256xf32>,
    %c0_139 = arith.constant 0 : index
    %c0_140 = arith.constant 0 : index
    %410 = vector.load %arg18[%c0_139, %c0_140] : memref<8x128xf32, #tpu.memory_space<vmem>>, vector<8x128xf32>
    tpu.vector_store %arg18[%c0_139, %c0_140], %403 {strides = array<i32>} : memref<8x128xf32, #tpu.memory_space<vmem>>, vector<8x128xf32>,
    %c0_141 = arith.constant 0 : index
    %c0_142 = arith.constant 0 : index
    %411 = vector.load %arg19[%c0_141, %c0_142] : memref<8x128xf32, #tpu.memory_space<vmem>>, vector<8x128xf32>
    tpu.vector_store %arg19[%c0_141, %c0_142], %401 {strides = array<i32>} : memref<8x128xf32, #tpu.memory_space<vmem>>, vector<8x128xf32>,
    return
  }
  func.func @transform_0(%arg0: i32) -> (i32, i32) {
    %c0_i32 = arith.constant 0 : i32
    %c0_i32_0 = arith.constant 0 : i32
    %c0_i32_1 = arith.constant 0 : i32
    return %c0_i32, %c0_i32_0 : i32, i32
  }
  func.func @transform_1(%arg0: i32) -> (i32, i32) {
    %c0_i32 = arith.constant 0 : i32
    %c0_i32_0 = arith.constant 0 : i32
    %c0_i32_1 = arith.constant 0 : i32
    return %c0_i32, %c0_i32_0 : i32, i32
  }
  func.func @transform_2(%arg0: i32) -> (i32, i32) {
    %c0_i32 = arith.constant 0 : i32
    %c0_i32_0 = arith.constant 0 : i32
    %c0_i32_1 = arith.constant 0 : i32
    return %c0_i32, %c0_i32_0 : i32, i32
  }
  func.func @transform_3(%arg0: i32) -> (i32, i32) {
    %c0_i32 = arith.constant 0 : i32
    %c0_i32_0 = arith.constant 0 : i32
    %c0_i32_1 = arith.constant 0 : i32
    return %c0_i32, %c0_i32_0 : i32, i32
  }
  func.func @transform_4(%arg0: i32) -> (i32, i32) {
    %c0_i32 = arith.constant 0 : i32
    %c0_i32_0 = arith.constant 0 : i32
    %c0_i32_1 = arith.constant 0 : i32
    return %c0_i32, %c0_i32_0 : i32, i32
  }
  func.func @transform_5(%arg0: i32) -> (i32, i32) {
    %c0_i32 = arith.constant 0 : i32
    %c0_i32_0 = arith.constant 0 : i32
    %c0_i32_1 = arith.constant 0 : i32
    return %c0_i32, %c0_i32_0 : i32, i32
  }
  func.func @transform_6(%arg0: i32) -> (i32, i32) {
    %c0_i32 = arith.constant 0 : i32
    %c0_i32_0 = arith.constant 0 : i32
    %c0_i32_1 = arith.constant 0 : i32
    return %c0_i32, %c0_i32_0 : i32, i32
  }
  func.func @transform_7(%arg0: i32) -> (i32, i32) {
    %c0_i32 = arith.constant 0 : i32
    %c0_i32_0 = arith.constant 0 : i32
    %c0_i32_1 = arith.constant 0 : i32
    return %c0_i32, %c0_i32_0 : i32, i32
  }
  func.func @transform_8(%arg0: i32) -> (i32, i32) {
    %c0_i32 = arith.constant 0 : i32
    %c0_i32_0 = arith.constant 0 : i32
    %c0_i32_1 = arith.constant 0 : i32
    return %c0_i32, %c0_i32_0 : i32, i32
  }
  func.func @transform_9(%arg0: i32) -> (i32, i32) {
    %c0_i32 = arith.constant 0 : i32
    %c0_i32_0 = arith.constant 0 : i32
    %c0_i32_1 = arith.constant 0 : i32
    return %c0_i32, %c0_i32_0 : i32, i32
  }
  func.func @transform_10(%arg0: i32) -> (i32, i32) {
    %c0_i32 = arith.constant 0 : i32
    %c0_i32_0 = arith.constant 0 : i32
    %c0_i32_1 = arith.constant 0 : i32
    return %c0_i32, %c0_i32_0 : i32, i32
  }
  func.func @transform_11(%arg0: i32) -> (i32, i32) {
    %c0_i32 = arith.constant 0 : i32
    %c0_i32_0 = arith.constant 0 : i32
    %c0_i32_1 = arith.constant 0 : i32
    return %c0_i32, %c0_i32_0 : i32, i32
  }
  func.func @transform_12(%arg0: i32) -> (i32, i32) {
    %c0_i32 = arith.constant 0 : i32
    %c0_i32_0 = arith.constant 0 : i32
    %c0_i32_1 = arith.constant 0 : i32
    return %c0_i32, %c0_i32_0 : i32, i32
  }
  func.func @transform_13(%arg0: i32) -> (i32, i32) {
    %c0_i32 = arith.constant 0 : i32
    %c0_i32_0 = arith.constant 0 : i32
    %c0_i32_1 = arith.constant 0 : i32
    return %c0_i32, %c0_i32_0 : i32, i32
  }
  func.func @transform_14(%arg0: i32) -> (i32, i32) {
    %c0_i32 = arith.constant 0 : i32
    %c0_i32_0 = arith.constant 0 : i32
    %c0_i32_1 = arith.constant 0 : i32
    return %c0_i32, %c0_i32_0 : i32, i32
  }
  func.func @transform_15(%arg0: i32) -> (i32, i32) {
    %c0_i32 = arith.constant 0 : i32
    %c0_i32_0 = arith.constant 0 : i32
    %c0_i32_1 = arith.constant 0 : i32
    return %c0_i32, %c0_i32_0 : i32, i32
  }
  func.func @transform_16(%arg0: i32) -> (i32, i32) {
    %c0_i32 = arith.constant 0 : i32
    %c0_i32_0 = arith.constant 0 : i32
    %c0_i32_1 = arith.constant 0 : i32
    return %c0_i32, %c0_i32_0 : i32, i32
  }
  func.func @transform_17(%arg0: i32) -> (i32, i32) {
    %c0_i32 = arith.constant 0 : i32
    %c0_i32_0 = arith.constant 0 : i32
    %c0_i32_1 = arith.constant 0 : i32
    return %c0_i32, %c0_i32_0 : i32, i32
  }
  func.func @transform_18(%arg0: i32) -> (i32, i32) {
    %c0_i32 = arith.constant 0 : i32
    %c0_i32_0 = arith.constant 0 : i32
    %c0_i32_1 = arith.constant 0 : i32
    return %c0_i32, %c0_i32_0 : i32, i32
  }
}

</mosaic_0001>

<llo_original>
// kernel: model_forward.1
$region0: #{model_forward.1}
  #allocation0 [shape = 'u32[]', space=smem, size = 0x4, offset = 0x4, fixed_abs, tag = 'smem constant byte address 0x4 - core index']
  #allocation1 [shape = 'u32[144,128]{1,0:T(1,128)}', space=vmem, size = 0x12000, scoped, tag = 'internal scratch']
  #allocation2 [shape = 'f32[64,1024]{1,0:T(8,128)}', space=vmem, size = 0x40000, scoped, tag = 'scratch operand']
  %s0 = inlined_call_operand.vmem [shape: s32[64,1], index: 0, kind: input, shape index: {}]
  %s1 = inlined_call_operand.vmem [shape: f32[32,128], index: 1, kind: input, shape index: {}]
  %s2 = inlined_call_operand.hbm [shape: f32[128,1024], index: 2, kind: input, shape index: {}]
  %s3 = inlined_call_operand.hbm [shape: f32[256,1024], index: 3, kind: input, shape index: {}]
  %s4 = inlined_call_operand.vmem [shape: f32[1,1024], index: 4, kind: input, shape index: {}]
  %s5 = inlined_call_operand.vmem [shape: f32[8,256], index: 5, kind: input, shape index: {}]
  %s6 = inlined_call_operand.vmem [shape: f32[8,256], index: 6, kind: input, shape index: {}]
  %s7 = inlined_call_operand.hbm [shape: f32[256,512], index: 7, kind: input, shape index: {}]
  %s8 = inlined_call_operand.hbm [shape: f32[128,512], index: 8, kind: input, shape index: {}]
  %s9 = inlined_call_operand.hbm [shape: f32[1,512], index: 9, kind: input, shape index: {}]
  %s10 = inlined_call_operand.vmem [shape: f32[8,128], index: 10, kind: input, shape index: {}]
  %s11 = inlined_call_operand.vmem [shape: f32[8,128], index: 11, kind: input, shape index: {}]
  %s12 = inlined_call_operand.hbm [shape: f32[128,128], index: 12, kind: input, shape index: {}]
  %s13 = inlined_call_operand.vmem [shape: f32[1,128], index: 13, kind: input, shape index: {}]
  %s14 = inlined_call_operand.vmem [shape: f32[64,128], index: 14, kind: output, shape index: {0}]
  %s15 = inlined_call_operand.hbm [shape: f32[8,256], index: 15, kind: output, shape index: {1}]
  %s16 = inlined_call_operand.hbm [shape: f32[8,256], index: 16, kind: output, shape index: {2}]
  %s17 = inlined_call_operand.hbm [shape: f32[8,128], index: 17, kind: output, shape index: {3}]
  %s18 = inlined_call_operand.hbm [shape: f32[8,128], index: 18, kind: output, shape index: {4}]
  %19 = xla_tuple %s14, %s15, %s16, %s17, %s18
  %s20 = sld [smem:[#allocation0]]
  $region122: #{model_forward.1} parent=0
    _
  %s22 = ssub.s32 1, %s20
  %s23 = scalar_select 0, %s22, %s20
  $region1: #{model_forward.1} parent=0
    #allocation3 [shape = 'u8[524288]{0}', space=vmem, size = 0x80000, scoped, tag = 'input window, operand 2, single buffered']
    #allocation4 [shape = 's32[1]{0}', space=sflag, size = 0x4, scoped, tag = 'scoped memory for model_forward.1']
    #allocation5 [shape = 's32[1]{0}', space=sflag, size = 0x4, scoped, tag = 'scoped memory for model_forward.1']
    #allocation6 [shape = 'u8[1048576]{0}', space=vmem, size = 0x100000, scoped, tag = 'input window, operand 3, single buffered']
    #allocation7 [shape = 's32[1]{0}', space=sflag, size = 0x4, scoped, tag = 'scoped memory for model_forward.1']
    #allocation8 [shape = 'u8[524288]{0}', space=vmem, size = 0x80000, scoped, tag = 'input window, operand 7, single buffered']
    #allocation9 [shape = 'u8[262144]{0}', space=vmem, size = 0x40000, scoped, tag = 'input window, operand 8, single buffered']
    #allocation10 [shape = 's32[1]{0}', space=sflag, size = 0x4, scoped, tag = 'scoped memory for model_forward.1']
    #allocation11 [shape = 'u8[2048]{0}', space=vmem, size = 0x800, scoped, tag = 'input window, operand 9, single buffered']
    #allocation12 [shape = 'u8[65536]{0}', space=vmem, size = 0x10000, scoped, tag = 'input window, operand 12, single buffered']
    #allocation13 [shape = 's32[1]{0}', space=sflag, size = 0x4, scoped, tag = 'scoped memory for model_forward.1']
    #allocation14 [shape = 'u8[8192]{0}', space=vmem, size = 0x2000, scoped, tag = 'output window, operand 1, single buffered']
    #allocation15 [shape = 'u8[8192]{0}', space=vmem, size = 0x2000, scoped, tag = 'output window, operand 2, single buffered']
    #allocation16 [shape = 's32[1]{0}', space=sflag, size = 0x4, scoped, tag = 'scoped memory for model_forward.1']
    #allocation17 [shape = 'u8[4096]{0}', space=vmem, size = 0x1000, scoped, tag = 'output window, operand 3, single buffered']
    #allocation18 [shape = 'u8[4096]{0}', space=vmem, size = 0x1000, scoped, tag = 'output window, operand 4, single buffered']
    #allocation19 [shape = 's32[1]{0}', space=sflag, size = 0x4, scoped, tag = 'scoped memory for model_forward.1']
    %24 = vsyncpa [#allocation4], 0
    %25 = vsyncpa [#allocation7], 0
    %26 = vsyncpa [#allocation10], 0
    %27 = vsyncpa [#allocation13], 0
    %28 = vsyncpa [#allocation5], 0
    %29 = vsyncpa [#allocation16], 0
    %30 = vsyncpa [#allocation19], 0
    // Predicated region
    $region2: #{model_forward.1} parent=1 // pred_check
      _
    $region3: #{model_forward.1} parent=1 // pred_check_branch
      %32 = sbr.rel (0) target = $region5
    $region4: #{model_forward.1} parent=1 // pred_region
      _
    $region5: #{model_forward.1} parent=1 // pred_fallthru
      _
    // Predicated region
    $region6: #{model_forward.1} parent=1 // pred_check
      _
    $region7: #{model_forward.1} parent=1 // pred_check_branch
      %34 = sbr.rel (0) target = $region9
    $region8: #{model_forward.1} parent=1 // pred_region
      _
    $region9: #{model_forward.1} parent=1 // pred_fallthru
      _
    // Predicated region
    $region10: #{model_forward.1} parent=1 // pred_check
      _
    $region11: #{model_forward.1} parent=1 // pred_check_branch
      %36 = sbr.rel (0) target = $region13
    $region12: #{model_forward.1} parent=1 // pred_region
      %s38 = ssub.s32 16384, 16384
      %39 = vsyncadd [#allocation4], %s38
      %s40 = sshll.u32 [#allocation3], 4
      %s41 = int_to_ptr.vmem [resolvable:$true] %s40
      %46 = dma.hbm_to_vmem [thread:$0]  %s2, 16384, %s41, [#allocation4], 1024, 1024, 64
    $region13: #{model_forward.1} parent=1 // pred_fallthru
      _
    // Predicated region
    $region14: #{model_forward.1} parent=1 // pred_check
      _
    $region15: #{model_forward.1} parent=1 // pred_check_branch
      %48 = sbr.rel (0) target = $region17
    $region16: #{model_forward.1} parent=1 // pred_region
      %s50 = ssub.s32 32768, 32768
      %51 = vsyncadd [#allocation7], %s50
      %s52 = sshll.u32 [#allocation6], 4
      %s53 = int_to_ptr.vmem [resolvable:$true] %s52
      %58 = dma.hbm_to_vmem [thread:$0]  %s3, 32768, %s53, [#allocation7], 1024, 1024, 64
    $region17: #{model_forward.1} parent=1 // pred_fallthru
      _
    // Predicated region
    $region18: #{model_forward.1} parent=1 // pred_check
      _
    $region19: #{model_forward.1} parent=1 // pred_check_branch
      %60 = sbr.rel (0) target = $region21
    $region20: #{model_forward.1} parent=1 // pred_region
      _
    $region21: #{model_forward.1} parent=1 // pred_fallthru
      _
    // Predicated region
    $region22: #{model_forward.1} parent=1 // pred_check
      _
    $region23: #{model_forward.1} parent=1 // pred_check_branch
      %62 = sbr.rel (0) target = $region25
    $region24: #{model_forward.1} parent=1 // pred_region
      _
    $region25: #{model_forward.1} parent=1 // pred_fallthru
      _
    // Predicated region
    $region26: #{model_forward.1} parent=1 // pred_check
      _
    $region27: #{model_forward.1} parent=1 // pred_check_branch
      %64 = sbr.rel (0) target = $region29
    $region28: #{model_forward.1} parent=1 // pred_region
      _
    $region29: #{model_forward.1} parent=1 // pred_fallthru
      _
    // Predicated region
    $region30: #{model_forward.1} parent=1 // pred_check
      _
    $region31: #{model_forward.1} parent=1 // pred_check_branch
      %66 = sbr.rel (0) target = $region33
    $region32: #{model_forward.1} parent=1 // pred_region
      %s68 = ssub.s32 16384, 16384
      %69 = vsyncadd [#allocation7], %s68
      %s70 = sshll.u32 [#allocation8], 4
      %s71 = int_to_ptr.vmem [resolvable:$true] %s70
      %76 = dma.hbm_to_vmem [thread:$0]  %s7, 16384, %s71, [#allocation7], 512, 512, 32
    $region33: #{model_forward.1} parent=1 // pred_fallthru
      _
    // Predicated region
    $region34: #{model_forward.1} parent=1 // pred_check
      _
    $region35: #{model_forward.1} parent=1 // pred_check_branch
      %78 = sbr.rel (0) target = $region37
    $region36: #{model_forward.1} parent=1 // pred_region
      %s80 = ssub.s32 8192, 8192
      %81 = vsyncadd [#allocation10], %s80
      %s82 = sshll.u32 [#allocation9], 4
      %s83 = int_to_ptr.vmem [resolvable:$true] %s82
      %88 = dma.hbm_to_vmem [thread:$0]  %s8, 8192, %s83, [#allocation10], 512, 512, 32
    $region37: #{model_forward.1} parent=1 // pred_fallthru
      _
    // Predicated region
    $region38: #{model_forward.1} parent=1 // pred_check
      _
    $region39: #{model_forward.1} parent=1 // pred_check_branch
      %90 = sbr.rel (0) target = $region41
    $region40: #{model_forward.1} parent=1 // pred_region
      %s92 = ssub.s32 64, 64
      %93 = vsyncadd [#allocation10], %s92
      %s95 = sshll.u32 [#allocation11], 4
      %s96 = int_to_ptr.vmem [resolvable:$true] %s95
      %98 = dma.hbm_to_vmem [thread:$0]  %s9, 64, %s96, [#allocation10]
    $region41: #{model_forward.1} parent=1 // pred_fallthru
      _
    // Predicated region
    $region42: #{model_forward.1} parent=1 // pred_check
      _
    $region43: #{model_forward.1} parent=1 // pred_check_branch
      %100 = sbr.rel (0) target = $region45
    $region44: #{model_forward.1} parent=1 // pred_region
      _
    $region45: #{model_forward.1} parent=1 // pred_fallthru
      _
    // Predicated region
    $region46: #{model_forward.1} parent=1 // pred_check
      _
    $region47: #{model_forward.1} parent=1 // pred_check_branch
      %102 = sbr.rel (0) target = $region49
    $region48: #{model_forward.1} parent=1 // pred_region
      _
    $region49: #{model_forward.1} parent=1 // pred_fallthru
      _
    // Predicated region
    $region50: #{model_forward.1} parent=1 // pred_check
      _
    $region51: #{model_forward.1} parent=1 // pred_check_branch
      %104 = sbr.rel (0) target = $region53
    $region52: #{model_forward.1} parent=1 // pred_region
      %s106 = ssub.s32 2048, 2048
      %107 = vsyncadd [#allocation13], %s106
      %s108 = sshll.u32 [#allocation12], 4
      %s109 = int_to_ptr.vmem [resolvable:$true] %s108
      %114 = dma.hbm_to_vmem [thread:$0]  %s12, 2048, %s109, [#allocation13], 128, 128, 8
    $region53: #{model_forward.1} parent=1 // pred_fallthru
      _
    // Predicated region
    $region54: #{model_forward.1} parent=1 // pred_check
      _
    $region55: #{model_forward.1} parent=1 // pred_check_branch
      %116 = sbr.rel (0) target = $region57
    $region56: #{model_forward.1} parent=1 // pred_region
      _
    $region57: #{model_forward.1} parent=1 // pred_fallthru
      _
    // Predicated region
    $region58: #{model_forward.1} parent=1 // pred_check
      _
    $region59: #{model_forward.1} parent=1 // pred_check_branch
      %118 = sbr.rel (0) target = $region61
    $region60: #{model_forward.1} parent=1 // pred_region
      %119 = dma.done [#allocation4], 16384
    $region61: #{model_forward.1} parent=1 // pred_fallthru
      _
    // Predicated region
    $region62: #{model_forward.1} parent=1 // pred_check
      _
    $region63: #{model_forward.1} parent=1 // pred_check_branch
      %121 = sbr.rel (0) target = $region65
    $region64: #{model_forward.1} parent=1 // pred_region
      %122 = dma.done [#allocation7], 32768
    $region65: #{model_forward.1} parent=1 // pred_fallthru
      _
    // Predicated region
    $region66: #{model_forward.1} parent=1 // pred_check
      _
    $region67: #{model_forward.1} parent=1 // pred_check_branch
      %124 = sbr.rel (0) target = $region69
    $region68: #{model_forward.1} parent=1 // pred_region
      %125 = dma.done [#allocation7], 16384
    $region69: #{model_forward.1} parent=1 // pred_fallthru
      _
    // Predicated region
    $region70: #{model_forward.1} parent=1 // pred_check
      _
    $region71: #{model_forward.1} parent=1 // pred_check_branch
      %127 = sbr.rel (0) target = $region73
    $region72: #{model_forward.1} parent=1 // pred_region
      %128 = dma.done [#allocation10], 8192
    $region73: #{model_forward.1} parent=1 // pred_fallthru
      _
    // Predicated region
    $region74: #{model_forward.1} parent=1 // pred_check
      _
    $region75: #{model_forward.1} parent=1 // pred_check_branch
      %130 = sbr.rel (0) target = $region77
    $region76: #{model_forward.1} parent=1 // pred_region
      %131 = dma.done [#allocation10], 64
    $region77: #{model_forward.1} parent=1 // pred_fallthru
      _
    // Predicated region
    $region78: #{model_forward.1} parent=1 // pred_check
      _
    $region79: #{model_forward.1} parent=1 // pred_check_branch
      %133 = sbr.rel (0) target = $region81
    $region80: #{model_forward.1} parent=1 // pred_region
      %134 = dma.done [#allocation13], 2048
    $region81: #{model_forward.1} parent=1 // pred_fallthru
      _
    %v135 = vld [vmem:[%s0] sm:$0xff]
    %v136 = vld [vmem:[%s0 + $0x8] sm:$0xff]
    %v137 = vld [vmem:[%s0 + $0x10] sm:$0xff]
    %v138 = vld [vmem:[%s0 + $0x18] sm:$0xff]
    %v139 = vld [vmem:[%s0 + $0x20] sm:$0xff]
    %v140 = vld [vmem:[%s0 + $0x28] sm:$0xff]
    %v141 = vld [vmem:[%s0 + $0x30] sm:$0xff]
    %v142 = vld [vmem:[%s0 + $0x38] sm:$0xff]
    %v143 = vlaneseq
    %v144 = vand.u32 %v143, 127
    %145 = vset.pattern.permute.xlu0 0
    %146 = vperm.xlu0 %145, %v135
    %v147 = vpop.permute.xlu0 %146
    %148 = vset.pattern.permute.xlu0 0
    %149 = vperm.xlu0 %148, %v136
    %v150 = vpop.permute.xlu0 %149
    %151 = vset.pattern.permute.xlu0 0
    %152 = vperm.xlu0 %151, %v137
    %v153 = vpop.permute.xlu0 %152
    %154 = vset.pattern.permute.xlu0 0
    %155 = vperm.xlu0 %154, %v138
    %v156 = vpop.permute.xlu0 %155
    %157 = vset.pattern.permute.xlu0 0
    %158 = vperm.xlu0 %157, %v139
    %v159 = vpop.permute.xlu0 %158
    %160 = vset.pattern.permute.xlu0 0
    %161 = vperm.xlu0 %160, %v140
    %v162 = vpop.permute.xlu0 %161
    %163 = vset.pattern.permute.xlu0 0
    %164 = vperm.xlu0 %163, %v141
    %v165 = vpop.permute.xlu0 %164
    %166 = vset.pattern.permute.xlu0 0
    %167 = vperm.xlu0 %166, %v142
    %v168 = vpop.permute.xlu0 %167
    %vm169 = vcmp.eq.s32.totalorder %v147, %v144
    %vm170 = vcmp.eq.s32.totalorder %v150, %v144
    %vm171 = vcmp.eq.s32.totalorder %v153, %v144
    %vm172 = vcmp.eq.s32.totalorder %v156, %v144
    %vm173 = vcmp.eq.s32.totalorder %v159, %v144
    %vm174 = vcmp.eq.s32.totalorder %v162, %v144
    %vm175 = vcmp.eq.s32.totalorder %v165, %v144
    %vm176 = vcmp.eq.s32.totalorder %v168, %v144
    %v177 = vsel %vm169, 1, 0
    %v178 = vsel %vm170, 1, 0
    %v179 = vsel %vm171, 1, 0
    %v180 = vsel %vm172, 1, 0
    %v181 = vsel %vm173, 1, 0
    %v182 = vsel %vm174, 1, 0
    %v183 = vsel %vm175, 1, 0
    %v184 = vsel %vm176, 1, 0
    %v185 = vcvt.s32.f32 %v177
    %v186 = vcvt.s32.f32 %v178
    %v187 = vcvt.s32.f32 %v179
    %v188 = vcvt.s32.f32 %v180
    %v189 = vcvt.s32.f32 %v181
    %v190 = vcvt.s32.f32 %v182
    %v191 = vcvt.s32.f32 %v183
    %v192 = vcvt.s32.f32 %v184
    %v193 = vld [vmem:[%s1] sm:$0xff]
    %v194 = vld [vmem:[%s1 + $0x8] sm:$0xff]
    %v195 = vld [vmem:[%s1 + $0x10] sm:$0xff]
    %v196 = vld [vmem:[%s1 + $0x18] sm:$0xff]
    %vm197 = vcmask 261120
    %v199 = vsel %vm197, %v185, 0
    %v202 = vsel %vm197, %v186, 0
    %v205 = vsel %vm197, %v187, 0
    %v208 = vsel %vm197, %v188, 0
    %v211 = vsel %vm197, %v189, 0
    %v214 = vsel %vm197, %v190, 0
    %v217 = vsel %vm197, %v191, 0
    %v220 = vsel %vm197, %v192, 0
    %222 = vmatprep.subr.mxu0 0.0
    %223 = vmatpush1.msra.mxu0 %v193
    %224 = vmatprep.subr.mxu0 0.0
    %225 = vmatpush1.msra.mxu0 %v194
    %226 = vmatprep.subr.mxu0 0.0
    %227 = vmatpush1.msra.mxu0 %v195
    %228 = vmatprep.subr.mxu0 0.0
    %229 = vmatpush1.msra.mxu0 %v196
    %230 = vmatprep.subr.mxu0 0.0
    %231 = vmatpush1.msra.mxu0 0.0
    %232 = vmatprep.subr.mxu0 0.0
    %233 = vmatpush1.msra.mxu0 0.0
    %234 = vmatprep.subr.mxu0 0.0
    %235 = vmatpush1.msra.mxu0 0.0
    %236 = vmatprep.subr.mxu0 0.0
    %237 = vmatpush1.msra.mxu0 0.0
    %238 = vmatprep.subr.mxu0 0.0
    %239 = vmatpush1.msra.mxu0 0.0
    %240 = vmatprep.subr.mxu0 0.0
    %241 = vmatpush1.msra.mxu0 0.0
    %242 = vmatprep.subr.mxu0 0.0
    %243 = vmatpush1.msra.mxu0 0.0
    %244 = vmatprep.subr.mxu0 0.0
    %245 = vmatpush1.msra.mxu0 0.0
    %246 = vmatprep.subr.mxu0 0.0
    %247 = vmatpush1.msra.mxu0 0.0
    %248 = vmatprep.subr.mxu0 0.0
    %249 = vmatpush1.msra.mxu0 0.0
    %250 = vmatprep.subr.mxu0 0.0
    %251 = vmatpush1.msra.mxu0 0.0
    %252 = vmatprep.subr.mxu0 0.0
    %253 = vmatpush1.msra.mxu0 0.0
    %254 = vmatprep.subr.mxu0 0.0
    %255 = vmatpush1.msra.mxu0 0.0
    %256 = vmatprep.subr.mxu0 0.0
    %257 = vmatpush1.msra.mxu0 0.0
    %258 = vmatprep.subr.mxu0 0.0
    %259 = vmatpush1.msra.mxu0 0.0
    %260 = vmatprep.subr.mxu0 0.0
    %261 = vmatpush1.msra.mxu0 0.0
    %262 = vmatprep.subr.mxu0 0.0
    %263 = vmatpush1.msra.mxu0 0.0
    %264 = vmatprep.subr.mxu0 0.0
    %265 = vmatpush1.msra.mxu0 0.0
    %266 = vmatprep.subr.mxu0 0.0
    %267 = vmatpush1.msra.mxu0 0.0
    %268 = vmatprep.subr.mxu0 0.0
    %269 = vmatpush1.msra.mxu0 0.0
    %270 = vmatprep.subr.mxu0 0.0
    %271 = vmatpush1.msra.mxu0 0.0
    %272 = vmatprep.subr.mxu0 0.0
    %273 = vmatpush1.msra.mxu0 0.0
    %274 = vmatprep.subr.mxu0 0.0
    %275 = vmatpush1.msra.mxu0 0.0
    %276 = vmatprep.subr.mxu0 0.0
    %277 = vmatpush1.msra.mxu0 0.0
    %278 = vmatprep.subr.mxu0 0.0
    %279 = vmatpush1.msra.mxu0 0.0
    %280 = vmatprep.subr.mxu0 0.0
    %281 = vmatpush1.msra.mxu0 0.0
    %282 = vmatprep.subr.mxu0 0.0
    %283 = vmatpush1.msra.mxu0 0.0
    %284 = vmatprep.subr.mxu0 0.0
    %285 = vmatpush1.msra.mxu0 0.0
    %286 = vmatprep.mubr.f32.mxu0 0.0
    %287 = vmatmul.mubr.f32.gmra.mrb[0].mxu0 %v199
    %v288 = vpop.f32.mrb[0].mxu0
    %v289 = vadd.f32 0.0, %v288
    %v290 = vpop.f32.mrb[0].mxu0
    %291 = vmatprep.mubr.f32.mxu0 0.0
    %292 = vmatmul.mubr.f32.gmra.mrb[0].mxu0 %v202
    %v293 = vpop.f32.mrb[0].mxu0
    %v294 = vadd.f32 0.0, %v293
    %v295 = vpop.f32.mrb[0].mxu0
    %296 = vmatprep.mubr.f32.mxu0 0.0
    %297 = vmatmul.mubr.f32.gmra.mrb[0].mxu0 %v205
    %v298 = vpop.f32.mrb[0].mxu0
    %v299 = vadd.f32 0.0, %v298
    %v300 = vpop.f32.mrb[0].mxu0
    %301 = vmatprep.mubr.f32.mxu0 0.0
    %302 = vmatmul.mubr.f32.gmra.mrb[0].mxu0 %v208
    %v303 = vpop.f32.mrb[0].mxu0
    %v304 = vadd.f32 0.0, %v303
    %v305 = vpop.f32.mrb[0].mxu0
    %306 = vmatprep.mubr.f32.mxu0 0.0
    %307 = vmatmul.mubr.f32.gmra.mrb[0].mxu0 %v211
    %v308 = vpop.f32.mrb[0].mxu0
    %v309 = vadd.f32 0.0, %v308
    %v310 = vpop.f32.mrb[0].mxu0
    %311 = vmatprep.mubr.f32.mxu0 0.0
    %312 = vmatmul.mubr.f32.gmra.mrb[0].mxu0 %v214
    %v313 = vpop.f32.mrb[0].mxu0
    %v314 = vadd.f32 0.0, %v313
    %v315 = vpop.f32.mrb[0].mxu0
    %316 = vmatprep.mubr.f32.mxu0 0.0
    %317 = vmatmul.mubr.f32.gmra.mrb[0].mxu0 %v217
    %v318 = vpop.f32.mrb[0].mxu0
    %v319 = vadd.f32 0.0, %v318
    %v320 = vpop.f32.mrb[0].mxu0
    %321 = vmatprep.mubr.f32.mxu0 0.0
    %322 = vmatmul.mubr.f32.gmra.mrb[0].mxu0 %v220
    %v323 = vpop.f32.mrb[0].mxu0
    %v324 = vadd.f32 0.0, %v323
    %v325 = vpop.f32.mrb[0].mxu0
    %326 = vdwg.mxu0
    %v327 = vld [vmem:[#allocation3] sm:$0xff]
    %v328 = vld [vmem:[#allocation3 + $0x8] sm:$0xff]
    %v329 = vld [vmem:[#allocation3 + $0x10] sm:$0xff]
    %v330 = vld [vmem:[#allocation3 + $0x18] sm:$0xff]
    %v331 = vld [vmem:[#allocation3 + $0x20] sm:$0xff]
    %v332 = vld [vmem:[#allocation3 + $0x28] sm:$0xff]
    %v333 = vld [vmem:[#allocation3 + $0x30] sm:$0xff]
    %v334 = vld [vmem:[#allocation3 + $0x38] sm:$0xff]
    %v335 = vld [vmem:[#allocation3 + $0x40] sm:$0xff]
    %v336 = vld [vmem:[#allocation3 + $0x48] sm:$0xff]
    %v337 = vld [vmem:[#allocation3 + $0x50] sm:$0xff]
    %v338 = vld [vmem:[#allocation3 + $0x58] sm:$0xff]
    %v339 = vld [vmem:[#allocation3 + $0x60] sm:$0xff]
    %v340 = vld [vmem:[#allocation3 + $0x68] sm:$0xff]
    %v341 = vld [vmem:[#allocation3 + $0x70] sm:$0xff]
    %v342 = vld [vmem:[#allocation3 + $0x78] sm:$0xff]
    %v343 = vld [vmem:[#allocation3 + $0x80] sm:$0xff]
    %v344 = vld [vmem:[#allocation3 + $0x88] sm:$0xff]
    %v345 = vld [vmem:[#allocation3 + $0x90] sm:$0xff]
    %v346 = vld [vmem:[#allocation3 + $0x98] sm:$0xff]
    %v347 = vld [vmem:[#allocation3 + $0xa0] sm:$0xff]
    %v348 = vld [vmem:[#allocation3 + $0xa8] sm:$0xff]
    %v349 = vld [vmem:[#allocation3 + $0xb0] sm:$0xff]
    %v350 = vld [vmem:[#allocation3 + $0xb8] sm:$0xff]
    %v351 = vld [vmem:[#allocation3 + $0xc0] sm:$0xff]
    %v352 = vld [vmem:[#allocation3 + $0xc8] sm:$0xff]
    %v353 = vld [vmem:[#allocation3 + $0xd0] sm:$0xff]
    %v354 = vld [vmem:[#allocation3 + $0xd8] sm:$0xff]
    %v355 = vld [vmem:[#allocation3 + $0xe0] sm:$0xff]
    %v356 = vld [vmem:[#allocation3 + $0xe8] sm:$0xff]
    %v357 = vld [vmem:[#allocation3 + $0xf0] sm:$0xff]
    %v358 = vld [vmem:[#allocation3 + $0xf8] sm:$0xff]
    %v359 = vld [vmem:[#allocation3 + $0x100] sm:$0xff]
    %v360 = vld [vmem:[#allocation3 + $0x108] sm:$0xff]
    %v361 = vld [vmem:[#allocation3 + $0x110] sm:$0xff]
    %v362 = vld [vmem:[#allocation3 + $0x118] sm:$0xff]
    %v363 = vld [vmem:[#allocation3 + $0x120] sm:$0xff]
    %v364 = vld [vmem:[#allocation3 + $0x128] sm:$0xff]
    %v365 = vld [vmem:[#allocation3 + $0x130] sm:$0xff]
    %v366 = vld [vmem:[#allocation3 + $0x138] sm:$0xff]
    %v367 = vld [vmem:[#allocation3 + $0x140] sm:$0xff]
    %v368 = vld [vmem:[#allocation3 + $0x148] sm:$0xff]
    %v369 = vld [vmem:[#allocation3 + $0x150] sm:$0xff]
    %v370 = vld [vmem:[#allocation3 + $0x158] sm:$0xff]
    %v371 = vld [vmem:[#allocation3 + $0x160] sm:$0xff]
    %v372 = vld [vmem:[#allocation3 + $0x168] sm:$0xff]
    %v373 = vld [vmem:[#allocation3 + $0x170] sm:$0xff]
    %v374 = vld [vmem:[#allocation3 + $0x178] sm:$0xff]
    %v375 = vld [vmem:[#allocation3 + $0x180] sm:$0xff]
    %v376 = vld [vmem:[#allocation3 + $0x188] sm:$0xff]
    %v377 = vld [vmem:[#allocation3 + $0x190] sm:$0xff]
    %v378 = vld [vmem:[#allocation3 + $0x198] sm:$0xff]
    %v379 = vld [vmem:[#allocation3 + $0x1a0] sm:$0xff]
    %v380 = vld [vmem:[#allocation3 + $0x1a8] sm:$0xff]
    %v381 = vld [vmem:[#allocation3 + $0x1b0] sm:$0xff]
    %v382 = vld [vmem:[#allocation3 + $0x1b8] sm:$0xff]
    %v383 = vld [vmem:[#allocation3 + $0x1c0] sm:$0xff]
    %v384 = vld [vmem:[#allocation3 + $0x1c8] sm:$0xff]
    %v385 = vld [vmem:[#allocation3 + $0x1d0] sm:$0xff]
    %v386 = vld [vmem:[#allocation3 + $0x1d8] sm:$0xff]
    %v387 = vld [vmem:[#allocation3 + $0x1e0] sm:$0xff]
    %v388 = vld [vmem:[#allocation3 + $0x1e8] sm:$0xff]
    %v389 = vld [vmem:[#allocation3 + $0x1f0] sm:$0xff]
    %v390 = vld [vmem:[#allocation3 + $0x1f8] sm:$0xff]
    %v391 = vld [vmem:[#allocation3 + $0x200] sm:$0xff]
    %v392 = vld [vmem:[#allocation3 + $0x208] sm:$0xff]
    %v393 = vld [vmem:[#allocation3 + $0x210] sm:$0xff]
    %v394 = vld [vmem:[#allocation3 + $0x218] sm:$0xff]
    %v395 = vld [vmem:[#allocation3 + $0x220] sm:$0xff]
    %v396 = vld [vmem:[#allocation3 + $0x228] sm:$0xff]
    %v397 = vld [vmem:[#allocation3 + $0x230] sm:$0xff]
    %v398 = vld [vmem:[#allocation3 + $0x238] sm:$0xff]
    %v399 = vld [vmem:[#allocation3 + $0x240] sm:$0xff]
    %v400 = vld [vmem:[#allocation3 + $0x248] sm:$0xff]
    %v401 = vld [vmem:[#allocation3 + $0x250] sm:$0xff]
    %v402 = vld [vmem:[#allocation3 + $0x258] sm:$0xff]
    %v403 = vld [vmem:[#allocation3 + $0x260] sm:$0xff]
    %v404 = vld [vmem:[#allocation3 + $0x268] sm:$0xff]
    %v405 = vld [vmem:[#allocation3 + $0x270] sm:$0xff]
    %v406 = vld [vmem:[#allocation3 + $0x278] sm:$0xff]
    %v407 = vld [vmem:[#allocation3 + $0x280] sm:$0xff]
    %v408 = vld [vmem:[#allocation3 + $0x288] sm:$0xff]
    %v409 = vld [vmem:[#allocation3 + $0x290] sm:$0xff]
    %v410 = vld [vmem:[#allocation3 + $0x298] sm:$0xff]
    %v411 = vld [vmem:[#allocation3 + $0x2a0] sm:$0xff]
    %v412 = vld [vmem:[#allocation3 + $0x2a8] sm:$0xff]
    %v413 = vld [vmem:[#allocation3 + $0x2b0] sm:$0xff]
    %v414 = vld [vmem:[#allocation3 + $0x2b8] sm:$0xff]
    %v415 = vld [vmem:[#allocation3 + $0x2c0] sm:$0xff]
    %v416 = vld [vmem:[#allocation3 + $0x2c8] sm:$0xff]
    %v417 = vld [vmem:[#allocation3 + $0x2d0] sm:$0xff]
    %v418 = vld [vmem:[#allocation3 + $0x2d8] sm:$0xff]
    %v419 = vld [vmem:[#allocation3 + $0x2e0] sm:$0xff]
    %v420 = vld [vmem:[#allocation3 + $0x2e8] sm:$0xff]
    %v421 = vld [vmem:[#allocation3 + $0x2f0] sm:$0xff]
    %v422 = vld [vmem:[#allocation3 + $0x2f8] sm:$0xff]
    %v423 = vld [vmem:[#allocation3 + $0x300] sm:$0xff]
    %v424 = vld [vmem:[#allocation3 + $0x308] sm:$0xff]
    %v425 = vld [vmem:[#allocation3 + $0x310] sm:$0xff]
    %v426 = vld [vmem:[#allocation3 + $0x318] sm:$0xff]
    %v427 = vld [vmem:[#allocation3 + $0x320] sm:$0xff]
    %v428 = vld [vmem:[#allocation3 + $0x328] sm:$0xff]
    %v429 = vld [vmem:[#allocation3 + $0x330] sm:$0xff]
    %v430 = vld [vmem:[#allocation3 + $0x338] sm:$0xff]
    %v431 = vld [vmem:[#allocation3 + $0x340] sm:$0xff]
    %v432 = vld [vmem:[#allocation3 + $0x348] sm:$0xff]
    %v433 = vld [vmem:[#allocation3 + $0x350] sm:$0xff]
    %v434 = vld [vmem:[#allocation3 + $0x358] sm:$0xff]
    %v435 = vld [vmem:[#allocation3 + $0x360] sm:$0xff]
    %v436 = vld [vmem:[#allocation3 + $0x368] sm:$0xff]
    %v437 = vld [vmem:[#allocation3 + $0x370] sm:$0xff]
    %v438 = vld [vmem:[#allocation3 + $0x378] sm:$0xff]
    %v439 = vld [vmem:[#allocation3 + $0x380] sm:$0xff]
    %v440 = vld [vmem:[#allocation3 + $0x388] sm:$0xff]
    %v441 = vld [vmem:[#allocation3 + $0x390] sm:$0xff]
    %v442 = vld [vmem:[#allocation3 + $0x398] sm:$0xff]
    %v443 = vld [vmem:[#allocation3 + $0x3a0] sm:$0xff]
    %v444 = vld [vmem:[#allocation3 + $0x3a8] sm:$0xff]
    %v445 = vld [vmem:[#allocation3 + $0x3b0] sm:$0xff]
    %v446 = vld [vmem:[#allocation3 + $0x3b8] sm:$0xff]
    %v447 = vld [vmem:[#allocation3 + $0x3c0] sm:$0xff]
    %v448 = vld [vmem:[#allocation3 + $0x3c8] sm:$0xff]
    %v449 = vld [vmem:[#allocation3 + $0x3d0] sm:$0xff]
    %v450 = vld [vmem:[#allocation3 + $0x3d8] sm:$0xff]
    %v451 = vld [vmem:[#allocation3 + $0x3e0] sm:$0xff]
    %v452 = vld [vmem:[#allocation3 + $0x3e8] sm:$0xff]
    %v453 = vld [vmem:[#allocation3 + $0x3f0] sm:$0xff]
    %v454 = vld [vmem:[#allocation3 + $0x3f8] sm:$0xff]
    %v455 = vld [vmem:[%s4] sm:$0xff]
    %v457 = vlaneseq
    %v458 = vshrl.u32 %v457, 7
    %v459 = vsub.s32 0, %v458
    %v460 = vrot.slane %v455, %v459
    %v461 = vlaneseq
    %v462 = vshrl.u32 %v461, 7
    %v463 = vsub.s32 1, %v462
    %v464 = vrot.slane %v455, %v463
    %v465 = vlaneseq
    %v466 = vshrl.u32 %v465, 7
    %v467 = vsub.s32 2, %v466
    %v468 = vrot.slane %v455, %v467
    %v469 = vlaneseq
    %v470 = vshrl.u32 %v469, 7
    %v471 = vsub.s32 3, %v470
    %v472 = vrot.slane %v455, %v471
    %v473 = vlaneseq
    %v474 = vshrl.u32 %v473, 7
    %v475 = vsub.s32 4, %v474
    %v476 = vrot.slane %v455, %v475
    %v477 = vlaneseq
    %v478 = vshrl.u32 %v477, 7
    %v479 = vsub.s32 5, %v478
    %v480 = vrot.slane %v455, %v479
    %v481 = vlaneseq
    %v482 = vshrl.u32 %v481, 7
    %v483 = vsub.s32 6, %v482
    %v484 = vrot.slane %v455, %v483
    %v485 = vlaneseq
    %v486 = vshrl.u32 %v485, 7
    %v487 = vsub.s32 7, %v486
    %v488 = vrot.slane %v455, %v487
    %497 = vmatprep.subr.mxu0 %v328
    %498 = vmatpush1.msra.mxu0 %v327
    %499 = vmatprep.subr.mxu0 %v336
    %500 = vmatpush1.msra.mxu0 %v335
    %501 = vmatprep.subr.mxu0 %v344
    %502 = vmatpush1.msra.mxu0 %v343
    %503 = vmatprep.subr.mxu0 %v352
    %504 = vmatpush1.msra.mxu0 %v351
    %505 = vmatprep.subr.mxu0 %v360
    %506 = vmatpush1.msra.mxu0 %v359
    %507 = vmatprep.subr.mxu0 %v368
    %508 = vmatpush1.msra.mxu0 %v367
    %509 = vmatprep.subr.mxu0 %v376
    %510 = vmatpush1.msra.mxu0 %v375
    %511 = vmatprep.subr.mxu0 %v384
    %512 = vmatpush1.msra.mxu0 %v383
    %513 = vmatprep.subr.mxu0 %v392
    %514 = vmatpush1.msra.mxu0 %v391
    %515 = vmatprep.subr.mxu0 %v400
    %516 = vmatpush1.msra.mxu0 %v399
    %517 = vmatprep.subr.mxu0 %v408
    %518 = vmatpush1.msra.mxu0 %v407
    %519 = vmatprep.subr.mxu0 %v416
    %520 = vmatpush1.msra.mxu0 %v415
    %521 = vmatprep.subr.mxu0 %v424
    %522 = vmatpush1.msra.mxu0 %v423
    %523 = vmatprep.subr.mxu0 %v432
    %524 = vmatpush1.msra.mxu0 %v431
    %525 = vmatprep.subr.mxu0 %v440
    %526 = vmatpush1.msra.mxu0 %v439
    %527 = vmatprep.subr.mxu0 %v448
    %528 = vmatpush1.msra.mxu0 %v447
    %529 = vmatprep.subr.mxu0 0.0
    %530 = vmatpush1.msra.mxu0 0.0
    %531 = vmatprep.subr.mxu0 0.0
    %532 = vmatpush1.msra.mxu0 0.0
    %533 = vmatprep.subr.mxu0 0.0
    %534 = vmatpush1.msra.mxu0 0.0
    %535 = vmatprep.subr.mxu0 0.0
    %536 = vmatpush1.msra.mxu0 0.0
    %537 = vmatprep.subr.mxu0 0.0
    %538 = vmatpush1.msra.mxu0 0.0
    %539 = vmatprep.subr.mxu0 0.0
    %540 = vmatpush1.msra.mxu0 0.0
    %541 = vmatprep.subr.mxu0 0.0
    %542 = vmatpush1.msra.mxu0 0.0
    %543 = vmatprep.subr.mxu0 0.0
    %544 = vmatpush1.msra.mxu0 0.0
    %545 = vmatprep.subr.mxu0 0.0
    %546 = vmatpush1.msra.mxu0 0.0
    %547 = vmatprep.subr.mxu0 0.0
    %548 = vmatpush1.msra.mxu0 0.0
    %549 = vmatprep.subr.mxu0 0.0
    %550 = vmatpush1.msra.mxu0 0.0
    %551 = vmatprep.subr.mxu0 0.0
    %552 = vmatpush1.msra.mxu0 0.0
    %553 = vmatprep.subr.mxu0 0.0
    %554 = vmatpush1.msra.mxu0 0.0
    %555 = vmatprep.subr.mxu0 0.0
    %556 = vmatpush1.msra.mxu0 0.0
    %557 = vmatprep.subr.mxu0 0.0
    %558 = vmatpush1.msra.mxu0 0.0
    %559 = vmatprep.subr.mxu0 0.0
    %560 = vmatpush1.msra.mxu0 0.0
    %561 = vmatprep.mubr.f32.mxu0 0.0
    %562 = vmatmul.mubr.f32.gmra.mrb[0].mxu0 %v289
    %v563 = vpop.f32.mrb[0].mxu0
    %v564 = vadd.f32 %v460, %v563
    %v565 = vpop.f32.mrb[0].mxu0
    %v566 = vadd.f32 %v464, %v565
    %567 = vmatprep.mubr.f32.mxu0 0.0
    %568 = vmatmul.mubr.f32.gmra.mrb[0].mxu0 %v294
    %v569 = vpop.f32.mrb[0].mxu0
    %v570 = vadd.f32 %v460, %v569
    %v571 = vpop.f32.mrb[0].mxu0
    %v572 = vadd.f32 %v464, %v571
    %573 = vmatprep.mubr.f32.mxu0 0.0
    %574 = vmatmul.mubr.f32.gmra.mrb[0].mxu0 %v299
    %v575 = vpop.f32.mrb[0].mxu0
    %v576 = vadd.f32 %v460, %v575
    %v577 = vpop.f32.mrb[0].mxu0
    %v578 = vadd.f32 %v464, %v577
    %579 = vmatprep.mubr.f32.mxu0 0.0
    %580 = vmatmul.mubr.f32.gmra.mrb[0].mxu0 %v304
    %v581 = vpop.f32.mrb[0].mxu0
    %v582 = vadd.f32 %v460, %v581
    %v583 = vpop.f32.mrb[0].mxu0
    %v584 = vadd.f32 %v464, %v583
    %585 = vmatprep.mubr.f32.mxu0 0.0
    %586 = vmatmul.mubr.f32.gmra.mrb[0].mxu0 %v309
    %v587 = vpop.f32.mrb[0].mxu0
    %v588 = vadd.f32 %v460, %v587
    %v589 = vpop.f32.mrb[0].mxu0
    %v590 = vadd.f32 %v464, %v589
    %591 = vmatprep.mubr.f32.mxu0 0.0
    %592 = vmatmul.mubr.f32.gmra.mrb[0].mxu0 %v314
    %v593 = vpop.f32.mrb[0].mxu0
    %v594 = vadd.f32 %v460, %v593
    %v595 = vpop.f32.mrb[0].mxu0
    %v596 = vadd.f32 %v464, %v595
    %597 = vmatprep.mubr.f32.mxu0 0.0
    %598 = vmatmul.mubr.f32.gmra.mrb[0].mxu0 %v319
    %v599 = vpop.f32.mrb[0].mxu0
    %v600 = vadd.f32 %v460, %v599
    %v601 = vpop.f32.mrb[0].mxu0
    %v602 = vadd.f32 %v464, %v601
    %603 = vmatprep.mubr.f32.mxu0 0.0
    %604 = vmatmul.mubr.f32.gmra.mrb[0].mxu0 %v324
    %v605 = vpop.f32.mrb[0].mxu0
    %v606 = vadd.f32 %v460, %v605
    %v607 = vpop.f32.mrb[0].mxu0
    %v608 = vadd.f32 %v464, %v607
    %609 = vdwg.mxu0
    %610 = vmatprep.subr.mxu0 %v330
    %611 = vmatpush1.msra.mxu0 %v329
    %612 = vmatprep.subr.mxu0 %v338
    %613 = vmatpush1.msra.mxu0 %v337
    %614 = vmatprep.subr.mxu0 %v346
    %615 = vmatpush1.msra.mxu0 %v345
    %616 = vmatprep.subr.mxu0 %v354
    %617 = vmatpush1.msra.mxu0 %v353
    %618 = vmatprep.subr.mxu0 %v362
    %619 = vmatpush1.msra.mxu0 %v361
    %620 = vmatprep.subr.mxu0 %v370
    %621 = vmatpush1.msra.mxu0 %v369
    %622 = vmatprep.subr.mxu0 %v378
    %623 = vmatpush1.msra.mxu0 %v377
    %624 = vmatprep.subr.mxu0 %v386
    %625 = vmatpush1.msra.mxu0 %v385
    %626 = vmatprep.subr.mxu0 %v394
    %627 = vmatpush1.msra.mxu0 %v393
    %628 = vmatprep.subr.mxu0 %v402
    %629 = vmatpush1.msra.mxu0 %v401
    %630 = vmatprep.subr.mxu0 %v410
    %631 = vmatpush1.msra.mxu0 %v409
    %632 = vmatprep.subr.mxu0 %v418
    %633 = vmatpush1.msra.mxu0 %v417
    %634 = vmatprep.subr.mxu0 %v426
    %635 = vmatpush1.msra.mxu0 %v425
    %636 = vmatprep.subr.mxu0 %v434
    %637 = vmatpush1.msra.mxu0 %v433
    %638 = vmatprep.subr.mxu0 %v442
    %639 = vmatpush1.msra.mxu0 %v441
    %640 = vmatprep.subr.mxu0 %v450
    %641 = vmatpush1.msra.mxu0 %v449
    %642 = vmatprep.subr.mxu0 0.0
    %643 = vmatpush1.msra.mxu0 0.0
    %644 = vmatprep.subr.mxu0 0.0
    %645 = vmatpush1.msra.mxu0 0.0
    %646 = vmatprep.subr.mxu0 0.0
    %647 = vmatpush1.msra.mxu0 0.0
    %648 = vmatprep.subr.mxu0 0.0
    %649 = vmatpush1.msra.mxu0 0.0
    %650 = vmatprep.subr.mxu0 0.0
    %651 = vmatpush1.msra.mxu0 0.0
    %652 = vmatprep.subr.mxu0 0.0
    %653 = vmatpush1.msra.mxu0 0.0
    %654 = vmatprep.subr.mxu0 0.0
    %655 = vmatpush1.msra.mxu0 0.0
    %656 = vmatprep.subr.mxu0 0.0
    %657 = vmatpush1.msra.mxu0 0.0
    %658 = vmatprep.subr.mxu0 0.0
    %659 = vmatpush1.msra.mxu0 0.0
    %660 = vmatprep.subr.mxu0 0.0
    %661 = vmatpush1.msra.mxu0 0.0
    %662 = vmatprep.subr.mxu0 0.0
    %663 = vmatpush1.msra.mxu0 0.0
    %664 = vmatprep.subr.mxu0 0.0
    %665 = vmatpush1.msra.mxu0 0.0
    %666 = vmatprep.subr.mxu0 0.0
    %667 = vmatpush1.msra.mxu0 0.0
    %668 = vmatprep.subr.mxu0 0.0
    %669 = vmatpush1.msra.mxu0 0.0
    %670 = vmatprep.subr.mxu0 0.0
    %671 = vmatpush1.msra.mxu0 0.0
    %672 = vmatprep.subr.mxu0 0.0
    %673 = vmatpush1.msra.mxu0 0.0
    %674 = vmatprep.mubr.f32.mxu0 0.0
    %675 = vmatmul.mubr.f32.gmra.mrb[0].mxu0 %v289
    %v676 = vpop.f32.mrb[0].mxu0
    %v677 = vadd.f32 %v468, %v676
    %v678 = vpop.f32.mrb[0].mxu0
    %v679 = vadd.f32 %v472, %v678
    %680 = vmatprep.mubr.f32.mxu0 0.0
    %681 = vmatmul.mubr.f32.gmra.mrb[0].mxu0 %v294
    %v682 = vpop.f32.mrb[0].mxu0
    %v683 = vadd.f32 %v468, %v682
    %v684 = vpop.f32.mrb[0].mxu0
    %v685 = vadd.f32 %v472, %v684
    %686 = vmatprep.mubr.f32.mxu0 0.0
    %687 = vmatmul.mubr.f32.gmra.mrb[0].mxu0 %v299
    %v688 = vpop.f32.mrb[0].mxu0
    %v689 = vadd.f32 %v468, %v688
    %v690 = vpop.f32.mrb[0].mxu0
    %v691 = vadd.f32 %v472, %v690
    %692 = vmatprep.mubr.f32.mxu0 0.0
    %693 = vmatmul.mubr.f32.gmra.mrb[0].mxu0 %v304
    %v694 = vpop.f32.mrb[0].mxu0
    %v695 = vadd.f32 %v468, %v694
    %v696 = vpop.f32.mrb[0].mxu0
    %v697 = vadd.f32 %v472, %v696
    %698 = vmatprep.mubr.f32.mxu0 0.0
    %699 = vmatmul.mubr.f32.gmra.mrb[0].mxu0 %v309
    %v700 = vpop.f32.mrb[0].mxu0
    %v701 = vadd.f32 %v468, %v700
    %v702 = vpop.f32.mrb[0].mxu0
    %v703 = vadd.f32 %v472, %v702
    %704 = vmatprep.mubr.f32.mxu0 0.0
    %705 = vmatmul.mubr.f32.gmra.mrb[0].mxu0 %v314
    %v706 = vpop.f32.mrb[0].mxu0
    %v707 = vadd.f32 %v468, %v706
    %v708 = vpop.f32.mrb[0].mxu0
    %v709 = vadd.f32 %v472, %v708
    %710 = vmatprep.mubr.f32.mxu0 0.0
    %711 = vmatmul.mubr.f32.gmra.mrb[0].mxu0 %v319
    %v712 = vpop.f32.mrb[0].mxu0
    %v713 = vadd.f32 %v468, %v712
    %v714 = vpop.f32.mrb[0].mxu0
    %v715 = vadd.f32 %v472, %v714
    %716 = vmatprep.mubr.f32.mxu0 0.0
    %717 = vmatmul.mubr.f32.gmra.mrb[0].mxu0 %v324
    %v718 = vpop.f32.mrb[0].mxu0
    %v719 = vadd.f32 %v468, %v718
    %v720 = vpop.f32.mrb[0].mxu0
    %v721 = vadd.f32 %v472, %v720
    %722 = vdwg.mxu0
    %723 = vmatprep.subr.mxu0 %v332
    %724 = vmatpush1.msra.mxu0 %v331
    %725 = vmatprep.subr.mxu0 %v340
    %726 = vmatpush1.msra.mxu0 %v339
    %727 = vmatprep.subr.mxu0 %v348
    %728 = vmatpush1.msra.mxu0 %v347
    %729 = vmatprep.subr.mxu0 %v356
    %730 = vmatpush1.msra.mxu0 %v355
    %731 = vmatprep.subr.mxu0 %v364
    %732 = vmatpush1.msra.mxu0 %v363
    %733 = vmatprep.subr.mxu0 %v372
    %734 = vmatpush1.msra.mxu0 %v371
    %735 = vmatprep.subr.mxu0 %v380
    %736 = vmatpush1.msra.mxu0 %v379
    %737 = vmatprep.subr.mxu0 %v388
    %738 = vmatpush1.msra.mxu0 %v387
    %739 = vmatprep.subr.mxu0 %v396
    %740 = vmatpush1.msra.mxu0 %v395
    %741 = vmatprep.subr.mxu0 %v404
    %742 = vmatpush1.msra.mxu0 %v403
    %743 = vmatprep.subr.mxu0 %v412
    %744 = vmatpush1.msra.mxu0 %v411
    %745 = vmatprep.subr.mxu0 %v420
    %746 = vmatpush1.msra.mxu0 %v419
    %747 = vmatprep.subr.mxu0 %v428
    %748 = vmatpush1.msra.mxu0 %v427
    %749 = vmatprep.subr.mxu0 %v436
    %750 = vmatpush1.msra.mxu0 %v435
    %751 = vmatprep.subr.mxu0 %v444
    %752 = vmatpush1.msra.mxu0 %v443
    %753 = vmatprep.subr.mxu0 %v452
    %754 = vmatpush1.msra.mxu0 %v451
    %755 = vmatprep.subr.mxu0 0.0
    %756 = vmatpush1.msra.mxu0 0.0
    %757 = vmatprep.subr.mxu0 0.0
    %758 = vmatpush1.msra.mxu0 0.0
    %759 = vmatprep.subr.mxu0 0.0
    %760 = vmatpush1.msra.mxu0 0.0
    %761 = vmatprep.subr.mxu0 0.0
    %762 = vmatpush1.msra.mxu0 0.0
    %763 = vmatprep.subr.mxu0 0.0
    %764 = vmatpush1.msra.mxu0 0.0
    %765 = vmatprep.subr.mxu0 0.0
    %766 = vmatpush1.msra.mxu0 0.0
    %767 = vmatprep.subr.mxu0 0.0
    %768 = vmatpush1.msra.mxu0 0.0
    %769 = vmatprep.subr.mxu0 0.0
    %770 = vmatpush1.msra.mxu0 0.0
    %771 = vmatprep.subr.mxu0 0.0
    %772 = vmatpush1.msra.mxu0 0.0
    %773 = vmatprep.subr.mxu0 0.0
    %774 = vmatpush1.msra.mxu0 0.0
    %775 = vmatprep.subr.mxu0 0.0
    %776 = vmatpush1.msra.mxu0 0.0
    %777 = vmatprep.subr.mxu0 0.0
    %778 = vmatpush1.msra.mxu0 0.0
    %779 = vmatprep.subr.mxu0 0.0
    %780 = vmatpush1.msra.mxu0 0.0
    %781 = vmatprep.subr.mxu0 0.0
    %782 = vmatpush1.msra.mxu0 0.0
    %783 = vmatprep.subr.mxu0 0.0
    %784 = vmatpush1.msra.mxu0 0.0
    %785 = vmatprep.subr.mxu0 0.0
    %786 = vmatpush1.msra.mxu0 0.0
    %787 = vmatprep.mubr.f32.mxu0 0.0
    %788 = vmatmul.mubr.f32.gmra.mrb[0].mxu0 %v289
    %v789 = vpop.f32.mrb[0].mxu0
    %v790 = vadd.f32 %v476, %v789
    %v791 = vpop.f32.mrb[0].mxu0
    %v792 = vadd.f32 %v480, %v791
    %793 = vmatprep.mubr.f32.mxu0 0.0
    %794 = vmatmul.mubr.f32.gmra.mrb[0].mxu0 %v294
    %v795 = vpop.f32.mrb[0].mxu0
    %v796 = vadd.f32 %v476, %v795
    %v797 = vpop.f32.mrb[0].mxu0
    %v798 = vadd.f32 %v480, %v797
    %799 = vmatprep.mubr.f32.mxu0 0.0
    %800 = vmatmul.mubr.f32.gmra.mrb[0].mxu0 %v299
    %v801 = vpop.f32.mrb[0].mxu0
    %v802 = vadd.f32 %v476, %v801
    %v803 = vpop.f32.mrb[0].mxu0
    %v804 = vadd.f32 %v480, %v803
    %805 = vmatprep.mubr.f32.mxu0 0.0
    %806 = vmatmul.mubr.f32.gmra.mrb[0].mxu0 %v304
    %v807 = vpop.f32.mrb[0].mxu0
    %v808 = vadd.f32 %v476, %v807
    %v809 = vpop.f32.mrb[0].mxu0
    %v810 = vadd.f32 %v480, %v809
    %811 = vmatprep.mubr.f32.mxu0 0.0
    %812 = vmatmul.mubr.f32.gmra.mrb[0].mxu0 %v309
    %v813 = vpop.f32.mrb[0].mxu0
    %v814 = vadd.f32 %v476, %v813
    %v815 = vpop.f32.mrb[0].mxu0
    %v816 = vadd.f32 %v480, %v815
    %817 = vmatprep.mubr.f32.mxu0 0.0
    %818 = vmatmul.mubr.f32.gmra.mrb[0].mxu0 %v314
    %v819 = vpop.f32.mrb[0].mxu0
    %v820 = vadd.f32 %v476, %v819
    %v821 = vpop.f32.mrb[0].mxu0
    %v822 = vadd.f32 %v480, %v821
    %823 = vmatprep.mubr.f32.mxu0 0.0
    %824 = vmatmul.mubr.f32.gmra.mrb[0].mxu0 %v319
    %v825 = vpop.f32.mrb[0].mxu0
    %v826 = vadd.f32 %v476, %v825
    %v827 = vpop.f32.mrb[0].mxu0
    %v828 = vadd.f32 %v480, %v827
    %829 = vmatprep.mubr.f32.mxu0 0.0
    %830 = vmatmul.mubr.f32.gmra.mrb[0].mxu0 %v324
    %v831 = vpop.f32.mrb[0].mxu0
    %v832 = vadd.f32 %v476, %v831
    %v833 = vpop.f32.mrb[0].mxu0
    %v834 = vadd.f32 %v480, %v833
    %835 = vdwg.mxu0
    %836 = vmatprep.subr.mxu0 %v334
    %837 = vmatpush1.msra.mxu0 %v333
    %838 = vmatprep.subr.mxu0 %v342
    %839 = vmatpush1.msra.mxu0 %v341
    %840 = vmatprep.subr.mxu0 %v350
    %841 = vmatpush1.msra.mxu0 %v349
    %842 = vmatprep.subr.mxu0 %v358
    %843 = vmatpush1.msra.mxu0 %v357
    %844 = vmatprep.subr.mxu0 %v366
    %845 = vmatpush1.msra.mxu0 %v365
    %846 = vmatprep.subr.mxu0 %v374
    %847 = vmatpush1.msra.mxu0 %v373
    %848 = vmatprep.subr.mxu0 %v382
    %849 = vmatpush1.msra.mxu0 %v381
    %850 = vmatprep.subr.mxu0 %v390
    %851 = vmatpush1.msra.mxu0 %v389
    %852 = vmatprep.subr.mxu0 %v398
    %853 = vmatpush1.msra.mxu0 %v397
    %854 = vmatprep.subr.mxu0 %v406
    %855 = vmatpush1.msra.mxu0 %v405
    %856 = vmatprep.subr.mxu0 %v414
    %857 = vmatpush1.msra.mxu0 %v413
    %858 = vmatprep.subr.mxu0 %v422
    %859 = vmatpush1.msra.mxu0 %v421
    %860 = vmatprep.subr.mxu0 %v430
    %861 = vmatpush1.msra.mxu0 %v429
    %862 = vmatprep.subr.mxu0 %v438
    %863 = vmatpush1.msra.mxu0 %v437
    %864 = vmatprep.subr.mxu0 %v446
    %865 = vmatpush1.msra.mxu0 %v445
    %866 = vmatprep.subr.mxu0 %v454
    %867 = vmatpush1.msra.mxu0 %v453
    %868 = vmatprep.subr.mxu0 0.0
    %869 = vmatpush1.msra.mxu0 0.0
    %870 = vmatprep.subr.mxu0 0.0
    %871 = vmatpush1.msra.mxu0 0.0
    %872 = vmatprep.subr.mxu0 0.0
    %873 = vmatpush1.msra.mxu0 0.0
    %874 = vmatprep.subr.mxu0 0.0
    %875 = vmatpush1.msra.mxu0 0.0
    %876 = vmatprep.subr.mxu0 0.0
    %877 = vmatpush1.msra.mxu0 0.0
    %878 = vmatprep.subr.mxu0 0.0
    %879 = vmatpush1.msra.mxu0 0.0
    %880 = vmatprep.subr.mxu0 0.0
    %881 = vmatpush1.msra.mxu0 0.0
    %882 = vmatprep.subr.mxu0 0.0
    %883 = vmatpush1.msra.mxu0 0.0
    %884 = vmatprep.subr.mxu0 0.0
    %885 = vmatpush1.msra.mxu0 0.0
    %886 = vmatprep.subr.mxu0 0.0
    %887 = vmatpush1.msra.mxu0 0.0
    %888 = vmatprep.subr.mxu0 0.0
    %889 = vmatpush1.msra.mxu0 0.0
    %890 = vmatprep.subr.mxu0 0.0
    %891 = vmatpush1.msra.mxu0 0.0
    %892 = vmatprep.subr.mxu0 0.0
    %893 = vmatpush1.msra.mxu0 0.0
    %894 = vmatprep.subr.mxu0 0.0
    %895 = vmatpush1.msra.mxu0 0.0
    %896 = vmatprep.subr.mxu0 0.0
    %897 = vmatpush1.msra.mxu0 0.0
    %898 = vmatprep.subr.mxu0 0.0
    %899 = vmatpush1.msra.mxu0 0.0
    %900 = vmatprep.mubr.f32.mxu0 0.0
    %901 = vmatmul.mubr.f32.gmra.mrb[0].mxu0 %v289
    %v902 = vpop.f32.mrb[0].mxu0
    %v903 = vadd.f32 %v484, %v902
    %v904 = vpop.f32.mrb[0].mxu0
    %v905 = vadd.f32 %v488, %v904
    %906 = vmatprep.mubr.f32.mxu0 0.0
    %907 = vmatmul.mubr.f32.gmra.mrb[0].mxu0 %v294
    %v908 = vpop.f32.mrb[0].mxu0
    %v909 = vadd.f32 %v484, %v908
    %v910 = vpop.f32.mrb[0].mxu0
    %v911 = vadd.f32 %v488, %v910
    %912 = vmatprep.mubr.f32.mxu0 0.0
    %913 = vmatmul.mubr.f32.gmra.mrb[0].mxu0 %v299
    %v914 = vpop.f32.mrb[0].mxu0
    %v915 = vadd.f32 %v484, %v914
    %v916 = vpop.f32.mrb[0].mxu0
    %v917 = vadd.f32 %v488, %v916
    %918 = vmatprep.mubr.f32.mxu0 0.0
    %919 = vmatmul.mubr.f32.gmra.mrb[0].mxu0 %v304
    %v920 = vpop.f32.mrb[0].mxu0
    %v921 = vadd.f32 %v484, %v920
    %v922 = vpop.f32.mrb[0].mxu0
    %v923 = vadd.f32 %v488, %v922
    %924 = vmatprep.mubr.f32.mxu0 0.0
    %925 = vmatmul.mubr.f32.gmra.mrb[0].mxu0 %v309
    %v926 = vpop.f32.mrb[0].mxu0
    %v927 = vadd.f32 %v484, %v926
    %v928 = vpop.f32.mrb[0].mxu0
    %v929 = vadd.f32 %v488, %v928
    %930 = vmatprep.mubr.f32.mxu0 0.0
    %931 = vmatmul.mubr.f32.gmra.mrb[0].mxu0 %v314
    %v932 = vpop.f32.mrb[0].mxu0
    %v933 = vadd.f32 %v484, %v932
    %v934 = vpop.f32.mrb[0].mxu0
    %v935 = vadd.f32 %v488, %v934
    %936 = vmatprep.mubr.f32.mxu0 0.0
    %937 = vmatmul.mubr.f32.gmra.mrb[0].mxu0 %v319
    %v938 = vpop.f32.mrb[0].mxu0
    %v939 = vadd.f32 %v484, %v938
    %v940 = vpop.f32.mrb[0].mxu0
    %v941 = vadd.f32 %v488, %v940
    %942 = vmatprep.mubr.f32.mxu0 0.0
    %943 = vmatmul.mubr.f32.gmra.mrb[0].mxu0 %v324
    %v944 = vpop.f32.mrb[0].mxu0
    %v945 = vadd.f32 %v484, %v944
    %v946 = vpop.f32.mrb[0].mxu0
    %v947 = vadd.f32 %v488, %v946
    %948 = vdwg.mxu0
    %949 = vst [vmem:[#allocation2] sm:$0xff] %v564
    %950 = vst [vmem:[#allocation2 + $0x8] sm:$0xff] %v566
    %951 = vst [vmem:[#allocation2 + $0x10] sm:$0xff] %v677
    %952 = vst [vmem:[#allocation2 + $0x18] sm:$0xff] %v679
    %953 = vst [vmem:[#allocation2 + $0x20] sm:$0xff] %v790
    %954 = vst [vmem:[#allocation2 + $0x28] sm:$0xff] %v792
    %955 = vst [vmem:[#allocation2 + $0x30] sm:$0xff] %v903
    %956 = vst [vmem:[#allocation2 + $0x38] sm:$0xff] %v905
    %957 = vst [vmem:[#allocation2 + $0x40] sm:$0xff] %v570
    %958 = vst [vmem:[#allocation2 + $0x48] sm:$0xff] %v572
    %959 = vst [vmem:[#allocation2 + $0x50] sm:$0xff] %v683
    %960 = vst [vmem:[#allocation2 + $0x58] sm:$0xff] %v685
    %961 = vst [vmem:[#allocation2 + $0x60] sm:$0xff] %v796
    %962 = vst [vmem:[#allocation2 + $0x68] sm:$0xff] %v798
    %963 = vst [vmem:[#allocation2 + $0x70] sm:$0xff] %v909
    %964 = vst [vmem:[#allocation2 + $0x78] sm:$0xff] %v911
    %965 = vst [vmem:[#allocation2 + $0x80] sm:$0xff] %v576
    %966 = vst [vmem:[#allocation2 + $0x88] sm:$0xff] %v578
    %967 = vst [vmem:[#allocation2 + $0x90] sm:$0xff] %v689
    %968 = vst [vmem:[#allocation2 + $0x98] sm:$0xff] %v691
    %969 = vst [vmem:[#allocation2 + $0xa0] sm:$0xff] %v802
    %970 = vst [vmem:[#allocation2 + $0xa8] sm:$0xff] %v804
    %971 = vst [vmem:[#allocation2 + $0xb0] sm:$0xff] %v915
    %972 = vst [vmem:[#allocation2 + $0xb8] sm:$0xff] %v917
    %973 = vst [vmem:[#allocation2 + $0xc0] sm:$0xff] %v582
    %974 = vst [vmem:[#allocation2 + $0xc8] sm:$0xff] %v584
    %975 = vst [vmem:[#allocation2 + $0xd0] sm:$0xff] %v695
    %976 = vst [vmem:[#allocation2 + $0xd8] sm:$0xff] %v697
    %977 = vst [vmem:[#allocation2 + $0xe0] sm:$0xff] %v808
    %978 = vst [vmem:[#allocation2 + $0xe8] sm:$0xff] %v810
    %979 = vst [vmem:[#allocation2 + $0xf0] sm:$0xff] %v921
    %980 = vst [vmem:[#allocation2 + $0xf8] sm:$0xff] %v923
    %981 = vst [vmem:[#allocation2 + $0x100] sm:$0xff] %v588
    %982 = vst [vmem:[#allocation2 + $0x108] sm:$0xff] %v590
    %983 = vst [vmem:[#allocation2 + $0x110] sm:$0xff] %v701
    %984 = vst [vmem:[#allocation2 + $0x118] sm:$0xff] %v703
    %985 = vst [vmem:[#allocation2 + $0x120] sm:$0xff] %v814
    %986 = vst [vmem:[#allocation2 + $0x128] sm:$0xff] %v816
    %987 = vst [vmem:[#allocation2 + $0x130] sm:$0xff] %v927
    %988 = vst [vmem:[#allocation2 + $0x138] sm:$0xff] %v929
    %989 = vst [vmem:[#allocation2 + $0x140] sm:$0xff] %v594
    %990 = vst [vmem:[#allocation2 + $0x148] sm:$0xff] %v596
    %991 = vst [vmem:[#allocation2 + $0x150] sm:$0xff] %v707
    %992 = vst [vmem:[#allocation2 + $0x158] sm:$0xff] %v709
    %993 = vst [vmem:[#allocation2 + $0x160] sm:$0xff] %v820
    %994 = vst [vmem:[#allocation2 + $0x168] sm:$0xff] %v822
    %995 = vst [vmem:[#allocation2 + $0x170] sm:$0xff] %v933
    %996 = vst [vmem:[#allocation2 + $0x178] sm:$0xff] %v935
    %997 = vst [vmem:[#allocation2 + $0x180] sm:$0xff] %v600
    %998 = vst [vmem:[#allocation2 + $0x188] sm:$0xff] %v602
    %999 = vst [vmem:[#allocation2 + $0x190] sm:$0xff] %v713
    %1000 = vst [vmem:[#allocation2 + $0x198] sm:$0xff] %v715
    %1001 = vst [vmem:[#allocation2 + $0x1a0] sm:$0xff] %v826
    %1002 = vst [vmem:[#allocation2 + $0x1a8] sm:$0xff] %v828
    %1003 = vst [vmem:[#allocation2 + $0x1b0] sm:$0xff] %v939
    %1004 = vst [vmem:[#allocation2 + $0x1b8] sm:$0xff] %v941
    %1005 = vst [vmem:[#allocation2 + $0x1c0] sm:$0xff] %v606
    %1006 = vst [vmem:[#allocation2 + $0x1c8] sm:$0xff] %v608
    %1007 = vst [vmem:[#allocation2 + $0x1d0] sm:$0xff] %v719
    %1008 = vst [vmem:[#allocation2 + $0x1d8] sm:$0xff] %v721
    %1009 = vst [vmem:[#allocation2 + $0x1e0] sm:$0xff] %v832
    %1010 = vst [vmem:[#allocation2 + $0x1e8] sm:$0xff] %v834
    %1011 = vst [vmem:[#allocation2 + $0x1f0] sm:$0xff] %v945
    %1012 = vst [vmem:[#allocation2 + $0x1f8] sm:$0xff] %v947
    %v1013 = vld [vmem:[#allocation6] sm:$0xff]
    %v1014 = vld [vmem:[#allocation6 + $0x8] sm:$0xff]
    %v1015 = vld [vmem:[#allocation6 + $0x10] sm:$0xff]
    %v1016 = vld [vmem:[#allocation6 + $0x18] sm:$0xff]
    %v1017 = vld [vmem:[#allocation6 + $0x20] sm:$0xff]
    %v1018 = vld [vmem:[#allocation6 + $0x28] sm:$0xff]
    %v1019 = vld [vmem:[#allocation6 + $0x30] sm:$0xff]
    %v1020 = vld [vmem:[#allocation6 + $0x38] sm:$0xff]
    %v1021 = vld [vmem:[#allocation6 + $0x40] sm:$0xff]
    %v1022 = vld [vmem:[#allocation6 + $0x48] sm:$0xff]
    %v1023 = vld [vmem:[#allocation6 + $0x50] sm:$0xff]
    %v1024 = vld [vmem:[#allocation6 + $0x58] sm:$0xff]
    %v1025 = vld [vmem:[#allocation6 + $0x60] sm:$0xff]
    %v1026 = vld [vmem:[#allocation6 + $0x68] sm:$0xff]
    %v1027 = vld [vmem:[#allocation6 + $0x70] sm:$0xff]
    %v1028 = vld [vmem:[#allocation6 + $0x78] sm:$0xff]
    %v1029 = vld [vmem:[#allocation6 + $0x80] sm:$0xff]
    %v1030 = vld [vmem:[#allocation6 + $0x88] sm:$0xff]
    %v1031 = vld [vmem:[#allocation6 + $0x90] sm:$0xff]
    %v1032 = vld [vmem:[#allocation6 + $0x98] sm:$0xff]
    %v1033 = vld [vmem:[#allocation6 + $0xa0] sm:$0xff]
    %v1034 = vld [vmem:[#allocation6 + $0xa8] sm:$0xff]
    %v1035 = vld [vmem:[#allocation6 + $0xb0] sm:$0xff]
    %v1036 = vld [vmem:[#allocation6 + $0xb8] sm:$0xff]
    %v1037 = vld [vmem:[#allocation6 + $0xc0] sm:$0xff]
    %v1038 = vld [vmem:[#allocation6 + $0xc8] sm:$0xff]
    %v1039 = vld [vmem:[#allocation6 + $0xd0] sm:$0xff]
    %v1040 = vld [vmem:[#allocation6 + $0xd8] sm:$0xff]
    %v1041 = vld [vmem:[#allocation6 + $0xe0] sm:$0xff]
    %v1042 = vld [vmem:[#allocation6 + $0xe8] sm:$0xff]
    %v1043 = vld [vmem:[#allocation6 + $0xf0] sm:$0xff]
    %v1044 = vld [vmem:[#allocation6 + $0xf8] sm:$0xff]
    %v1045 = vld [vmem:[#allocation6 + $0x100] sm:$0xff]
    %v1046 = vld [vmem:[#allocation6 + $0x108] sm:$0xff]
    %v1047 = vld [vmem:[#allocation6 + $0x110] sm:$0xff]
    %v1048 = vld [vmem:[#allocation6 + $0x118] sm:$0xff]
    %v1049 = vld [vmem:[#allocation6 + $0x120] sm:$0xff]
    %v1050 = vld [vmem:[#allocation6 + $0x128] sm:$0xff]
    %v1051 = vld [vmem:[#allocation6 + $0x130] sm:$0xff]
    %v1052 = vld [vmem:[#allocation6 + $0x138] sm:$0xff]
    %v1053 = vld [vmem:[#allocation6 + $0x140] sm:$0xff]
    %v1054 = vld [vmem:[#allocation6 + $0x148] sm:$0xff]
    %v1055 = vld [vmem:[#allocation6 + $0x150] sm:$0xff]
    %v1056 = vld [vmem:[#allocation6 + $0x158] sm:$0xff]
    %v1057 = vld [vmem:[#allocation6 + $0x160] sm:$0xff]
    %v1058 = vld [vmem:[#allocation6 + $0x168] sm:$0xff]
    %v1059 = vld [vmem:[#allocation6 + $0x170] sm:$0xff]
    %v1060 = vld [vmem:[#allocation6 + $0x178] sm:$0xff]
    %v1061 = vld [vmem:[#allocation6 + $0x180] sm:$0xff]
    %v1062 = vld [vmem:[#allocation6 + $0x188] sm:$0xff]
    %v1063 = vld [vmem:[#allocation6 + $0x190] sm:$0xff]
    %v1064 = vld [vmem:[#allocation6 + $0x198] sm:$0xff]
    %v1065 = vld [vmem:[#allocation6 + $0x1a0] sm:$0xff]
    %v1066 = vld [vmem:[#allocation6 + $0x1a8] sm:$0xff]
    %v1067 = vld [vmem:[#allocation6 + $0x1b0] sm:$0xff]
    %v1068 = vld [vmem:[#allocation6 + $0x1b8] sm:$0xff]
    %v1069 = vld [vmem:[#allocation6 + $0x1c0] sm:$0xff]
    %v1070 = vld [vmem:[#allocation6 + $0x1c8] sm:$0xff]
    %v1071 = vld [vmem:[#allocation6 + $0x1d0] sm:$0xff]
    %v1072 = vld [vmem:[#allocation6 + $0x1d8] sm:$0xff]
    %v1073 = vld [vmem:[#allocation6 + $0x1e0] sm:$0xff]
    %v1074 = vld [vmem:[#allocation6 + $0x1e8] sm:$0xff]
    %v1075 = vld [vmem:[#allocation6 + $0x1f0] sm:$0xff]
    %v1076 = vld [vmem:[#allocation6 + $0x1f8] sm:$0xff]
    %v1077 = vld [vmem:[#allocation6 + $0x200] sm:$0xff]
    %v1078 = vld [vmem:[#allocation6 + $0x208] sm:$0xff]
    %v1079 = vld [vmem:[#allocation6 + $0x210] sm:$0xff]
    %v1080 = vld [vmem:[#allocation6 + $0x218] sm:$0xff]
    %v1081 = vld [vmem:[#allocation6 + $0x220] sm:$0xff]
    %v1082 = vld [vmem:[#allocation6 + $0x228] sm:$0xff]
    %v1083 = vld [vmem:[#allocation6 + $0x230] sm:$0xff]
    %v1084 = vld [vmem:[#allocation6 + $0x238] sm:$0xff]
    %v1085 = vld [vmem:[#allocation6 + $0x240] sm:$0xff]
    %v1086 = vld [vmem:[#allocation6 + $0x248] sm:$0xff]
    %v1087 = vld [vmem:[#allocation6 + $0x250] sm:$0xff]
    %v1088 = vld [vmem:[#allocation6 + $0x258] sm:$0xff]
    %v1089 = vld [vmem:[#allocation6 + $0x260] sm:$0xff]
    %v1090 = vld [vmem:[#allocation6 + $0x268] sm:$0xff]
    %v1091 = vld [vmem:[#allocation6 + $0x270] sm:$0xff]
    %v1092 = vld [vmem:[#allocation6 + $0x278] sm:$0xff]
    %v1093 = vld [vmem:[#allocation6 + $0x280] sm:$0xff]
    %v1094 = vld [vmem:[#allocation6 + $0x288] sm:$0xff]
    %v1095 = vld [vmem:[#allocation6 + $0x290] sm:$0xff]
    %v1096 = vld [vmem:[#allocation6 + $0x298] sm:$0xff]
    %v1097 = vld [vmem:[#allocation6 + $0x2a0] sm:$0xff]
    %v1098 = vld [vmem:[#allocation6 + $0x2a8] sm:$0xff]
    %v1099 = vld [vmem:[#allocation6 + $0x2b0] sm:$0xff]
    %v1100 = vld [vmem:[#allocation6 + $0x2b8] sm:$0xff]
    %v1101 = vld [vmem:[#allocation6 + $0x2c0] sm:$0xff]
    %v1102 = vld [vmem:[#allocation6 + $0x2c8] sm:$0xff]
    %v1103 = vld [vmem:[#allocation6 + $0x2d0] sm:$0xff]
    %v1104 = vld [vmem:[#allocation6 + $0x2d8] sm:$0xff]
    %v1105 = vld [vmem:[#allocation6 + $0x2e0] sm:$0xff]
    %v1106 = vld [vmem:[#allocation6 + $0x2e8] sm:$0xff]
    %v1107 = vld [vmem:[#allocation6 + $0x2f0] sm:$0xff]
    %v1108 = vld [vmem:[#allocation6 + $0x2f8] sm:$0xff]
    %v1109 = vld [vmem:[#allocation6 + $0x300] sm:$0xff]
    %v1110 = vld [vmem:[#allocation6 + $0x308] sm:$0xff]
    %v1111 = vld [vmem:[#allocation6 + $0x310] sm:$0xff]
    %v1112 = vld [vmem:[#allocation6 + $0x318] sm:$0xff]
    %v1113 = vld [vmem:[#allocation6 + $0x320] sm:$0xff]
    %v1114 = vld [vmem:[#allocation6 + $0x328] sm:$0xff]
    %v1115 = vld [vmem:[#allocation6 + $0x330] sm:$0xff]
    %v1116 = vld [vmem:[#allocation6 + $0x338] sm:$0xff]
    %v1117 = vld [vmem:[#allocation6 + $0x340] sm:$0xff]
    %v1118 = vld [vmem:[#allocation6 + $0x348] sm:$0xff]
    %v1119 = vld [vmem:[#allocation6 + $0x350] sm:$0xff]
    %v1120 = vld [vmem:[#allocation6 + $0x358] sm:$0xff]
    %v1121 = vld [vmem:[#allocation6 + $0x360] sm:$0xff]
    %v1122 = vld [vmem:[#allocation6 + $0x368] sm:$0xff]
    %v1123 = vld [vmem:[#allocation6 + $0x370] sm:$0xff]
    %v1124 = vld [vmem:[#allocation6 + $0x378] sm:$0xff]
    %v1125 = vld [vmem:[#allocation6 + $0x380] sm:$0xff]
    %v1126 = vld [vmem:[#allocation6 + $0x388] sm:$0xff]
    %v1127 = vld [vmem:[#allocation6 + $0x390] sm:$0xff]
    %v1128 = vld [vmem:[#allocation6 + $0x398] sm:$0xff]
    %v1129 = vld [vmem:[#allocation6 + $0x3a0] sm:$0xff]
    %v1130 = vld [vmem:[#allocation6 + $0x3a8] sm:$0xff]
    %v1131 = vld [vmem:[#allocation6 + $0x3b0] sm:$0xff]
    %v1132 = vld [vmem:[#allocation6 + $0x3b8] sm:$0xff]
    %v1133 = vld [vmem:[#allocation6 + $0x3c0] sm:$0xff]
    %v1134 = vld [vmem:[#allocation6 + $0x3c8] sm:$0xff]
    %v1135 = vld [vmem:[#allocation6 + $0x3d0] sm:$0xff]
    %v1136 = vld [vmem:[#allocation6 + $0x3d8] sm:$0xff]
    %v1137 = vld [vmem:[#allocation6 + $0x3e0] sm:$0xff]
    %v1138 = vld [vmem:[#allocation6 + $0x3e8] sm:$0xff]
    %v1139 = vld [vmem:[#allocation6 + $0x3f0] sm:$0xff]
    %v1140 = vld [vmem:[#allocation6 + $0x3f8] sm:$0xff]
    %v1141 = vld [vmem:[#allocation6 + $0x400] sm:$0xff]
    %v1142 = vld [vmem:[#allocation6 + $0x408] sm:$0xff]
    %v1143 = vld [vmem:[#allocation6 + $0x410] sm:$0xff]
    %v1144 = vld [vmem:[#allocation6 + $0x418] sm:$0xff]
    %v1145 = vld [vmem:[#allocation6 + $0x420] sm:$0xff]
    %v1146 = vld [vmem:[#allocation6 + $0x428] sm:$0xff]
    %v1147 = vld [vmem:[#allocation6 + $0x430] sm:$0xff]
    %v1148 = vld [vmem:[#allocation6 + $0x438] sm:$0xff]
    %v1149 = vld [vmem:[#allocation6 + $0x440] sm:$0xff]
    %v1150 = vld [vmem:[#allocation6 + $0x448] sm:$0xff]
    %v1151 = vld [vmem:[#allocation6 + $0x450] sm:$0xff]
    %v1152 = vld [vmem:[#allocation6 + $0x458] sm:$0xff]
    %v1153 = vld [vmem:[#allocation6 + $0x460] sm:$0xff]
    %v1154 = vld [vmem:[#allocation6 + $0x468] sm:$0xff]
    %v1155 = vld [vmem:[#allocation6 + $0x470] sm:$0xff]
    %v1156 = vld [vmem:[#allocation6 + $0x478] sm:$0xff]
    %v1157 = vld [vmem:[#allocation6 + $0x480] sm:$0xff]
    %v1158 = vld [vmem:[#allocation6 + $0x488] sm:$0xff]
    %v1159 = vld [vmem:[#allocation6 + $0x490] sm:$0xff]
    %v1160 = vld [vmem:[#allocation6 + $0x498] sm:$0xff]
    %v1161 = vld [vmem:[#allocation6 + $0x4a0] sm:$0xff]
    %v1162 = vld [vmem:[#allocation6 + $0x4a8] sm:$0xff]
    %v1163 = vld [vmem:[#allocation6 + $0x4b0] sm:$0xff]
    %v1164 = vld [vmem:[#allocation6 + $0x4b8] sm:$0xff]
    %v1165 = vld [vmem:[#allocation6 + $0x4c0] sm:$0xff]
    %v1166 = vld [vmem:[#allocation6 + $0x4c8] sm:$0xff]
    %v1167 = vld [vmem:[#allocation6 + $0x4d0] sm:$0xff]
    %v1168 = vld [vmem:[#allocation6 + $0x4d8] sm:$0xff]
    %v1169 = vld [vmem:[#allocation6 + $0x4e0] sm:$0xff]
    %v1170 = vld [vmem:[#allocation6 + $0x4e8] sm:$0xff]
    %v1171 = vld [vmem:[#allocation6 + $0x4f0] sm:$0xff]
    %v1172 = vld [vmem:[#allocation6 + $0x4f8] sm:$0xff]
    %v1173 = vld [vmem:[#allocation6 + $0x500] sm:$0xff]
    %v1174 = vld [vmem:[#allocation6 + $0x508] sm:$0xff]
    %v1175 = vld [vmem:[#allocation6 + $0x510] sm:$0xff]
    %v1176 = vld [vmem:[#allocation6 + $0x518] sm:$0xff]
    %v1177 = vld [vmem:[#allocation6 + $0x520] sm:$0xff]
    %v1178 = vld [vmem:[#allocation6 + $0x528] sm:$0xff]
    %v1179 = vld [vmem:[#allocation6 + $0x530] sm:$0xff]
    %v1180 = vld [vmem:[#allocation6 + $0x538] sm:$0xff]
    %v1181 = vld [vmem:[#allocation6 + $0x540] sm:$0xff]
    %v1182 = vld [vmem:[#allocation6 + $0x548] sm:$0xff]
    %v1183 = vld [vmem:[#allocation6 + $0x550] sm:$0xff]
    %v1184 = vld [vmem:[#allocation6 + $0x558] sm:$0xff]
    %v1185 = vld [vmem:[#allocation6 + $0x560] sm:$0xff]
    %v1186 = vld [vmem:[#allocation6 + $0x568] sm:$0xff]
    %v1187 = vld [vmem:[#allocation6 + $0x570] sm:$0xff]
    %v1188 = vld [vmem:[#allocation6 + $0x578] sm:$0xff]
    %v1189 = vld [vmem:[#allocation6 + $0x580] sm:$0xff]
    %v1190 = vld [vmem:[#allocation6 + $0x588] sm:$0xff]
    %v1191 = vld [vmem:[#allocation6 + $0x590] sm:$0xff]
    %v1192 = vld [vmem:[#allocation6 + $0x598] sm:$0xff]
    %v1193 = vld [vmem:[#allocation6 + $0x5a0] sm:$0xff]
    %v1194 = vld [vmem:[#allocation6 + $0x5a8] sm:$0xff]
    %v1195 = vld [vmem:[#allocation6 + $0x5b0] sm:$0xff]
    %v1196 = vld [vmem:[#allocation6 + $0x5b8] sm:$0xff]
    %v1197 = vld [vmem:[#allocation6 + $0x5c0] sm:$0xff]
    %v1198 = vld [vmem:[#allocation6 + $0x5c8] sm:$0xff]
    %v1199 = vld [vmem:[#allocation6 + $0x5d0] sm:$0xff]
    %v1200 = vld [vmem:[#allocation6 + $0x5d8] sm:$0xff]
    %v1201 = vld [vmem:[#allocation6 + $0x5e0] sm:$0xff]
    %v1202 = vld [vmem:[#allocation6 + $0x5e8] sm:$0xff]
    %v1203 = vld [vmem:[#allocation6 + $0x5f0] sm:$0xff]
    %v1204 = vld [vmem:[#allocation6 + $0x5f8] sm:$0xff]
    %v1205 = vld [vmem:[#allocation6 + $0x600] sm:$0xff]
    %v1206 = vld [vmem:[#allocation6 + $0x608] sm:$0xff]
    %v1207 = vld [vmem:[#allocation6 + $0x610] sm:$0xff]
    %v1208 = vld [vmem:[#allocation6 + $0x618] sm:$0xff]
    %v1209 = vld [vmem:[#allocation6 + $0x620] sm:$0xff]
    %v1210 = vld [vmem:[#allocation6 + $0x628] sm:$0xff]
    %v1211 = vld [vmem:[#allocation6 + $0x630] sm:$0xff]
    %v1212 = vld [vmem:[#allocation6 + $0x638] sm:$0xff]
    %v1213 = vld [vmem:[#allocation6 + $0x640] sm:$0xff]
    %v1214 = vld [vmem:[#allocation6 + $0x648] sm:$0xff]
    %v1215 = vld [vmem:[#allocation6 + $0x650] sm:$0xff]
    %v1216 = vld [vmem:[#allocation6 + $0x658] sm:$0xff]
    %v1217 = vld [vmem:[#allocation6 + $0x660] sm:$0xff]
    %v1218 = vld [vmem:[#allocation6 + $0x668] sm:$0xff]
    %v1219 = vld [vmem:[#allocation6 + $0x670] sm:$0xff]
    %v1220 = vld [vmem:[#allocation6 + $0x678] sm:$0xff]
    %v1221 = vld [vmem:[#allocation6 + $0x680] sm:$0xff]
    %v1222 = vld [vmem:[#allocation6 + $0x688] sm:$0xff]
    %v1223 = vld [vmem:[#allocation6 + $0x690] sm:$0xff]
    %v1224 = vld [vmem:[#allocation6 + $0x698] sm:$0xff]
    %v1225 = vld [vmem:[#allocation6 + $0x6a0] sm:$0xff]
    %v1226 = vld [vmem:[#allocation6 + $0x6a8] sm:$0xff]
    %v1227 = vld [vmem:[#allocation6 + $0x6b0] sm:$0xff]
    %v1228 = vld [vmem:[#allocation6 + $0x6b8] sm:$0xff]
    %v1229 = vld [vmem:[#allocation6 + $0x6c0] sm:$0xff]
    %v1230 = vld [vmem:[#allocation6 + $0x6c8] sm:$0xff]
    %v1231 = vld [vmem:[#allocation6 + $0x6d0] sm:$0xff]
    %v1232 = vld [vmem:[#allocation6 + $0x6d8] sm:$0xff]
    %v1233 = vld [vmem:[#allocation6 + $0x6e0] sm:$0xff]
    %v1234 = vld [vmem:[#allocation6 + $0x6e8] sm:$0xff]
    %v1235 = vld [vmem:[#allocation6 + $0x6f0] sm:$0xff]
    %v1236 = vld [vmem:[#allocation6 + $0x6f8] sm:$0xff]
    %v1237 = vld [vmem:[#allocation6 + $0x700] sm:$0xff]
    %v1238 = vld [vmem:[#allocation6 + $0x708] sm:$0xff]
    %v1239 = vld [vmem:[#allocation6 + $0x710] sm:$0xff]
    %v1240 = vld [vmem:[#allocation6 + $0x718] sm:$0xff]
    %v1241 = vld [vmem:[#allocation6 + $0x720] sm:$0xff]
    %v1242 = vld [vmem:[#allocation6 + $0x728] sm:$0xff]
    %v1243 = vld [vmem:[#allocation6 + $0x730] sm:$0xff]
    %v1244 = vld [vmem:[#allocation6 + $0x738] sm:$0xff]
    %v1245 = vld [vmem:[#allocation6 + $0x740] sm:$0xff]
    %v1246 = vld [vmem:[#allocation6 + $0x748] sm:$0xff]
    %v1247 = vld [vmem:[#allocation6 + $0x750] sm:$0xff]
    %v1248 = vld [vmem:[#allocation6 + $0x758] sm:$0xff]
    %v1249 = vld [vmem:[#allocation6 + $0x760] sm:$0xff]
    %v1250 = vld [vmem:[#allocation6 + $0x768] sm:$0xff]
    %v1251 = vld [vmem:[#allocation6 + $0x770] sm:$0xff]
    %v1252 = vld [vmem:[#allocation6 + $0x778] sm:$0xff]
    %v1253 = vld [vmem:[#allocation6 + $0x780] sm:$0xff]
    %v1254 = vld [vmem:[#allocation6 + $0x788] sm:$0xff]
    %v1255 = vld [vmem:[#allocation6 + $0x790] sm:$0xff]
    %v1256 = vld [vmem:[#allocation6 + $0x798] sm:$0xff]
    %v1257 = vld [vmem:[#allocation6 + $0x7a0] sm:$0xff]
    %v1258 = vld [vmem:[#allocation6 + $0x7a8] sm:$0xff]
    %v1259 = vld [vmem:[#allocation6 + $0x7b0] sm:$0xff]
    %v1260 = vld [vmem:[#allocation6 + $0x7b8] sm:$0xff]
    %v1261 = vld [vmem:[#allocation6 + $0x7c0] sm:$0xff]
    %v1262 = vld [vmem:[#allocation6 + $0x7c8] sm:$0xff]
    %v1263 = vld [vmem:[#allocation6 + $0x7d0] sm:$0xff]
    %v1264 = vld [vmem:[#allocation6 + $0x7d8] sm:$0xff]
    %v1265 = vld [vmem:[#allocation6 + $0x7e0] sm:$0xff]
    %v1266 = vld [vmem:[#allocation6 + $0x7e8] sm:$0xff]
    %v1267 = vld [vmem:[#allocation6 + $0x7f0] sm:$0xff]
    %v1268 = vld [vmem:[#allocation6 + $0x7f8] sm:$0xff]
    %v1269 = vld [vmem:[#allocation9] sm:$0xff]
    %v1270 = vld [vmem:[#allocation9 + $0x8] sm:$0xff]
    %v1271 = vld [vmem:[#allocation9 + $0x10] sm:$0xff]
    %v1272 = vld [vmem:[#allocation9 + $0x18] sm:$0xff]
    %v1273 = vld [vmem:[#allocation9 + $0x20] sm:$0xff]
    %v1274 = vld [vmem:[#allocation9 + $0x28] sm:$0xff]
    %v1275 = vld [vmem:[#allocation9 + $0x30] sm:$0xff]
    %v1276 = vld [vmem:[#allocation9 + $0x38] sm:$0xff]
    %v1277 = vld [vmem:[#allocation9 + $0x40] sm:$0xff]
    %v1278 = vld [vmem:[#allocation9 + $0x48] sm:$0xff]
    %v1279 = vld [vmem:[#allocation9 + $0x50] sm:$0xff]
    %v1280 = vld [vmem:[#allocation9 + $0x58] sm:$0xff]
    %v1281 = vld [vmem:[#allocation9 + $0x60] sm:$0xff]
    %v1282 = vld [vmem:[#allocation9 + $0x68] sm:$0xff]
    %v1283 = vld [vmem:[#allocation9 + $0x70] sm:$0xff]
    %v1284 = vld [vmem:[#allocation9 + $0x78] sm:$0xff]
    %v1285 = vld [vmem:[#allocation9 + $0x80] sm:$0xff]
    %v1286 = vld [vmem:[#allocation9 + $0x88] sm:$0xff]
    %v1287 = vld [vmem:[#allocation9 + $0x90] sm:$0xff]
    %v1288 = vld [vmem:[#allocation9 + $0x98] sm:$0xff]
    %v1289 = vld [vmem:[#allocation9 + $0xa0] sm:$0xff]
    %v1290 = vld [vmem:[#allocation9 + $0xa8] sm:$0xff]
    %v1291 = vld [vmem:[#allocation9 + $0xb0] sm:$0xff]
    %v1292 = vld [vmem:[#allocation9 + $0xb8] sm:$0xff]
    %v1293 = vld [vmem:[#allocation9 + $0xc0] sm:$0xff]
    %v1294 = vld [vmem:[#allocation9 + $0xc8] sm:$0xff]
    %v1295 = vld [vmem:[#allocation9 + $0xd0] sm:$0xff]
    %v1296 = vld [vmem:[#allocation9 + $0xd8] sm:$0xff]
    %v1297 = vld [vmem:[#allocation9 + $0xe0] sm:$0xff]
    %v1298 = vld [vmem:[#allocation9 + $0xe8] sm:$0xff]
    %v1299 = vld [vmem:[#allocation9 + $0xf0] sm:$0xff]
    %v1300 = vld [vmem:[#allocation9 + $0xf8] sm:$0xff]
    %v1301 = vld [vmem:[#allocation9 + $0x100] sm:$0xff]
    %v1302 = vld [vmem:[#allocation9 + $0x108] sm:$0xff]
    %v1303 = vld [vmem:[#allocation9 + $0x110] sm:$0xff]
    %v1304 = vld [vmem:[#allocation9 + $0x118] sm:$0xff]
    %v1305 = vld [vmem:[#allocation9 + $0x120] sm:$0xff]
    %v1306 = vld [vmem:[#allocation9 + $0x128] sm:$0xff]
    %v1307 = vld [vmem:[#allocation9 + $0x130] sm:$0xff]
    %v1308 = vld [vmem:[#allocation9 + $0x138] sm:$0xff]
    %v1309 = vld [vmem:[#allocation9 + $0x140] sm:$0xff]
    %v1310 = vld [vmem:[#allocation9 + $0x148] sm:$0xff]
    %v1311 = vld [vmem:[#allocation9 + $0x150] sm:$0xff]
    %v1312 = vld [vmem:[#allocation9 + $0x158] sm:$0xff]
    %v1313 = vld [vmem:[#allocation9 + $0x160] sm:$0xff]
    %v1314 = vld [vmem:[#allocation9 + $0x168] sm:$0xff]
    %v1315 = vld [vmem:[#allocation9 + $0x170] sm:$0xff]
    %v1316 = vld [vmem:[#allocation9 + $0x178] sm:$0xff]
    %v1317 = vld [vmem:[#allocation9 + $0x180] sm:$0xff]
    %v1318 = vld [vmem:[#allocation9 + $0x188] sm:$0xff]
    %v1319 = vld [vmem:[#allocation9 + $0x190] sm:$0xff]
    %v1320 = vld [vmem:[#allocation9 + $0x198] sm:$0xff]
    %v1321 = vld [vmem:[#allocation9 + $0x1a0] sm:$0xff]
    %v1322 = vld [vmem:[#allocation9 + $0x1a8] sm:$0xff]
    %v1323 = vld [vmem:[#allocation9 + $0x1b0] sm:$0xff]
    %v1324 = vld [vmem:[#allocation9 + $0x1b8] sm:$0xff]
    %v1325 = vld [vmem:[#allocation9 + $0x1c0] sm:$0xff]
    %v1326 = vld [vmem:[#allocation9 + $0x1c8] sm:$0xff]
    %v1327 = vld [vmem:[#allocation9 + $0x1d0] sm:$0xff]
    %v1328 = vld [vmem:[#allocation9 + $0x1d8] sm:$0xff]
    %v1329 = vld [vmem:[#allocation9 + $0x1e0] sm:$0xff]
    %v1330 = vld [vmem:[#allocation9 + $0x1e8] sm:$0xff]
    %v1331 = vld [vmem:[#allocation9 + $0x1f0] sm:$0xff]
    %v1332 = vld [vmem:[#allocation9 + $0x1f8] sm:$0xff]
    %v1333 = vld [vmem:[#allocation8] sm:$0xff]
    %v1334 = vld [vmem:[#allocation8 + $0x8] sm:$0xff]
    %v1335 = vld [vmem:[#allocation8 + $0x10] sm:$0xff]
    %v1336 = vld [vmem:[#allocation8 + $0x18] sm:$0xff]
    %v1337 = vld [vmem:[#allocation8 + $0x20] sm:$0xff]
    %v1338 = vld [vmem:[#allocation8 + $0x28] sm:$0xff]
    %v1339 = vld [vmem:[#allocation8 + $0x30] sm:$0xff]
    %v1340 = vld [vmem:[#allocation8 + $0x38] sm:$0xff]
    %v1341 = vld [vmem:[#allocation8 + $0x40] sm:$0xff]
    %v1342 = vld [vmem:[#allocation8 + $0x48] sm:$0xff]
    %v1343 = vld [vmem:[#allocation8 + $0x50] sm:$0xff]
    %v1344 = vld [vmem:[#allocation8 + $0x58] sm:$0xff]
    %v1345 = vld [vmem:[#allocation8 + $0x60] sm:$0xff]
    %v1346 = vld [vmem:[#allocation8 + $0x68] sm:$0xff]
    %v1347 = vld [vmem:[#allocation8 + $0x70] sm:$0xff]
    %v1348 = vld [vmem:[#allocation8 + $0x78] sm:$0xff]
    %v1349 = vld [vmem:[#allocation8 + $0x80] sm:$0xff]
    %v1350 = vld [vmem:[#allocation8 + $0x88] sm:$0xff]
    %v1351 = vld [vmem:[#allocation8 + $0x90] sm:$0xff]
    %v1352 = vld [vmem:[#allocation8 + $0x98] sm:$0xff]
    %v1353 = vld [vmem:[#allocation8 + $0xa0] sm:$0xff]
    %v1354 = vld [vmem:[#allocation8 + $0xa8] sm:$0xff]
    %v1355 = vld [vmem:[#allocation8 + $0xb0] sm:$0xff]
    %v1356 = vld [vmem:[#allocation8 + $0xb8] sm:$0xff]
    %v1357 = vld [vmem:[#allocation8 + $0xc0] sm:$0xff]
    %v1358 = vld [vmem:[#allocation8 + $0xc8] sm:$0xff]
    %v1359 = vld [vmem:[#allocation8 + $0xd0] sm:$0xff]
    %v1360 = vld [vmem:[#allocation8 + $0xd8] sm:$0xff]
    %v1361 = vld [vmem:[#allocation8 + $0xe0] sm:$0xff]
    %v1362 = vld [vmem:[#allocation8 + $0xe8] sm:$0xff]
    %v1363 = vld [vmem:[#allocation8 + $0xf0] sm:$0xff]
    %v1364 = vld [vmem:[#allocation8 + $0xf8] sm:$0xff]
    %v1365 = vld [vmem:[#allocation8 + $0x100] sm:$0xff]
    %v1366 = vld [vmem:[#allocation8 + $0x108] sm:$0xff]
    %v1367 = vld [vmem:[#allocation8 + $0x110] sm:$0xff]
    %v1368 = vld [vmem:[#allocation8 + $0x118] sm:$0xff]
    %v1369 = vld [vmem:[#allocation8 + $0x120] sm:$0xff]
    %v1370 = vld [vmem:[#allocation8 + $0x128] sm:$0xff]
    %v1371 = vld [vmem:[#allocation8 + $0x130] sm:$0xff]
    %v1372 = vld [vmem:[#allocation8 + $0x138] sm:$0xff]
    %v1373 = vld [vmem:[#allocation8 + $0x140] sm:$0xff]
    %v1374 = vld [vmem:[#allocation8 + $0x148] sm:$0xff]
    %v1375 = vld [vmem:[#allocation8 + $0x150] sm:$0xff]
    %v1376 = vld [vmem:[#allocation8 + $0x158] sm:$0xff]
    %v1377 = vld [vmem:[#allocation8 + $0x160] sm:$0xff]
    %v1378 = vld [vmem:[#allocation8 + $0x168] sm:$0xff]
    %v1379 = vld [vmem:[#allocation8 + $0x170] sm:$0xff]
    %v1380 = vld [vmem:[#allocation8 + $0x178] sm:$0xff]
    %v1381 = vld [vmem:[#allocation8 + $0x180] sm:$0xff]
    %v1382 = vld [vmem:[#allocation8 + $0x188] sm:$0xff]
    %v1383 = vld [vmem:[#allocation8 + $0x190] sm:$0xff]
    %v1384 = vld [vmem:[#allocation8 + $0x198] sm:$0xff]
    %v1385 = vld [vmem:[#allocation8 + $0x1a0] sm:$0xff]
    %v1386 = vld [vmem:[#allocation8 + $0x1a8] sm:$0xff]
    %v1387 = vld [vmem:[#allocation8 + $0x1b0] sm:$0xff]
    %v1388 = vld [vmem:[#allocation8 + $0x1b8] sm:$0xff]
    %v1389 = vld [vmem:[#allocation8 + $0x1c0] sm:$0xff]
    %v1390 = vld [vmem:[#allocation8 + $0x1c8] sm:$0xff]
    %v1391 = vld [vmem:[#allocation8 + $0x1d0] sm:$0xff]
    %v1392 = vld [vmem:[#allocation8 + $0x1d8] sm:$0xff]
    %v1393 = vld [vmem:[#allocation8 + $0x1e0] sm:$0xff]
    %v1394 = vld [vmem:[#allocation8 + $0x1e8] sm:$0xff]
    %v1395 = vld [vmem:[#allocation8 + $0x1f0] sm:$0xff]
    %v1396 = vld [vmem:[#allocation8 + $0x1f8] sm:$0xff]
    %v1397 = vld [vmem:[#allocation8 + $0x200] sm:$0xff]
    %v1398 = vld [vmem:[#allocation8 + $0x208] sm:$0xff]
    %v1399 = vld [vmem:[#allocation8 + $0x210] sm:$0xff]
    %v1400 = vld [vmem:[#allocation8 + $0x218] sm:$0xff]
    %v1401 = vld [vmem:[#allocation8 + $0x220] sm:$0xff]
    %v1402 = vld [vmem:[#allocation8 + $0x228] sm:$0xff]
    %v1403 = vld [vmem:[#allocation8 + $0x230] sm:$0xff]
    %v1404 = vld [vmem:[#allocation8 + $0x238] sm:$0xff]
    %v1405 = vld [vmem:[#allocation8 + $0x240] sm:$0xff]
    %v1406 = vld [vmem:[#allocation8 + $0x248] sm:$0xff]
    %v1407 = vld [vmem:[#allocation8 + $0x250] sm:$0xff]
    %v1408 = vld [vmem:[#allocation8 + $0x258] sm:$0xff]
    %v1409 = vld [vmem:[#allocation8 + $0x260] sm:$0xff]
    %v1410 = vld [vmem:[#allocation8 + $0x268] sm:$0xff]
    %v1411 = vld [vmem:[#allocation8 + $0x270] sm:$0xff]
    %v1412 = vld [vmem:[#allocation8 + $0x278] sm:$0xff]
    %v1413 = vld [vmem:[#allocation8 + $0x280] sm:$0xff]
    %v1414 = vld [vmem:[#allocation8 + $0x288] sm:$0xff]
    %v1415 = vld [vmem:[#allocation8 + $0x290] sm:$0xff]
    %v1416 = vld [vmem:[#allocation8 + $0x298] sm:$0xff]
    %v1417 = vld [vmem:[#allocation8 + $0x2a0] sm:$0xff]
    %v1418 = vld [vmem:[#allocation8 + $0x2a8] sm:$0xff]
    %v1419 = vld [vmem:[#allocation8 + $0x2b0] sm:$0xff]
    %v1420 = vld [vmem:[#allocation8 + $0x2b8] sm:$0xff]
    %v1421 = vld [vmem:[#allocation8 + $0x2c0] sm:$0xff]
    %v1422 = vld [vmem:[#allocation8 + $0x2c8] sm:$0xff]
    %v1423 = vld [vmem:[#allocation8 + $0x2d0] sm:$0xff]
    %v1424 = vld [vmem:[#allocation8 + $0x2d8] sm:$0xff]
    %v1425 = vld [vmem:[#allocation8 + $0x2e0] sm:$0xff]
    %v1426 = vld [vmem:[#allocation8 + $0x2e8] sm:$0xff]
    %v1427 = vld [vmem:[#allocation8 + $0x2f0] sm:$0xff]
    %v1428 = vld [vmem:[#allocation8 + $0x2f8] sm:$0xff]
    %v1429 = vld [vmem:[#allocation8 + $0x300] sm:$0xff]
    %v1430 = vld [vmem:[#allocation8 + $0x308] sm:$0xff]
    %v1431 = vld [vmem:[#allocation8 + $0x310] sm:$0xff]
    %v1432 = vld [vmem:[#allocation8 + $0x318] sm:$0xff]
    %v1433 = vld [vmem:[#allocation8 + $0x320] sm:$0xff]
    %v1434 = vld [vmem:[#allocation8 + $0x328] sm:$0xff]
    %v1435 = vld [vmem:[#allocation8 + $0x330] sm:$0xff]
    %v1436 = vld [vmem:[#allocation8 + $0x338] sm:$0xff]
    %v1437 = vld [vmem:[#allocation8 + $0x340] sm:$0xff]
    %v1438 = vld [vmem:[#allocation8 + $0x348] sm:$0xff]
    %v1439 = vld [vmem:[#allocation8 + $0x350] sm:$0xff]
    %v1440 = vld [vmem:[#allocation8 + $0x358] sm:$0xff]
    %v1441 = vld [vmem:[#allocation8 + $0x360] sm:$0xff]
    %v1442 = vld [vmem:[#allocation8 + $0x368] sm:$0xff]
    %v1443 = vld [vmem:[#allocation8 + $0x370] sm:$0xff]
    %v1444 = vld [vmem:[#allocation8 + $0x378] sm:$0xff]
    %v1445 = vld [vmem:[#allocation8 + $0x380] sm:$0xff]
    %v1446 = vld [vmem:[#allocation8 + $0x388] sm:$0xff]
    %v1447 = vld [vmem:[#allocation8 + $0x390] sm:$0xff]
    %v1448 = vld [vmem:[#allocation8 + $0x398] sm:$0xff]
    %v1449 = vld [vmem:[#allocation8 + $0x3a0] sm:$0xff]
    %v1450 = vld [vmem:[#allocation8 + $0x3a8] sm:$0xff]
    %v1451 = vld [vmem:[#allocation8 + $0x3b0] sm:$0xff]
    %v1452 = vld [vmem:[#allocation8 + $0x3b8] sm:$0xff]
    %v1453 = vld [vmem:[#allocation8 + $0x3c0] sm:$0xff]
    %v1454 = vld [vmem:[#allocation8 + $0x3c8] sm:$0xff]
    %v1455 = vld [vmem:[#allocation8 + $0x3d0] sm:$0xff]
    %v1456 = vld [vmem:[#allocation8 + $0x3d8] sm:$0xff]
    %v1457 = vld [vmem:[#allocation8 + $0x3e0] sm:$0xff]
    %v1458 = vld [vmem:[#allocation8 + $0x3e8] sm:$0xff]
    %v1459 = vld [vmem:[#allocation8 + $0x3f0] sm:$0xff]
    %v1460 = vld [vmem:[#allocation8 + $0x3f8] sm:$0xff]
    %v1461 = vld [vmem:[#allocation11] sm:$0xf]
    %v1462 = vld [vmem:[#allocation12] sm:$0xff]
    %v1463 = vld [vmem:[#allocation12 + $0x8] sm:$0xff]
    %v1464 = vld [vmem:[#allocation12 + $0x10] sm:$0xff]
    %v1465 = vld [vmem:[#allocation12 + $0x18] sm:$0xff]
    %v1466 = vld [vmem:[#allocation12 + $0x20] sm:$0xff]
    %v1467 = vld [vmem:[#allocation12 + $0x28] sm:$0xff]
    %v1468 = vld [vmem:[#allocation12 + $0x30] sm:$0xff]
    %v1469 = vld [vmem:[#allocation12 + $0x38] sm:$0xff]
    %v1470 = vld [vmem:[#allocation12 + $0x40] sm:$0xff]
    %v1471 = vld [vmem:[#allocation12 + $0x48] sm:$0xff]
    %v1472 = vld [vmem:[#allocation12 + $0x50] sm:$0xff]
    %v1473 = vld [vmem:[#allocation12 + $0x58] sm:$0xff]
    %v1474 = vld [vmem:[#allocation12 + $0x60] sm:$0xff]
    %v1475 = vld [vmem:[#allocation12 + $0x68] sm:$0xff]
    %v1476 = vld [vmem:[#allocation12 + $0x70] sm:$0xff]
    %v1477 = vld [vmem:[#allocation12 + $0x78] sm:$0xff]
    %v1478 = vld [vmem:[%s13] sm:$0x1]
    %v1479 = vld [vmem:[%s5] sm:$0xff]
    %v1480 = vld [vmem:[%s5 + $0x8] sm:$0xff]
    %v1481 = vld [vmem:[%s10] sm:$0xff]
    %v1482 = vld [vmem:[%s6] sm:$0xff]
    %v1483 = vld [vmem:[%s6 + $0x8] sm:$0xff]
    %v1484 = vld [vmem:[%s11] sm:$0xff]
    %1485 = vmatprep.subr.mxu0 %v1014
    %1486 = vmatpush1.msra.mxu0 %v1013
    %1487 = vmatprep.subr.mxu0 %v1022
    %1488 = vmatpush1.msra.mxu0 %v1021
    %1489 = vmatprep.subr.mxu0 %v1030
    %1490 = vmatpush1.msra.mxu0 %v1029
    %1491 = vmatprep.subr.mxu0 %v1038
    %1492 = vmatpush1.msra.mxu0 %v1037
    %1493 = vmatprep.subr.mxu0 %v1046
    %1494 = vmatpush1.msra.mxu0 %v1045
    %1495 = vmatprep.subr.mxu0 %v1054
    %1496 = vmatpush1.msra.mxu0 %v1053
    %1497 = vmatprep.subr.mxu0 %v1062
    %1498 = vmatpush1.msra.mxu0 %v1061
    %1499 = vmatprep.subr.mxu0 %v1070
    %1500 = vmatpush1.msra.mxu0 %v1069
    %1501 = vmatprep.subr.mxu0 %v1078
    %1502 = vmatpush1.msra.mxu0 %v1077
    %1503 = vmatprep.subr.mxu0 %v1086
    %1504 = vmatpush1.msra.mxu0 %v1085
    %1505 = vmatprep.subr.mxu0 %v1094
    %1506 = vmatpush1.msra.mxu0 %v1093
    %1507 = vmatprep.subr.mxu0 %v1102
    %1508 = vmatpush1.msra.mxu0 %v1101
    %1509 = vmatprep.subr.mxu0 %v1110
    %1510 = vmatpush1.msra.mxu0 %v1109
    %1511 = vmatprep.subr.mxu0 %v1118
    %1512 = vmatpush1.msra.mxu0 %v1117
    %1513 = vmatprep.subr.mxu0 %v1126
    %1514 = vmatpush1.msra.mxu0 %v1125
    %1515 = vmatprep.subr.mxu0 %v1134
    %1516 = vmatpush1.msra.mxu0 %v1133
    %1517 = vmatprep.subr.mxu0 %v1142
    %1518 = vmatpush1.msra.mxu0 %v1141
    %1519 = vmatprep.subr.mxu0 %v1150
    %1520 = vmatpush1.msra.mxu0 %v1149
    %1521 = vmatprep.subr.mxu0 %v1158
    %1522 = vmatpush1.msra.mxu0 %v1157
    %1523 = vmatprep.subr.mxu0 %v1166
    %1524 = vmatpush1.msra.mxu0 %v1165
    %1525 = vmatprep.subr.mxu0 %v1174
    %1526 = vmatpush1.msra.mxu0 %v1173
    %1527 = vmatprep.subr.mxu0 %v1182
    %1528 = vmatpush1.msra.mxu0 %v1181
    %1529 = vmatprep.subr.mxu0 %v1190
    %1530 = vmatpush1.msra.mxu0 %v1189
    %1531 = vmatprep.subr.mxu0 %v1198
    %1532 = vmatpush1.msra.mxu0 %v1197
    %1533 = vmatprep.subr.mxu0 %v1206
    %1534 = vmatpush1.msra.mxu0 %v1205
    %1535 = vmatprep.subr.mxu0 %v1214
    %1536 = vmatpush1.msra.mxu0 %v1213
    %1537 = vmatprep.subr.mxu0 %v1222
    %1538 = vmatpush1.msra.mxu0 %v1221
    %1539 = vmatprep.subr.mxu0 %v1230
    %1540 = vmatpush1.msra.mxu0 %v1229
    %1541 = vmatprep.subr.mxu0 %v1238
    %1542 = vmatpush1.msra.mxu0 %v1237
    %1543 = vmatprep.subr.mxu0 %v1246
    %1544 = vmatpush1.msra.mxu0 %v1245
    %1545 = vmatprep.subr.mxu0 %v1254
    %1546 = vmatpush1.msra.mxu0 %v1253
    %1547 = vmatprep.subr.mxu0 %v1262
    %1548 = vmatpush1.msra.mxu0 %v1261
    %1549 = vmatprep.mubr.f32.mxu0 %v1480
    %1550 = vmatmul.mubr.f32.gmra.mrb[0].mxu0 %v1479
    %v1551 = vpop.f32.mrb[0].mxu0
    %v1552 = vadd.f32 0.0, %v1551
    %v1553 = vpop.f32.mrb[0].mxu0
    %v1554 = vadd.f32 0.0, %v1553
    %1555 = vdwg.mxu0
    %1556 = vmatprep.subr.mxu0 %v1016
    %1557 = vmatpush1.msra.mxu0 %v1015
    %1558 = vmatprep.subr.mxu0 %v1024
    %1559 = vmatpush1.msra.mxu0 %v1023
    %1560 = vmatprep.subr.mxu0 %v1032
    %1561 = vmatpush1.msra.mxu0 %v1031
    %1562 = vmatprep.subr.mxu0 %v1040
    %1563 = vmatpush1.msra.mxu0 %v1039
    %1564 = vmatprep.subr.mxu0 %v1048
    %1565 = vmatpush1.msra.mxu0 %v1047
    %1566 = vmatprep.subr.mxu0 %v1056
    %1567 = vmatpush1.msra.mxu0 %v1055
    %1568 = vmatprep.subr.mxu0 %v1064
    %1569 = vmatpush1.msra.mxu0 %v1063
    %1570 = vmatprep.subr.mxu0 %v1072
    %1571 = vmatpush1.msra.mxu0 %v1071
    %1572 = vmatprep.subr.mxu0 %v1080
    %1573 = vmatpush1.msra.mxu0 %v1079
    %1574 = vmatprep.subr.mxu0 %v1088
    %1575 = vmatpush1.msra.mxu0 %v1087
    %1576 = vmatprep.subr.mxu0 %v1096
    %1577 = vmatpush1.msra.mxu0 %v1095
    %1578 = vmatprep.subr.mxu0 %v1104
    %1579 = vmatpush1.msra.mxu0 %v1103
    %1580 = vmatprep.subr.mxu0 %v1112
    %1581 = vmatpush1.msra.mxu0 %v1111
    %1582 = vmatprep.subr.mxu0 %v1120
    %1583 = vmatpush1.msra.mxu0 %v1119
    %1584 = vmatprep.subr.mxu0 %v1128
    %1585 = vmatpush1.msra.mxu0 %v1127
    %1586 = vmatprep.subr.mxu0 %v1136
    %1587 = vmatpush1.msra.mxu0 %v1135
    %1588 = vmatprep.subr.mxu0 %v1144
    %1589 = vmatpush1.msra.mxu0 %v1143
    %1590 = vmatprep.subr.mxu0 %v1152
    %1591 = vmatpush1.msra.mxu0 %v1151
    %1592 = vmatprep.subr.mxu0 %v1160
    %1593 = vmatpush1.msra.mxu0 %v1159
    %1594 = vmatprep.subr.mxu0 %v1168
    %1595 = vmatpush1.msra.mxu0 %v1167
    %1596 = vmatprep.subr.mxu0 %v1176
    %1597 = vmatpush1.msra.mxu0 %v1175
    %1598 = vmatprep.subr.mxu0 %v1184
    %1599 = vmatpush1.msra.mxu0 %v1183
    %1600 = vmatprep.subr.mxu0 %v1192
    %1601 = vmatpush1.msra.mxu0 %v1191
    %1602 = vmatprep.subr.mxu0 %v1200
    %1603 = vmatpush1.msra.mxu0 %v1199
    %1604 = vmatprep.subr.mxu0 %v1208
    %1605 = vmatpush1.msra.mxu0 %v1207
    %1606 = vmatprep.subr.mxu0 %v1216
    %1607 = vmatpush1.msra.mxu0 %v1215
    %1608 = vmatprep.subr.mxu0 %v1224
    %1609 = vmatpush1.msra.mxu0 %v1223
    %1610 = vmatprep.subr.mxu0 %v1232
    %1611 = vmatpush1.msra.mxu0 %v1231
    %1612 = vmatprep.subr.mxu0 %v1240
    %1613 = vmatpush1.msra.mxu0 %v1239
    %1614 = vmatprep.subr.mxu0 %v1248
    %1615 = vmatpush1.msra.mxu0 %v1247
    %1616 = vmatprep.subr.mxu0 %v1256
    %1617 = vmatpush1.msra.mxu0 %v1255
    %1618 = vmatprep.subr.mxu0 %v1264
    %1619 = vmatpush1.msra.mxu0 %v1263
    %1620 = vmatprep.mubr.f32.mxu0 %v1480
    %1621 = vmatmul.mubr.f32.gmra.mrb[0].mxu0 %v1479
    %v1622 = vpop.f32.mrb[0].mxu0
    %v1623 = vadd.f32 0.0, %v1622
    %v1624 = vpop.f32.mrb[0].mxu0
    %v1625 = vadd.f32 0.0, %v1624
    %1626 = vdwg.mxu0
    %1627 = vmatprep.subr.mxu0 %v1018
    %1628 = vmatpush1.msra.mxu0 %v1017
    %1629 = vmatprep.subr.mxu0 %v1026
    %1630 = vmatpush1.msra.mxu0 %v1025
    %1631 = vmatprep.subr.mxu0 %v1034
    %1632 = vmatpush1.msra.mxu0 %v1033
    %1633 = vmatprep.subr.mxu0 %v1042
    %1634 = vmatpush1.msra.mxu0 %v1041
    %1635 = vmatprep.subr.mxu0 %v1050
    %1636 = vmatpush1.msra.mxu0 %v1049
    %1637 = vmatprep.subr.mxu0 %v1058
    %1638 = vmatpush1.msra.mxu0 %v1057
    %1639 = vmatprep.subr.mxu0 %v1066
    %1640 = vmatpush1.msra.mxu0 %v1065
    %1641 = vmatprep.subr.mxu0 %v1074
    %1642 = vmatpush1.msra.mxu0 %v1073
    %1643 = vmatprep.subr.mxu0 %v1082
    %1644 = vmatpush1.msra.mxu0 %v1081
    %1645 = vmatprep.subr.mxu0 %v1090
    %1646 = vmatpush1.msra.mxu0 %v1089
    %1647 = vmatprep.subr.mxu0 %v1098
    %1648 = vmatpush1.msra.mxu0 %v1097
    %1649 = vmatprep.subr.mxu0 %v1106
    %1650 = vmatpush1.msra.mxu0 %v1105
    %1651 = vmatprep.subr.mxu0 %v1114
    %1652 = vmatpush1.msra.mxu0 %v1113
    %1653 = vmatprep.subr.mxu0 %v1122
    %1654 = vmatpush1.msra.mxu0 %v1121
    %1655 = vmatprep.subr.mxu0 %v1130
    %1656 = vmatpush1.msra.mxu0 %v1129
    %1657 = vmatprep.subr.mxu0 %v1138
    %1658 = vmatpush1.msra.mxu0 %v1137
    %1659 = vmatprep.subr.mxu0 %v1146
    %1660 = vmatpush1.msra.mxu0 %v1145
    %1661 = vmatprep.subr.mxu0 %v1154
    %1662 = vmatpush1.msra.mxu0 %v1153
    %1663 = vmatprep.subr.mxu0 %v1162
    %1664 = vmatpush1.msra.mxu0 %v1161
    %1665 = vmatprep.subr.mxu0 %v1170
    %1666 = vmatpush1.msra.mxu0 %v1169
    %1667 = vmatprep.subr.mxu0 %v1178
    %1668 = vmatpush1.msra.mxu0 %v1177
    %1669 = vmatprep.subr.mxu0 %v1186
    %1670 = vmatpush1.msra.mxu0 %v1185
    %1671 = vmatprep.subr.mxu0 %v1194
    %1672 = vmatpush1.msra.mxu0 %v1193
    %1673 = vmatprep.subr.mxu0 %v1202
    %1674 = vmatpush1.msra.mxu0 %v1201
    %1675 = vmatprep.subr.mxu0 %v1210
    %1676 = vmatpush1.msra.mxu0 %v1209
    %1677 = vmatprep.subr.mxu0 %v1218
    %1678 = vmatpush1.msra.mxu0 %v1217
    %1679 = vmatprep.subr.mxu0 %v1226
    %1680 = vmatpush1.msra.mxu0 %v1225
    %1681 = vmatprep.subr.mxu0 %v1234
    %1682 = vmatpush1.msra.mxu0 %v1233
    %1683 = vmatprep.subr.mxu0 %v1242
    %1684 = vmatpush1.msra.mxu0 %v1241
    %1685 = vmatprep.subr.mxu0 %v1250
    %1686 = vmatpush1.msra.mxu0 %v1249
    %1687 = vmatprep.subr.mxu0 %v1258
    %1688 = vmatpush1.msra.mxu0 %v1257
    %1689 = vmatprep.subr.mxu0 %v1266
    %1690 = vmatpush1.msra.mxu0 %v1265
    %1691 = vmatprep.mubr.f32.mxu0 %v1480
    %1692 = vmatmul.mubr.f32.gmra.mrb[0].mxu0 %v1479
    %v1693 = vpop.f32.mrb[0].mxu0
    %v1694 = vadd.f32 0.0, %v1693
    %v1695 = vpop.f32.mrb[0].mxu0
    %v1696 = vadd.f32 0.0, %v1695
    %1697 = vdwg.mxu0
    %1698 = vmatprep.subr.mxu0 %v1020
    %1699 = vmatpush1.msra.mxu0 %v1019
    %1700 = vmatprep.subr.mxu0 %v1028
    %1701 = vmatpush1.msra.mxu0 %v1027
    %1702 = vmatprep.subr.mxu0 %v1036
    %1703 = vmatpush1.msra.mxu0 %v1035
    %1704 = vmatprep.subr.mxu0 %v1044
    %1705 = vmatpush1.msra.mxu0 %v1043
    %1706 = vmatprep.subr.mxu0 %v1052
    %1707 = vmatpush1.msra.mxu0 %v1051
    %1708 = vmatprep.subr.mxu0 %v1060
    %1709 = vmatpush1.msra.mxu0 %v1059
    %1710 = vmatprep.subr.mxu0 %v1068
    %1711 = vmatpush1.msra.mxu0 %v1067
    %1712 = vmatprep.subr.mxu0 %v1076
    %1713 = vmatpush1.msra.mxu0 %v1075
    %1714 = vmatprep.subr.mxu0 %v1084
    %1715 = vmatpush1.msra.mxu0 %v1083
    %1716 = vmatprep.subr.mxu0 %v1092
    %1717 = vmatpush1.msra.mxu0 %v1091
    %1718 = vmatprep.subr.mxu0 %v1100
    %1719 = vmatpush1.msra.mxu0 %v1099
    %1720 = vmatprep.subr.mxu0 %v1108
    %1721 = vmatpush1.msra.mxu0 %v1107
    %1722 = vmatprep.subr.mxu0 %v1116
    %1723 = vmatpush1.msra.mxu0 %v1115
    %1724 = vmatprep.subr.mxu0 %v1124
    %1725 = vmatpush1.msra.mxu0 %v1123
    %1726 = vmatprep.subr.mxu0 %v1132
    %1727 = vmatpush1.msra.mxu0 %v1131
    %1728 = vmatprep.subr.mxu0 %v1140
    %1729 = vmatpush1.msra.mxu0 %v1139
    %1730 = vmatprep.subr.mxu0 %v1148
    %1731 = vmatpush1.msra.mxu0 %v1147
    %1732 = vmatprep.subr.mxu0 %v1156
    %1733 = vmatpush1.msra.mxu0 %v1155
    %1734 = vmatprep.subr.mxu0 %v1164
    %1735 = vmatpush1.msra.mxu0 %v1163
    %1736 = vmatprep.subr.mxu0 %v1172
    %1737 = vmatpush1.msra.mxu0 %v1171
    %1738 = vmatprep.subr.mxu0 %v1180
    %1739 = vmatpush1.msra.mxu0 %v1179
    %1740 = vmatprep.subr.mxu0 %v1188
    %1741 = vmatpush1.msra.mxu0 %v1187
    %1742 = vmatprep.subr.mxu0 %v1196
    %1743 = vmatpush1.msra.mxu0 %v1195
    %1744 = vmatprep.subr.mxu0 %v1204
    %1745 = vmatpush1.msra.mxu0 %v1203
    %1746 = vmatprep.subr.mxu0 %v1212
    %1747 = vmatpush1.msra.mxu0 %v1211
    %1748 = vmatprep.subr.mxu0 %v1220
    %1749 = vmatpush1.msra.mxu0 %v1219
    %1750 = vmatprep.subr.mxu0 %v1228
    %1751 = vmatpush1.msra.mxu0 %v1227
    %1752 = vmatprep.subr.mxu0 %v1236
    %1753 = vmatpush1.msra.mxu0 %v1235
    %1754 = vmatprep.subr.mxu0 %v1244
    %1755 = vmatpush1.msra.mxu0 %v1243
    %1756 = vmatprep.subr.mxu0 %v1252
    %1757 = vmatpush1.msra.mxu0 %v1251
    %1758 = vmatprep.subr.mxu0 %v1260
    %1759 = vmatpush1.msra.mxu0 %v1259
    %1760 = vmatprep.subr.mxu0 %v1268
    %1761 = vmatpush1.msra.mxu0 %v1267
    %1762 = vmatprep.mubr.f32.mxu0 %v1480
    %1763 = vmatmul.mubr.f32.gmra.mrb[0].mxu0 %v1479
    %v1764 = vpop.f32.mrb[0].mxu0
    %v1765 = vadd.f32 0.0, %v1764
    %v1766 = vpop.f32.mrb[0].mxu0
    %v1767 = vadd.f32 0.0, %v1766
    %1768 = vdwg.mxu0
    %v1769 = vld [vmem:[#allocation2] sm:$0xff]
    %v1770 = vld [vmem:[#allocation2 + $0x8] sm:$0xff]
    %v1771 = vld [vmem:[#allocation2 + $0x10] sm:$0xff]
    %v1772 = vld [vmem:[#allocation2 + $0x18] sm:$0xff]
    %v1773 = vld [vmem:[#allocation2 + $0x20] sm:$0xff]
    %v1774 = vld [vmem:[#allocation2 + $0x28] sm:$0xff]
    %v1775 = vld [vmem:[#allocation2 + $0x30] sm:$0xff]
    %v1776 = vld [vmem:[#allocation2 + $0x38] sm:$0xff]
    %v1777 = vadd.f32 %v1769, %v1552
    %v1778 = vadd.f32 %v1770, %v1554
    %v1779 = vadd.f32 %v1771, %v1623
    %v1780 = vadd.f32 %v1772, %v1625
    %v1781 = vadd.f32 %v1773, %v1694
    %v1782 = vadd.f32 %v1774, %v1696
    %v1783 = vadd.f32 %v1775, %v1765
    %v1784 = vadd.f32 %v1776, %v1767
    %v1785 = vmul.f32 %v1777, 0.5
    %v1786 = vmul.f32 %v1778, 0.5
    %v1787 = vmul.f32 %v1779, 0.5
    %v1788 = vmul.f32 %v1780, 0.5
    %v1789 = vmul.f32 %v1781, 0.5
    %v1790 = vmul.f32 %v1782, 0.5
    %v1791 = vtanh.pop %v1785
    %v1792 = vtanh.pop %v1786
    %v1793 = vtanh.pop %v1787
    %v1794 = vtanh.pop %v1788
    %v1795 = vtanh.pop %v1789
    %v1796 = vtanh.pop %v1790
    %v1797 = vmul.f32 %v1791, 0.5
    %v1798 = vmul.f32 %v1792, 0.5
    %v1799 = vmul.f32 %v1793, 0.5
    %v1800 = vmul.f32 %v1794, 0.5
    %v1801 = vmul.f32 %v1795, 0.5
    %v1802 = vmul.f32 %v1796, 0.5
    %v1803 = vadd.f32 %v1797, 0.5
    %v1804 = vadd.f32 %v1798, 0.5
    %v1805 = vadd.f32 %v1799, 0.5
    %v1806 = vadd.f32 %v1800, 0.5
    %v1807 = vadd.f32 %v1801, 0.5
    %v1808 = vadd.f32 %v1802, 0.5
    %v1809 = vtanh.pop %v1783
    %v1810 = vtanh.pop %v1784
    %v1811 = vmul.f32 %v1805, %v1482
    %v1812 = vmul.f32 %v1806, %v1483
    %v1813 = vmul.f32 %v1803, %v1809
    %v1814 = vmul.f32 %v1804, %v1810
    %v1815 = vadd.f32 %v1811, %v1813
    %v1816 = vadd.f32 %v1812, %v1814
    %v1817 = vtanh.pop %v1815
    %v1818 = vtanh.pop %v1816
    %v1819 = vmul.f32 %v1807, %v1817
    %v1820 = vmul.f32 %v1808, %v1818
    %1821 = vmatprep.subr.mxu0 %v1270
    %1822 = vmatpush1.msra.mxu0 %v1269
    %1823 = vmatprep.subr.mxu0 %v1274
    %1824 = vmatpush1.msra.mxu0 %v1273
    %1825 = vmatprep.subr.mxu0 %v1278
    %1826 = vmatpush1.msra.mxu0 %v1277
    %1827 = vmatprep.subr.mxu0 %v1282
    %1828 = vmatpush1.msra.mxu0 %v1281
    %1829 = vmatprep.subr.mxu0 %v1286
    %1830 = vmatpush1.msra.mxu0 %v1285
    %1831 = vmatprep.subr.mxu0 %v1290
    %1832 = vmatpush1.msra.mxu0 %v1289
    %1833 = vmatprep.subr.mxu0 %v1294
    %1834 = vmatpush1.msra.mxu0 %v1293
    %1835 = vmatprep.subr.mxu0 %v1298
    %1836 = vmatpush1.msra.mxu0 %v1297
    %1837 = vmatprep.subr.mxu0 %v1302
    %1838 = vmatpush1.msra.mxu0 %v1301
    %1839 = vmatprep.subr.mxu0 %v1306
    %1840 = vmatpush1.msra.mxu0 %v1305
    %1841 = vmatprep.subr.mxu0 %v1310
    %1842 = vmatpush1.msra.mxu0 %v1309
    %1843 = vmatprep.subr.mxu0 %v1314
    %1844 = vmatpush1.msra.mxu0 %v1313
    %1845 = vmatprep.subr.mxu0 %v1318
    %1846 = vmatpush1.msra.mxu0 %v1317
    %1847 = vmatprep.subr.mxu0 %v1322
    %1848 = vmatpush1.msra.mxu0 %v1321
    %1849 = vmatprep.subr.mxu0 %v1326
    %1850 = vmatpush1.msra.mxu0 %v1325
    %1851 = vmatprep.subr.mxu0 %v1330
    %1852 = vmatpush1.msra.mxu0 %v1329
    %1853 = vmatprep.subr.mxu0 0.0
    %1854 = vmatpush1.msra.mxu0 0.0
    %1855 = vmatprep.subr.mxu0 0.0
    %1856 = vmatpush1.msra.mxu0 0.0
    %1857 = vmatprep.subr.mxu0 0.0
    %1858 = vmatpush1.msra.mxu0 0.0
    %1859 = vmatprep.subr.mxu0 0.0
    %1860 = vmatpush1.msra.mxu0 0.0
    %1861 = vmatprep.subr.mxu0 0.0
    %1862 = vmatpush1.msra.mxu0 0.0
    %1863 = vmatprep.subr.mxu0 0.0
    %1864 = vmatpush1.msra.mxu0 0.0
    %1865 = vmatprep.subr.mxu0 0.0
    %1866 = vmatpush1.msra.mxu0 0.0
    %1867 = vmatprep.subr.mxu0 0.0
    %1868 = vmatpush1.msra.mxu0 0.0
    %1869 = vmatprep.subr.mxu0 0.0
    %1870 = vmatpush1.msra.mxu0 0.0
    %1871 = vmatprep.subr.mxu0 0.0
    %1872 = vmatpush1.msra.mxu0 0.0
    %1873 = vmatprep.subr.mxu0 0.0
    %1874 = vmatpush1.msra.mxu0 0.0
    %1875 = vmatprep.subr.mxu0 0.0
    %1876 = vmatpush1.msra.mxu0 0.0
    %1877 = vmatprep.subr.mxu0 0.0
    %1878 = vmatpush1.msra.mxu0 0.0
    %1879 = vmatprep.subr.mxu0 0.0
    %1880 = vmatpush1.msra.mxu0 0.0
    %1881 = vmatprep.subr.mxu0 0.0
    %1882 = vmatpush1.msra.mxu0 0.0
    %1883 = vmatprep.subr.mxu0 0.0
    %1884 = vmatpush1.msra.mxu0 0.0
    %1885 = vmatprep.mubr.f32.mxu0 0.0
    %1886 = vmatmul.mubr.f32.gmra.mrb[0].mxu0 %v1481
    %v1887 = vpop.f32.mrb[0].mxu0
    %v1888 = vadd.f32 0.0, %v1887
    %v1889 = vpop.f32.mrb[0].mxu0
    %v1890 = vadd.f32 0.0, %v1889
    %1891 = vdwg.mxu0
    %1892 = vmatprep.subr.mxu0 %v1272
    %1893 = vmatpush1.msra.mxu0 %v1271
    %1894 = vmatprep.subr.mxu0 %v1276
    %1895 = vmatpush1.msra.mxu0 %v1275
    %1896 = vmatprep.subr.mxu0 %v1280
    %1897 = vmatpush1.msra.mxu0 %v1279
    %1898 = vmatprep.subr.mxu0 %v1284
    %1899 = vmatpush1.msra.mxu0 %v1283
    %1900 = vmatprep.subr.mxu0 %v1288
    %1901 = vmatpush1.msra.mxu0 %v1287
    %1902 = vmatprep.subr.mxu0 %v1292
    %1903 = vmatpush1.msra.mxu0 %v1291
    %1904 = vmatprep.subr.mxu0 %v1296
    %1905 = vmatpush1.msra.mxu0 %v1295
    %1906 = vmatprep.subr.mxu0 %v1300
    %1907 = vmatpush1.msra.mxu0 %v1299
    %1908 = vmatprep.subr.mxu0 %v1304
    %1909 = vmatpush1.msra.mxu0 %v1303
    %1910 = vmatprep.subr.mxu0 %v1308
    %1911 = vmatpush1.msra.mxu0 %v1307
    %1912 = vmatprep.subr.mxu0 %v1312
    %1913 = vmatpush1.msra.mxu0 %v1311
    %1914 = vmatprep.subr.mxu0 %v1316
    %1915 = vmatpush1.msra.mxu0 %v1315
    %1916 = vmatprep.subr.mxu0 %v1320
    %1917 = vmatpush1.msra.mxu0 %v1319
    %1918 = vmatprep.subr.mxu0 %v1324
    %1919 = vmatpush1.msra.mxu0 %v1323
    %1920 = vmatprep.subr.mxu0 %v1328
    %1921 = vmatpush1.msra.mxu0 %v1327
    %1922 = vmatprep.subr.mxu0 %v1332
    %1923 = vmatpush1.msra.mxu0 %v1331
    %1924 = vmatprep.subr.mxu0 0.0
    %1925 = vmatpush1.msra.mxu0 0.0
    %1926 = vmatprep.subr.mxu0 0.0
    %1927 = vmatpush1.msra.mxu0 0.0
    %1928 = vmatprep.subr.mxu0 0.0
    %1929 = vmatpush1.msra.mxu0 0.0
    %1930 = vmatprep.subr.mxu0 0.0
    %1931 = vmatpush1.msra.mxu0 0.0
    %1932 = vmatprep.subr.mxu0 0.0
    %1933 = vmatpush1.msra.mxu0 0.0
    %1934 = vmatprep.subr.mxu0 0.0
    %1935 = vmatpush1.msra.mxu0 0.0
    %1936 = vmatprep.subr.mxu0 0.0
    %1937 = vmatpush1.msra.mxu0 0.0
    %1938 = vmatprep.subr.mxu0 0.0
    %1939 = vmatpush1.msra.mxu0 0.0
    %1940 = vmatprep.subr.mxu0 0.0
    %1941 = vmatpush1.msra.mxu0 0.0
    %1942 = vmatprep.subr.mxu0 0.0
    %1943 = vmatpush1.msra.mxu0 0.0
    %1944 = vmatprep.subr.mxu0 0.0
    %1945 = vmatpush1.msra.mxu0 0.0
    %1946 = vmatprep.subr.mxu0 0.0
    %1947 = vmatpush1.msra.mxu0 0.0
    %1948 = vmatprep.subr.mxu0 0.0
    %1949 = vmatpush1.msra.mxu0 0.0
    %1950 = vmatprep.subr.mxu0 0.0
    %1951 = vmatpush1.msra.mxu0 0.0
    %1952 = vmatprep.subr.mxu0 0.0
    %1953 = vmatpush1.msra.mxu0 0.0
    %1954 = vmatprep.subr.mxu0 0.0
    %1955 = vmatpush1.msra.mxu0 0.0
    %1956 = vmatprep.mubr.f32.mxu0 0.0
    %1957 = vmatmul.mubr.f32.gmra.mrb[0].mxu0 %v1481
    %v1958 = vpop.f32.mrb[0].mxu0
    %v1959 = vadd.f32 0.0, %v1958
    %v1960 = vpop.f32.mrb[0].mxu0
    %v1961 = vadd.f32 0.0, %v1960
    %1962 = vdwg.mxu0
    %v1964 = vlaneseq
    %v1965 = vshrl.u32 %v1964, 7
    %v1966 = vsub.s32 0, %v1965
    %v1967 = vrot.slane %v1461, %v1966
    %v1968 = vlaneseq
    %v1969 = vshrl.u32 %v1968, 7
    %v1970 = vsub.s32 1, %v1969
    %v1971 = vrot.slane %v1461, %v1970
    %v1972 = vlaneseq
    %v1973 = vshrl.u32 %v1972, 7
    %v1974 = vsub.s32 2, %v1973
    %v1975 = vrot.slane %v1461, %v1974
    %v1976 = vlaneseq
    %v1977 = vshrl.u32 %v1976, 7
    %v1978 = vsub.s32 3, %v1977
    %v1979 = vrot.slane %v1461, %v1978
    %1984 = vmatprep.subr.mxu0 %v1334
    %1985 = vmatpush1.msra.mxu0 %v1333
    %1986 = vmatprep.subr.mxu0 %v1338
    %1987 = vmatpush1.msra.mxu0 %v1337
    %1988 = vmatprep.subr.mxu0 %v1342
    %1989 = vmatpush1.msra.mxu0 %v1341
    %1990 = vmatprep.subr.mxu0 %v1346
    %1991 = vmatpush1.msra.mxu0 %v1345
    %1992 = vmatprep.subr.mxu0 %v1350
    %1993 = vmatpush1.msra.mxu0 %v1349
    %1994 = vmatprep.subr.mxu0 %v1354
    %1995 = vmatpush1.msra.mxu0 %v1353
    %1996 = vmatprep.subr.mxu0 %v1358
    %1997 = vmatpush1.msra.mxu0 %v1357
    %1998 = vmatprep.subr.mxu0 %v1362
    %1999 = vmatpush1.msra.mxu0 %v1361
    %2000 = vmatprep.subr.mxu0 %v1366
    %2001 = vmatpush1.msra.mxu0 %v1365
    %2002 = vmatprep.subr.mxu0 %v1370
    %2003 = vmatpush1.msra.mxu0 %v1369
    %2004 = vmatprep.subr.mxu0 %v1374
    %2005 = vmatpush1.msra.mxu0 %v1373
    %2006 = vmatprep.subr.mxu0 %v1378
    %2007 = vmatpush1.msra.mxu0 %v1377
    %2008 = vmatprep.subr.mxu0 %v1382
    %2009 = vmatpush1.msra.mxu0 %v1381
    %2010 = vmatprep.subr.mxu0 %v1386
    %2011 = vmatpush1.msra.mxu0 %v1385
    %2012 = vmatprep.subr.mxu0 %v1390
    %2013 = vmatpush1.msra.mxu0 %v1389
    %2014 = vmatprep.subr.mxu0 %v1394
    %2015 = vmatpush1.msra.mxu0 %v1393
    %2016 = vmatprep.subr.mxu0 %v1398
    %2017 = vmatpush1.msra.mxu0 %v1397
    %2018 = vmatprep.subr.mxu0 %v1402
    %2019 = vmatpush1.msra.mxu0 %v1401
    %2020 = vmatprep.subr.mxu0 %v1406
    %2021 = vmatpush1.msra.mxu0 %v1405
    %2022 = vmatprep.subr.mxu0 %v1410
    %2023 = vmatpush1.msra.mxu0 %v1409
    %2024 = vmatprep.subr.mxu0 %v1414
    %2025 = vmatpush1.msra.mxu0 %v1413
    %2026 = vmatprep.subr.mxu0 %v1418
    %2027 = vmatpush1.msra.mxu0 %v1417
    %2028 = vmatprep.subr.mxu0 %v1422
    %2029 = vmatpush1.msra.mxu0 %v1421
    %2030 = vmatprep.subr.mxu0 %v1426
    %2031 = vmatpush1.msra.mxu0 %v1425
    %2032 = vmatprep.subr.mxu0 %v1430
    %2033 = vmatpush1.msra.mxu0 %v1429
    %2034 = vmatprep.subr.mxu0 %v1434
    %2035 = vmatpush1.msra.mxu0 %v1433
    %2036 = vmatprep.subr.mxu0 %v1438
    %2037 = vmatpush1.msra.mxu0 %v1437
    %2038 = vmatprep.subr.mxu0 %v1442
    %2039 = vmatpush1.msra.mxu0 %v1441
    %2040 = vmatprep.subr.mxu0 %v1446
    %2041 = vmatpush1.msra.mxu0 %v1445
    %2042 = vmatprep.subr.mxu0 %v1450
    %2043 = vmatpush1.msra.mxu0 %v1449
    %2044 = vmatprep.subr.mxu0 %v1454
    %2045 = vmatpush1.msra.mxu0 %v1453
    %2046 = vmatprep.subr.mxu0 %v1458
    %2047 = vmatpush1.msra.mxu0 %v1457
    %2048 = vmatprep.mubr.f32.mxu0 %v1820
    %2049 = vmatmul.mubr.f32.gmra.mrb[0].mxu0 %v1819
    %v2050 = vpop.f32.mrb[0].mxu0
    %v2051 = vadd.f32 %v1967, %v2050
    %v2052 = vpop.f32.mrb[0].mxu0
    %v2053 = vadd.f32 %v1971, %v2052
    %2054 = vdwg.mxu0
    %2055 = vmatprep.subr.mxu0 %v1336
    %2056 = vmatpush1.msra.mxu0 %v1335
    %2057 = vmatprep.subr.mxu0 %v1340
    %2058 = vmatpush1.msra.mxu0 %v1339
    %2059 = vmatprep.subr.mxu0 %v1344
    %2060 = vmatpush1.msra.mxu0 %v1343
    %2061 = vmatprep.subr.mxu0 %v1348
    %2062 = vmatpush1.msra.mxu0 %v1347
    %2063 = vmatprep.subr.mxu0 %v1352
    %2064 = vmatpush1.msra.mxu0 %v1351
    %2065 = vmatprep.subr.mxu0 %v1356
    %2066 = vmatpush1.msra.mxu0 %v1355
    %2067 = vmatprep.subr.mxu0 %v1360
    %2068 = vmatpush1.msra.mxu0 %v1359
    %2069 = vmatprep.subr.mxu0 %v1364
    %2070 = vmatpush1.msra.mxu0 %v1363
    %2071 = vmatprep.subr.mxu0 %v1368
    %2072 = vmatpush1.msra.mxu0 %v1367
    %2073 = vmatprep.subr.mxu0 %v1372
    %2074 = vmatpush1.msra.mxu0 %v1371
    %2075 = vmatprep.subr.mxu0 %v1376
    %2076 = vmatpush1.msra.mxu0 %v1375
    %2077 = vmatprep.subr.mxu0 %v1380
    %2078 = vmatpush1.msra.mxu0 %v1379
    %2079 = vmatprep.subr.mxu0 %v1384
    %2080 = vmatpush1.msra.mxu0 %v1383
    %2081 = vmatprep.subr.mxu0 %v1388
    %2082 = vmatpush1.msra.mxu0 %v1387
    %2083 = vmatprep.subr.mxu0 %v1392
    %2084 = vmatpush1.msra.mxu0 %v1391
    %2085 = vmatprep.subr.mxu0 %v1396
    %2086 = vmatpush1.msra.mxu0 %v1395
    %2087 = vmatprep.subr.mxu0 %v1400
    %2088 = vmatpush1.msra.mxu0 %v1399
    %2089 = vmatprep.subr.mxu0 %v1404
    %2090 = vmatpush1.msra.mxu0 %v1403
    %2091 = vmatprep.subr.mxu0 %v1408
    %2092 = vmatpush1.msra.mxu0 %v1407
    %2093 = vmatprep.subr.mxu0 %v1412
    %2094 = vmatpush1.msra.mxu0 %v1411
    %2095 = vmatprep.subr.mxu0 %v1416
    %2096 = vmatpush1.msra.mxu0 %v1415
    %2097 = vmatprep.subr.mxu0 %v1420
    %2098 = vmatpush1.msra.mxu0 %v1419
    %2099 = vmatprep.subr.mxu0 %v1424
    %2100 = vmatpush1.msra.mxu0 %v1423
    %2101 = vmatprep.subr.mxu0 %v1428
    %2102 = vmatpush1.msra.mxu0 %v1427
    %2103 = vmatprep.subr.mxu0 %v1432
    %2104 = vmatpush1.msra.mxu0 %v1431
    %2105 = vmatprep.subr.mxu0 %v1436
    %2106 = vmatpush1.msra.mxu0 %v1435
    %2107 = vmatprep.subr.mxu0 %v1440
    %2108 = vmatpush1.msra.mxu0 %v1439
    %2109 = vmatprep.subr.mxu0 %v1444
    %2110 = vmatpush1.msra.mxu0 %v1443
    %2111 = vmatprep.subr.mxu0 %v1448
    %2112 = vmatpush1.msra.mxu0 %v1447
    %2113 = vmatprep.subr.mxu0 %v1452
    %2114 = vmatpush1.msra.mxu0 %v1451
    %2115 = vmatprep.subr.mxu0 %v1456
    %2116 = vmatpush1.msra.mxu0 %v1455
    %2117 = vmatprep.subr.mxu0 %v1460
    %2118 = vmatpush1.msra.mxu0 %v1459
    %2119 = vmatprep.mubr.f32.mxu0 %v1820
    %2120 = vmatmul.mubr.f32.gmra.mrb[0].mxu0 %v1819
    %v2121 = vpop.f32.mrb[0].mxu0
    %v2122 = vadd.f32 %v1975, %v2121
    %v2123 = vpop.f32.mrb[0].mxu0
    %v2124 = vadd.f32 %v1979, %v2123
    %2125 = vdwg.mxu0
    %v2126 = vadd.f32 %v2051, %v1888
    %v2127 = vadd.f32 %v2053, %v1890
    %v2128 = vadd.f32 %v2122, %v1959
    %v2129 = vadd.f32 %v2124, %v1961
    %v2130 = vmul.f32 %v2126, 0.5
    %v2131 = vmul.f32 %v2127, 0.5
    %v2132 = vmul.f32 %v2128, 0.5
    %v2133 = vtanh.pop %v2130
    %v2134 = vtanh.pop %v2131
    %v2135 = vtanh.pop %v2132
    %v2136 = vmul.f32 %v2133, 0.5
    %v2137 = vmul.f32 %v2134, 0.5
    %v2138 = vmul.f32 %v2135, 0.5
    %v2139 = vadd.f32 %v2136, 0.5
    %v2140 = vadd.f32 %v2137, 0.5
    %v2141 = vadd.f32 %v2138, 0.5
    %v2142 = vtanh.pop %v2129
    %v2143 = vmul.f32 %v2140, %v1484
    %v2144 = vmul.f32 %v2139, %v2142
    %v2145 = vadd.f32 %v2143, %v2144
    %v2146 = vtanh.pop %v2145
    %v2147 = vmul.f32 %v2141, %v2146
    %v2149 = vlaneseq
    %v2150 = vshrl.u32 %v2149, 7
    %v2151 = vsub.s32 0, %v2150
    %v2152 = vrot.slane %v1478, %v2151
    %2154 = vmatprep.subr.mxu0 0.0
    %2155 = vmatpush1.msra.mxu0 %v1462
    %2156 = vmatprep.subr.mxu0 0.0
    %2157 = vmatpush1.msra.mxu0 %v1463
    %2158 = vmatprep.subr.mxu0 0.0
    %2159 = vmatpush1.msra.mxu0 %v1464
    %2160 = vmatprep.subr.mxu0 0.0
    %2161 = vmatpush1.msra.mxu0 %v1465
    %2162 = vmatprep.subr.mxu0 0.0
    %2163 = vmatpush1.msra.mxu0 %v1466
    %2164 = vmatprep.subr.mxu0 0.0
    %2165 = vmatpush1.msra.mxu0 %v1467
    %2166 = vmatprep.subr.mxu0 0.0
    %2167 = vmatpush1.msra.mxu0 %v1468
    %2168 = vmatprep.subr.mxu0 0.0
    %2169 = vmatpush1.msra.mxu0 %v1469
    %2170 = vmatprep.subr.mxu0 0.0
    %2171 = vmatpush1.msra.mxu0 %v1470
    %2172 = vmatprep.subr.mxu0 0.0
    %2173 = vmatpush1.msra.mxu0 %v1471
    %2174 = vmatprep.subr.mxu0 0.0
    %2175 = vmatpush1.msra.mxu0 %v1472
    %2176 = vmatprep.subr.mxu0 0.0
    %2177 = vmatpush1.msra.mxu0 %v1473
    %2178 = vmatprep.subr.mxu0 0.0
    %2179 = vmatpush1.msra.mxu0 %v1474
    %2180 = vmatprep.subr.mxu0 0.0
    %2181 = vmatpush1.msra.mxu0 %v1475
    %2182 = vmatprep.subr.mxu0 0.0
    %2183 = vmatpush1.msra.mxu0 %v1476
    %2184 = vmatprep.subr.mxu0 0.0
    %2185 = vmatpush1.msra.mxu0 %v1477
    %2186 = vmatprep.subr.mxu0 0.0
    %2187 = vmatpush1.msra.mxu0 0.0
    %2188 = vmatprep.subr.mxu0 0.0
    %2189 = vmatpush1.msra.mxu0 0.0
    %2190 = vmatprep.subr.mxu0 0.0
    %2191 = vmatpush1.msra.mxu0 0.0
    %2192 = vmatprep.subr.mxu0 0.0
    %2193 = vmatpush1.msra.mxu0 0.0
    %2194 = vmatprep.subr.mxu0 0.0
    %2195 = vmatpush1.msra.mxu0 0.0
    %2196 = vmatprep.subr.mxu0 0.0
    %2197 = vmatpush1.msra.mxu0 0.0
    %2198 = vmatprep.subr.mxu0 0.0
    %2199 = vmatpush1.msra.mxu0 0.0
    %2200 = vmatprep.subr.mxu0 0.0
    %2201 = vmatpush1.msra.mxu0 0.0
    %2202 = vmatprep.subr.mxu0 0.0
    %2203 = vmatpush1.msra.mxu0 0.0
    %2204 = vmatprep.subr.mxu0 0.0
    %2205 = vmatpush1.msra.mxu0 0.0
    %2206 = vmatprep.subr.mxu0 0.0
    %2207 = vmatpush1.msra.mxu0 0.0
    %2208 = vmatprep.subr.mxu0 0.0
    %2209 = vmatpush1.msra.mxu0 0.0
    %2210 = vmatprep.subr.mxu0 0.0
    %2211 = vmatpush1.msra.mxu0 0.0
    %2212 = vmatprep.subr.mxu0 0.0
    %2213 = vmatpush1.msra.mxu0 0.0
    %2214 = vmatprep.subr.mxu0 0.0
    %2215 = vmatpush1.msra.mxu0 0.0
    %2216 = vmatprep.subr.mxu0 0.0
    %2217 = vmatpush1.msra.mxu0 0.0
    %2218 = vmatprep.mubr.f32.mxu0 0.0
    %2219 = vmatmul.mubr.f32.gmra.mrb[0].mxu0 %v2147
    %v2220 = vpop.f32.mrb[0].mxu0
    %v2221 = vadd.f32 %v2152, %v2220
    %v2222 = vpop.f32.mrb[0].mxu0
    %2223 = vdwg.mxu0
    %2224 = vst [vmem:[%s14] sm:$0xff] %v2221
    %2225 = vmatprep.subr.mxu0 %v1014
    %2226 = vmatpush1.msra.mxu0 %v1013
    %2227 = vmatprep.subr.mxu0 %v1022
    %2228 = vmatpush1.msra.mxu0 %v1021
    %2229 = vmatprep.subr.mxu0 %v1030
    %2230 = vmatpush1.msra.mxu0 %v1029
    %2231 = vmatprep.subr.mxu0 %v1038
    %2232 = vmatpush1.msra.mxu0 %v1037
    %2233 = vmatprep.subr.mxu0 %v1046
    %2234 = vmatpush1.msra.mxu0 %v1045
    %2235 = vmatprep.subr.mxu0 %v1054
    %2236 = vmatpush1.msra.mxu0 %v1053
    %2237 = vmatprep.subr.mxu0 %v1062
    %2238 = vmatpush1.msra.mxu0 %v1061
    %2239 = vmatprep.subr.mxu0 %v1070
    %2240 = vmatpush1.msra.mxu0 %v1069
    %2241 = vmatprep.subr.mxu0 %v1078
    %2242 = vmatpush1.msra.mxu0 %v1077
    %2243 = vmatprep.subr.mxu0 %v1086
    %2244 = vmatpush1.msra.mxu0 %v1085
    %2245 = vmatprep.subr.mxu0 %v1094
    %2246 = vmatpush1.msra.mxu0 %v1093
    %2247 = vmatprep.subr.mxu0 %v1102
    %2248 = vmatpush1.msra.mxu0 %v1101
    %2249 = vmatprep.subr.mxu0 %v1110
    %2250 = vmatpush1.msra.mxu0 %v1109
    %2251 = vmatprep.subr.mxu0 %v1118
    %2252 = vmatpush1.msra.mxu0 %v1117
    %2253 = vmatprep.subr.mxu0 %v1126
    %2254 = vmatpush1.msra.mxu0 %v1125
    %2255 = vmatprep.subr.mxu0 %v1134
    %2256 = vmatpush1.msra.mxu0 %v1133
    %2257 = vmatprep.subr.mxu0 %v1142
    %2258 = vmatpush1.msra.mxu0 %v1141
    %2259 = vmatprep.subr.mxu0 %v1150
    %2260 = vmatpush1.msra.mxu0 %v1149
    %2261 = vmatprep.subr.mxu0 %v1158
    %2262 = vmatpush1.msra.mxu0 %v1157
    %2263 = vmatprep.subr.mxu0 %v1166
    %2264 = vmatpush1.msra.mxu0 %v1165
    %2265 = vmatprep.subr.mxu0 %v1174
    %2266 = vmatpush1.msra.mxu0 %v1173
    %2267 = vmatprep.subr.mxu0 %v1182
    %2268 = vmatpush1.msra.mxu0 %v1181
    %2269 = vmatprep.subr.mxu0 %v1190
    %2270 = vmatpush1.msra.mxu0 %v1189
    %2271 = vmatprep.subr.mxu0 %v1198
    %2272 = vmatpush1.msra.mxu0 %v1197
    %2273 = vmatprep.subr.mxu0 %v1206
    %2274 = vmatpush1.msra.mxu0 %v1205
    %2275 = vmatprep.subr.mxu0 %v1214
    %2276 = vmatpush1.msra.mxu0 %v1213
    %2277 = vmatprep.subr.mxu0 %v1222
    %2278 = vmatpush1.msra.mxu0 %v1221
    %2279 = vmatprep.subr.mxu0 %v1230
    %2280 = vmatpush1.msra.mxu0 %v1229
    %2281 = vmatprep.subr.mxu0 %v1238
    %2282 = vmatpush1.msra.mxu0 %v1237
    %2283 = vmatprep.subr.mxu0 %v1246
    %2284 = vmatpush1.msra.mxu0 %v1245
    %2285 = vmatprep.subr.mxu0 %v1254
    %2286 = vmatpush1.msra.mxu0 %v1253
    %2287 = vmatprep.subr.mxu0 %v1262
    %2288 = vmatpush1.msra.mxu0 %v1261
    %2289 = vmatprep.mubr.f32.mxu0 %v1820
    %2290 = vmatmul.mubr.f32.gmra.mrb[0].mxu0 %v1819
    %v2291 = vpop.f32.mrb[0].mxu0
    %v2292 = vadd.f32 0.0, %v2291
    %v2293 = vpop.f32.mrb[0].mxu0
    %v2294 = vadd.f32 0.0, %v2293
    %2295 = vdwg.mxu0
    %2296 = vmatprep.subr.mxu0 %v1016
    %2297 = vmatpush1.msra.mxu0 %v1015
    %2298 = vmatprep.subr.mxu0 %v1024
    %2299 = vmatpush1.msra.mxu0 %v1023
    %2300 = vmatprep.subr.mxu0 %v1032
    %2301 = vmatpush1.msra.mxu0 %v1031
    %2302 = vmatprep.subr.mxu0 %v1040
    %2303 = vmatpush1.msra.mxu0 %v1039
    %2304 = vmatprep.subr.mxu0 %v1048
    %2305 = vmatpush1.msra.mxu0 %v1047
    %2306 = vmatprep.subr.mxu0 %v1056
    %2307 = vmatpush1.msra.mxu0 %v1055
    %2308 = vmatprep.subr.mxu0 %v1064
    %2309 = vmatpush1.msra.mxu0 %v1063
    %2310 = vmatprep.subr.mxu0 %v1072
    %2311 = vmatpush1.msra.mxu0 %v1071
    %2312 = vmatprep.subr.mxu0 %v1080
    %2313 = vmatpush1.msra.mxu0 %v1079
    %2314 = vmatprep.subr.mxu0 %v1088
    %2315 = vmatpush1.msra.mxu0 %v1087
    %2316 = vmatprep.subr.mxu0 %v1096
    %2317 = vmatpush1.msra.mxu0 %v1095
    %2318 = vmatprep.subr.mxu0 %v1104
    %2319 = vmatpush1.msra.mxu0 %v1103
    %2320 = vmatprep.subr.mxu0 %v1112
    %2321 = vmatpush1.msra.mxu0 %v1111
    %2322 = vmatprep.subr.mxu0 %v1120
    %2323 = vmatpush1.msra.mxu0 %v1119
    %2324 = vmatprep.subr.mxu0 %v1128
    %2325 = vmatpush1.msra.mxu0 %v1127
    %2326 = vmatprep.subr.mxu0 %v1136
    %2327 = vmatpush1.msra.mxu0 %v1135
    %2328 = vmatprep.subr.mxu0 %v1144
    %2329 = vmatpush1.msra.mxu0 %v1143
    %2330 = vmatprep.subr.mxu0 %v1152
    %2331 = vmatpush1.msra.mxu0 %v1151
    %2332 = vmatprep.subr.mxu0 %v1160
    %2333 = vmatpush1.msra.mxu0 %v1159
    %2334 = vmatprep.subr.mxu0 %v1168
    %2335 = vmatpush1.msra.mxu0 %v1167
    %2336 = vmatprep.subr.mxu0 %v1176
    %2337 = vmatpush1.msra.mxu0 %v1175
    %2338 = vmatprep.subr.mxu0 %v1184
    %2339 = vmatpush1.msra.mxu0 %v1183
    %2340 = vmatprep.subr.mxu0 %v1192
    %2341 = vmatpush1.msra.mxu0 %v1191
    %2342 = vmatprep.subr.mxu0 %v1200
    %2343 = vmatpush1.msra.mxu0 %v1199
    %2344 = vmatprep.subr.mxu0 %v1208
    %2345 = vmatpush1.msra.mxu0 %v1207
    %2346 = vmatprep.subr.mxu0 %v1216
    %2347 = vmatpush1.msra.mxu0 %v1215
    %2348 = vmatprep.subr.mxu0 %v1224
    %2349 = vmatpush1.msra.mxu0 %v1223
    %2350 = vmatprep.subr.mxu0 %v1232
    %2351 = vmatpush1.msra.mxu0 %v1231
    %2352 = vmatprep.subr.mxu0 %v1240
    %2353 = vmatpush1.msra.mxu0 %v1239
    %2354 = vmatprep.subr.mxu0 %v1248
    %2355 = vmatpush1.msra.mxu0 %v1247
    %2356 = vmatprep.subr.mxu0 %v1256
    %2357 = vmatpush1.msra.mxu0 %v1255
    %2358 = vmatprep.subr.mxu0 %v1264
    %2359 = vmatpush1.msra.mxu0 %v1263
    %2360 = vmatprep.mubr.f32.mxu0 %v1820
    %2361 = vmatmul.mubr.f32.gmra.mrb[0].mxu0 %v1819
    %v2362 = vpop.f32.mrb[0].mxu0
    %v2363 = vadd.f32 0.0, %v2362
    %v2364 = vpop.f32.mrb[0].mxu0
    %v2365 = vadd.f32 0.0, %v2364
    %2366 = vdwg.mxu0
    %2367 = vmatprep.subr.mxu0 %v1018
    %2368 = vmatpush1.msra.mxu0 %v1017
    %2369 = vmatprep.subr.mxu0 %v1026
    %2370 = vmatpush1.msra.mxu0 %v1025
    %2371 = vmatprep.subr.mxu0 %v1034
    %2372 = vmatpush1.msra.mxu0 %v1033
    %2373 = vmatprep.subr.mxu0 %v1042
    %2374 = vmatpush1.msra.mxu0 %v1041
    %2375 = vmatprep.subr.mxu0 %v1050
    %2376 = vmatpush1.msra.mxu0 %v1049
    %2377 = vmatprep.subr.mxu0 %v1058
    %2378 = vmatpush1.msra.mxu0 %v1057
    %2379 = vmatprep.subr.mxu0 %v1066
    %2380 = vmatpush1.msra.mxu0 %v1065
    %2381 = vmatprep.subr.mxu0 %v1074
    %2382 = vmatpush1.msra.mxu0 %v1073
    %2383 = vmatprep.subr.mxu0 %v1082
    %2384 = vmatpush1.msra.mxu0 %v1081
    %2385 = vmatprep.subr.mxu0 %v1090
    %2386 = vmatpush1.msra.mxu0 %v1089
    %2387 = vmatprep.subr.mxu0 %v1098
    %2388 = vmatpush1.msra.mxu0 %v1097
    %2389 = vmatprep.subr.mxu0 %v1106
    %2390 = vmatpush1.msra.mxu0 %v1105
    %2391 = vmatprep.subr.mxu0 %v1114
    %2392 = vmatpush1.msra.mxu0 %v1113
    %2393 = vmatprep.subr.mxu0 %v1122
    %2394 = vmatpush1.msra.mxu0 %v1121
    %2395 = vmatprep.subr.mxu0 %v1130
    %2396 = vmatpush1.msra.mxu0 %v1129
    %2397 = vmatprep.subr.mxu0 %v1138
    %2398 = vmatpush1.msra.mxu0 %v1137
    %2399 = vmatprep.subr.mxu0 %v1146
    %2400 = vmatpush1.msra.mxu0 %v1145
    %2401 = vmatprep.subr.mxu0 %v1154
    %2402 = vmatpush1.msra.mxu0 %v1153
    %2403 = vmatprep.subr.mxu0 %v1162
    %2404 = vmatpush1.msra.mxu0 %v1161
    %2405 = vmatprep.subr.mxu0 %v1170
    %2406 = vmatpush1.msra.mxu0 %v1169
    %2407 = vmatprep.subr.mxu0 %v1178
    %2408 = vmatpush1.msra.mxu0 %v1177
    %2409 = vmatprep.subr.mxu0 %v1186
    %2410 = vmatpush1.msra.mxu0 %v1185
    %2411 = vmatprep.subr.mxu0 %v1194
    %2412 = vmatpush1.msra.mxu0 %v1193
    %2413 = vmatprep.subr.mxu0 %v1202
    %2414 = vmatpush1.msra.mxu0 %v1201
    %2415 = vmatprep.subr.mxu0 %v1210
    %2416 = vmatpush1.msra.mxu0 %v1209
    %2417 = vmatprep.subr.mxu0 %v1218
    %2418 = vmatpush1.msra.mxu0 %v1217
    %2419 = vmatprep.subr.mxu0 %v1226
    %2420 = vmatpush1.msra.mxu0 %v1225
    %2421 = vmatprep.subr.mxu0 %v1234
    %2422 = vmatpush1.msra.mxu0 %v1233
    %2423 = vmatprep.subr.mxu0 %v1242
    %2424 = vmatpush1.msra.mxu0 %v1241
    %2425 = vmatprep.subr.mxu0 %v1250
    %2426 = vmatpush1.msra.mxu0 %v1249
    %2427 = vmatprep.subr.mxu0 %v1258
    %2428 = vmatpush1.msra.mxu0 %v1257
    %2429 = vmatprep.subr.mxu0 %v1266
    %2430 = vmatpush1.msra.mxu0 %v1265
    %2431 = vmatprep.mubr.f32.mxu0 %v1820
    %2432 = vmatmul.mubr.f32.gmra.mrb[0].mxu0 %v1819
    %v2433 = vpop.f32.mrb[0].mxu0
    %v2434 = vadd.f32 0.0, %v2433
    %v2435 = vpop.f32.mrb[0].mxu0
    %v2436 = vadd.f32 0.0, %v2435
    %2437 = vdwg.mxu0
    %2438 = vmatprep.subr.mxu0 %v1020
    %2439 = vmatpush1.msra.mxu0 %v1019
    %2440 = vmatprep.subr.mxu0 %v1028
    %2441 = vmatpush1.msra.mxu0 %v1027
    %2442 = vmatprep.subr.mxu0 %v1036
    %2443 = vmatpush1.msra.mxu0 %v1035
    %2444 = vmatprep.subr.mxu0 %v1044
    %2445 = vmatpush1.msra.mxu0 %v1043
    %2446 = vmatprep.subr.mxu0 %v1052
    %2447 = vmatpush1.msra.mxu0 %v1051
    %2448 = vmatprep.subr.mxu0 %v1060
    %2449 = vmatpush1.msra.mxu0 %v1059
    %2450 = vmatprep.subr.mxu0 %v1068
    %2451 = vmatpush1.msra.mxu0 %v1067
    %2452 = vmatprep.subr.mxu0 %v1076
    %2453 = vmatpush1.msra.mxu0 %v1075
    %2454 = vmatprep.subr.mxu0 %v1084
    %2455 = vmatpush1.msra.mxu0 %v1083
    %2456 = vmatprep.subr.mxu0 %v1092
    %2457 = vmatpush1.msra.mxu0 %v1091
    %2458 = vmatprep.subr.mxu0 %v1100
    %2459 = vmatpush1.msra.mxu0 %v1099
    %2460 = vmatprep.subr.mxu0 %v1108
    %2461 = vmatpush1.msra.mxu0 %v1107
    %2462 = vmatprep.subr.mxu0 %v1116
    %2463 = vmatpush1.msra.mxu0 %v1115
    %2464 = vmatprep.subr.mxu0 %v1124
    %2465 = vmatpush1.msra.mxu0 %v1123
    %2466 = vmatprep.subr.mxu0 %v1132
    %2467 = vmatpush1.msra.mxu0 %v1131
    %2468 = vmatprep.subr.mxu0 %v1140
    %2469 = vmatpush1.msra.mxu0 %v1139
    %2470 = vmatprep.subr.mxu0 %v1148
    %2471 = vmatpush1.msra.mxu0 %v1147
    %2472 = vmatprep.subr.mxu0 %v1156
    %2473 = vmatpush1.msra.mxu0 %v1155
    %2474 = vmatprep.subr.mxu0 %v1164
    %2475 = vmatpush1.msra.mxu0 %v1163
    %2476 = vmatprep.subr.mxu0 %v1172
    %2477 = vmatpush1.msra.mxu0 %v1171
    %2478 = vmatprep.subr.mxu0 %v1180
    %2479 = vmatpush1.msra.mxu0 %v1179
    %2480 = vmatprep.subr.mxu0 %v1188
    %2481 = vmatpush1.msra.mxu0 %v1187
    %2482 = vmatprep.subr.mxu0 %v1196
    %2483 = vmatpush1.msra.mxu0 %v1195
    %2484 = vmatprep.subr.mxu0 %v1204
    %2485 = vmatpush1.msra.mxu0 %v1203
    %2486 = vmatprep.subr.mxu0 %v1212
    %2487 = vmatpush1.msra.mxu0 %v1211
    %2488 = vmatprep.subr.mxu0 %v1220
    %2489 = vmatpush1.msra.mxu0 %v1219
    %2490 = vmatprep.subr.mxu0 %v1228
    %2491 = vmatpush1.msra.mxu0 %v1227
    %2492 = vmatprep.subr.mxu0 %v1236
    %2493 = vmatpush1.msra.mxu0 %v1235
    %2494 = vmatprep.subr.mxu0 %v1244
    %2495 = vmatpush1.msra.mxu0 %v1243
    %2496 = vmatprep.subr.mxu0 %v1252
    %2497 = vmatpush1.msra.mxu0 %v1251
    %2498 = vmatprep.subr.mxu0 %v1260
    %2499 = vmatpush1.msra.mxu0 %v1259
    %2500 = vmatprep.subr.mxu0 %v1268
    %2501 = vmatpush1.msra.mxu0 %v1267
    %2502 = vmatprep.mubr.f32.mxu0 %v1820
    %2503 = vmatmul.mubr.f32.gmra.mrb[0].mxu0 %v1819
    %v2504 = vpop.f32.mrb[0].mxu0
    %v2505 = vadd.f32 0.0, %v2504
    %v2506 = vpop.f32.mrb[0].mxu0
    %v2507 = vadd.f32 0.0, %v2506
    %2508 = vdwg.mxu0
    %v2509 = vld [vmem:[#allocation2 + $0x40] sm:$0xff]
    %v2510 = vld [vmem:[#allocation2 + $0x48] sm:$0xff]
    %v2511 = vld [vmem:[#allocation2 + $0x50] sm:$0xff]
    %v2512 = vld [vmem:[#allocation2 + $0x58] sm:$0xff]
    %v2513 = vld [vmem:[#allocation2 + $0x60] sm:$0xff]
    %v2514 = vld [vmem:[#allocation2 + $0x68] sm:$0xff]
    %v2515 = vld [vmem:[#allocation2 + $0x70] sm:$0xff]
    %v2516 = vld [vmem:[#allocation2 + $0x78] sm:$0xff]
    %v2517 = vadd.f32 %v2509, %v2292
    %v2518 = vadd.f32 %v2510, %v2294
    %v2519 = vadd.f32 %v2511, %v2363
    %v2520 = vadd.f32 %v2512, %v2365
    %v2521 = vadd.f32 %v2513, %v2434
    %v2522 = vadd.f32 %v2514, %v2436
    %v2523 = vadd.f32 %v2515, %v2505
    %v2524 = vadd.f32 %v2516, %v2507
    %v2525 = vmul.f32 %v2517, 0.5
    %v2526 = vmul.f32 %v2518, 0.5
    %v2527 = vmul.f32 %v2519, 0.5
    %v2528 = vmul.f32 %v2520, 0.5
    %v2529 = vmul.f32 %v2521, 0.5
    %v2530 = vmul.f32 %v2522, 0.5
    %v2531 = vtanh.pop %v2525
    %v2532 = vtanh.pop %v2526
    %v2533 = vtanh.pop %v2527
    %v2534 = vtanh.pop %v2528
    %v2535 = vtanh.pop %v2529
    %v2536 = vtanh.pop %v2530
    %v2537 = vmul.f32 %v2531, 0.5
    %v2538 = vmul.f32 %v2532, 0.5
    %v2539 = vmul.f32 %v2533, 0.5
    %v2540 = vmul.f32 %v2534, 0.5
    %v2541 = vmul.f32 %v2535, 0.5
    %v2542 = vmul.f32 %v2536, 0.5
    %v2543 = vadd.f32 %v2537, 0.5
    %v2544 = vadd.f32 %v2538, 0.5
    %v2545 = vadd.f32 %v2539, 0.5
    %v2546 = vadd.f32 %v2540, 0.5
    %v2547 = vadd.f32 %v2541, 0.5
    %v2548 = vadd.f32 %v2542, 0.5
    %v2549 = vtanh.pop %v2523
    %v2550 = vtanh.pop %v2524
    %v2551 = vmul.f32 %v2545, %v1815
    %v2552 = vmul.f32 %v2546, %v1816
    %v2553 = vmul.f32 %v2543, %v2549
    %v2554 = vmul.f32 %v2544, %v2550
    %v2555 = vadd.f32 %v2551, %v2553
    %v2556 = vadd.f32 %v2552, %v2554
    %v2557 = vtanh.pop %v2555
    %v2558 = vtanh.pop %v2556
    %v2559 = vmul.f32 %v2547, %v2557
    %v2560 = vmul.f32 %v2548, %v2558
    %2561 = vmatprep.subr.mxu0 %v1270
    %2562 = vmatpush1.msra.mxu0 %v1269
    %2563 = vmatprep.subr.mxu0 %v1274
    %2564 = vmatpush1.msra.mxu0 %v1273
    %2565 = vmatprep.subr.mxu0 %v1278
    %2566 = vmatpush1.msra.mxu0 %v1277
    %2567 = vmatprep.subr.mxu0 %v1282
    %2568 = vmatpush1.msra.mxu0 %v1281
    %2569 = vmatprep.subr.mxu0 %v1286
    %2570 = vmatpush1.msra.mxu0 %v1285
    %2571 = vmatprep.subr.mxu0 %v1290
    %2572 = vmatpush1.msra.mxu0 %v1289
    %2573 = vmatprep.subr.mxu0 %v1294
    %2574 = vmatpush1.msra.mxu0 %v1293
    %2575 = vmatprep.subr.mxu0 %v1298
    %2576 = vmatpush1.msra.mxu0 %v1297
    %2577 = vmatprep.subr.mxu0 %v1302
    %2578 = vmatpush1.msra.mxu0 %v1301
    %2579 = vmatprep.subr.mxu0 %v1306
    %2580 = vmatpush1.msra.mxu0 %v1305
    %2581 = vmatprep.subr.mxu0 %v1310
    %2582 = vmatpush1.msra.mxu0 %v1309
    %2583 = vmatprep.subr.mxu0 %v1314
    %2584 = vmatpush1.msra.mxu0 %v1313
    %2585 = vmatprep.subr.mxu0 %v1318
    %2586 = vmatpush1.msra.mxu0 %v1317
    %2587 = vmatprep.subr.mxu0 %v1322
    %2588 = vmatpush1.msra.mxu0 %v1321
    %2589 = vmatprep.subr.mxu0 %v1326
    %2590 = vmatpush1.msra.mxu0 %v1325
    %2591 = vmatprep.subr.mxu0 %v1330
    %2592 = vmatpush1.msra.mxu0 %v1329
    %2593 = vmatprep.subr.mxu0 0.0
    %2594 = vmatpush1.msra.mxu0 0.0
    %2595 = vmatprep.subr.mxu0 0.0
    %2596 = vmatpush1.msra.mxu0 0.0
    %2597 = vmatprep.subr.mxu0 0.0
    %2598 = vmatpush1.msra.mxu0 0.0
    %2599 = vmatprep.subr.mxu0 0.0
    %2600 = vmatpush1.msra.mxu0 0.0
    %2601 = vmatprep.subr.mxu0 0.0
    %2602 = vmatpush1.msra.mxu0 0.0
    %2603 = vmatprep.subr.mxu0 0.0
    %2604 = vmatpush1.msra.mxu0 0.0
    %2605 = vmatprep.subr.mxu0 0.0
    %2606 = vmatpush1.msra.mxu0 0.0
    %2607 = vmatprep.subr.mxu0 0.0
    %2608 = vmatpush1.msra.mxu0 0.0
    %2609 = vmatprep.subr.mxu0 0.0
    %2610 = vmatpush1.msra.mxu0 0.0
    %2611 = vmatprep.subr.mxu0 0.0
    %2612 = vmatpush1.msra.mxu0 0.0
    %2613 = vmatprep.subr.mxu0 0.0
    %2614 = vmatpush1.msra.mxu0 0.0
    %2615 = vmatprep.subr.mxu0 0.0
    %2616 = vmatpush1.msra.mxu0 0.0
    %2617 = vmatprep.subr.mxu0 0.0
    %2618 = vmatpush1.msra.mxu0 0.0
    %2619 = vmatprep.subr.mxu0 0.0
    %2620 = vmatpush1.msra.mxu0 0.0
    %2621 = vmatprep.subr.mxu0 0.0
    %2622 = vmatpush1.msra.mxu0 0.0
    %2623 = vmatprep.subr.mxu0 0.0
    %2624 = vmatpush1.msra.mxu0 0.0
    %2625 = vmatprep.mubr.f32.mxu0 0.0
    %2626 = vmatmul.mubr.f32.gmra.mrb[0].mxu0 %v2147
    %v2627 = vpop.f32.mrb[0].mxu0
    %v2628 = vadd.f32 0.0, %v2627
    %v2629 = vpop.f32.mrb[0].mxu0
    %v2630 = vadd.f32 0.0, %v2629
    %2631 = vdwg.mxu0
    %2632 = vmatprep.subr.mxu0 %v1272
    %2633 = vmatpush1.msra.mxu0 %v1271
    %2634 = vmatprep.subr.mxu0 %v1276
    %2635 = vmatpush1.msra.mxu0 %v1275
    %2636 = vmatprep.subr.mxu0 %v1280
    %2637 = vmatpush1.msra.mxu0 %v1279
    %2638 = vmatprep.subr.mxu0 %v1284
    %2639 = vmatpush1.msra.mxu0 %v1283
    %2640 = vmatprep.subr.mxu0 %v1288
    %2641 = vmatpush1.msra.mxu0 %v1287
    %2642 = vmatprep.subr.mxu0 %v1292
    %2643 = vmatpush1.msra.mxu0 %v1291
    %2644 = vmatprep.subr.mxu0 %v1296
    %2645 = vmatpush1.msra.mxu0 %v1295
    %2646 = vmatprep.subr.mxu0 %v1300
    %2647 = vmatpush1.msra.mxu0 %v1299
    %2648 = vmatprep.subr.mxu0 %v1304
    %2649 = vmatpush1.msra.mxu0 %v1303
    %2650 = vmatprep.subr.mxu0 %v1308
    %2651 = vmatpush1.msra.mxu0 %v1307
    %2652 = vmatprep.subr.mxu0 %v1312
    %2653 = vmatpush1.msra.mxu0 %v1311
    %2654 = vmatprep.subr.mxu0 %v1316
    %2655 = vmatpush1.msra.mxu0 %v1315
    %2656 = vmatprep.subr.mxu0 %v1320
    %2657 = vmatpush1.msra.mxu0 %v1319
    %2658 = vmatprep.subr.mxu0 %v1324
    %2659 = vmatpush1.msra.mxu0 %v1323
    %2660 = vmatprep.subr.mxu0 %v1328
    %2661 = vmatpush1.msra.mxu0 %v1327
    %2662 = vmatprep.subr.mxu0 %v1332
    %2663 = vmatpush1.msra.mxu0 %v1331
    %2664 = vmatprep.subr.mxu0 0.0
    %2665 = vmatpush1.msra.mxu0 0.0
    %2666 = vmatprep.subr.mxu0 0.0
    %2667 = vmatpush1.msra.mxu0 0.0
    %2668 = vmatprep.subr.mxu0 0.0
    %2669 = vmatpush1.msra.mxu0 0.0
    %2670 = vmatprep.subr.mxu0 0.0
    %2671 = vmatpush1.msra.mxu0 0.0
    %2672 = vmatprep.subr.mxu0 0.0
    %2673 = vmatpush1.msra.mxu0 0.0
    %2674 = vmatprep.subr.mxu0 0.0
    %2675 = vmatpush1.msra.mxu0 0.0
    %2676 = vmatprep.subr.mxu0 0.0
    %2677 = vmatpush1.msra.mxu0 0.0
    %2678 = vmatprep.subr.mxu0 0.0
    %2679 = vmatpush1.msra.mxu0 0.0
    %2680 = vmatprep.subr.mxu0 0.0
    %2681 = vmatpush1.msra.mxu0 0.0
    %2682 = vmatprep.subr.mxu0 0.0
    %2683 = vmatpush1.msra.mxu0 0.0
    %2684 = vmatprep.subr.mxu0 0.0
    %2685 = vmatpush1.msra.mxu0 0.0
    %2686 = vmatprep.subr.mxu0 0.0
    %2687 = vmatpush1.msra.mxu0 0.0
    %2688 = vmatprep.subr.mxu0 0.0
    %2689 = vmatpush1.msra.mxu0 0.0
    %2690 = vmatprep.subr.mxu0 0.0
    %2691 = vmatpush1.msra.mxu0 0.0
    %2692 = vmatprep.subr.mxu0 0.0
    %2693 = vmatpush1.msra.mxu0 0.0
    %2694 = vmatprep.subr.mxu0 0.0
    %2695 = vmatpush1.msra.mxu0 0.0
    %2696 = vmatprep.mubr.f32.mxu0 0.0
    %2697 = vmatmul.mubr.f32.gmra.mrb[0].mxu0 %v2147
    %v2698 = vpop.f32.mrb[0].mxu0
    %v2699 = vadd.f32 0.0, %v2698
    %v2700 = vpop.f32.mrb[0].mxu0
    %v2701 = vadd.f32 0.0, %v2700
    %2702 = vdwg.mxu0
    %2703 = vmatprep.subr.mxu0 %v1334
    %2704 = vmatpush1.msra.mxu0 %v1333
    %2705 = vmatprep.subr.mxu0 %v1338
    %2706 = vmatpush1.msra.mxu0 %v1337
    %2707 = vmatprep.subr.mxu0 %v1342
    %2708 = vmatpush1.msra.mxu0 %v1341
    %2709 = vmatprep.subr.mxu0 %v1346
    %2710 = vmatpush1.msra.mxu0 %v1345
    %2711 = vmatprep.subr.mxu0 %v1350
    %2712 = vmatpush1.msra.mxu0 %v1349
    %2713 = vmatprep.subr.mxu0 %v1354
    %2714 = vmatpush1.msra.mxu0 %v1353
    %2715 = vmatprep.subr.mxu0 %v1358
    %2716 = vmatpush1.msra.mxu0 %v1357
    %2717 = vmatprep.subr.mxu0 %v1362
    %2718 = vmatpush1.msra.mxu0 %v1361
    %2719 = vmatprep.subr.mxu0 %v1366
    %2720 = vmatpush1.msra.mxu0 %v1365
    %2721 = vmatprep.subr.mxu0 %v1370
    %2722 = vmatpush1.msra.mxu0 %v1369
    %2723 = vmatprep.subr.mxu0 %v1374
    %2724 = vmatpush1.msra.mxu0 %v1373
    %2725 = vmatprep.subr.mxu0 %v1378
    %2726 = vmatpush1.msra.mxu0 %v1377
    %2727 = vmatprep.subr.mxu0 %v1382
    %2728 = vmatpush1.msra.mxu0 %v1381
    %2729 = vmatprep.subr.mxu0 %v1386
    %2730 = vmatpush1.msra.mxu0 %v1385
    %2731 = vmatprep.subr.mxu0 %v1390
    %2732 = vmatpush1.msra.mxu0 %v1389
    %2733 = vmatprep.subr.mxu0 %v1394
    %2734 = vmatpush1.msra.mxu0 %v1393
    %2735 = vmatprep.subr.mxu0 %v1398
    %2736 = vmatpush1.msra.mxu0 %v1397
    %2737 = vmatprep.subr.mxu0 %v1402
    %2738 = vmatpush1.msra.mxu0 %v1401
    %2739 = vmatprep.subr.mxu0 %v1406
    %2740 = vmatpush1.msra.mxu0 %v1405
    %2741 = vmatprep.subr.mxu0 %v1410
    %2742 = vmatpush1.msra.mxu0 %v1409
    %2743 = vmatprep.subr.mxu0 %v1414
    %2744 = vmatpush1.msra.mxu0 %v1413
    %2745 = vmatprep.subr.mxu0 %v1418
    %2746 = vmatpush1.msra.mxu0 %v1417
    %2747 = vmatprep.subr.mxu0 %v1422
    %2748 = vmatpush1.msra.mxu0 %v1421
    %2749 = vmatprep.subr.mxu0 %v1426
    %2750 = vmatpush1.msra.mxu0 %v1425
    %2751 = vmatprep.subr.mxu0 %v1430
    %2752 = vmatpush1.msra.mxu0 %v1429
    %2753 = vmatprep.subr.mxu0 %v1434
    %2754 = vmatpush1.msra.mxu0 %v1433
    %2755 = vmatprep.subr.mxu0 %v1438
    %2756 = vmatpush1.msra.mxu0 %v1437
    %2757 = vmatprep.subr.mxu0 %v1442
    %2758 = vmatpush1.msra.mxu0 %v1441
    %2759 = vmatprep.subr.mxu0 %v1446
    %2760 = vmatpush1.msra.mxu0 %v1445
    %2761 = vmatprep.subr.mxu0 %v1450
    %2762 = vmatpush1.msra.mxu0 %v1449
    %2763 = vmatprep.subr.mxu0 %v1454
    %2764 = vmatpush1.msra.mxu0 %v1453
    %2765 = vmatprep.subr.mxu0 %v1458
    %2766 = vmatpush1.msra.mxu0 %v1457
    %2767 = vmatprep.mubr.f32.mxu0 %v2560
    %2768 = vmatmul.mubr.f32.gmra.mrb[0].mxu0 %v2559
    %v2769 = vpop.f32.mrb[0].mxu0
    %v2770 = vadd.f32 %v1967, %v2769
    %v2771 = vpop.f32.mrb[0].mxu0
    %v2772 = vadd.f32 %v1971, %v2771
    %2773 = vdwg.mxu0
    %2774 = vmatprep.subr.mxu0 %v1336
    %2775 = vmatpush1.msra.mxu0 %v1335
    %2776 = vmatprep.subr.mxu0 %v1340
    %2777 = vmatpush1.msra.mxu0 %v1339
    %2778 = vmatprep.subr.mxu0 %v1344
    %2779 = vmatpush1.msra.mxu0 %v1343
    %2780 = vmatprep.subr.mxu0 %v1348
    %2781 = vmatpush1.msra.mxu0 %v1347
    %2782 = vmatprep.subr.mxu0 %v1352
    %2783 = vmatpush1.msra.mxu0 %v1351
    %2784 = vmatprep.subr.mxu0 %v1356
    %2785 = vmatpush1.msra.mxu0 %v1355
    %2786 = vmatprep.subr.mxu0 %v1360
    %2787 = vmatpush1.msra.mxu0 %v1359
    %2788 = vmatprep.subr.mxu0 %v1364
    %2789 = vmatpush1.msra.mxu0 %v1363
    %2790 = vmatprep.subr.mxu0 %v1368
    %2791 = vmatpush1.msra.mxu0 %v1367
    %2792 = vmatprep.subr.mxu0 %v1372
    %2793 = vmatpush1.msra.mxu0 %v1371
    %2794 = vmatprep.subr.mxu0 %v1376
    %2795 = vmatpush1.msra.mxu0 %v1375
    %2796 = vmatprep.subr.mxu0 %v1380
    %2797 = vmatpush1.msra.mxu0 %v1379
    %2798 = vmatprep.subr.mxu0 %v1384
    %2799 = vmatpush1.msra.mxu0 %v1383
    %2800 = vmatprep.subr.mxu0 %v1388
    %2801 = vmatpush1.msra.mxu0 %v1387
    %2802 = vmatprep.subr.mxu0 %v1392
    %2803 = vmatpush1.msra.mxu0 %v1391
    %2804 = vmatprep.subr.mxu0 %v1396
    %2805 = vmatpush1.msra.mxu0 %v1395
    %2806 = vmatprep.subr.mxu0 %v1400
    %2807 = vmatpush1.msra.mxu0 %v1399
    %2808 = vmatprep.subr.mxu0 %v1404
    %2809 = vmatpush1.msra.mxu0 %v1403
    %2810 = vmatprep.subr.mxu0 %v1408
    %2811 = vmatpush1.msra.mxu0 %v1407
    %2812 = vmatprep.subr.mxu0 %v1412
    %2813 = vmatpush1.msra.mxu0 %v1411
    %2814 = vmatprep.subr.mxu0 %v1416
    %2815 = vmatpush1.msra.mxu0 %v1415
    %2816 = vmatprep.subr.mxu0 %v1420
    %2817 = vmatpush1.msra.mxu0 %v1419
    %2818 = vmatprep.subr.mxu0 %v1424
    %2819 = vmatpush1.msra.mxu0 %v1423
    %2820 = vmatprep.subr.mxu0 %v1428
    %2821 = vmatpush1.msra.mxu0 %v1427
    %2822 = vmatprep.subr.mxu0 %v1432
    %2823 = vmatpush1.msra.mxu0 %v1431
    %2824 = vmatprep.subr.mxu0 %v1436
    %2825 = vmatpush1.msra.mxu0 %v1435
    %2826 = vmatprep.subr.mxu0 %v1440
    %2827 = vmatpush1.msra.mxu0 %v1439
    %2828 = vmatprep.subr.mxu0 %v1444
    %2829 = vmatpush1.msra.mxu0 %v1443
    %2830 = vmatprep.subr.mxu0 %v1448
    %2831 = vmatpush1.msra.mxu0 %v1447
    %2832 = vmatprep.subr.mxu0 %v1452
    %2833 = vmatpush1.msra.mxu0 %v1451
    %2834 = vmatprep.subr.mxu0 %v1456
    %2835 = vmatpush1.msra.mxu0 %v1455
    %2836 = vmatprep.subr.mxu0 %v1460
    %2837 = vmatpush1.msra.mxu0 %v1459
    %2838 = vmatprep.mubr.f32.mxu0 %v2560
    %2839 = vmatmul.mubr.f32.gmra.mrb[0].mxu0 %v2559
    %v2840 = vpop.f32.mrb[0].mxu0
    %v2841 = vadd.f32 %v1975, %v2840
    %v2842 = vpop.f32.mrb[0].mxu0
    %v2843 = vadd.f32 %v1979, %v2842
    %2844 = vdwg.mxu0
    %v2845 = vadd.f32 %v2770, %v2628
    %v2846 = vadd.f32 %v2772, %v2630
    %v2847 = vadd.f32 %v2841, %v2699
    %v2848 = vadd.f32 %v2843, %v2701
    %v2849 = vmul.f32 %v2845, 0.5
    %v2850 = vmul.f32 %v2846, 0.5
    %v2851 = vmul.f32 %v2847, 0.5
    %v2852 = vtanh.pop %v2849
    %v2853 = vtanh.pop %v2850
    %v2854 = vtanh.pop %v2851
    %v2855 = vmul.f32 %v2852, 0.5
    %v2856 = vmul.f32 %v2853, 0.5
    %v2857 = vmul.f32 %v2854, 0.5
    %v2858 = vadd.f32 %v2855, 0.5
    %v2859 = vadd.f32 %v2856, 0.5
    %v2860 = vadd.f32 %v2857, 0.5
    %v2861 = vtanh.pop %v2848
    %v2862 = vmul.f32 %v2859, %v2145
    %v2863 = vmul.f32 %v2858, %v2861
    %v2864 = vadd.f32 %v2862, %v2863
    %v2865 = vtanh.pop %v2864
    %v2866 = vmul.f32 %v2860, %v2865
    %2867 = vmatprep.subr.mxu0 0.0
    %2868 = vmatpush1.msra.mxu0 %v1462
    %2869 = vmatprep.subr.mxu0 0.0
    %2870 = vmatpush1.msra.mxu0 %v1463
    %2871 = vmatprep.subr.mxu0 0.0
    %2872 = vmatpush1.msra.mxu0 %v1464
    %2873 = vmatprep.subr.mxu0 0.0
    %2874 = vmatpush1.msra.mxu0 %v1465
    %2875 = vmatprep.subr.mxu0 0.0
    %2876 = vmatpush1.msra.mxu0 %v1466
    %2877 = vmatprep.subr.mxu0 0.0
    %2878 = vmatpush1.msra.mxu0 %v1467
    %2879 = vmatprep.subr.mxu0 0.0
    %2880 = vmatpush1.msra.mxu0 %v1468
    %2881 = vmatprep.subr.mxu0 0.0
    %2882 = vmatpush1.msra.mxu0 %v1469
    %2883 = vmatprep.subr.mxu0 0.0
    %2884 = vmatpush1.msra.mxu0 %v1470
    %2885 = vmatprep.subr.mxu0 0.0
    %2886 = vmatpush1.msra.mxu0 %v1471
    %2887 = vmatprep.subr.mxu0 0.0
    %2888 = vmatpush1.msra.mxu0 %v1472
    %2889 = vmatprep.subr.mxu0 0.0
    %2890 = vmatpush1.msra.mxu0 %v1473
    %2891 = vmatprep.subr.mxu0 0.0
    %2892 = vmatpush1.msra.mxu0 %v1474
    %2893 = vmatprep.subr.mxu0 0.0
    %2894 = vmatpush1.msra.mxu0 %v1475
    %2895 = vmatprep.subr.mxu0 0.0
    %2896 = vmatpush1.msra.mxu0 %v1476
    %2897 = vmatprep.subr.mxu0 0.0
    %2898 = vmatpush1.msra.mxu0 %v1477
    %2899 = vmatprep.subr.mxu0 0.0
    %2900 = vmatpush1.msra.mxu0 0.0
    %2901 = vmatprep.subr.mxu0 0.0
    %2902 = vmatpush1.msra.mxu0 0.0
    %2903 = vmatprep.subr.mxu0 0.0
    %2904 = vmatpush1.msra.mxu0 0.0
    %2905 = vmatprep.subr.mxu0 0.0
    %2906 = vmatpush1.msra.mxu0 0.0
    %2907 = vmatprep.subr.mxu0 0.0
    %2908 = vmatpush1.msra.mxu0 0.0
    %2909 = vmatprep.subr.mxu0 0.0
    %2910 = vmatpush1.msra.mxu0 0.0
    %2911 = vmatprep.subr.mxu0 0.0
    %2912 = vmatpush1.msra.mxu0 0.0
    %2913 = vmatprep.subr.mxu0 0.0
    %2914 = vmatpush1.msra.mxu0 0.0
    %2915 = vmatprep.subr.mxu0 0.0
    %2916 = vmatpush1.msra.mxu0 0.0
    %2917 = vmatprep.subr.mxu0 0.0
    %2918 = vmatpush1.msra.mxu0 0.0
    %2919 = vmatprep.subr.mxu0 0.0
    %2920 = vmatpush1.msra.mxu0 0.0
    %2921 = vmatprep.subr.mxu0 0.0
    %2922 = vmatpush1.msra.mxu0 0.0
    %2923 = vmatprep.subr.mxu0 0.0
    %2924 = vmatpush1.msra.mxu0 0.0
    %2925 = vmatprep.subr.mxu0 0.0
    %2926 = vmatpush1.msra.mxu0 0.0
    %2927 = vmatprep.subr.mxu0 0.0
    %2928 = vmatpush1.msra.mxu0 0.0
    %2929 = vmatprep.subr.mxu0 0.0
    %2930 = vmatpush1.msra.mxu0 0.0
    %2931 = vmatprep.mubr.f32.mxu0 0.0
    %2932 = vmatmul.mubr.f32.gmra.mrb[0].mxu0 %v2866
    %v2933 = vpop.f32.mrb[0].mxu0
    %v2934 = vadd.f32 %v2152, %v2933
    %v2935 = vpop.f32.mrb[0].mxu0
    %2936 = vdwg.mxu0
    %2937 = vst [vmem:[%s14 + $0x8] sm:$0xff] %v2934
    %2938 = vmatprep.subr.mxu0 %v1014
    %2939 = vmatpush1.msra.mxu0 %v1013
    %2940 = vmatprep.subr.mxu0 %v1022
    %2941 = vmatpush1.msra.mxu0 %v1021
    %2942 = vmatprep.subr.mxu0 %v1030
    %2943 = vmatpush1.msra.mxu0 %v1029
    %2944 = vmatprep.subr.mxu0 %v1038
    %2945 = vmatpush1.msra.mxu0 %v1037
    %2946 = vmatprep.subr.mxu0 %v1046
    %2947 = vmatpush1.msra.mxu0 %v1045
    %2948 = vmatprep.subr.mxu0 %v1054
    %2949 = vmatpush1.msra.mxu0 %v1053
    %2950 = vmatprep.subr.mxu0 %v1062
    %2951 = vmatpush1.msra.mxu0 %v1061
    %2952 = vmatprep.subr.mxu0 %v1070
    %2953 = vmatpush1.msra.mxu0 %v1069
    %2954 = vmatprep.subr.mxu0 %v1078
    %2955 = vmatpush1.msra.mxu0 %v1077
    %2956 = vmatprep.subr.mxu0 %v1086
    %2957 = vmatpush1.msra.mxu0 %v1085
    %2958 = vmatprep.subr.mxu0 %v1094
    %2959 = vmatpush1.msra.mxu0 %v1093
    %2960 = vmatprep.subr.mxu0 %v1102
    %2961 = vmatpush1.msra.mxu0 %v1101
    %2962 = vmatprep.subr.mxu0 %v1110
    %2963 = vmatpush1.msra.mxu0 %v1109
    %2964 = vmatprep.subr.mxu0 %v1118
    %2965 = vmatpush1.msra.mxu0 %v1117
    %2966 = vmatprep.subr.mxu0 %v1126
    %2967 = vmatpush1.msra.mxu0 %v1125
    %2968 = vmatprep.subr.mxu0 %v1134
    %2969 = vmatpush1.msra.mxu0 %v1133
    %2970 = vmatprep.subr.mxu0 %v1142
    %2971 = vmatpush1.msra.mxu0 %v1141
    %2972 = vmatprep.subr.mxu0 %v1150
    %2973 = vmatpush1.msra.mxu0 %v1149
    %2974 = vmatprep.subr.mxu0 %v1158
    %2975 = vmatpush1.msra.mxu0 %v1157
    %2976 = vmatprep.subr.mxu0 %v1166
    %2977 = vmatpush1.msra.mxu0 %v1165
    %2978 = vmatprep.subr.mxu0 %v1174
    %2979 = vmatpush1.msra.mxu0 %v1173
    %2980 = vmatprep.subr.mxu0 %v1182
    %2981 = vmatpush1.msra.mxu0 %v1181
    %2982 = vmatprep.subr.mxu0 %v1190
    %2983 = vmatpush1.msra.mxu0 %v1189
    %2984 = vmatprep.subr.mxu0 %v1198
    %2985 = vmatpush1.msra.mxu0 %v1197
    %2986 = vmatprep.subr.mxu0 %v1206
    %2987 = vmatpush1.msra.mxu0 %v1205
    %2988 = vmatprep.subr.mxu0 %v1214
    %2989 = vmatpush1.msra.mxu0 %v1213
    %2990 = vmatprep.subr.mxu0 %v1222
    %2991 = vmatpush1.msra.mxu0 %v1221
    %2992 = vmatprep.subr.mxu0 %v1230
    %2993 = vmatpush1.msra.mxu0 %v1229
    %2994 = vmatprep.subr.mxu0 %v1238
    %2995 = vmatpush1.msra.mxu0 %v1237
    %2996 = vmatprep.subr.mxu0 %v1246
    %2997 = vmatpush1.msra.mxu0 %v1245
    %2998 = vmatprep.subr.mxu0 %v1254
    %2999 = vmatpush1.msra.mxu0 %v1253
    %3000 = vmatprep.subr.mxu0 %v1262
    %3001 = vmatpush1.msra.mxu0 %v1261
    %3002 = vmatprep.mubr.f32.mxu0 %v2560
    %3003 = vmatmul.mubr.f32.gmra.mrb[0].mxu0 %v2559
    %v3004 = vpop.f32.mrb[0].mxu0
    %v3005 = vadd.f32 0.0, %v3004
    %v3006 = vpop.f32.mrb[0].mxu0
    %v3007 = vadd.f32 0.0, %v3006
    %3008 = vdwg.mxu0
    %3009 = vmatprep.subr.mxu0 %v1016
    %3010 = vmatpush1.msra.mxu0 %v1015
    %3011 = vmatprep.subr.mxu0 %v1024
    %3012 = vmatpush1.msra.mxu0 %v1023
    %3013 = vmatprep.subr.mxu0 %v1032
    %3014 = vmatpush1.msra.mxu0 %v1031
    %3015 = vmatprep.subr.mxu0 %v1040
    %3016 = vmatpush1.msra.mxu0 %v1039
    %3017 = vmatprep.subr.mxu0 %v1048
    %3018 = vmatpush1.msra.mxu0 %v1047
    %3019 = vmatprep.subr.mxu0 %v1056
    %3020 = vmatpush1.msra.mxu0 %v1055
    %3021 = vmatprep.subr.mxu0 %v1064
    %3022 = vmatpush1.msra.mxu0 %v1063
    %3023 = vmatprep.subr.mxu0 %v1072
    %3024 = vmatpush1.msra.mxu0 %v1071
    %3025 = vmatprep.subr.mxu0 %v1080
    %3026 = vmatpush1.msra.mxu0 %v1079
    %3027 = vmatprep.subr.mxu0 %v1088
    %3028 = vmatpush1.msra.mxu0 %v1087
    %3029 = vmatprep.subr.mxu0 %v1096
    %3030 = vmatpush1.msra.mxu0 %v1095
    %3031 = vmatprep.subr.mxu0 %v1104
    %3032 = vmatpush1.msra.mxu0 %v1103
    %3033 = vmatprep.subr.mxu0 %v1112
    %3034 = vmatpush1.msra.mxu0 %v1111
    %3035 = vmatprep.subr.mxu0 %v1120
    %3036 = vmatpush1.msra.mxu0 %v1119
    %3037 = vmatprep.subr.mxu0 %v1128
    %3038 = vmatpush1.msra.mxu0 %v1127
    %3039 = vmatprep.subr.mxu0 %v1136
    %3040 = vmatpush1.msra.mxu0 %v1135
    %3041 = vmatprep.subr.mxu0 %v1144
    %3042 = vmatpush1.msra.mxu0 %v1143
    %3043 = vmatprep.subr.mxu0 %v1152
    %3044 = vmatpush1.msra.mxu0 %v1151
    %3045 = vmatprep.subr.mxu0 %v1160
    %3046 = vmatpush1.msra.mxu0 %v1159
    %3047 = vmatprep.subr.mxu0 %v1168
    %3048 = vmatpush1.msra.mxu0 %v1167
    %3049 = vmatprep.subr.mxu0 %v1176
    %3050 = vmatpush1.msra.mxu0 %v1175
    %3051 = vmatprep.subr.mxu0 %v1184
    %3052 = vmatpush1.msra.mxu0 %v1183
    %3053 = vmatprep.subr.mxu0 %v1192
    %3054 = vmatpush1.msra.mxu0 %v1191
    %3055 = vmatprep.subr.mxu0 %v1200
    %3056 = vmatpush1.msra.mxu0 %v1199
    %3057 = vmatprep.subr.mxu0 %v1208
    %3058 = vmatpush1.msra.mxu0 %v1207
    %3059 = vmatprep.subr.mxu0 %v1216
    %3060 = vmatpush1.msra.mxu0 %v1215
    %3061 = vmatprep.subr.mxu0 %v1224
    %3062 = vmatpush1.msra.mxu0 %v1223
    %3063 = vmatprep.subr.mxu0 %v1232
    %3064 = vmatpush1.msra.mxu0 %v1231
    %3065 = vmatprep.subr.mxu0 %v1240
    %3066 = vmatpush1.msra.mxu0 %v1239
    %3067 = vmatprep.subr.mxu0 %v1248
    %3068 = vmatpush1.msra.mxu0 %v1247
    %3069 = vmatprep.subr.mxu0 %v1256
    %3070 = vmatpush1.msra.mxu0 %v1255
    %3071 = vmatprep.subr.mxu0 %v1264
    %3072 = vmatpush1.msra.mxu0 %v1263
    %3073 = vmatprep.mubr.f32.mxu0 %v2560
    %3074 = vmatmul.mubr.f32.gmra.mrb[0].mxu0 %v2559
    %v3075 = vpop.f32.mrb[0].mxu0
    %v3076 = vadd.f32 0.0, %v3075
    %v3077 = vpop.f32.mrb[0].mxu0
    %v3078 = vadd.f32 0.0, %v3077
    %3079 = vdwg.mxu0
    %3080 = vmatprep.subr.mxu0 %v1018
    %3081 = vmatpush1.msra.mxu0 %v1017
    %3082 = vmatprep.subr.mxu0 %v1026
    %3083 = vmatpush1.msra.mxu0 %v1025
    %3084 = vmatprep.subr.mxu0 %v1034
    %3085 = vmatpush1.msra.mxu0 %v1033
    %3086 = vmatprep.subr.mxu0 %v1042
    %3087 = vmatpush1.msra.mxu0 %v1041
    %3088 = vmatprep.subr.mxu0 %v1050
    %3089 = vmatpush1.msra.mxu0 %v1049
    %3090 = vmatprep.subr.mxu0 %v1058
    %3091 = vmatpush1.msra.mxu0 %v1057
    %3092 = vmatprep.subr.mxu0 %v1066
    %3093 = vmatpush1.msra.mxu0 %v1065
    %3094 = vmatprep.subr.mxu0 %v1074
    %3095 = vmatpush1.msra.mxu0 %v1073
    %3096 = vmatprep.subr.mxu0 %v1082
    %3097 = vmatpush1.msra.mxu0 %v1081
    %3098 = vmatprep.subr.mxu0 %v1090
    %3099 = vmatpush1.msra.mxu0 %v1089
    %3100 = vmatprep.subr.mxu0 %v1098
    %3101 = vmatpush1.msra.mxu0 %v1097
    %3102 = vmatprep.subr.mxu0 %v1106
    %3103 = vmatpush1.msra.mxu0 %v1105
    %3104 = vmatprep.subr.mxu0 %v1114
    %3105 = vmatpush1.msra.mxu0 %v1113
    %3106 = vmatprep.subr.mxu0 %v1122
    %3107 = vmatpush1.msra.mxu0 %v1121
    %3108 = vmatprep.subr.mxu0 %v1130
    %3109 = vmatpush1.msra.mxu0 %v1129
    %3110 = vmatprep.subr.mxu0 %v1138
    %3111 = vmatpush1.msra.mxu0 %v1137
    %3112 = vmatprep.subr.mxu0 %v1146
    %3113 = vmatpush1.msra.mxu0 %v1145
    %3114 = vmatprep.subr.mxu0 %v1154
    %3115 = vmatpush1.msra.mxu0 %v1153
    %3116 = vmatprep.subr.mxu0 %v1162
    %3117 = vmatpush1.msra.mxu0 %v1161
    %3118 = vmatprep.subr.mxu0 %v1170
    %3119 = vmatpush1.msra.mxu0 %v1169
    %3120 = vmatprep.subr.mxu0 %v1178
    %3121 = vmatpush1.msra.mxu0 %v1177
    %3122 = vmatprep.subr.mxu0 %v1186
    %3123 = vmatpush1.msra.mxu0 %v1185
    %3124 = vmatprep.subr.mxu0 %v1194
    %3125 = vmatpush1.msra.mxu0 %v1193
    %3126 = vmatprep.subr.mxu0 %v1202
    %3127 = vmatpush1.msra.mxu0 %v1201
    %3128 = vmatprep.subr.mxu0 %v1210
    %3129 = vmatpush1.msra.mxu0 %v1209
    %3130 = vmatprep.subr.mxu0 %v1218
    %3131 = vmatpush1.msra.mxu0 %v1217
    %3132 = vmatprep.subr.mxu0 %v1226
    %3133 = vmatpush1.msra.mxu0 %v1225
    %3134 = vmatprep.subr.mxu0 %v1234
    %3135 = vmatpush1.msra.mxu0 %v1233
    %3136 = vmatprep.subr.mxu0 %v1242
    %3137 = vmatpush1.msra.mxu0 %v1241
    %3138 = vmatprep.subr.mxu0 %v1250
    %3139 = vmatpush1.msra.mxu0 %v1249
    %3140 = vmatprep.subr.mxu0 %v1258
    %3141 = vmatpush1.msra.mxu0 %v1257
    %3142 = vmatprep.subr.mxu0 %v1266
    %3143 = vmatpush1.msra.mxu0 %v1265
    %3144 = vmatprep.mubr.f32.mxu0 %v2560
    %3145 = vmatmul.mubr.f32.gmra.mrb[0].mxu0 %v2559
    %v3146 = vpop.f32.mrb[0].mxu0
    %v3147 = vadd.f32 0.0, %v3146
    %v3148 = vpop.f32.mrb[0].mxu0
    %v3149 = vadd.f32 0.0, %v3148
    %3150 = vdwg.mxu0
    %3151 = vmatprep.subr.mxu0 %v1020
    %3152 = vmatpush1.msra.mxu0 %v1019
    %3153 = vmatprep.subr.mxu0 %v1028
    %3154 = vmatpush1.msra.mxu0 %v1027
    %3155 = vmatprep.subr.mxu0 %v1036
    %3156 = vmatpush1.msra.mxu0 %v1035
    %3157 = vmatprep.subr.mxu0 %v1044
    %3158 = vmatpush1.msra.mxu0 %v1043
    %3159 = vmatprep.subr.mxu0 %v1052
    %3160 = vmatpush1.msra.mxu0 %v1051
    %3161 = vmatprep.subr.mxu0 %v1060
    %3162 = vmatpush1.msra.mxu0 %v1059
    %3163 = vmatprep.subr.mxu0 %v1068
    %3164 = vmatpush1.msra.mxu0 %v1067
    %3165 = vmatprep.subr.mxu0 %v1076
    %3166 = vmatpush1.msra.mxu0 %v1075
    %3167 = vmatprep.subr.mxu0 %v1084
    %3168 = vmatpush1.msra.mxu0 %v1083
    %3169 = vmatprep.subr.mxu0 %v1092
    %3170 = vmatpush1.msra.mxu0 %v1091
    %3171 = vmatprep.subr.mxu0 %v1100
    %3172 = vmatpush1.msra.mxu0 %v1099
    %3173 = vmatprep.subr.mxu0 %v1108
    %3174 = vmatpush1.msra.mxu0 %v1107
    %3175 = vmatprep.subr.mxu0 %v1116
    %3176 = vmatpush1.msra.mxu0 %v1115
    %3177 = vmatprep.subr.mxu0 %v1124
    %3178 = vmatpush1.msra.mxu0 %v1123
    %3179 = vmatprep.subr.mxu0 %v1132
    %3180 = vmatpush1.msra.mxu0 %v1131
    %3181 = vmatprep.subr.mxu0 %v1140
    %3182 = vmatpush1.msra.mxu0 %v1139
    %3183 = vmatprep.subr.mxu0 %v1148
    %3184 = vmatpush1.msra.mxu0 %v1147
    %3185 = vmatprep.subr.mxu0 %v1156
    %3186 = vmatpush1.msra.mxu0 %v1155
    %3187 = vmatprep.subr.mxu0 %v1164
    %3188 = vmatpush1.msra.mxu0 %v1163
    %3189 = vmatprep.subr.mxu0 %v1172
    %3190 = vmatpush1.msra.mxu0 %v1171
    %3191 = vmatprep.subr.mxu0 %v1180
    %3192 = vmatpush1.msra.mxu0 %v1179
    %3193 = vmatprep.subr.mxu0 %v1188
    %3194 = vmatpush1.msra.mxu0 %v1187
    %3195 = vmatprep.subr.mxu0 %v1196
    %3196 = vmatpush1.msra.mxu0 %v1195
    %3197 = vmatprep.subr.mxu0 %v1204
    %3198 = vmatpush1.msra.mxu0 %v1203
    %3199 = vmatprep.subr.mxu0 %v1212
    %3200 = vmatpush1.msra.mxu0 %v1211
    %3201 = vmatprep.subr.mxu0 %v1220
    %3202 = vmatpush1.msra.mxu0 %v1219
    %3203 = vmatprep.subr.mxu0 %v1228
    %3204 = vmatpush1.msra.mxu0 %v1227
    %3205 = vmatprep.subr.mxu0 %v1236
    %3206 = vmatpush1.msra.mxu0 %v1235
    %3207 = vmatprep.subr.mxu0 %v1244
    %3208 = vmatpush1.msra.mxu0 %v1243
    %3209 = vmatprep.subr.mxu0 %v1252
    %3210 = vmatpush1.msra.mxu0 %v1251
    %3211 = vmatprep.subr.mxu0 %v1260
    %3212 = vmatpush1.msra.mxu0 %v1259
    %3213 = vmatprep.subr.mxu0 %v1268
    %3214 = vmatpush1.msra.mxu0 %v1267
    %3215 = vmatprep.mubr.f32.mxu0 %v2560
    %3216 = vmatmul.mubr.f32.gmra.mrb[0].mxu0 %v2559
    %v3217 = vpop.f32.mrb[0].mxu0
    %v3218 = vadd.f32 0.0, %v3217
    %v3219 = vpop.f32.mrb[0].mxu0
    %v3220 = vadd.f32 0.0, %v3219
    %3221 = vdwg.mxu0
    %v3222 = vld [vmem:[#allocation2 + $0x80] sm:$0xff]
    %v3223 = vld [vmem:[#allocation2 + $0x88] sm:$0xff]
    %v3224 = vld [vmem:[#allocation2 + $0x90] sm:$0xff]
    %v3225 = vld [vmem:[#allocation2 + $0x98] sm:$0xff]
    %v3226 = vld [vmem:[#allocation2 + $0xa0] sm:$0xff]
    %v3227 = vld [vmem:[#allocation2 + $0xa8] sm:$0xff]
    %v3228 = vld [vmem:[#allocation2 + $0xb0] sm:$0xff]
    %v3229 = vld [vmem:[#allocation2 + $0xb8] sm:$0xff]
    %v3230 = vadd.f32 %v3222, %v3005
    %v3231 = vadd.f32 %v3223, %v3007
    %v3232 = vadd.f32 %v3224, %v3076
    %v3233 = vadd.f32 %v3225, %v3078
    %v3234 = vadd.f32 %v3226, %v3147
    %v3235 = vadd.f32 %v3227, %v3149
    %v3236 = vadd.f32 %v3228, %v3218
    %v3237 = vadd.f32 %v3229, %v3220
    %v3238 = vmul.f32 %v3230, 0.5
    %v3239 = vmul.f32 %v3231, 0.5
    %v3240 = vmul.f32 %v3232, 0.5
    %v3241 = vmul.f32 %v3233, 0.5
    %v3242 = vmul.f32 %v3234, 0.5
    %v3243 = vmul.f32 %v3235, 0.5
    %v3244 = vtanh.pop %v3238
    %v3245 = vtanh.pop %v3239
    %v3246 = vtanh.pop %v3240
    %v3247 = vtanh.pop %v3241
    %v3248 = vtanh.pop %v3242
    %v3249 = vtanh.pop %v3243
    %v3250 = vmul.f32 %v3244, 0.5
    %v3251 = vmul.f32 %v3245, 0.5
    %v3252 = vmul.f32 %v3246, 0.5
    %v3253 = vmul.f32 %v3247, 0.5
    %v3254 = vmul.f32 %v3248, 0.5
    %v3255 = vmul.f32 %v3249, 0.5
    %v3256 = vadd.f32 %v3250, 0.5
    %v3257 = vadd.f32 %v3251, 0.5
    %v3258 = vadd.f32 %v3252, 0.5
    %v3259 = vadd.f32 %v3253, 0.5
    %v3260 = vadd.f32 %v3254, 0.5
    %v3261 = vadd.f32 %v3255, 0.5
    %v3262 = vtanh.pop %v3236
    %v3263 = vtanh.pop %v3237
    %v3264 = vmul.f32 %v3258, %v2555
    %v3265 = vmul.f32 %v3259, %v2556
    %v3266 = vmul.f32 %v3256, %v3262
    %v3267 = vmul.f32 %v3257, %v3263
    %v3268 = vadd.f32 %v3264, %v3266
    %v3269 = vadd.f32 %v3265, %v3267
    %v3270 = vtanh.pop %v3268
    %v3271 = vtanh.pop %v3269
    %v3272 = vmul.f32 %v3260, %v3270
    %v3273 = vmul.f32 %v3261, %v3271
    %3274 = vmatprep.subr.mxu0 %v1270
    %3275 = vmatpush1.msra.mxu0 %v1269
    %3276 = vmatprep.subr.mxu0 %v1274
    %3277 = vmatpush1.msra.mxu0 %v1273
    %3278 = vmatprep.subr.mxu0 %v1278
    %3279 = vmatpush1.msra.mxu0 %v1277
    %3280 = vmatprep.subr.mxu0 %v1282
    %3281 = vmatpush1.msra.mxu0 %v1281
    %3282 = vmatprep.subr.mxu0 %v1286
    %3283 = vmatpush1.msra.mxu0 %v1285
    %3284 = vmatprep.subr.mxu0 %v1290
    %3285 = vmatpush1.msra.mxu0 %v1289
    %3286 = vmatprep.subr.mxu0 %v1294
    %3287 = vmatpush1.msra.mxu0 %v1293
    %3288 = vmatprep.subr.mxu0 %v1298
    %3289 = vmatpush1.msra.mxu0 %v1297
    %3290 = vmatprep.subr.mxu0 %v1302
    %3291 = vmatpush1.msra.mxu0 %v1301
    %3292 = vmatprep.subr.mxu0 %v1306
    %3293 = vmatpush1.msra.mxu0 %v1305
    %3294 = vmatprep.subr.mxu0 %v1310
    %3295 = vmatpush1.msra.mxu0 %v1309
    %3296 = vmatprep.subr.mxu0 %v1314
    %3297 = vmatpush1.msra.mxu0 %v1313
    %3298 = vmatprep.subr.mxu0 %v1318
    %3299 = vmatpush1.msra.mxu0 %v1317
    %3300 = vmatprep.subr.mxu0 %v1322
    %3301 = vmatpush1.msra.mxu0 %v1321
    %3302 = vmatprep.subr.mxu0 %v1326
    %3303 = vmatpush1.msra.mxu0 %v1325
    %3304 = vmatprep.subr.mxu0 %v1330
    %3305 = vmatpush1.msra.mxu0 %v1329
    %3306 = vmatprep.subr.mxu0 0.0
    %3307 = vmatpush1.msra.mxu0 0.0
    %3308 = vmatprep.subr.mxu0 0.0
    %3309 = vmatpush1.msra.mxu0 0.0
    %3310 = vmatprep.subr.mxu0 0.0
    %3311 = vmatpush1.msra.mxu0 0.0
    %3312 = vmatprep.subr.mxu0 0.0
    %3313 = vmatpush1.msra.mxu0 0.0
    %3314 = vmatprep.subr.mxu0 0.0
    %3315 = vmatpush1.msra.mxu0 0.0
    %3316 = vmatprep.subr.mxu0 0.0
    %3317 = vmatpush1.msra.mxu0 0.0
    %3318 = vmatprep.subr.mxu0 0.0
    %3319 = vmatpush1.msra.mxu0 0.0
    %3320 = vmatprep.subr.mxu0 0.0
    %3321 = vmatpush1.msra.mxu0 0.0
    %3322 = vmatprep.subr.mxu0 0.0
    %3323 = vmatpush1.msra.mxu0 0.0
    %3324 = vmatprep.subr.mxu0 0.0
    %3325 = vmatpush1.msra.mxu0 0.0
    %3326 = vmatprep.subr.mxu0 0.0
    %3327 = vmatpush1.msra.mxu0 0.0
    %3328 = vmatprep.subr.mxu0 0.0
    %3329 = vmatpush1.msra.mxu0 0.0
    %3330 = vmatprep.subr.mxu0 0.0
    %3331 = vmatpush1.msra.mxu0 0.0
    %3332 = vmatprep.subr.mxu0 0.0
    %3333 = vmatpush1.msra.mxu0 0.0
    %3334 = vmatprep.subr.mxu0 0.0
    %3335 = vmatpush1.msra.mxu0 0.0
    %3336 = vmatprep.subr.mxu0 0.0
    %3337 = vmatpush1.msra.mxu0 0.0
    %3338 = vmatprep.mubr.f32.mxu0 0.0
    %3339 = vmatmul.mubr.f32.gmra.mrb[0].mxu0 %v2866
    %v3340 = vpop.f32.mrb[0].mxu0
    %v3341 = vadd.f32 0.0, %v3340
    %v3342 = vpop.f32.mrb[0].mxu0
    %v3343 = vadd.f32 0.0, %v3342
    %3344 = vdwg.mxu0
    %3345 = vmatprep.subr.mxu0 %v1272
    %3346 = vmatpush1.msra.mxu0 %v1271
    %3347 = vmatprep.subr.mxu0 %v1276
    %3348 = vmatpush1.msra.mxu0 %v1275
    %3349 = vmatprep.subr.mxu0 %v1280
    %3350 = vmatpush1.msra.mxu0 %v1279
    %3351 = vmatprep.subr.mxu0 %v1284
    %3352 = vmatpush1.msra.mxu0 %v1283
    %3353 = vmatprep.subr.mxu0 %v1288
    %3354 = vmatpush1.msra.mxu0 %v1287
    %3355 = vmatprep.subr.mxu0 %v1292
    %3356 = vmatpush1.msra.mxu0 %v1291
    %3357 = vmatprep.subr.mxu0 %v1296
    %3358 = vmatpush1.msra.mxu0 %v1295
    %3359 = vmatprep.subr.mxu0 %v1300
    %3360 = vmatpush1.msra.mxu0 %v1299
    %3361 = vmatprep.subr.mxu0 %v1304
    %3362 = vmatpush1.msra.mxu0 %v1303
    %3363 = vmatprep.subr.mxu0 %v1308
    %3364 = vmatpush1.msra.mxu0 %v1307
    %3365 = vmatprep.subr.mxu0 %v1312
    %3366 = vmatpush1.msra.mxu0 %v1311
    %3367 = vmatprep.subr.mxu0 %v1316
    %3368 = vmatpush1.msra.mxu0 %v1315
    %3369 = vmatprep.subr.mxu0 %v1320
    %3370 = vmatpush1.msra.mxu0 %v1319
    %3371 = vmatprep.subr.mxu0 %v1324
    %3372 = vmatpush1.msra.mxu0 %v1323
    %3373 = vmatprep.subr.mxu0 %v1328
    %3374 = vmatpush1.msra.mxu0 %v1327
    %3375 = vmatprep.subr.mxu0 %v1332
    %3376 = vmatpush1.msra.mxu0 %v1331
    %3377 = vmatprep.subr.mxu0 0.0
    %3378 = vmatpush1.msra.mxu0 0.0
    %3379 = vmatprep.subr.mxu0 0.0
    %3380 = vmatpush1.msra.mxu0 0.0
    %3381 = vmatprep.subr.mxu0 0.0
    %3382 = vmatpush1.msra.mxu0 0.0
    %3383 = vmatprep.subr.mxu0 0.0
    %3384 = vmatpush1.msra.mxu0 0.0
    %3385 = vmatprep.subr.mxu0 0.0
    %3386 = vmatpush1.msra.mxu0 0.0
    %3387 = vmatprep.subr.mxu0 0.0
    %3388 = vmatpush1.msra.mxu0 0.0
    %3389 = vmatprep.subr.mxu0 0.0
    %3390 = vmatpush1.msra.mxu0 0.0
    %3391 = vmatprep.subr.mxu0 0.0
    %3392 = vmatpush1.msra.mxu0 0.0
    %3393 = vmatprep.subr.mxu0 0.0
    %3394 = vmatpush1.msra.mxu0 0.0
    %3395 = vmatprep.subr.mxu0 0.0
    %3396 = vmatpush1.msra.mxu0 0.0
    %3397 = vmatprep.subr.mxu0 0.0
    %3398 = vmatpush1.msra.mxu0 0.0
    %3399 = vmatprep.subr.mxu0 0.0
    %3400 = vmatpush1.msra.mxu0 0.0
    %3401 = vmatprep.subr.mxu0 0.0
    %3402 = vmatpush1.msra.mxu0 0.0
    %3403 = vmatprep.subr.mxu0 0.0
    %3404 = vmatpush1.msra.mxu0 0.0
    %3405 = vmatprep.subr.mxu0 0.0
    %3406 = vmatpush1.msra.mxu0 0.0
    %3407 = vmatprep.subr.mxu0 0.0
    %3408 = vmatpush1.msra.mxu0 0.0
    %3409 = vmatprep.mubr.f32.mxu0 0.0
    %3410 = vmatmul.mubr.f32.gmra.mrb[0].mxu0 %v2866
    %v3411 = vpop.f32.mrb[0].mxu0
    %v3412 = vadd.f32 0.0, %v3411
    %v3413 = vpop.f32.mrb[0].mxu0
    %v3414 = vadd.f32 0.0, %v3413
    %3415 = vdwg.mxu0
    %3416 = vmatprep.subr.mxu0 %v1334
    %3417 = vmatpush1.msra.mxu0 %v1333
    %3418 = vmatprep.subr.mxu0 %v1338
    %3419 = vmatpush1.msra.mxu0 %v1337
    %3420 = vmatprep.subr.mxu0 %v1342
    %3421 = vmatpush1.msra.mxu0 %v1341
    %3422 = vmatprep.subr.mxu0 %v1346
    %3423 = vmatpush1.msra.mxu0 %v1345
    %3424 = vmatprep.subr.mxu0 %v1350
    %3425 = vmatpush1.msra.mxu0 %v1349
    %3426 = vmatprep.subr.mxu0 %v1354
    %3427 = vmatpush1.msra.mxu0 %v1353
    %3428 = vmatprep.subr.mxu0 %v1358
    %3429 = vmatpush1.msra.mxu0 %v1357
    %3430 = vmatprep.subr.mxu0 %v1362
    %3431 = vmatpush1.msra.mxu0 %v1361
    %3432 = vmatprep.subr.mxu0 %v1366
    %3433 = vmatpush1.msra.mxu0 %v1365
    %3434 = vmatprep.subr.mxu0 %v1370
    %3435 = vmatpush1.msra.mxu0 %v1369
    %3436 = vmatprep.subr.mxu0 %v1374
    %3437 = vmatpush1.msra.mxu0 %v1373
    %3438 = vmatprep.subr.mxu0 %v1378
    %3439 = vmatpush1.msra.mxu0 %v1377
    %3440 = vmatprep.subr.mxu0 %v1382
    %3441 = vmatpush1.msra.mxu0 %v1381
    %3442 = vmatprep.subr.mxu0 %v1386
    %3443 = vmatpush1.msra.mxu0 %v1385
    %3444 = vmatprep.subr.mxu0 %v1390
    %3445 = vmatpush1.msra.mxu0 %v1389
    %3446 = vmatprep.subr.mxu0 %v1394
    %3447 = vmatpush1.msra.mxu0 %v1393
    %3448 = vmatprep.subr.mxu0 %v1398
    %3449 = vmatpush1.msra.mxu0 %v1397
    %3450 = vmatprep.subr.mxu0 %v1402
    %3451 = vmatpush1.msra.mxu0 %v1401
    %3452 = vmatprep.subr.mxu0 %v1406
    %3453 = vmatpush1.msra.mxu0 %v1405
    %3454 = vmatprep.subr.mxu0 %v1410
    %3455 = vmatpush1.msra.mxu0 %v1409
    %3456 = vmatprep.subr.mxu0 %v1414
    %3457 = vmatpush1.msra.mxu0 %v1413
    %3458 = vmatprep.subr.mxu0 %v1418
    %3459 = vmatpush1.msra.mxu0 %v1417
    %3460 = vmatprep.subr.mxu0 %v1422
    %3461 = vmatpush1.msra.mxu0 %v1421
    %3462 = vmatprep.subr.mxu0 %v1426
    %3463 = vmatpush1.msra.mxu0 %v1425
    %3464 = vmatprep.subr.mxu0 %v1430
    %3465 = vmatpush1.msra.mxu0 %v1429
    %3466 = vmatprep.subr.mxu0 %v1434
    %3467 = vmatpush1.msra.mxu0 %v1433
    %3468 = vmatprep.subr.mxu0 %v1438
    %3469 = vmatpush1.msra.mxu0 %v1437
    %3470 = vmatprep.subr.mxu0 %v1442
    %3471 = vmatpush1.msra.mxu0 %v1441
    %3472 = vmatprep.subr.mxu0 %v1446
    %3473 = vmatpush1.msra.mxu0 %v1445
    %3474 = vmatprep.subr.mxu0 %v1450
    %3475 = vmatpush1.msra.mxu0 %v1449
    %3476 = vmatprep.subr.mxu0 %v1454
    %3477 = vmatpush1.msra.mxu0 %v1453
    %3478 = vmatprep.subr.mxu0 %v1458
    %3479 = vmatpush1.msra.mxu0 %v1457
    %3480 = vmatprep.mubr.f32.mxu0 %v3273
    %3481 = vmatmul.mubr.f32.gmra.mrb[0].mxu0 %v3272
    %v3482 = vpop.f32.mrb[0].mxu0
    %v3483 = vadd.f32 %v1967, %v3482
    %v3484 = vpop.f32.mrb[0].mxu0
    %v3485 = vadd.f32 %v1971, %v3484
    %3486 = vdwg.mxu0
    %3487 = vmatprep.subr.mxu0 %v1336
    %3488 = vmatpush1.msra.mxu0 %v1335
    %3489 = vmatprep.subr.mxu0 %v1340
    %3490 = vmatpush1.msra.mxu0 %v1339
    %3491 = vmatprep.subr.mxu0 %v1344
    %3492 = vmatpush1.msra.mxu0 %v1343
    %3493 = vmatprep.subr.mxu0 %v1348
    %3494 = vmatpush1.msra.mxu0 %v1347
    %3495 = vmatprep.subr.mxu0 %v1352
    %3496 = vmatpush1.msra.mxu0 %v1351
    %3497 = vmatprep.subr.mxu0 %v1356
    %3498 = vmatpush1.msra.mxu0 %v1355
    %3499 = vmatprep.subr.mxu0 %v1360
    %3500 = vmatpush1.msra.mxu0 %v1359
    %3501 = vmatprep.subr.mxu0 %v1364
    %3502 = vmatpush1.msra.mxu0 %v1363
    %3503 = vmatprep.subr.mxu0 %v1368
    %3504 = vmatpush1.msra.mxu0 %v1367
    %3505 = vmatprep.subr.mxu0 %v1372
    %3506 = vmatpush1.msra.mxu0 %v1371
    %3507 = vmatprep.subr.mxu0 %v1376
    %3508 = vmatpush1.msra.mxu0 %v1375
    %3509 = vmatprep.subr.mxu0 %v1380
    %3510 = vmatpush1.msra.mxu0 %v1379
    %3511 = vmatprep.subr.mxu0 %v1384
    %3512 = vmatpush1.msra.mxu0 %v1383
    %3513 = vmatprep.subr.mxu0 %v1388
    %3514 = vmatpush1.msra.mxu0 %v1387
    %3515 = vmatprep.subr.mxu0 %v1392
    %3516 = vmatpush1.msra.mxu0 %v1391
    %3517 = vmatprep.subr.mxu0 %v1396
    %3518 = vmatpush1.msra.mxu0 %v1395
    %3519 = vmatprep.subr.mxu0 %v1400
    %3520 = vmatpush1.msra.mxu0 %v1399
    %3521 = vmatprep.subr.mxu0 %v1404
    %3522 = vmatpush1.msra.mxu0 %v1403
    %3523 = vmatprep.subr.mxu0 %v1408
    %3524 = vmatpush1.msra.mxu0 %v1407
    %3525 = vmatprep.subr.mxu0 %v1412
    %3526 = vmatpush1.msra.mxu0 %v1411
    %3527 = vmatprep.subr.mxu0 %v1416
    %3528 = vmatpush1.msra.mxu0 %v1415
    %3529 = vmatprep.subr.mxu0 %v1420
    %3530 = vmatpush1.msra.mxu0 %v1419
    %3531 = vmatprep.subr.mxu0 %v1424
    %3532 = vmatpush1.msra.mxu0 %v1423
    %3533 = vmatprep.subr.mxu0 %v1428
    %3534 = vmatpush1.msra.mxu0 %v1427
    %3535 = vmatprep.subr.mxu0 %v1432
    %3536 = vmatpush1.msra.mxu0 %v1431
    %3537 = vmatprep.subr.mxu0 %v1436
    %3538 = vmatpush1.msra.mxu0 %v1435
    %3539 = vmatprep.subr.mxu0 %v1440
    %3540 = vmatpush1.msra.mxu0 %v1439
    %3541 = vmatprep.subr.mxu0 %v1444
    %3542 = vmatpush1.msra.mxu0 %v1443
    %3543 = vmatprep.subr.mxu0 %v1448
    %3544 = vmatpush1.msra.mxu0 %v1447
    %3545 = vmatprep.subr.mxu0 %v1452
    %3546 = vmatpush1.msra.mxu0 %v1451
    %3547 = vmatprep.subr.mxu0 %v1456
    %3548 = vmatpush1.msra.mxu0 %v1455
    %3549 = vmatprep.subr.mxu0 %v1460
    %3550 = vmatpush1.msra.mxu0 %v1459
    %3551 = vmatprep.mubr.f32.mxu0 %v3273
    %3552 = vmatmul.mubr.f32.gmra.mrb[0].mxu0 %v3272
    %v3553 = vpop.f32.mrb[0].mxu0
    %v3554 = vadd.f32 %v1975, %v3553
    %v3555 = vpop.f32.mrb[0].mxu0
    %v3556 = vadd.f32 %v1979, %v3555
    %3557 = vdwg.mxu0
    %v3558 = vadd.f32 %v3483, %v3341
    %v3559 = vadd.f32 %v3485, %v3343
    %v3560 = vadd.f32 %v3554, %v3412
    %v3561 = vadd.f32 %v3556, %v3414
    %v3562 = vmul.f32 %v3558, 0.5
    %v3563 = vmul.f32 %v3559, 0.5
    %v3564 = vmul.f32 %v3560, 0.5
    %v3565 = vtanh.pop %v3562
    %v3566 = vtanh.pop %v3563
    %v3567 = vtanh.pop %v3564
    %v3568 = vmul.f32 %v3565, 0.5
    %v3569 = vmul.f32 %v3566, 0.5
    %v3570 = vmul.f32 %v3567, 0.5
    %v3571 = vadd.f32 %v3568, 0.5
    %v3572 = vadd.f32 %v3569, 0.5
    %v3573 = vadd.f32 %v3570, 0.5
    %v3574 = vtanh.pop %v3561
    %v3575 = vmul.f32 %v3572, %v2864
    %v3576 = vmul.f32 %v3571, %v3574
    %v3577 = vadd.f32 %v3575, %v3576
    %v3578 = vtanh.pop %v3577
    %v3579 = vmul.f32 %v3573, %v3578
    %3580 = vmatprep.subr.mxu0 0.0
    %3581 = vmatpush1.msra.mxu0 %v1462
    %3582 = vmatprep.subr.mxu0 0.0
    %3583 = vmatpush1.msra.mxu0 %v1463
    %3584 = vmatprep.subr.mxu0 0.0
    %3585 = vmatpush1.msra.mxu0 %v1464
    %3586 = vmatprep.subr.mxu0 0.0
    %3587 = vmatpush1.msra.mxu0 %v1465
    %3588 = vmatprep.subr.mxu0 0.0
    %3589 = vmatpush1.msra.mxu0 %v1466
    %3590 = vmatprep.subr.mxu0 0.0
    %3591 = vmatpush1.msra.mxu0 %v1467
    %3592 = vmatprep.subr.mxu0 0.0
    %3593 = vmatpush1.msra.mxu0 %v1468
    %3594 = vmatprep.subr.mxu0 0.0
    %3595 = vmatpush1.msra.mxu0 %v1469
    %3596 = vmatprep.subr.mxu0 0.0
    %3597 = vmatpush1.msra.mxu0 %v1470
    %3598 = vmatprep.subr.mxu0 0.0
    %3599 = vmatpush1.msra.mxu0 %v1471
    %3600 = vmatprep.subr.mxu0 0.0
    %3601 = vmatpush1.msra.mxu0 %v1472
    %3602 = vmatprep.subr.mxu0 0.0
    %3603 = vmatpush1.msra.mxu0 %v1473
    %3604 = vmatprep.subr.mxu0 0.0
    %3605 = vmatpush1.msra.mxu0 %v1474
    %3606 = vmatprep.subr.mxu0 0.0
    %3607 = vmatpush1.msra.mxu0 %v1475
    %3608 = vmatprep.subr.mxu0 0.0
    %3609 = vmatpush1.msra.mxu0 %v1476
    %3610 = vmatprep.subr.mxu0 0.0
    %3611 = vmatpush1.msra.mxu0 %v1477
    %3612 = vmatprep.subr.mxu0 0.0
    %3613 = vmatpush1.msra.mxu0 0.0
    %3614 = vmatprep.subr.mxu0 0.0
    %3615 = vmatpush1.msra.mxu0 0.0
    %3616 = vmatprep.subr.mxu0 0.0
    %3617 = vmatpush1.msra.mxu0 0.0
    %3618 = vmatprep.subr.mxu0 0.0
    %3619 = vmatpush1.msra.mxu0 0.0
    %3620 = vmatprep.subr.mxu0 0.0
    %3621 = vmatpush1.msra.mxu0 0.0
    %3622 = vmatprep.subr.mxu0 0.0
    %3623 = vmatpush1.msra.mxu0 0.0
    %3624 = vmatprep.subr.mxu0 0.0
    %3625 = vmatpush1.msra.mxu0 0.0
    %3626 = vmatprep.subr.mxu0 0.0
    %3627 = vmatpush1.msra.mxu0 0.0
    %3628 = vmatprep.subr.mxu0 0.0
    %3629 = vmatpush1.msra.mxu0 0.0
    %3630 = vmatprep.subr.mxu0 0.0
    %3631 = vmatpush1.msra.mxu0 0.0
    %3632 = vmatprep.subr.mxu0 0.0
    %3633 = vmatpush1.msra.mxu0 0.0
    %3634 = vmatprep.subr.mxu0 0.0
    %3635 = vmatpush1.msra.mxu0 0.0
    %3636 = vmatprep.subr.mxu0 0.0
    %3637 = vmatpush1.msra.mxu0 0.0
    %3638 = vmatprep.subr.mxu0 0.0
    %3639 = vmatpush1.msra.mxu0 0.0
    %3640 = vmatprep.subr.mxu0 0.0
    %3641 = vmatpush1.msra.mxu0 0.0
    %3642 = vmatprep.subr.mxu0 0.0
    %3643 = vmatpush1.msra.mxu0 0.0
    %3644 = vmatprep.mubr.f32.mxu0 0.0
    %3645 = vmatmul.mubr.f32.gmra.mrb[0].mxu0 %v3579
    %v3646 = vpop.f32.mrb[0].mxu0
    %v3647 = vadd.f32 %v2152, %v3646
    %v3648 = vpop.f32.mrb[0].mxu0
    %3649 = vdwg.mxu0
    %3650 = vst [vmem:[%s14 + $0x10] sm:$0xff] %v3647
    %3651 = vmatprep.subr.mxu0 %v1014
    %3652 = vmatpush1.msra.mxu0 %v1013
    %3653 = vmatprep.subr.mxu0 %v1022
    %3654 = vmatpush1.msra.mxu0 %v1021
    %3655 = vmatprep.subr.mxu0 %v1030
    %3656 = vmatpush1.msra.mxu0 %v1029
    %3657 = vmatprep.subr.mxu0 %v1038
    %3658 = vmatpush1.msra.mxu0 %v1037
    %3659 = vmatprep.subr.mxu0 %v1046
    %3660 = vmatpush1.msra.mxu0 %v1045
    %3661 = vmatprep.subr.mxu0 %v1054
    %3662 = vmatpush1.msra.mxu0 %v1053
    %3663 = vmatprep.subr.mxu0 %v1062
    %3664 = vmatpush1.msra.mxu0 %v1061
    %3665 = vmatprep.subr.mxu0 %v1070
    %3666 = vmatpush1.msra.mxu0 %v1069
    %3667 = vmatprep.subr.mxu0 %v1078
    %3668 = vmatpush1.msra.mxu0 %v1077
    %3669 = vmatprep.subr.mxu0 %v1086
    %3670 = vmatpush1.msra.mxu0 %v1085
    %3671 = vmatprep.subr.mxu0 %v1094
    %3672 = vmatpush1.msra.mxu0 %v1093
    %3673 = vmatprep.subr.mxu0 %v1102
    %3674 = vmatpush1.msra.mxu0 %v1101
    %3675 = vmatprep.subr.mxu0 %v1110
    %3676 = vmatpush1.msra.mxu0 %v1109
    %3677 = vmatprep.subr.mxu0 %v1118
    %3678 = vmatpush1.msra.mxu0 %v1117
    %3679 = vmatprep.subr.mxu0 %v1126
    %3680 = vmatpush1.msra.mxu0 %v1125
    %3681 = vmatprep.subr.mxu0 %v1134
    %3682 = vmatpush1.msra.mxu0 %v1133
    %3683 = vmatprep.subr.mxu0 %v1142
    %3684 = vmatpush1.msra.mxu0 %v1141
    %3685 = vmatprep.subr.mxu0 %v1150
    %3686 = vmatpush1.msra.mxu0 %v1149
    %3687 = vmatprep.subr.mxu0 %v1158
    %3688 = vmatpush1.msra.mxu0 %v1157
    %3689 = vmatprep.subr.mxu0 %v1166
    %3690 = vmatpush1.msra.mxu0 %v1165
    %3691 = vmatprep.subr.mxu0 %v1174
    %3692 = vmatpush1.msra.mxu0 %v1173
    %3693 = vmatprep.subr.mxu0 %v1182
    %3694 = vmatpush1.msra.mxu0 %v1181
    %3695 = vmatprep.subr.mxu0 %v1190
    %3696 = vmatpush1.msra.mxu0 %v1189
    %3697 = vmatprep.subr.mxu0 %v1198
    %3698 = vmatpush1.msra.mxu0 %v1197
    %3699 = vmatprep.subr.mxu0 %v1206
    %3700 = vmatpush1.msra.mxu0 %v1205
    %3701 = vmatprep.subr.mxu0 %v1214
    %3702 = vmatpush1.msra.mxu0 %v1213
    %3703 = vmatprep.subr.mxu0 %v1222
    %3704 = vmatpush1.msra.mxu0 %v1221
    %3705 = vmatprep.subr.mxu0 %v1230
    %3706 = vmatpush1.msra.mxu0 %v1229
    %3707 = vmatprep.subr.mxu0 %v1238
    %3708 = vmatpush1.msra.mxu0 %v1237
    %3709 = vmatprep.subr.mxu0 %v1246
    %3710 = vmatpush1.msra.mxu0 %v1245
    %3711 = vmatprep.subr.mxu0 %v1254
    %3712 = vmatpush1.msra.mxu0 %v1253
    %3713 = vmatprep.subr.mxu0 %v1262
    %3714 = vmatpush1.msra.mxu0 %v1261
    %3715 = vmatprep.mubr.f32.mxu0 %v3273
    %3716 = vmatmul.mubr.f32.gmra.mrb[0].mxu0 %v3272
    %v3717 = vpop.f32.mrb[0].mxu0
    %v3718 = vadd.f32 0.0, %v3717
    %v3719 = vpop.f32.mrb[0].mxu0
    %v3720 = vadd.f32 0.0, %v3719
    %3721 = vdwg.mxu0
    %3722 = vmatprep.subr.mxu0 %v1016
    %3723 = vmatpush1.msra.mxu0 %v1015
    %3724 = vmatprep.subr.mxu0 %v1024
    %3725 = vmatpush1.msra.mxu0 %v1023
    %3726 = vmatprep.subr.mxu0 %v1032
    %3727 = vmatpush1.msra.mxu0 %v1031
    %3728 = vmatprep.subr.mxu0 %v1040
    %3729 = vmatpush1.msra.mxu0 %v1039
    %3730 = vmatprep.subr.mxu0 %v1048
    %3731 = vmatpush1.msra.mxu0 %v1047
    %3732 = vmatprep.subr.mxu0 %v1056
    %3733 = vmatpush1.msra.mxu0 %v1055
    %3734 = vmatprep.subr.mxu0 %v1064
    %3735 = vmatpush1.msra.mxu0 %v1063
    %3736 = vmatprep.subr.mxu0 %v1072
    %3737 = vmatpush1.msra.mxu0 %v1071
    %3738 = vmatprep.subr.mxu0 %v1080
    %3739 = vmatpush1.msra.mxu0 %v1079
    %3740 = vmatprep.subr.mxu0 %v1088
    %3741 = vmatpush1.msra.mxu0 %v1087
    %3742 = vmatprep.subr.mxu0 %v1096
    %3743 = vmatpush1.msra.mxu0 %v1095
    %3744 = vmatprep.subr.mxu0 %v1104
    %3745 = vmatpush1.msra.mxu0 %v1103
    %3746 = vmatprep.subr.mxu0 %v1112
    %3747 = vmatpush1.msra.mxu0 %v1111
    %3748 = vmatprep.subr.mxu0 %v1120
    %3749 = vmatpush1.msra.mxu0 %v1119
    %3750 = vmatprep.subr.mxu0 %v1128
    %3751 = vmatpush1.msra.mxu0 %v1127
    %3752 = vmatprep.subr.mxu0 %v1136
    %3753 = vmatpush1.msra.mxu0 %v1135
    %3754 = vmatprep.subr.mxu0 %v1144
    %3755 = vmatpush1.msra.mxu0 %v1143
    %3756 = vmatprep.subr.mxu0 %v1152
    %3757 = vmatpush1.msra.mxu0 %v1151
    %3758 = vmatprep.subr.mxu0 %v1160
    %3759 = vmatpush1.msra.mxu0 %v1159
    %3760 = vmatprep.subr.mxu0 %v1168
    %3761 = vmatpush1.msra.mxu0 %v1167
    %3762 = vmatprep.subr.mxu0 %v1176
    %3763 = vmatpush1.msra.mxu0 %v1175
    %3764 = vmatprep.subr.mxu0 %v1184
    %3765 = vmatpush1.msra.mxu0 %v1183
    %3766 = vmatprep.subr.mxu0 %v1192
    %3767 = vmatpush1.msra.mxu0 %v1191
    %3768 = vmatprep.subr.mxu0 %v1200
    %3769 = vmatpush1.msra.mxu0 %v1199
    %3770 = vmatprep.subr.mxu0 %v1208
    %3771 = vmatpush1.msra.mxu0 %v1207
    %3772 = vmatprep.subr.mxu0 %v1216
    %3773 = vmatpush1.msra.mxu0 %v1215
    %3774 = vmatprep.subr.mxu0 %v1224
    %3775 = vmatpush1.msra.mxu0 %v1223
    %3776 = vmatprep.subr.mxu0 %v1232
    %3777 = vmatpush1.msra.mxu0 %v1231
    %3778 = vmatprep.subr.mxu0 %v1240
    %3779 = vmatpush1.msra.mxu0 %v1239
    %3780 = vmatprep.subr.mxu0 %v1248
    %3781 = vmatpush1.msra.mxu0 %v1247
    %3782 = vmatprep.subr.mxu0 %v1256
    %3783 = vmatpush1.msra.mxu0 %v1255
    %3784 = vmatprep.subr.mxu0 %v1264
    %3785 = vmatpush1.msra.mxu0 %v1263
    %3786 = vmatprep.mubr.f32.mxu0 %v3273
    %3787 = vmatmul.mubr.f32.gmra.mrb[0].mxu0 %v3272
    %v3788 = vpop.f32.mrb[0].mxu0
    %v3789 = vadd.f32 0.0, %v3788
    %v3790 = vpop.f32.mrb[0].mxu0
    %v3791 = vadd.f32 0.0, %v3790
    %3792 = vdwg.mxu0
    %3793 = vmatprep.subr.mxu0 %v1018
    %3794 = vmatpush1.msra.mxu0 %v1017
    %3795 = vmatprep.subr.mxu0 %v1026
    %3796 = vmatpush1.msra.mxu0 %v1025
    %3797 = vmatprep.subr.mxu0 %v1034
    %3798 = vmatpush1.msra.mxu0 %v1033
    %3799 = vmatprep.subr.mxu0 %v1042
    %3800 = vmatpush1.msra.mxu0 %v1041
    %3801 = vmatprep.subr.mxu0 %v1050
    %3802 = vmatpush1.msra.mxu0 %v1049
    %3803 = vmatprep.subr.mxu0 %v1058
    %3804 = vmatpush1.msra.mxu0 %v1057
    %3805 = vmatprep.subr.mxu0 %v1066
    %3806 = vmatpush1.msra.mxu0 %v1065
    %3807 = vmatprep.subr.mxu0 %v1074
    %3808 = vmatpush1.msra.mxu0 %v1073
    %3809 = vmatprep.subr.mxu0 %v1082
    %3810 = vmatpush1.msra.mxu0 %v1081
    %3811 = vmatprep.subr.mxu0 %v1090
    %3812 = vmatpush1.msra.mxu0 %v1089
    %3813 = vmatprep.subr.mxu0 %v1098
    %3814 = vmatpush1.msra.mxu0 %v1097
    %3815 = vmatprep.subr.mxu0 %v1106
    %3816 = vmatpush1.msra.mxu0 %v1105
    %3817 = vmatprep.subr.mxu0 %v1114
    %3818 = vmatpush1.msra.mxu0 %v1113
    %3819 = vmatprep.subr.mxu0 %v1122
    %3820 = vmatpush1.msra.mxu0 %v1121
    %3821 = vmatprep.subr.mxu0 %v1130
    %3822 = vmatpush1.msra.mxu0 %v1129
    %3823 = vmatprep.subr.mxu0 %v1138
    %3824 = vmatpush1.msra.mxu0 %v1137
    %3825 = vmatprep.subr.mxu0 %v1146
    %3826 = vmatpush1.msra.mxu0 %v1145
    %3827 = vmatprep.subr.mxu0 %v1154
    %3828 = vmatpush1.msra.mxu0 %v1153
    %3829 = vmatprep.subr.mxu0 %v1162
    %3830 = vmatpush1.msra.mxu0 %v1161
    %3831 = vmatprep.subr.mxu0 %v1170
    %3832 = vmatpush1.msra.mxu0 %v1169
    %3833 = vmatprep.subr.mxu0 %v1178
    %3834 = vmatpush1.msra.mxu0 %v1177
    %3835 = vmatprep.subr.mxu0 %v1186
    %3836 = vmatpush1.msra.mxu0 %v1185
    %3837 = vmatprep.subr.mxu0 %v1194
    %3838 = vmatpush1.msra.mxu0 %v1193
    %3839 = vmatprep.subr.mxu0 %v1202
    %3840 = vmatpush1.msra.mxu0 %v1201
    %3841 = vmatprep.subr.mxu0 %v1210
    %3842 = vmatpush1.msra.mxu0 %v1209
    %3843 = vmatprep.subr.mxu0 %v1218
    %3844 = vmatpush1.msra.mxu0 %v1217
    %3845 = vmatprep.subr.mxu0 %v1226
    %3846 = vmatpush1.msra.mxu0 %v1225
    %3847 = vmatprep.subr.mxu0 %v1234
    %3848 = vmatpush1.msra.mxu0 %v1233
    %3849 = vmatprep.subr.mxu0 %v1242
    %3850 = vmatpush1.msra.mxu0 %v1241
    %3851 = vmatprep.subr.mxu0 %v1250
    %3852 = vmatpush1.msra.mxu0 %v1249
    %3853 = vmatprep.subr.mxu0 %v1258
    %3854 = vmatpush1.msra.mxu0 %v1257
    %3855 = vmatprep.subr.mxu0 %v1266
    %3856 = vmatpush1.msra.mxu0 %v1265
    %3857 = vmatprep.mubr.f32.mxu0 %v3273
    %3858 = vmatmul.mubr.f32.gmra.mrb[0].mxu0 %v3272
    %v3859 = vpop.f32.mrb[0].mxu0
    %v3860 = vadd.f32 0.0, %v3859
    %v3861 = vpop.f32.mrb[0].mxu0
    %v3862 = vadd.f32 0.0, %v3861
    %3863 = vdwg.mxu0
    %3864 = vmatprep.subr.mxu0 %v1020
    %3865 = vmatpush1.msra.mxu0 %v1019
    %3866 = vmatprep.subr.mxu0 %v1028
    %3867 = vmatpush1.msra.mxu0 %v1027
    %3868 = vmatprep.subr.mxu0 %v1036
    %3869 = vmatpush1.msra.mxu0 %v1035
    %3870 = vmatprep.subr.mxu0 %v1044
    %3871 = vmatpush1.msra.mxu0 %v1043
    %3872 = vmatprep.subr.mxu0 %v1052
    %3873 = vmatpush1.msra.mxu0 %v1051
    %3874 = vmatprep.subr.mxu0 %v1060
    %3875 = vmatpush1.msra.mxu0 %v1059
    %3876 = vmatprep.subr.mxu0 %v1068
    %3877 = vmatpush1.msra.mxu0 %v1067
    %3878 = vmatprep.subr.mxu0 %v1076
    %3879 = vmatpush1.msra.mxu0 %v1075
    %3880 = vmatprep.subr.mxu0 %v1084
    %3881 = vmatpush1.msra.mxu0 %v1083
    %3882 = vmatprep.subr.mxu0 %v1092
    %3883 = vmatpush1.msra.mxu0 %v1091
    %3884 = vmatprep.subr.mxu0 %v1100
    %3885 = vmatpush1.msra.mxu0 %v1099
    %3886 = vmatprep.subr.mxu0 %v1108
    %3887 = vmatpush1.msra.mxu0 %v1107
    %3888 = vmatprep.subr.mxu0 %v1116
    %3889 = vmatpush1.msra.mxu0 %v1115
    %3890 = vmatprep.subr.mxu0 %v1124
    %3891 = vmatpush1.msra.mxu0 %v1123
    %3892 = vmatprep.subr.mxu0 %v1132
    %3893 = vmatpush1.msra.mxu0 %v1131
    %3894 = vmatprep.subr.mxu0 %v1140
    %3895 = vmatpush1.msra.mxu0 %v1139
    %3896 = vmatprep.subr.mxu0 %v1148
    %3897 = vmatpush1.msra.mxu0 %v1147
    %3898 = vmatprep.subr.mxu0 %v1156
    %3899 = vmatpush1.msra.mxu0 %v1155
    %3900 = vmatprep.subr.mxu0 %v1164
    %3901 = vmatpush1.msra.mxu0 %v1163
    %3902 = vmatprep.subr.mxu0 %v1172
    %3903 = vmatpush1.msra.mxu0 %v1171
    %3904 = vmatprep.subr.mxu0 %v1180
    %3905 = vmatpush1.msra.mxu0 %v1179
    %3906 = vmatprep.subr.mxu0 %v1188
    %3907 = vmatpush1.msra.mxu0 %v1187
    %3908 = vmatprep.subr.mxu0 %v1196
    %3909 = vmatpush1.msra.mxu0 %v1195
    %3910 = vmatprep.subr.mxu0 %v1204
    %3911 = vmatpush1.msra.mxu0 %v1203
    %3912 = vmatprep.subr.mxu0 %v1212
    %3913 = vmatpush1.msra.mxu0 %v1211
    %3914 = vmatprep.subr.mxu0 %v1220
    %3915 = vmatpush1.msra.mxu0 %v1219
    %3916 = vmatprep.subr.mxu0 %v1228
    %3917 = vmatpush1.msra.mxu0 %v1227
    %3918 = vmatprep.subr.mxu0 %v1236
    %3919 = vmatpush1.msra.mxu0 %v1235
    %3920 = vmatprep.subr.mxu0 %v1244
    %3921 = vmatpush1.msra.mxu0 %v1243
    %3922 = vmatprep.subr.mxu0 %v1252
    %3923 = vmatpush1.msra.mxu0 %v1251
    %3924 = vmatprep.subr.mxu0 %v1260
    %3925 = vmatpush1.msra.mxu0 %v1259
    %3926 = vmatprep.subr.mxu0 %v1268
    %3927 = vmatpush1.msra.mxu0 %v1267
    %3928 = vmatprep.mubr.f32.mxu0 %v3273
    %3929 = vmatmul.mubr.f32.gmra.mrb[0].mxu0 %v3272
    %v3930 = vpop.f32.mrb[0].mxu0
    %v3931 = vadd.f32 0.0, %v3930
    %v3932 = vpop.f32.mrb[0].mxu0
    %v3933 = vadd.f32 0.0, %v3932
    %3934 = vdwg.mxu0
    %v3935 = vld [vmem:[#allocation2 + $0xc0] sm:$0xff]
    %v3936 = vld [vmem:[#allocation2 + $0xc8] sm:$0xff]
    %v3937 = vld [vmem:[#allocation2 + $0xd0] sm:$0xff]
    %v3938 = vld [vmem:[#allocation2 + $0xd8] sm:$0xff]
    %v3939 = vld [vmem:[#allocation2 + $0xe0] sm:$0xff]
    %v3940 = vld [vmem:[#allocation2 + $0xe8] sm:$0xff]
    %v3941 = vld [vmem:[#allocation2 + $0xf0] sm:$0xff]
    %v3942 = vld [vmem:[#allocation2 + $0xf8] sm:$0xff]
    %v3943 = vadd.f32 %v3935, %v3718
    %v3944 = vadd.f32 %v3936, %v3720
    %v3945 = vadd.f32 %v3937, %v3789
    %v3946 = vadd.f32 %v3938, %v3791
    %v3947 = vadd.f32 %v3939, %v3860
    %v3948 = vadd.f32 %v3940, %v3862
    %v3949 = vadd.f32 %v3941, %v3931
    %v3950 = vadd.f32 %v3942, %v3933
    %v3951 = vmul.f32 %v3943, 0.5
    %v3952 = vmul.f32 %v3944, 0.5
    %v3953 = vmul.f32 %v3945, 0.5
    %v3954 = vmul.f32 %v3946, 0.5
    %v3955 = vmul.f32 %v3947, 0.5
    %v3956 = vmul.f32 %v3948, 0.5
    %v3957 = vtanh.pop %v3951
    %v3958 = vtanh.pop %v3952
    %v3959 = vtanh.pop %v3953
    %v3960 = vtanh.pop %v3954
    %v3961 = vtanh.pop %v3955
    %v3962 = vtanh.pop %v3956
    %v3963 = vmul.f32 %v3957, 0.5
    %v3964 = vmul.f32 %v3958, 0.5
    %v3965 = vmul.f32 %v3959, 0.5
    %v3966 = vmul.f32 %v3960, 0.5
    %v3967 = vmul.f32 %v3961, 0.5
    %v3968 = vmul.f32 %v3962, 0.5
    %v3969 = vadd.f32 %v3963, 0.5
    %v3970 = vadd.f32 %v3964, 0.5
    %v3971 = vadd.f32 %v3965, 0.5
    %v3972 = vadd.f32 %v3966, 0.5
    %v3973 = vadd.f32 %v3967, 0.5
    %v3974 = vadd.f32 %v3968, 0.5
    %v3975 = vtanh.pop %v3949
    %v3976 = vtanh.pop %v3950
    %v3977 = vmul.f32 %v3971, %v3268
    %v3978 = vmul.f32 %v3972, %v3269
    %v3979 = vmul.f32 %v3969, %v3975
    %v3980 = vmul.f32 %v3970, %v3976
    %v3981 = vadd.f32 %v3977, %v3979
    %v3982 = vadd.f32 %v3978, %v3980
    %v3983 = vtanh.pop %v3981
    %v3984 = vtanh.pop %v3982
    %v3985 = vmul.f32 %v3973, %v3983
    %v3986 = vmul.f32 %v3974, %v3984
    %3987 = vmatprep.subr.mxu0 %v1270
    %3988 = vmatpush1.msra.mxu0 %v1269
    %3989 = vmatprep.subr.mxu0 %v1274
    %3990 = vmatpush1.msra.mxu0 %v1273
    %3991 = vmatprep.subr.mxu0 %v1278
    %3992 = vmatpush1.msra.mxu0 %v1277
    %3993 = vmatprep.subr.mxu0 %v1282
    %3994 = vmatpush1.msra.mxu0 %v1281
    %3995 = vmatprep.subr.mxu0 %v1286
    %3996 = vmatpush1.msra.mxu0 %v1285
    %3997 = vmatprep.subr.mxu0 %v1290
    %3998 = vmatpush1.msra.mxu0 %v1289
    %3999 = vmatprep.subr.mxu0 %v1294
    %4000 = vmatpush1.msra.mxu0 %v1293
    %4001 = vmatprep.subr.mxu0 %v1298
    %4002 = vmatpush1.msra.mxu0 %v1297
    %4003 = vmatprep.subr.mxu0 %v1302
    %4004 = vmatpush1.msra.mxu0 %v1301
    %4005 = vmatprep.subr.mxu0 %v1306
    %4006 = vmatpush1.msra.mxu0 %v1305
    %4007 = vmatprep.subr.mxu0 %v1310
    %4008 = vmatpush1.msra.mxu0 %v1309
    %4009 = vmatprep.subr.mxu0 %v1314
    %4010 = vmatpush1.msra.mxu0 %v1313
    %4011 = vmatprep.subr.mxu0 %v1318
    %4012 = vmatpush1.msra.mxu0 %v1317
    %4013 = vmatprep.subr.mxu0 %v1322
    %4014 = vmatpush1.msra.mxu0 %v1321
    %4015 = vmatprep.subr.mxu0 %v1326
    %4016 = vmatpush1.msra.mxu0 %v1325
    %4017 = vmatprep.subr.mxu0 %v1330
    %4018 = vmatpush1.msra.mxu0 %v1329
    %4019 = vmatprep.subr.mxu0 0.0
    %4020 = vmatpush1.msra.mxu0 0.0
    %4021 = vmatprep.subr.mxu0 0.0
    %4022 = vmatpush1.msra.mxu0 0.0
    %4023 = vmatprep.subr.mxu0 0.0
    %4024 = vmatpush1.msra.mxu0 0.0
    %4025 = vmatprep.subr.mxu0 0.0
    %4026 = vmatpush1.msra.mxu0 0.0
    %4027 = vmatprep.subr.mxu0 0.0
    %4028 = vmatpush1.msra.mxu0 0.0
    %4029 = vmatprep.subr.mxu0 0.0
    %4030 = vmatpush1.msra.mxu0 0.0
    %4031 = vmatprep.subr.mxu0 0.0
    %4032 = vmatpush1.msra.mxu0 0.0
    %4033 = vmatprep.subr.mxu0 0.0
    %4034 = vmatpush1.msra.mxu0 0.0
    %4035 = vmatprep.subr.mxu0 0.0
    %4036 = vmatpush1.msra.mxu0 0.0
    %4037 = vmatprep.subr.mxu0 0.0
    %4038 = vmatpush1.msra.mxu0 0.0
    %4039 = vmatprep.subr.mxu0 0.0
    %4040 = vmatpush1.msra.mxu0 0.0
    %4041 = vmatprep.subr.mxu0 0.0
    %4042 = vmatpush1.msra.mxu0 0.0
    %4043 = vmatprep.subr.mxu0 0.0
    %4044 = vmatpush1.msra.mxu0 0.0
    %4045 = vmatprep.subr.mxu0 0.0
    %4046 = vmatpush1.msra.mxu0 0.0
    %4047 = vmatprep.subr.mxu0 0.0
    %4048 = vmatpush1.msra.mxu0 0.0
    %4049 = vmatprep.subr.mxu0 0.0
    %4050 = vmatpush1.msra.mxu0 0.0
    %4051 = vmatprep.mubr.f32.mxu0 0.0
    %4052 = vmatmul.mubr.f32.gmra.mrb[0].mxu0 %v3579
    %v4053 = vpop.f32.mrb[0].mxu0
    %v4054 = vadd.f32 0.0, %v4053
    %v4055 = vpop.f32.mrb[0].mxu0
    %v4056 = vadd.f32 0.0, %v4055
    %4057 = vdwg.mxu0
    %4058 = vmatprep.subr.mxu0 %v1272
    %4059 = vmatpush1.msra.mxu0 %v1271
    %4060 = vmatprep.subr.mxu0 %v1276
    %4061 = vmatpush1.msra.mxu0 %v1275
    %4062 = vmatprep.subr.mxu0 %v1280
    %4063 = vmatpush1.msra.mxu0 %v1279
    %4064 = vmatprep.subr.mxu0 %v1284
    %4065 = vmatpush1.msra.mxu0 %v1283
    %4066 = vmatprep.subr.mxu0 %v1288
    %4067 = vmatpush1.msra.mxu0 %v1287
    %4068 = vmatprep.subr.mxu0 %v1292
    %4069 = vmatpush1.msra.mxu0 %v1291
    %4070 = vmatprep.subr.mxu0 %v1296
    %4071 = vmatpush1.msra.mxu0 %v1295
    %4072 = vmatprep.subr.mxu0 %v1300
    %4073 = vmatpush1.msra.mxu0 %v1299
    %4074 = vmatprep.subr.mxu0 %v1304
    %4075 = vmatpush1.msra.mxu0 %v1303
    %4076 = vmatprep.subr.mxu0 %v1308
    %4077 = vmatpush1.msra.mxu0 %v1307
    %4078 = vmatprep.subr.mxu0 %v1312
    %4079 = vmatpush1.msra.mxu0 %v1311
    %4080 = vmatprep.subr.mxu0 %v1316
    %4081 = vmatpush1.msra.mxu0 %v1315
    %4082 = vmatprep.subr.mxu0 %v1320
    %4083 = vmatpush1.msra.mxu0 %v1319
    %4084 = vmatprep.subr.mxu0 %v1324
    %4085 = vmatpush1.msra.mxu0 %v1323
    %4086 = vmatprep.subr.mxu0 %v1328
    %4087 = vmatpush1.msra.mxu0 %v1327
    %4088 = vmatprep.subr.mxu0 %v1332
    %4089 = vmatpush1.msra.mxu0 %v1331
    %4090 = vmatprep.subr.mxu0 0.0
    %4091 = vmatpush1.msra.mxu0 0.0
    %4092 = vmatprep.subr.mxu0 0.0
    %4093 = vmatpush1.msra.mxu0 0.0
    %4094 = vmatprep.subr.mxu0 0.0
    %4095 = vmatpush1.msra.mxu0 0.0
    %4096 = vmatprep.subr.mxu0 0.0
    %4097 = vmatpush1.msra.mxu0 0.0
    %4098 = vmatprep.subr.mxu0 0.0
    %4099 = vmatpush1.msra.mxu0 0.0
    %4100 = vmatprep.subr.mxu0 0.0
    %4101 = vmatpush1.msra.mxu0 0.0
    %4102 = vmatprep.subr.mxu0 0.0
    %4103 = vmatpush1.msra.mxu0 0.0
    %4104 = vmatprep.subr.mxu0 0.0
    %4105 = vmatpush1.msra.mxu0 0.0
    %4106 = vmatprep.subr.mxu0 0.0
    %4107 = vmatpush1.msra.mxu0 0.0
    %4108 = vmatprep.subr.mxu0 0.0
    %4109 = vmatpush1.msra.mxu0 0.0
    %4110 = vmatprep.subr.mxu0 0.0
    %4111 = vmatpush1.msra.mxu0 0.0
    %4112 = vmatprep.subr.mxu0 0.0
    %4113 = vmatpush1.msra.mxu0 0.0
    %4114 = vmatprep.subr.mxu0 0.0
    %4115 = vmatpush1.msra.mxu0 0.0
    %4116 = vmatprep.subr.mxu0 0.0
    %4117 = vmatpush1.msra.mxu0 0.0
    %4118 = vmatprep.subr.mxu0 0.0
    %4119 = vmatpush1.msra.mxu0 0.0
    %4120 = vmatprep.subr.mxu0 0.0
    %4121 = vmatpush1.msra.mxu0 0.0
    %4122 = vmatprep.mubr.f32.mxu0 0.0
    %4123 = vmatmul.mubr.f32.gmra.mrb[0].mxu0 %v3579
    %v4124 = vpop.f32.mrb[0].mxu0
    %v4125 = vadd.f32 0.0, %v4124
    %v4126 = vpop.f32.mrb[0].mxu0
    %v4127 = vadd.f32 0.0, %v4126
    %4128 = vdwg.mxu0
    %4129 = vmatprep.subr.mxu0 %v1334
    %4130 = vmatpush1.msra.mxu0 %v1333
    %4131 = vmatprep.subr.mxu0 %v1338
    %4132 = vmatpush1.msra.mxu0 %v1337
    %4133 = vmatprep.subr.mxu0 %v1342
    %4134 = vmatpush1.msra.mxu0 %v1341
    %4135 = vmatprep.subr.mxu0 %v1346
    %4136 = vmatpush1.msra.mxu0 %v1345
    %4137 = vmatprep.subr.mxu0 %v1350
    %4138 = vmatpush1.msra.mxu0 %v1349
    %4139 = vmatprep.subr.mxu0 %v1354
    %4140 = vmatpush1.msra.mxu0 %v1353
    %4141 = vmatprep.subr.mxu0 %v1358
    %4142 = vmatpush1.msra.mxu0 %v1357
    %4143 = vmatprep.subr.mxu0 %v1362
    %4144 = vmatpush1.msra.mxu0 %v1361
    %4145 = vmatprep.subr.mxu0 %v1366
    %4146 = vmatpush1.msra.mxu0 %v1365
    %4147 = vmatprep.subr.mxu0 %v1370
    %4148 = vmatpush1.msra.mxu0 %v1369
    %4149 = vmatprep.subr.mxu0 %v1374
    %4150 = vmatpush1.msra.mxu0 %v1373
    %4151 = vmatprep.subr.mxu0 %v1378
    %4152 = vmatpush1.msra.mxu0 %v1377
    %4153 = vmatprep.subr.mxu0 %v1382
    %4154 = vmatpush1.msra.mxu0 %v1381
    %4155 = vmatprep.subr.mxu0 %v1386
    %4156 = vmatpush1.msra.mxu0 %v1385
    %4157 = vmatprep.subr.mxu0 %v1390
    %4158 = vmatpush1.msra.mxu0 %v1389
    %4159 = vmatprep.subr.mxu0 %v1394
    %4160 = vmatpush1.msra.mxu0 %v1393
    %4161 = vmatprep.subr.mxu0 %v1398
    %4162 = vmatpush1.msra.mxu0 %v1397
    %4163 = vmatprep.subr.mxu0 %v1402
    %4164 = vmatpush1.msra.mxu0 %v1401
    %4165 = vmatprep.subr.mxu0 %v1406
    %4166 = vmatpush1.msra.mxu0 %v1405
    %4167 = vmatprep.subr.mxu0 %v1410
    %4168 = vmatpush1.msra.mxu0 %v1409
    %4169 = vmatprep.subr.mxu0 %v1414
    %4170 = vmatpush1.msra.mxu0 %v1413
    %4171 = vmatprep.subr.mxu0 %v1418
    %4172 = vmatpush1.msra.mxu0 %v1417
    %4173 = vmatprep.subr.mxu0 %v1422
    %4174 = vmatpush1.msra.mxu0 %v1421
    %4175 = vmatprep.subr.mxu0 %v1426
    %4176 = vmatpush1.msra.mxu0 %v1425
    %4177 = vmatprep.subr.mxu0 %v1430
    %4178 = vmatpush1.msra.mxu0 %v1429
    %4179 = vmatprep.subr.mxu0 %v1434
    %4180 = vmatpush1.msra.mxu0 %v1433
    %4181 = vmatprep.subr.mxu0 %v1438
    %4182 = vmatpush1.msra.mxu0 %v1437
    %4183 = vmatprep.subr.mxu0 %v1442
    %4184 = vmatpush1.msra.mxu0 %v1441
    %4185 = vmatprep.subr.mxu0 %v1446
    %4186 = vmatpush1.msra.mxu0 %v1445
    %4187 = vmatprep.subr.mxu0 %v1450
    %4188 = vmatpush1.msra.mxu0 %v1449
    %4189 = vmatprep.subr.mxu0 %v1454
    %4190 = vmatpush1.msra.mxu0 %v1453
    %4191 = vmatprep.subr.mxu0 %v1458
    %4192 = vmatpush1.msra.mxu0 %v1457
    %4193 = vmatprep.mubr.f32.mxu0 %v3986
    %4194 = vmatmul.mubr.f32.gmra.mrb[0].mxu0 %v3985
    %v4195 = vpop.f32.mrb[0].mxu0
    %v4196 = vadd.f32 %v1967, %v4195
    %v4197 = vpop.f32.mrb[0].mxu0
    %v4198 = vadd.f32 %v1971, %v4197
    %4199 = vdwg.mxu0
    %4200 = vmatprep.subr.mxu0 %v1336
    %4201 = vmatpush1.msra.mxu0 %v1335
    %4202 = vmatprep.subr.mxu0 %v1340
    %4203 = vmatpush1.msra.mxu0 %v1339
    %4204 = vmatprep.subr.mxu0 %v1344
    %4205 = vmatpush1.msra.mxu0 %v1343
    %4206 = vmatprep.subr.mxu0 %v1348
    %4207 = vmatpush1.msra.mxu0 %v1347
    %4208 = vmatprep.subr.mxu0 %v1352
    %4209 = vmatpush1.msra.mxu0 %v1351
    %4210 = vmatprep.subr.mxu0 %v1356
    %4211 = vmatpush1.msra.mxu0 %v1355
    %4212 = vmatprep.subr.mxu0 %v1360
    %4213 = vmatpush1.msra.mxu0 %v1359
    %4214 = vmatprep.subr.mxu0 %v1364
    %4215 = vmatpush1.msra.mxu0 %v1363
    %4216 = vmatprep.subr.mxu0 %v1368
    %4217 = vmatpush1.msra.mxu0 %v1367
    %4218 = vmatprep.subr.mxu0 %v1372
    %4219 = vmatpush1.msra.mxu0 %v1371
    %4220 = vmatprep.subr.mxu0 %v1376
    %4221 = vmatpush1.msra.mxu0 %v1375
    %4222 = vmatprep.subr.mxu0 %v1380
    %4223 = vmatpush1.msra.mxu0 %v1379
    %4224 = vmatprep.subr.mxu0 %v1384
    %4225 = vmatpush1.msra.mxu0 %v1383
    %4226 = vmatprep.subr.mxu0 %v1388
    %4227 = vmatpush1.msra.mxu0 %v1387
    %4228 = vmatprep.subr.mxu0 %v1392
    %4229 = vmatpush1.msra.mxu0 %v1391
    %4230 = vmatprep.subr.mxu0 %v1396
    %4231 = vmatpush1.msra.mxu0 %v1395
    %4232 = vmatprep.subr.mxu0 %v1400
    %4233 = vmatpush1.msra.mxu0 %v1399
    %4234 = vmatprep.subr.mxu0 %v1404
    %4235 = vmatpush1.msra.mxu0 %v1403
    %4236 = vmatprep.subr.mxu0 %v1408
    %4237 = vmatpush1.msra.mxu0 %v1407
    %4238 = vmatprep.subr.mxu0 %v1412
    %4239 = vmatpush1.msra.mxu0 %v1411
    %4240 = vmatprep.subr.mxu0 %v1416
    %4241 = vmatpush1.msra.mxu0 %v1415
    %4242 = vmatprep.subr.mxu0 %v1420
    %4243 = vmatpush1.msra.mxu0 %v1419
    %4244 = vmatprep.subr.mxu0 %v1424
    %4245 = vmatpush1.msra.mxu0 %v1423
    %4246 = vmatprep.subr.mxu0 %v1428
    %4247 = vmatpush1.msra.mxu0 %v1427
    %4248 = vmatprep.subr.mxu0 %v1432
    %4249 = vmatpush1.msra.mxu0 %v1431
    %4250 = vmatprep.subr.mxu0 %v1436
    %4251 = vmatpush1.msra.mxu0 %v1435
    %4252 = vmatprep.subr.mxu0 %v1440
    %4253 = vmatpush1.msra.mxu0 %v1439
    %4254 = vmatprep.subr.mxu0 %v1444
    %4255 = vmatpush1.msra.mxu0 %v1443
    %4256 = vmatprep.subr.mxu0 %v1448
    %4257 = vmatpush1.msra.mxu0 %v1447
    %4258 = vmatprep.subr.mxu0 %v1452
    %4259 = vmatpush1.msra.mxu0 %v1451
    %4260 = vmatprep.subr.mxu0 %v1456
    %4261 = vmatpush1.msra.mxu0 %v1455
    %4262 = vmatprep.subr.mxu0 %v1460
    %4263 = vmatpush1.msra.mxu0 %v1459
    %4264 = vmatprep.mubr.f32.mxu0 %v3986
    %4265 = vmatmul.mubr.f32.gmra.mrb[0].mxu0 %v3985
    %v4266 = vpop.f32.mrb[0].mxu0
    %v4267 = vadd.f32 %v1975, %v4266
    %v4268 = vpop.f32.mrb[0].mxu0
    %v4269 = vadd.f32 %v1979, %v4268
    %4270 = vdwg.mxu0
    %v4271 = vadd.f32 %v4196, %v4054
    %v4272 = vadd.f32 %v4198, %v4056
    %v4273 = vadd.f32 %v4267, %v4125
    %v4274 = vadd.f32 %v4269, %v4127
    %v4275 = vmul.f32 %v4271, 0.5
    %v4276 = vmul.f32 %v4272, 0.5
    %v4277 = vmul.f32 %v4273, 0.5
    %v4278 = vtanh.pop %v4275
    %v4279 = vtanh.pop %v4276
    %v4280 = vtanh.pop %v4277
    %v4281 = vmul.f32 %v4278, 0.5
    %v4282 = vmul.f32 %v4279, 0.5
    %v4283 = vmul.f32 %v4280, 0.5
    %v4284 = vadd.f32 %v4281, 0.5
    %v4285 = vadd.f32 %v4282, 0.5
    %v4286 = vadd.f32 %v4283, 0.5
    %v4287 = vtanh.pop %v4274
    %v4288 = vmul.f32 %v4285, %v3577
    %v4289 = vmul.f32 %v4284, %v4287
    %v4290 = vadd.f32 %v4288, %v4289
    %v4291 = vtanh.pop %v4290
    %v4292 = vmul.f32 %v4286, %v4291
    %4293 = vmatprep.subr.mxu0 0.0
    %4294 = vmatpush1.msra.mxu0 %v1462
    %4295 = vmatprep.subr.mxu0 0.0
    %4296 = vmatpush1.msra.mxu0 %v1463
    %4297 = vmatprep.subr.mxu0 0.0
    %4298 = vmatpush1.msra.mxu0 %v1464
    %4299 = vmatprep.subr.mxu0 0.0
    %4300 = vmatpush1.msra.mxu0 %v1465
    %4301 = vmatprep.subr.mxu0 0.0
    %4302 = vmatpush1.msra.mxu0 %v1466
    %4303 = vmatprep.subr.mxu0 0.0
    %4304 = vmatpush1.msra.mxu0 %v1467
    %4305 = vmatprep.subr.mxu0 0.0
    %4306 = vmatpush1.msra.mxu0 %v1468
    %4307 = vmatprep.subr.mxu0 0.0
    %4308 = vmatpush1.msra.mxu0 %v1469
    %4309 = vmatprep.subr.mxu0 0.0
    %4310 = vmatpush1.msra.mxu0 %v1470
    %4311 = vmatprep.subr.mxu0 0.0
    %4312 = vmatpush1.msra.mxu0 %v1471
    %4313 = vmatprep.subr.mxu0 0.0
    %4314 = vmatpush1.msra.mxu0 %v1472
    %4315 = vmatprep.subr.mxu0 0.0
    %4316 = vmatpush1.msra.mxu0 %v1473
    %4317 = vmatprep.subr.mxu0 0.0
    %4318 = vmatpush1.msra.mxu0 %v1474
    %4319 = vmatprep.subr.mxu0 0.0
    %4320 = vmatpush1.msra.mxu0 %v1475
    %4321 = vmatprep.subr.mxu0 0.0
    %4322 = vmatpush1.msra.mxu0 %v1476
    %4323 = vmatprep.subr.mxu0 0.0
    %4324 = vmatpush1.msra.mxu0 %v1477
    %4325 = vmatprep.subr.mxu0 0.0
    %4326 = vmatpush1.msra.mxu0 0.0
    %4327 = vmatprep.subr.mxu0 0.0
    %4328 = vmatpush1.msra.mxu0 0.0
    %4329 = vmatprep.subr.mxu0 0.0
    %4330 = vmatpush1.msra.mxu0 0.0
    %4331 = vmatprep.subr.mxu0 0.0
    %4332 = vmatpush1.msra.mxu0 0.0
    %4333 = vmatprep.subr.mxu0 0.0
    %4334 = vmatpush1.msra.mxu0 0.0
    %4335 = vmatprep.subr.mxu0 0.0
    %4336 = vmatpush1.msra.mxu0 0.0
    %4337 = vmatprep.subr.mxu0 0.0
    %4338 = vmatpush1.msra.mxu0 0.0
    %4339 = vmatprep.subr.mxu0 0.0
    %4340 = vmatpush1.msra.mxu0 0.0
    %4341 = vmatprep.subr.mxu0 0.0
    %4342 = vmatpush1.msra.mxu0 0.0
    %4343 = vmatprep.subr.mxu0 0.0
    %4344 = vmatpush1.msra.mxu0 0.0
    %4345 = vmatprep.subr.mxu0 0.0
    %4346 = vmatpush1.msra.mxu0 0.0
    %4347 = vmatprep.subr.mxu0 0.0
    %4348 = vmatpush1.msra.mxu0 0.0
    %4349 = vmatprep.subr.mxu0 0.0
    %4350 = vmatpush1.msra.mxu0 0.0
    %4351 = vmatprep.subr.mxu0 0.0
    %4352 = vmatpush1.msra.mxu0 0.0
    %4353 = vmatprep.subr.mxu0 0.0
    %4354 = vmatpush1.msra.mxu0 0.0
    %4355 = vmatprep.subr.mxu0 0.0
    %4356 = vmatpush1.msra.mxu0 0.0
    %4357 = vmatprep.mubr.f32.mxu0 0.0
    %4358 = vmatmul.mubr.f32.gmra.mrb[0].mxu0 %v4292
    %v4359 = vpop.f32.mrb[0].mxu0
    %v4360 = vadd.f32 %v2152, %v4359
    %v4361 = vpop.f32.mrb[0].mxu0
    %4362 = vdwg.mxu0
    %4363 = vst [vmem:[%s14 + $0x18] sm:$0xff] %v4360
    %4364 = vmatprep.subr.mxu0 %v1014
    %4365 = vmatpush1.msra.mxu0 %v1013
    %4366 = vmatprep.subr.mxu0 %v1022
    %4367 = vmatpush1.msra.mxu0 %v1021
    %4368 = vmatprep.subr.mxu0 %v1030
    %4369 = vmatpush1.msra.mxu0 %v1029
    %4370 = vmatprep.subr.mxu0 %v1038
    %4371 = vmatpush1.msra.mxu0 %v1037
    %4372 = vmatprep.subr.mxu0 %v1046
    %4373 = vmatpush1.msra.mxu0 %v1045
    %4374 = vmatprep.subr.mxu0 %v1054
    %4375 = vmatpush1.msra.mxu0 %v1053
    %4376 = vmatprep.subr.mxu0 %v1062
    %4377 = vmatpush1.msra.mxu0 %v1061
    %4378 = vmatprep.subr.mxu0 %v1070
    %4379 = vmatpush1.msra.mxu0 %v1069
    %4380 = vmatprep.subr.mxu0 %v1078
    %4381 = vmatpush1.msra.mxu0 %v1077
    %4382 = vmatprep.subr.mxu0 %v1086
    %4383 = vmatpush1.msra.mxu0 %v1085
    %4384 = vmatprep.subr.mxu0 %v1094
    %4385 = vmatpush1.msra.mxu0 %v1093
    %4386 = vmatprep.subr.mxu0 %v1102
    %4387 = vmatpush1.msra.mxu0 %v1101
    %4388 = vmatprep.subr.mxu0 %v1110
    %4389 = vmatpush1.msra.mxu0 %v1109
    %4390 = vmatprep.subr.mxu0 %v1118
    %4391 = vmatpush1.msra.mxu0 %v1117
    %4392 = vmatprep.subr.mxu0 %v1126
    %4393 = vmatpush1.msra.mxu0 %v1125
    %4394 = vmatprep.subr.mxu0 %v1134
    %4395 = vmatpush1.msra.mxu0 %v1133
    %4396 = vmatprep.subr.mxu0 %v1142
    %4397 = vmatpush1.msra.mxu0 %v1141
    %4398 = vmatprep.subr.mxu0 %v1150
    %4399 = vmatpush1.msra.mxu0 %v1149
    %4400 = vmatprep.subr.mxu0 %v1158
    %4401 = vmatpush1.msra.mxu0 %v1157
    %4402 = vmatprep.subr.mxu0 %v1166
    %4403 = vmatpush1.msra.mxu0 %v1165
    %4404 = vmatprep.subr.mxu0 %v1174
    %4405 = vmatpush1.msra.mxu0 %v1173
    %4406 = vmatprep.subr.mxu0 %v1182
    %4407 = vmatpush1.msra.mxu0 %v1181
    %4408 = vmatprep.subr.mxu0 %v1190
    %4409 = vmatpush1.msra.mxu0 %v1189
    %4410 = vmatprep.subr.mxu0 %v1198
    %4411 = vmatpush1.msra.mxu0 %v1197
    %4412 = vmatprep.subr.mxu0 %v1206
    %4413 = vmatpush1.msra.mxu0 %v1205
    %4414 = vmatprep.subr.mxu0 %v1214
    %4415 = vmatpush1.msra.mxu0 %v1213
    %4416 = vmatprep.subr.mxu0 %v1222
    %4417 = vmatpush1.msra.mxu0 %v1221
    %4418 = vmatprep.subr.mxu0 %v1230
    %4419 = vmatpush1.msra.mxu0 %v1229
    %4420 = vmatprep.subr.mxu0 %v1238
    %4421 = vmatpush1.msra.mxu0 %v1237
    %4422 = vmatprep.subr.mxu0 %v1246
    %4423 = vmatpush1.msra.mxu0 %v1245
    %4424 = vmatprep.subr.mxu0 %v1254
    %4425 = vmatpush1.msra.mxu0 %v1253
    %4426 = vmatprep.subr.mxu0 %v1262
    %4427 = vmatpush1.msra.mxu0 %v1261
    %4428 = vmatprep.mubr.f32.mxu0 %v3986
    %4429 = vmatmul.mubr.f32.gmra.mrb[0].mxu0 %v3985
    %v4430 = vpop.f32.mrb[0].mxu0
    %v4431 = vadd.f32 0.0, %v4430
    %v4432 = vpop.f32.mrb[0].mxu0
    %v4433 = vadd.f32 0.0, %v4432
    %4434 = vdwg.mxu0
    %4435 = vmatprep.subr.mxu0 %v1016
    %4436 = vmatpush1.msra.mxu0 %v1015
    %4437 = vmatprep.subr.mxu0 %v1024
    %4438 = vmatpush1.msra.mxu0 %v1023
    %4439 = vmatprep.subr.mxu0 %v1032
    %4440 = vmatpush1.msra.mxu0 %v1031
    %4441 = vmatprep.subr.mxu0 %v1040
    %4442 = vmatpush1.msra.mxu0 %v1039
    %4443 = vmatprep.subr.mxu0 %v1048
    %4444 = vmatpush1.msra.mxu0 %v1047
    %4445 = vmatprep.subr.mxu0 %v1056
    %4446 = vmatpush1.msra.mxu0 %v1055
    %4447 = vmatprep.subr.mxu0 %v1064
    %4448 = vmatpush1.msra.mxu0 %v1063
    %4449 = vmatprep.subr.mxu0 %v1072
    %4450 = vmatpush1.msra.mxu0 %v1071
    %4451 = vmatprep.subr.mxu0 %v1080
    %4452 = vmatpush1.msra.mxu0 %v1079
    %4453 = vmatprep.subr.mxu0 %v1088
    %4454 = vmatpush1.msra.mxu0 %v1087
    %4455 = vmatprep.subr.mxu0 %v1096
    %4456 = vmatpush1.msra.mxu0 %v1095
    %4457 = vmatprep.subr.mxu0 %v1104
    %4458 = vmatpush1.msra.mxu0 %v1103
    %4459 = vmatprep.subr.mxu0 %v1112
    %4460 = vmatpush1.msra.mxu0 %v1111
    %4461 = vmatprep.subr.mxu0 %v1120
    %4462 = vmatpush1.msra.mxu0 %v1119
    %4463 = vmatprep.subr.mxu0 %v1128
    %4464 = vmatpush1.msra.mxu0 %v1127
    %4465 = vmatprep.subr.mxu0 %v1136
    %4466 = vmatpush1.msra.mxu0 %v1135
    %4467 = vmatprep.subr.mxu0 %v1144
    %4468 = vmatpush1.msra.mxu0 %v1143
    %4469 = vmatprep.subr.mxu0 %v1152
    %4470 = vmatpush1.msra.mxu0 %v1151
    %4471 = vmatprep.subr.mxu0 %v1160
    %4472 = vmatpush1.msra.mxu0 %v1159
    %4473 = vmatprep.subr.mxu0 %v1168
    %4474 = vmatpush1.msra.mxu0 %v1167
    %4475 = vmatprep.subr.mxu0 %v1176
    %4476 = vmatpush1.msra.mxu0 %v1175
    %4477 = vmatprep.subr.mxu0 %v1184
    %4478 = vmatpush1.msra.mxu0 %v1183
    %4479 = vmatprep.subr.mxu0 %v1192
    %4480 = vmatpush1.msra.mxu0 %v1191
    %4481 = vmatprep.subr.mxu0 %v1200
    %4482 = vmatpush1.msra.mxu0 %v1199
    %4483 = vmatprep.subr.mxu0 %v1208
    %4484 = vmatpush1.msra.mxu0 %v1207
    %4485 = vmatprep.subr.mxu0 %v1216
    %4486 = vmatpush1.msra.mxu0 %v1215
    %4487 = vmatprep.subr.mxu0 %v1224
    %4488 = vmatpush1.msra.mxu0 %v1223
    %4489 = vmatprep.subr.mxu0 %v1232
    %4490 = vmatpush1.msra.mxu0 %v1231
    %4491 = vmatprep.subr.mxu0 %v1240
    %4492 = vmatpush1.msra.mxu0 %v1239
    %4493 = vmatprep.subr.mxu0 %v1248
    %4494 = vmatpush1.msra.mxu0 %v1247
    %4495 = vmatprep.subr.mxu0 %v1256
    %4496 = vmatpush1.msra.mxu0 %v1255
    %4497 = vmatprep.subr.mxu0 %v1264
    %4498 = vmatpush1.msra.mxu0 %v1263
    %4499 = vmatprep.mubr.f32.mxu0 %v3986
    %4500 = vmatmul.mubr.f32.gmra.mrb[0].mxu0 %v3985
    %v4501 = vpop.f32.mrb[0].mxu0
    %v4502 = vadd.f32 0.0, %v4501
    %v4503 = vpop.f32.mrb[0].mxu0
    %v4504 = vadd.f32 0.0, %v4503
    %4505 = vdwg.mxu0
    %4506 = vmatprep.subr.mxu0 %v1018
    %4507 = vmatpush1.msra.mxu0 %v1017
    %4508 = vmatprep.subr.mxu0 %v1026
    %4509 = vmatpush1.msra.mxu0 %v1025
    %4510 = vmatprep.subr.mxu0 %v1034
    %4511 = vmatpush1.msra.mxu0 %v1033
    %4512 = vmatprep.subr.mxu0 %v1042
    %4513 = vmatpush1.msra.mxu0 %v1041
    %4514 = vmatprep.subr.mxu0 %v1050
    %4515 = vmatpush1.msra.mxu0 %v1049
    %4516 = vmatprep.subr.mxu0 %v1058
    %4517 = vmatpush1.msra.mxu0 %v1057
    %4518 = vmatprep.subr.mxu0 %v1066
    %4519 = vmatpush1.msra.mxu0 %v1065
    %4520 = vmatprep.subr.mxu0 %v1074
    %4521 = vmatpush1.msra.mxu0 %v1073
    %4522 = vmatprep.subr.mxu0 %v1082
    %4523 = vmatpush1.msra.mxu0 %v1081
    %4524 = vmatprep.subr.mxu0 %v1090
    %4525 = vmatpush1.msra.mxu0 %v1089
    %4526 = vmatprep.subr.mxu0 %v1098
    %4527 = vmatpush1.msra.mxu0 %v1097
    %4528 = vmatprep.subr.mxu0 %v1106
    %4529 = vmatpush1.msra.mxu0 %v1105
    %4530 = vmatprep.subr.mxu0 %v1114
    %4531 = vmatpush1.msra.mxu0 %v1113
    %4532 = vmatprep.subr.mxu0 %v1122
    %4533 = vmatpush1.msra.mxu0 %v1121
    %4534 = vmatprep.subr.mxu0 %v1130
    %4535 = vmatpush1.msra.mxu0 %v1129
    %4536 = vmatprep.subr.mxu0 %v1138
    %4537 = vmatpush1.msra.mxu0 %v1137
    %4538 = vmatprep.subr.mxu0 %v1146
    %4539 = vmatpush1.msra.mxu0 %v1145
    %4540 = vmatprep.subr.mxu0 %v1154
    %4541 = vmatpush1.msra.mxu0 %v1153
    %4542 = vmatprep.subr.mxu0 %v1162
    %4543 = vmatpush1.msra.mxu0 %v1161
    %4544 = vmatprep.subr.mxu0 %v1170
    %4545 = vmatpush1.msra.mxu0 %v1169
    %4546 = vmatprep.subr.mxu0 %v1178
    %4547 = vmatpush1.msra.mxu0 %v1177
    %4548 = vmatprep.subr.mxu0 %v1186
    %4549 = vmatpush1.msra.mxu0 %v1185
    %4550 = vmatprep.subr.mxu0 %v1194
    %4551 = vmatpush1.msra.mxu0 %v1193
    %4552 = vmatprep.subr.mxu0 %v1202
    %4553 = vmatpush1.msra.mxu0 %v1201
    %4554 = vmatprep.subr.mxu0 %v1210
    %4555 = vmatpush1.msra.mxu0 %v1209
    %4556 = vmatprep.subr.mxu0 %v1218
    %4557 = vmatpush1.msra.mxu0 %v1217
    %4558 = vmatprep.subr.mxu0 %v1226
    %4559 = vmatpush1.msra.mxu0 %v1225
    %4560 = vmatprep.subr.mxu0 %v1234
    %4561 = vmatpush1.msra.mxu0 %v1233
    %4562 = vmatprep.subr.mxu0 %v1242
    %4563 = vmatpush1.msra.mxu0 %v1241
    %4564 = vmatprep.subr.mxu0 %v1250
    %4565 = vmatpush1.msra.mxu0 %v1249
    %4566 = vmatprep.subr.mxu0 %v1258
    %4567 = vmatpush1.msra.mxu0 %v1257
    %4568 = vmatprep.subr.mxu0 %v1266
    %4569 = vmatpush1.msra.mxu0 %v1265
    %4570 = vmatprep.mubr.f32.mxu0 %v3986
    %4571 = vmatmul.mubr.f32.gmra.mrb[0].mxu0 %v3985
    %v4572 = vpop.f32.mrb[0].mxu0
    %v4573 = vadd.f32 0.0, %v4572
    %v4574 = vpop.f32.mrb[0].mxu0
    %v4575 = vadd.f32 0.0, %v4574
    %4576 = vdwg.mxu0
    %4577 = vmatprep.subr.mxu0 %v1020
    %4578 = vmatpush1.msra.mxu0 %v1019
    %4579 = vmatprep.subr.mxu0 %v1028
    %4580 = vmatpush1.msra.mxu0 %v1027
    %4581 = vmatprep.subr.mxu0 %v1036
    %4582 = vmatpush1.msra.mxu0 %v1035
    %4583 = vmatprep.subr.mxu0 %v1044
    %4584 = vmatpush1.msra.mxu0 %v1043
    %4585 = vmatprep.subr.mxu0 %v1052
    %4586 = vmatpush1.msra.mxu0 %v1051
    %4587 = vmatprep.subr.mxu0 %v1060
    %4588 = vmatpush1.msra.mxu0 %v1059
    %4589 = vmatprep.subr.mxu0 %v1068
    %4590 = vmatpush1.msra.mxu0 %v1067
    %4591 = vmatprep.subr.mxu0 %v1076
    %4592 = vmatpush1.msra.mxu0 %v1075
    %4593 = vmatprep.subr.mxu0 %v1084
    %4594 = vmatpush1.msra.mxu0 %v1083
    %4595 = vmatprep.subr.mxu0 %v1092
    %4596 = vmatpush1.msra.mxu0 %v1091
    %4597 = vmatprep.subr.mxu0 %v1100
    %4598 = vmatpush1.msra.mxu0 %v1099
    %4599 = vmatprep.subr.mxu0 %v1108
    %4600 = vmatpush1.msra.mxu0 %v1107
    %4601 = vmatprep.subr.mxu0 %v1116
    %4602 = vmatpush1.msra.mxu0 %v1115
    %4603 = vmatprep.subr.mxu0 %v1124
    %4604 = vmatpush1.msra.mxu0 %v1123
    %4605 = vmatprep.subr.mxu0 %v1132
    %4606 = vmatpush1.msra.mxu0 %v1131
    %4607 = vmatprep.subr.mxu0 %v1140
    %4608 = vmatpush1.msra.mxu0 %v1139
    %4609 = vmatprep.subr.mxu0 %v1148
    %4610 = vmatpush1.msra.mxu0 %v1147
    %4611 = vmatprep.subr.mxu0 %v1156
    %4612 = vmatpush1.msra.mxu0 %v1155
    %4613 = vmatprep.subr.mxu0 %v1164
    %4614 = vmatpush1.msra.mxu0 %v1163
    %4615 = vmatprep.subr.mxu0 %v1172
    %4616 = vmatpush1.msra.mxu0 %v1171
    %4617 = vmatprep.subr.mxu0 %v1180
    %4618 = vmatpush1.msra.mxu0 %v1179
    %4619 = vmatprep.subr.mxu0 %v1188
    %4620 = vmatpush1.msra.mxu0 %v1187
    %4621 = vmatprep.subr.mxu0 %v1196
    %4622 = vmatpush1.msra.mxu0 %v1195
    %4623 = vmatprep.subr.mxu0 %v1204
    %4624 = vmatpush1.msra.mxu0 %v1203
    %4625 = vmatprep.subr.mxu0 %v1212
    %4626 = vmatpush1.msra.mxu0 %v1211
    %4627 = vmatprep.subr.mxu0 %v1220
    %4628 = vmatpush1.msra.mxu0 %v1219
    %4629 = vmatprep.subr.mxu0 %v1228
    %4630 = vmatpush1.msra.mxu0 %v1227
    %4631 = vmatprep.subr.mxu0 %v1236
    %4632 = vmatpush1.msra.mxu0 %v1235
    %4633 = vmatprep.subr.mxu0 %v1244
    %4634 = vmatpush1.msra.mxu0 %v1243
    %4635 = vmatprep.subr.mxu0 %v1252
    %4636 = vmatpush1.msra.mxu0 %v1251
    %4637 = vmatprep.subr.mxu0 %v1260
    %4638 = vmatpush1.msra.mxu0 %v1259
    %4639 = vmatprep.subr.mxu0 %v1268
    %4640 = vmatpush1.msra.mxu0 %v1267
    %4641 = vmatprep.mubr.f32.mxu0 %v3986
    %4642 = vmatmul.mubr.f32.gmra.mrb[0].mxu0 %v3985
    %v4643 = vpop.f32.mrb[0].mxu0
    %v4644 = vadd.f32 0.0, %v4643
    %v4645 = vpop.f32.mrb[0].mxu0
    %v4646 = vadd.f32 0.0, %v4645
    %4647 = vdwg.mxu0
    %v4648 = vld [vmem:[#allocation2 + $0x100] sm:$0xff]
    %v4649 = vld [vmem:[#allocation2 + $0x108] sm:$0xff]
    %v4650 = vld [vmem:[#allocation2 + $0x110] sm:$0xff]
    %v4651 = vld [vmem:[#allocation2 + $0x118] sm:$0xff]
    %v4652 = vld [vmem:[#allocation2 + $0x120] sm:$0xff]
    %v4653 = vld [vmem:[#allocation2 + $0x128] sm:$0xff]
    %v4654 = vld [vmem:[#allocation2 + $0x130] sm:$0xff]
    %v4655 = vld [vmem:[#allocation2 + $0x138] sm:$0xff]
    %v4656 = vadd.f32 %v4648, %v4431
    %v4657 = vadd.f32 %v4649, %v4433
    %v4658 = vadd.f32 %v4650, %v4502
    %v4659 = vadd.f32 %v4651, %v4504
    %v4660 = vadd.f32 %v4652, %v4573
    %v4661 = vadd.f32 %v4653, %v4575
    %v4662 = vadd.f32 %v4654, %v4644
    %v4663 = vadd.f32 %v4655, %v4646
    %v4664 = vmul.f32 %v4656, 0.5
    %v4665 = vmul.f32 %v4657, 0.5
    %v4666 = vmul.f32 %v4658, 0.5
    %v4667 = vmul.f32 %v4659, 0.5
    %v4668 = vmul.f32 %v4660, 0.5
    %v4669 = vmul.f32 %v4661, 0.5
    %v4670 = vtanh.pop %v4664
    %v4671 = vtanh.pop %v4665
    %v4672 = vtanh.pop %v4666
    %v4673 = vtanh.pop %v4667
    %v4674 = vtanh.pop %v4668
    %v4675 = vtanh.pop %v4669
    %v4676 = vmul.f32 %v4670, 0.5
    %v4677 = vmul.f32 %v4671, 0.5
    %v4678 = vmul.f32 %v4672, 0.5
    %v4679 = vmul.f32 %v4673, 0.5
    %v4680 = vmul.f32 %v4674, 0.5
    %v4681 = vmul.f32 %v4675, 0.5
    %v4682 = vadd.f32 %v4676, 0.5
    %v4683 = vadd.f32 %v4677, 0.5
    %v4684 = vadd.f32 %v4678, 0.5
    %v4685 = vadd.f32 %v4679, 0.5
    %v4686 = vadd.f32 %v4680, 0.5
    %v4687 = vadd.f32 %v4681, 0.5
    %v4688 = vtanh.pop %v4662
    %v4689 = vtanh.pop %v4663
    %v4690 = vmul.f32 %v4684, %v3981
    %v4691 = vmul.f32 %v4685, %v3982
    %v4692 = vmul.f32 %v4682, %v4688
    %v4693 = vmul.f32 %v4683, %v4689
    %v4694 = vadd.f32 %v4690, %v4692
    %v4695 = vadd.f32 %v4691, %v4693
    %v4696 = vtanh.pop %v4694
    %v4697 = vtanh.pop %v4695
    %v4698 = vmul.f32 %v4686, %v4696
    %v4699 = vmul.f32 %v4687, %v4697
    %4700 = vmatprep.subr.mxu0 %v1270
    %4701 = vmatpush1.msra.mxu0 %v1269
    %4702 = vmatprep.subr.mxu0 %v1274
    %4703 = vmatpush1.msra.mxu0 %v1273
    %4704 = vmatprep.subr.mxu0 %v1278
    %4705 = vmatpush1.msra.mxu0 %v1277
    %4706 = vmatprep.subr.mxu0 %v1282
    %4707 = vmatpush1.msra.mxu0 %v1281
    %4708 = vmatprep.subr.mxu0 %v1286
    %4709 = vmatpush1.msra.mxu0 %v1285
    %4710 = vmatprep.subr.mxu0 %v1290
    %4711 = vmatpush1.msra.mxu0 %v1289
    %4712 = vmatprep.subr.mxu0 %v1294
    %4713 = vmatpush1.msra.mxu0 %v1293
    %4714 = vmatprep.subr.mxu0 %v1298
    %4715 = vmatpush1.msra.mxu0 %v1297
    %4716 = vmatprep.subr.mxu0 %v1302
    %4717 = vmatpush1.msra.mxu0 %v1301
    %4718 = vmatprep.subr.mxu0 %v1306
    %4719 = vmatpush1.msra.mxu0 %v1305
    %4720 = vmatprep.subr.mxu0 %v1310
    %4721 = vmatpush1.msra.mxu0 %v1309
    %4722 = vmatprep.subr.mxu0 %v1314
    %4723 = vmatpush1.msra.mxu0 %v1313
    %4724 = vmatprep.subr.mxu0 %v1318
    %4725 = vmatpush1.msra.mxu0 %v1317
    %4726 = vmatprep.subr.mxu0 %v1322
    %4727 = vmatpush1.msra.mxu0 %v1321
    %4728 = vmatprep.subr.mxu0 %v1326
    %4729 = vmatpush1.msra.mxu0 %v1325
    %4730 = vmatprep.subr.mxu0 %v1330
    %4731 = vmatpush1.msra.mxu0 %v1329
    %4732 = vmatprep.subr.mxu0 0.0
    %4733 = vmatpush1.msra.mxu0 0.0
    %4734 = vmatprep.subr.mxu0 0.0
    %4735 = vmatpush1.msra.mxu0 0.0
    %4736 = vmatprep.subr.mxu0 0.0
    %4737 = vmatpush1.msra.mxu0 0.0
    %4738 = vmatprep.subr.mxu0 0.0
    %4739 = vmatpush1.msra.mxu0 0.0
    %4740 = vmatprep.subr.mxu0 0.0
    %4741 = vmatpush1.msra.mxu0 0.0
    %4742 = vmatprep.subr.mxu0 0.0
    %4743 = vmatpush1.msra.mxu0 0.0
    %4744 = vmatprep.subr.mxu0 0.0
    %4745 = vmatpush1.msra.mxu0 0.0
    %4746 = vmatprep.subr.mxu0 0.0
    %4747 = vmatpush1.msra.mxu0 0.0
    %4748 = vmatprep.subr.mxu0 0.0
    %4749 = vmatpush1.msra.mxu0 0.0
    %4750 = vmatprep.subr.mxu0 0.0
    %4751 = vmatpush1.msra.mxu0 0.0
    %4752 = vmatprep.subr.mxu0 0.0
    %4753 = vmatpush1.msra.mxu0 0.0
    %4754 = vmatprep.subr.mxu0 0.0
    %4755 = vmatpush1.msra.mxu0 0.0
    %4756 = vmatprep.subr.mxu0 0.0
    %4757 = vmatpush1.msra.mxu0 0.0
    %4758 = vmatprep.subr.mxu0 0.0
    %4759 = vmatpush1.msra.mxu0 0.0
    %4760 = vmatprep.subr.mxu0 0.0
    %4761 = vmatpush1.msra.mxu0 0.0
    %4762 = vmatprep.subr.mxu0 0.0
    %4763 = vmatpush1.msra.mxu0 0.0
    %4764 = vmatprep.mubr.f32.mxu0 0.0
    %4765 = vmatmul.mubr.f32.gmra.mrb[0].mxu0 %v4292
    %v4766 = vpop.f32.mrb[0].mxu0
    %v4767 = vadd.f32 0.0, %v4766
    %v4768 = vpop.f32.mrb[0].mxu0
    %v4769 = vadd.f32 0.0, %v4768
    %4770 = vdwg.mxu0
    %4771 = vmatprep.subr.mxu0 %v1272
    %4772 = vmatpush1.msra.mxu0 %v1271
    %4773 = vmatprep.subr.mxu0 %v1276
    %4774 = vmatpush1.msra.mxu0 %v1275
    %4775 = vmatprep.subr.mxu0 %v1280
    %4776 = vmatpush1.msra.mxu0 %v1279
    %4777 = vmatprep.subr.mxu0 %v1284
    %4778 = vmatpush1.msra.mxu0 %v1283
    %4779 = vmatprep.subr.mxu0 %v1288
    %4780 = vmatpush1.msra.mxu0 %v1287
    %4781 = vmatprep.subr.mxu0 %v1292
    %4782 = vmatpush1.msra.mxu0 %v1291
    %4783 = vmatprep.subr.mxu0 %v1296
    %4784 = vmatpush1.msra.mxu0 %v1295
    %4785 = vmatprep.subr.mxu0 %v1300
    %4786 = vmatpush1.msra.mxu0 %v1299
    %4787 = vmatprep.subr.mxu0 %v1304
    %4788 = vmatpush1.msra.mxu0 %v1303
    %4789 = vmatprep.subr.mxu0 %v1308
    %4790 = vmatpush1.msra.mxu0 %v1307
    %4791 = vmatprep.subr.mxu0 %v1312
    %4792 = vmatpush1.msra.mxu0 %v1311
    %4793 = vmatprep.subr.mxu0 %v1316
    %4794 = vmatpush1.msra.mxu0 %v1315
    %4795 = vmatprep.subr.mxu0 %v1320
    %4796 = vmatpush1.msra.mxu0 %v1319
    %4797 = vmatprep.subr.mxu0 %v1324
    %4798 = vmatpush1.msra.mxu0 %v1323
    %4799 = vmatprep.subr.mxu0 %v1328
    %4800 = vmatpush1.msra.mxu0 %v1327
    %4801 = vmatprep.subr.mxu0 %v1332
    %4802 = vmatpush1.msra.mxu0 %v1331
    %4803 = vmatprep.subr.mxu0 0.0
    %4804 = vmatpush1.msra.mxu0 0.0
    %4805 = vmatprep.subr.mxu0 0.0
    %4806 = vmatpush1.msra.mxu0 0.0
    %4807 = vmatprep.subr.mxu0 0.0
    %4808 = vmatpush1.msra.mxu0 0.0
    %4809 = vmatprep.subr.mxu0 0.0
    %4810 = vmatpush1.msra.mxu0 0.0
    %4811 = vmatprep.subr.mxu0 0.0
    %4812 = vmatpush1.msra.mxu0 0.0
    %4813 = vmatprep.subr.mxu0 0.0
    %4814 = vmatpush1.msra.mxu0 0.0
    %4815 = vmatprep.subr.mxu0 0.0
    %4816 = vmatpush1.msra.mxu0 0.0
    %4817 = vmatprep.subr.mxu0 0.0
    %4818 = vmatpush1.msra.mxu0 0.0
    %4819 = vmatprep.subr.mxu0 0.0
    %4820 = vmatpush1.msra.mxu0 0.0
    %4821 = vmatprep.subr.mxu0 0.0
    %4822 = vmatpush1.msra.mxu0 0.0
    %4823 = vmatprep.subr.mxu0 0.0
    %4824 = vmatpush1.msra.mxu0 0.0
    %4825 = vmatprep.subr.mxu0 0.0
    %4826 = vmatpush1.msra.mxu0 0.0
    %4827 = vmatprep.subr.mxu0 0.0
    %4828 = vmatpush1.msra.mxu0 0.0
    %4829 = vmatprep.subr.mxu0 0.0
    %4830 = vmatpush1.msra.mxu0 0.0
    %4831 = vmatprep.subr.mxu0 0.0
    %4832 = vmatpush1.msra.mxu0 0.0
    %4833 = vmatprep.subr.mxu0 0.0
    %4834 = vmatpush1.msra.mxu0 0.0
    %4835 = vmatprep.mubr.f32.mxu0 0.0
    %4836 = vmatmul.mubr.f32.gmra.mrb[0].mxu0 %v4292
    %v4837 = vpop.f32.mrb[0].mxu0
    %v4838 = vadd.f32 0.0, %v4837
    %v4839 = vpop.f32.mrb[0].mxu0
    %v4840 = vadd.f32 0.0, %v4839
    %4841 = vdwg.mxu0
    %4842 = vmatprep.subr.mxu0 %v1334
    %4843 = vmatpush1.msra.mxu0 %v1333
    %4844 = vmatprep.subr.mxu0 %v1338
    %4845 = vmatpush1.msra.mxu0 %v1337
    %4846 = vmatprep.subr.mxu0 %v1342
    %4847 = vmatpush1.msra.mxu0 %v1341
    %4848 = vmatprep.subr.mxu0 %v1346
    %4849 = vmatpush1.msra.mxu0 %v1345
    %4850 = vmatprep.subr.mxu0 %v1350
    %4851 = vmatpush1.msra.mxu0 %v1349
    %4852 = vmatprep.subr.mxu0 %v1354
    %4853 = vmatpush1.msra.mxu0 %v1353
    %4854 = vmatprep.subr.mxu0 %v1358
    %4855 = vmatpush1.msra.mxu0 %v1357
    %4856 = vmatprep.subr.mxu0 %v1362
    %4857 = vmatpush1.msra.mxu0 %v1361
    %4858 = vmatprep.subr.mxu0 %v1366
    %4859 = vmatpush1.msra.mxu0 %v1365
    %4860 = vmatprep.subr.mxu0 %v1370
    %4861 = vmatpush1.msra.mxu0 %v1369
    %4862 = vmatprep.subr.mxu0 %v1374
    %4863 = vmatpush1.msra.mxu0 %v1373
    %4864 = vmatprep.subr.mxu0 %v1378
    %4865 = vmatpush1.msra.mxu0 %v1377
    %4866 = vmatprep.subr.mxu0 %v1382
    %4867 = vmatpush1.msra.mxu0 %v1381
    %4868 = vmatprep.subr.mxu0 %v1386
    %4869 = vmatpush1.msra.mxu0 %v1385
    %4870 = vmatprep.subr.mxu0 %v1390
    %4871 = vmatpush1.msra.mxu0 %v1389
    %4872 = vmatprep.subr.mxu0 %v1394
    %4873 = vmatpush1.msra.mxu0 %v1393
    %4874 = vmatprep.subr.mxu0 %v1398
    %4875 = vmatpush1.msra.mxu0 %v1397
    %4876 = vmatprep.subr.mxu0 %v1402
    %4877 = vmatpush1.msra.mxu0 %v1401
    %4878 = vmatprep.subr.mxu0 %v1406
    %4879 = vmatpush1.msra.mxu0 %v1405
    %4880 = vmatprep.subr.mxu0 %v1410
    %4881 = vmatpush1.msra.mxu0 %v1409
    %4882 = vmatprep.subr.mxu0 %v1414
    %4883 = vmatpush1.msra.mxu0 %v1413
    %4884 = vmatprep.subr.mxu0 %v1418
    %4885 = vmatpush1.msra.mxu0 %v1417
    %4886 = vmatprep.subr.mxu0 %v1422
    %4887 = vmatpush1.msra.mxu0 %v1421
    %4888 = vmatprep.subr.mxu0 %v1426
    %4889 = vmatpush1.msra.mxu0 %v1425
    %4890 = vmatprep.subr.mxu0 %v1430
    %4891 = vmatpush1.msra.mxu0 %v1429
    %4892 = vmatprep.subr.mxu0 %v1434
    %4893 = vmatpush1.msra.mxu0 %v1433
    %4894 = vmatprep.subr.mxu0 %v1438
    %4895 = vmatpush1.msra.mxu0 %v1437
    %4896 = vmatprep.subr.mxu0 %v1442
    %4897 = vmatpush1.msra.mxu0 %v1441
    %4898 = vmatprep.subr.mxu0 %v1446
    %4899 = vmatpush1.msra.mxu0 %v1445
    %4900 = vmatprep.subr.mxu0 %v1450
    %4901 = vmatpush1.msra.mxu0 %v1449
    %4902 = vmatprep.subr.mxu0 %v1454
    %4903 = vmatpush1.msra.mxu0 %v1453
    %4904 = vmatprep.subr.mxu0 %v1458
    %4905 = vmatpush1.msra.mxu0 %v1457
    %4906 = vmatprep.mubr.f32.mxu0 %v4699
    %4907 = vmatmul.mubr.f32.gmra.mrb[0].mxu0 %v4698
    %v4908 = vpop.f32.mrb[0].mxu0
    %v4909 = vadd.f32 %v1967, %v4908
    %v4910 = vpop.f32.mrb[0].mxu0
    %v4911 = vadd.f32 %v1971, %v4910
    %4912 = vdwg.mxu0
    %4913 = vmatprep.subr.mxu0 %v1336
    %4914 = vmatpush1.msra.mxu0 %v1335
    %4915 = vmatprep.subr.mxu0 %v1340
    %4916 = vmatpush1.msra.mxu0 %v1339
    %4917 = vmatprep.subr.mxu0 %v1344
    %4918 = vmatpush1.msra.mxu0 %v1343
    %4919 = vmatprep.subr.mxu0 %v1348
    %4920 = vmatpush1.msra.mxu0 %v1347
    %4921 = vmatprep.subr.mxu0 %v1352
    %4922 = vmatpush1.msra.mxu0 %v1351
    %4923 = vmatprep.subr.mxu0 %v1356
    %4924 = vmatpush1.msra.mxu0 %v1355
    %4925 = vmatprep.subr.mxu0 %v1360
    %4926 = vmatpush1.msra.mxu0 %v1359
    %4927 = vmatprep.subr.mxu0 %v1364
    %4928 = vmatpush1.msra.mxu0 %v1363
    %4929 = vmatprep.subr.mxu0 %v1368
    %4930 = vmatpush1.msra.mxu0 %v1367
    %4931 = vmatprep.subr.mxu0 %v1372
    %4932 = vmatpush1.msra.mxu0 %v1371
    %4933 = vmatprep.subr.mxu0 %v1376
    %4934 = vmatpush1.msra.mxu0 %v1375
    %4935 = vmatprep.subr.mxu0 %v1380
    %4936 = vmatpush1.msra.mxu0 %v1379
    %4937 = vmatprep.subr.mxu0 %v1384
    %4938 = vmatpush1.msra.mxu0 %v1383
    %4939 = vmatprep.subr.mxu0 %v1388
    %4940 = vmatpush1.msra.mxu0 %v1387
    %4941 = vmatprep.subr.mxu0 %v1392
    %4942 = vmatpush1.msra.mxu0 %v1391
    %4943 = vmatprep.subr.mxu0 %v1396
    %4944 = vmatpush1.msra.mxu0 %v1395
    %4945 = vmatprep.subr.mxu0 %v1400
    %4946 = vmatpush1.msra.mxu0 %v1399
    %4947 = vmatprep.subr.mxu0 %v1404
    %4948 = vmatpush1.msra.mxu0 %v1403
    %4949 = vmatprep.subr.mxu0 %v1408
    %4950 = vmatpush1.msra.mxu0 %v1407
    %4951 = vmatprep.subr.mxu0 %v1412
    %4952 = vmatpush1.msra.mxu0 %v1411
    %4953 = vmatprep.subr.mxu0 %v1416
    %4954 = vmatpush1.msra.mxu0 %v1415
    %4955 = vmatprep.subr.mxu0 %v1420
    %4956 = vmatpush1.msra.mxu0 %v1419
    %4957 = vmatprep.subr.mxu0 %v1424
    %4958 = vmatpush1.msra.mxu0 %v1423
    %4959 = vmatprep.subr.mxu0 %v1428
    %4960 = vmatpush1.msra.mxu0 %v1427
    %4961 = vmatprep.subr.mxu0 %v1432
    %4962 = vmatpush1.msra.mxu0 %v1431
    %4963 = vmatprep.subr.mxu0 %v1436
    %4964 = vmatpush1.msra.mxu0 %v1435
    %4965 = vmatprep.subr.mxu0 %v1440
    %4966 = vmatpush1.msra.mxu0 %v1439
    %4967 = vmatprep.subr.mxu0 %v1444
    %4968 = vmatpush1.msra.mxu0 %v1443
    %4969 = vmatprep.subr.mxu0 %v1448
    %4970 = vmatpush1.msra.mxu0 %v1447
    %4971 = vmatprep.subr.mxu0 %v1452
    %4972 = vmatpush1.msra.mxu0 %v1451
    %4973 = vmatprep.subr.mxu0 %v1456
    %4974 = vmatpush1.msra.mxu0 %v1455
    %4975 = vmatprep.subr.mxu0 %v1460
    %4976 = vmatpush1.msra.mxu0 %v1459
    %4977 = vmatprep.mubr.f32.mxu0 %v4699
    %4978 = vmatmul.mubr.f32.gmra.mrb[0].mxu0 %v4698
    %v4979 = vpop.f32.mrb[0].mxu0
    %v4980 = vadd.f32 %v1975, %v4979
    %v4981 = vpop.f32.mrb[0].mxu0
    %v4982 = vadd.f32 %v1979, %v4981
    %4983 = vdwg.mxu0
    %v4984 = vadd.f32 %v4909, %v4767
    %v4985 = vadd.f32 %v4911, %v4769
    %v4986 = vadd.f32 %v4980, %v4838
    %v4987 = vadd.f32 %v4982, %v4840
    %v4988 = vmul.f32 %v4984, 0.5
    %v4989 = vmul.f32 %v4985, 0.5
    %v4990 = vmul.f32 %v4986, 0.5
    %v4991 = vtanh.pop %v4988
    %v4992 = vtanh.pop %v4989
    %v4993 = vtanh.pop %v4990
    %v4994 = vmul.f32 %v4991, 0.5
    %v4995 = vmul.f32 %v4992, 0.5
    %v4996 = vmul.f32 %v4993, 0.5
    %v4997 = vadd.f32 %v4994, 0.5
    %v4998 = vadd.f32 %v4995, 0.5
    %v4999 = vadd.f32 %v4996, 0.5
    %v5000 = vtanh.pop %v4987
    %v5001 = vmul.f32 %v4998, %v4290
    %v5002 = vmul.f32 %v4997, %v5000
    %v5003 = vadd.f32 %v5001, %v5002
    %v5004 = vtanh.pop %v5003
    %v5005 = vmul.f32 %v4999, %v5004
    %5006 = vmatprep.subr.mxu0 0.0
    %5007 = vmatpush1.msra.mxu0 %v1462
    %5008 = vmatprep.subr.mxu0 0.0
    %5009 = vmatpush1.msra.mxu0 %v1463
    %5010 = vmatprep.subr.mxu0 0.0
    %5011 = vmatpush1.msra.mxu0 %v1464
    %5012 = vmatprep.subr.mxu0 0.0
    %5013 = vmatpush1.msra.mxu0 %v1465
    %5014 = vmatprep.subr.mxu0 0.0
    %5015 = vmatpush1.msra.mxu0 %v1466
    %5016 = vmatprep.subr.mxu0 0.0
    %5017 = vmatpush1.msra.mxu0 %v1467
    %5018 = vmatprep.subr.mxu0 0.0
    %5019 = vmatpush1.msra.mxu0 %v1468
    %5020 = vmatprep.subr.mxu0 0.0
    %5021 = vmatpush1.msra.mxu0 %v1469
    %5022 = vmatprep.subr.mxu0 0.0
    %5023 = vmatpush1.msra.mxu0 %v1470
    %5024 = vmatprep.subr.mxu0 0.0
    %5025 = vmatpush1.msra.mxu0 %v1471
    %5026 = vmatprep.subr.mxu0 0.0
    %5027 = vmatpush1.msra.mxu0 %v1472
    %5028 = vmatprep.subr.mxu0 0.0
    %5029 = vmatpush1.msra.mxu0 %v1473
    %5030 = vmatprep.subr.mxu0 0.0
    %5031 = vmatpush1.msra.mxu0 %v1474
    %5032 = vmatprep.subr.mxu0 0.0
    %5033 = vmatpush1.msra.mxu0 %v1475
    %5034 = vmatprep.subr.mxu0 0.0
    %5035 = vmatpush1.msra.mxu0 %v1476
    %5036 = vmatprep.subr.mxu0 0.0
    %5037 = vmatpush1.msra.mxu0 %v1477
    %5038 = vmatprep.subr.mxu0 0.0
    %5039 = vmatpush1.msra.mxu0 0.0
    %5040 = vmatprep.subr.mxu0 0.0
    %5041 = vmatpush1.msra.mxu0 0.0
    %5042 = vmatprep.subr.mxu0 0.0
    %5043 = vmatpush1.msra.mxu0 0.0
    %5044 = vmatprep.subr.mxu0 0.0
    %5045 = vmatpush1.msra.mxu0 0.0
    %5046 = vmatprep.subr.mxu0 0.0
    %5047 = vmatpush1.msra.mxu0 0.0
    %5048 = vmatprep.subr.mxu0 0.0
    %5049 = vmatpush1.msra.mxu0 0.0
    %5050 = vmatprep.subr.mxu0 0.0
    %5051 = vmatpush1.msra.mxu0 0.0
    %5052 = vmatprep.subr.mxu0 0.0
    %5053 = vmatpush1.msra.mxu0 0.0
    %5054 = vmatprep.subr.mxu0 0.0
    %5055 = vmatpush1.msra.mxu0 0.0
    %5056 = vmatprep.subr.mxu0 0.0
    %5057 = vmatpush1.msra.mxu0 0.0
    %5058 = vmatprep.subr.mxu0 0.0
    %5059 = vmatpush1.msra.mxu0 0.0
    %5060 = vmatprep.subr.mxu0 0.0
    %5061 = vmatpush1.msra.mxu0 0.0
    %5062 = vmatprep.subr.mxu0 0.0
    %5063 = vmatpush1.msra.mxu0 0.0
    %5064 = vmatprep.subr.mxu0 0.0
    %5065 = vmatpush1.msra.mxu0 0.0
    %5066 = vmatprep.subr.mxu0 0.0
    %5067 = vmatpush1.msra.mxu0 0.0
    %5068 = vmatprep.subr.mxu0 0.0
    %5069 = vmatpush1.msra.mxu0 0.0
    %5070 = vmatprep.mubr.f32.mxu0 0.0
    %5071 = vmatmul.mubr.f32.gmra.mrb[0].mxu0 %v5005
    %v5072 = vpop.f32.mrb[0].mxu0
    %v5073 = vadd.f32 %v2152, %v5072
    %v5074 = vpop.f32.mrb[0].mxu0
    %5075 = vdwg.mxu0
    %5076 = vst [vmem:[%s14 + $0x20] sm:$0xff] %v5073
    %5077 = vmatprep.subr.mxu0 %v1014
    %5078 = vmatpush1.msra.mxu0 %v1013
    %5079 = vmatprep.subr.mxu0 %v1022
    %5080 = vmatpush1.msra.mxu0 %v1021
    %5081 = vmatprep.subr.mxu0 %v1030
    %5082 = vmatpush1.msra.mxu0 %v1029
    %5083 = vmatprep.subr.mxu0 %v1038
    %5084 = vmatpush1.msra.mxu0 %v1037
    %5085 = vmatprep.subr.mxu0 %v1046
    %5086 = vmatpush1.msra.mxu0 %v1045
    %5087 = vmatprep.subr.mxu0 %v1054
    %5088 = vmatpush1.msra.mxu0 %v1053
    %5089 = vmatprep.subr.mxu0 %v1062
    %5090 = vmatpush1.msra.mxu0 %v1061
    %5091 = vmatprep.subr.mxu0 %v1070
    %5092 = vmatpush1.msra.mxu0 %v1069
    %5093 = vmatprep.subr.mxu0 %v1078
    %5094 = vmatpush1.msra.mxu0 %v1077
    %5095 = vmatprep.subr.mxu0 %v1086
    %5096 = vmatpush1.msra.mxu0 %v1085
    %5097 = vmatprep.subr.mxu0 %v1094
    %5098 = vmatpush1.msra.mxu0 %v1093
    %5099 = vmatprep.subr.mxu0 %v1102
    %5100 = vmatpush1.msra.mxu0 %v1101
    %5101 = vmatprep.subr.mxu0 %v1110
    %5102 = vmatpush1.msra.mxu0 %v1109
    %5103 = vmatprep.subr.mxu0 %v1118
    %5104 = vmatpush1.msra.mxu0 %v1117
    %5105 = vmatprep.subr.mxu0 %v1126
    %5106 = vmatpush1.msra.mxu0 %v1125
    %5107 = vmatprep.subr.mxu0 %v1134
    %5108 = vmatpush1.msra.mxu0 %v1133
    %5109 = vmatprep.subr.mxu0 %v1142
    %5110 = vmatpush1.msra.mxu0 %v1141
    %5111 = vmatprep.subr.mxu0 %v1150
    %5112 = vmatpush1.msra.mxu0 %v1149
    %5113 = vmatprep.subr.mxu0 %v1158
    %5114 = vmatpush1.msra.mxu0 %v1157
    %5115 = vmatprep.subr.mxu0 %v1166
    %5116 = vmatpush1.msra.mxu0 %v1165
    %5117 = vmatprep.subr.mxu0 %v1174
    %5118 = vmatpush1.msra.mxu0 %v1173
    %5119 = vmatprep.subr.mxu0 %v1182
    %5120 = vmatpush1.msra.mxu0 %v1181
    %5121 = vmatprep.subr.mxu0 %v1190
    %5122 = vmatpush1.msra.mxu0 %v1189
    %5123 = vmatprep.subr.mxu0 %v1198
    %5124 = vmatpush1.msra.mxu0 %v1197
    %5125 = vmatprep.subr.mxu0 %v1206
    %5126 = vmatpush1.msra.mxu0 %v1205
    %5127 = vmatprep.subr.mxu0 %v1214
    %5128 = vmatpush1.msra.mxu0 %v1213
    %5129 = vmatprep.subr.mxu0 %v1222
    %5130 = vmatpush1.msra.mxu0 %v1221
    %5131 = vmatprep.subr.mxu0 %v1230
    %5132 = vmatpush1.msra.mxu0 %v1229
    %5133 = vmatprep.subr.mxu0 %v1238
    %5134 = vmatpush1.msra.mxu0 %v1237
    %5135 = vmatprep.subr.mxu0 %v1246
    %5136 = vmatpush1.msra.mxu0 %v1245
    %5137 = vmatprep.subr.mxu0 %v1254
    %5138 = vmatpush1.msra.mxu0 %v1253
    %5139 = vmatprep.subr.mxu0 %v1262
    %5140 = vmatpush1.msra.mxu0 %v1261
    %5141 = vmatprep.mubr.f32.mxu0 %v4699
    %5142 = vmatmul.mubr.f32.gmra.mrb[0].mxu0 %v4698
    %v5143 = vpop.f32.mrb[0].mxu0
    %v5144 = vadd.f32 0.0, %v5143
    %v5145 = vpop.f32.mrb[0].mxu0
    %v5146 = vadd.f32 0.0, %v5145
    %5147 = vdwg.mxu0
    %5148 = vmatprep.subr.mxu0 %v1016
    %5149 = vmatpush1.msra.mxu0 %v1015
    %5150 = vmatprep.subr.mxu0 %v1024
    %5151 = vmatpush1.msra.mxu0 %v1023
    %5152 = vmatprep.subr.mxu0 %v1032
    %5153 = vmatpush1.msra.mxu0 %v1031
    %5154 = vmatprep.subr.mxu0 %v1040
    %5155 = vmatpush1.msra.mxu0 %v1039
    %5156 = vmatprep.subr.mxu0 %v1048
    %5157 = vmatpush1.msra.mxu0 %v1047
    %5158 = vmatprep.subr.mxu0 %v1056
    %5159 = vmatpush1.msra.mxu0 %v1055
    %5160 = vmatprep.subr.mxu0 %v1064
    %5161 = vmatpush1.msra.mxu0 %v1063
    %5162 = vmatprep.subr.mxu0 %v1072
    %5163 = vmatpush1.msra.mxu0 %v1071
    %5164 = vmatprep.subr.mxu0 %v1080
    %5165 = vmatpush1.msra.mxu0 %v1079
    %5166 = vmatprep.subr.mxu0 %v1088
    %5167 = vmatpush1.msra.mxu0 %v1087
    %5168 = vmatprep.subr.mxu0 %v1096
    %5169 = vmatpush1.msra.mxu0 %v1095
    %5170 = vmatprep.subr.mxu0 %v1104
    %5171 = vmatpush1.msra.mxu0 %v1103
    %5172 = vmatprep.subr.mxu0 %v1112
    %5173 = vmatpush1.msra.mxu0 %v1111
    %5174 = vmatprep.subr.mxu0 %v1120
    %5175 = vmatpush1.msra.mxu0 %v1119
    %5176 = vmatprep.subr.mxu0 %v1128
    %5177 = vmatpush1.msra.mxu0 %v1127
    %5178 = vmatprep.subr.mxu0 %v1136
    %5179 = vmatpush1.msra.mxu0 %v1135
    %5180 = vmatprep.subr.mxu0 %v1144
    %5181 = vmatpush1.msra.mxu0 %v1143
    %5182 = vmatprep.subr.mxu0 %v1152
    %5183 = vmatpush1.msra.mxu0 %v1151
    %5184 = vmatprep.subr.mxu0 %v1160
    %5185 = vmatpush1.msra.mxu0 %v1159
    %5186 = vmatprep.subr.mxu0 %v1168
    %5187 = vmatpush1.msra.mxu0 %v1167
    %5188 = vmatprep.subr.mxu0 %v1176
    %5189 = vmatpush1.msra.mxu0 %v1175
    %5190 = vmatprep.subr.mxu0 %v1184
    %5191 = vmatpush1.msra.mxu0 %v1183
    %5192 = vmatprep.subr.mxu0 %v1192
    %5193 = vmatpush1.msra.mxu0 %v1191
    %5194 = vmatprep.subr.mxu0 %v1200
    %5195 = vmatpush1.msra.mxu0 %v1199
    %5196 = vmatprep.subr.mxu0 %v1208
    %5197 = vmatpush1.msra.mxu0 %v1207
    %5198 = vmatprep.subr.mxu0 %v1216
    %5199 = vmatpush1.msra.mxu0 %v1215
    %5200 = vmatprep.subr.mxu0 %v1224
    %5201 = vmatpush1.msra.mxu0 %v1223
    %5202 = vmatprep.subr.mxu0 %v1232
    %5203 = vmatpush1.msra.mxu0 %v1231
    %5204 = vmatprep.subr.mxu0 %v1240
    %5205 = vmatpush1.msra.mxu0 %v1239
    %5206 = vmatprep.subr.mxu0 %v1248
    %5207 = vmatpush1.msra.mxu0 %v1247
    %5208 = vmatprep.subr.mxu0 %v1256
    %5209 = vmatpush1.msra.mxu0 %v1255
    %5210 = vmatprep.subr.mxu0 %v1264
    %5211 = vmatpush1.msra.mxu0 %v1263
    %5212 = vmatprep.mubr.f32.mxu0 %v4699
    %5213 = vmatmul.mubr.f32.gmra.mrb[0].mxu0 %v4698
    %v5214 = vpop.f32.mrb[0].mxu0
    %v5215 = vadd.f32 0.0, %v5214
    %v5216 = vpop.f32.mrb[0].mxu0
    %v5217 = vadd.f32 0.0, %v5216
    %5218 = vdwg.mxu0
    %5219 = vmatprep.subr.mxu0 %v1018
    %5220 = vmatpush1.msra.mxu0 %v1017
    %5221 = vmatprep.subr.mxu0 %v1026
    %5222 = vmatpush1.msra.mxu0 %v1025
    %5223 = vmatprep.subr.mxu0 %v1034
    %5224 = vmatpush1.msra.mxu0 %v1033
    %5225 = vmatprep.subr.mxu0 %v1042
    %5226 = vmatpush1.msra.mxu0 %v1041
    %5227 = vmatprep.subr.mxu0 %v1050
    %5228 = vmatpush1.msra.mxu0 %v1049
    %5229 = vmatprep.subr.mxu0 %v1058
    %5230 = vmatpush1.msra.mxu0 %v1057
    %5231 = vmatprep.subr.mxu0 %v1066
    %5232 = vmatpush1.msra.mxu0 %v1065
    %5233 = vmatprep.subr.mxu0 %v1074
    %5234 = vmatpush1.msra.mxu0 %v1073
    %5235 = vmatprep.subr.mxu0 %v1082
    %5236 = vmatpush1.msra.mxu0 %v1081
    %5237 = vmatprep.subr.mxu0 %v1090
    %5238 = vmatpush1.msra.mxu0 %v1089
    %5239 = vmatprep.subr.mxu0 %v1098
    %5240 = vmatpush1.msra.mxu0 %v1097
    %5241 = vmatprep.subr.mxu0 %v1106
    %5242 = vmatpush1.msra.mxu0 %v1105
    %5243 = vmatprep.subr.mxu0 %v1114
    %5244 = vmatpush1.msra.mxu0 %v1113
    %5245 = vmatprep.subr.mxu0 %v1122
    %5246 = vmatpush1.msra.mxu0 %v1121
    %5247 = vmatprep.subr.mxu0 %v1130
    %5248 = vmatpush1.msra.mxu0 %v1129
    %5249 = vmatprep.subr.mxu0 %v1138
    %5250 = vmatpush1.msra.mxu0 %v1137
    %5251 = vmatprep.subr.mxu0 %v1146
    %5252 = vmatpush1.msra.mxu0 %v1145
    %5253 = vmatprep.subr.mxu0 %v1154
    %5254 = vmatpush1.msra.mxu0 %v1153
    %5255 = vmatprep.subr.mxu0 %v1162
    %5256 = vmatpush1.msra.mxu0 %v1161
    %5257 = vmatprep.subr.mxu0 %v1170
    %5258 = vmatpush1.msra.mxu0 %v1169
    %5259 = vmatprep.subr.mxu0 %v1178
    %5260 = vmatpush1.msra.mxu0 %v1177
    %5261 = vmatprep.subr.mxu0 %v1186
    %5262 = vmatpush1.msra.mxu0 %v1185
    %5263 = vmatprep.subr.mxu0 %v1194
    %5264 = vmatpush1.msra.mxu0 %v1193
    %5265 = vmatprep.subr.mxu0 %v1202
    %5266 = vmatpush1.msra.mxu0 %v1201
    %5267 = vmatprep.subr.mxu0 %v1210
    %5268 = vmatpush1.msra.mxu0 %v1209
    %5269 = vmatprep.subr.mxu0 %v1218
    %5270 = vmatpush1.msra.mxu0 %v1217
    %5271 = vmatprep.subr.mxu0 %v1226
    %5272 = vmatpush1.msra.mxu0 %v1225
    %5273 = vmatprep.subr.mxu0 %v1234
    %5274 = vmatpush1.msra.mxu0 %v1233
    %5275 = vmatprep.subr.mxu0 %v1242
    %5276 = vmatpush1.msra.mxu0 %v1241
    %5277 = vmatprep.subr.mxu0 %v1250
    %5278 = vmatpush1.msra.mxu0 %v1249
    %5279 = vmatprep.subr.mxu0 %v1258
    %5280 = vmatpush1.msra.mxu0 %v1257
    %5281 = vmatprep.subr.mxu0 %v1266
    %5282 = vmatpush1.msra.mxu0 %v1265
    %5283 = vmatprep.mubr.f32.mxu0 %v4699
    %5284 = vmatmul.mubr.f32.gmra.mrb[0].mxu0 %v4698
    %v5285 = vpop.f32.mrb[0].mxu0
    %v5286 = vadd.f32 0.0, %v5285
    %v5287 = vpop.f32.mrb[0].mxu0
    %v5288 = vadd.f32 0.0, %v5287
    %5289 = vdwg.mxu0
    %5290 = vmatprep.subr.mxu0 %v1020
    %5291 = vmatpush1.msra.mxu0 %v1019
    %5292 = vmatprep.subr.mxu0 %v1028
    %5293 = vmatpush1.msra.mxu0 %v1027
    %5294 = vmatprep.subr.mxu0 %v1036
    %5295 = vmatpush1.msra.mxu0 %v1035
    %5296 = vmatprep.subr.mxu0 %v1044
    %5297 = vmatpush1.msra.mxu0 %v1043
    %5298 = vmatprep.subr.mxu0 %v1052
    %5299 = vmatpush1.msra.mxu0 %v1051
    %5300 = vmatprep.subr.mxu0 %v1060
    %5301 = vmatpush1.msra.mxu0 %v1059
    %5302 = vmatprep.subr.mxu0 %v1068
    %5303 = vmatpush1.msra.mxu0 %v1067
    %5304 = vmatprep.subr.mxu0 %v1076
    %5305 = vmatpush1.msra.mxu0 %v1075
    %5306 = vmatprep.subr.mxu0 %v1084
    %5307 = vmatpush1.msra.mxu0 %v1083
    %5308 = vmatprep.subr.mxu0 %v1092
    %5309 = vmatpush1.msra.mxu0 %v1091
    %5310 = vmatprep.subr.mxu0 %v1100
    %5311 = vmatpush1.msra.mxu0 %v1099
    %5312 = vmatprep.subr.mxu0 %v1108
    %5313 = vmatpush1.msra.mxu0 %v1107
    %5314 = vmatprep.subr.mxu0 %v1116
    %5315 = vmatpush1.msra.mxu0 %v1115
    %5316 = vmatprep.subr.mxu0 %v1124
    %5317 = vmatpush1.msra.mxu0 %v1123
    %5318 = vmatprep.subr.mxu0 %v1132
    %5319 = vmatpush1.msra.mxu0 %v1131
    %5320 = vmatprep.subr.mxu0 %v1140
    %5321 = vmatpush1.msra.mxu0 %v1139
    %5322 = vmatprep.subr.mxu0 %v1148
    %5323 = vmatpush1.msra.mxu0 %v1147
    %5324 = vmatprep.subr.mxu0 %v1156
    %5325 = vmatpush1.msra.mxu0 %v1155
    %5326 = vmatprep.subr.mxu0 %v1164
    %5327 = vmatpush1.msra.mxu0 %v1163
    %5328 = vmatprep.subr.mxu0 %v1172
    %5329 = vmatpush1.msra.mxu0 %v1171
    %5330 = vmatprep.subr.mxu0 %v1180
    %5331 = vmatpush1.msra.mxu0 %v1179
    %5332 = vmatprep.subr.mxu0 %v1188
    %5333 = vmatpush1.msra.mxu0 %v1187
    %5334 = vmatprep.subr.mxu0 %v1196
    %5335 = vmatpush1.msra.mxu0 %v1195
    %5336 = vmatprep.subr.mxu0 %v1204
    %5337 = vmatpush1.msra.mxu0 %v1203
    %5338 = vmatprep.subr.mxu0 %v1212
    %5339 = vmatpush1.msra.mxu0 %v1211
    %5340 = vmatprep.subr.mxu0 %v1220
    %5341 = vmatpush1.msra.mxu0 %v1219
    %5342 = vmatprep.subr.mxu0 %v1228
    %5343 = vmatpush1.msra.mxu0 %v1227
    %5344 = vmatprep.subr.mxu0 %v1236
    %5345 = vmatpush1.msra.mxu0 %v1235
    %5346 = vmatprep.subr.mxu0 %v1244
    %5347 = vmatpush1.msra.mxu0 %v1243
    %5348 = vmatprep.subr.mxu0 %v1252
    %5349 = vmatpush1.msra.mxu0 %v1251
    %5350 = vmatprep.subr.mxu0 %v1260
    %5351 = vmatpush1.msra.mxu0 %v1259
    %5352 = vmatprep.subr.mxu0 %v1268
    %5353 = vmatpush1.msra.mxu0 %v1267
    %5354 = vmatprep.mubr.f32.mxu0 %v4699
    %5355 = vmatmul.mubr.f32.gmra.mrb[0].mxu0 %v4698
    %v5356 = vpop.f32.mrb[0].mxu0
    %v5357 = vadd.f32 0.0, %v5356
    %v5358 = vpop.f32.mrb[0].mxu0
    %v5359 = vadd.f32 0.0, %v5358
    %5360 = vdwg.mxu0
    %v5361 = vld [vmem:[#allocation2 + $0x140] sm:$0xff]
    %v5362 = vld [vmem:[#allocation2 + $0x148] sm:$0xff]
    %v5363 = vld [vmem:[#allocation2 + $0x150] sm:$0xff]
    %v5364 = vld [vmem:[#allocation2 + $0x158] sm:$0xff]
    %v5365 = vld [vmem:[#allocation2 + $0x160] sm:$0xff]
    %v5366 = vld [vmem:[#allocation2 + $0x168] sm:$0xff]
    %v5367 = vld [vmem:[#allocation2 + $0x170] sm:$0xff]
    %v5368 = vld [vmem:[#allocation2 + $0x178] sm:$0xff]
    %v5369 = vadd.f32 %v5361, %v5144
    %v5370 = vadd.f32 %v5362, %v5146
    %v5371 = vadd.f32 %v5363, %v5215
    %v5372 = vadd.f32 %v5364, %v5217
    %v5373 = vadd.f32 %v5365, %v5286
    %v5374 = vadd.f32 %v5366, %v5288
    %v5375 = vadd.f32 %v5367, %v5357
    %v5376 = vadd.f32 %v5368, %v5359
    %v5377 = vmul.f32 %v5369, 0.5
    %v5378 = vmul.f32 %v5370, 0.5
    %v5379 = vmul.f32 %v5371, 0.5
    %v5380 = vmul.f32 %v5372, 0.5
    %v5381 = vmul.f32 %v5373, 0.5
    %v5382 = vmul.f32 %v5374, 0.5
    %v5383 = vtanh.pop %v5377
    %v5384 = vtanh.pop %v5378
    %v5385 = vtanh.pop %v5379
    %v5386 = vtanh.pop %v5380
    %v5387 = vtanh.pop %v5381
    %v5388 = vtanh.pop %v5382
    %v5389 = vmul.f32 %v5383, 0.5
    %v5390 = vmul.f32 %v5384, 0.5
    %v5391 = vmul.f32 %v5385, 0.5
    %v5392 = vmul.f32 %v5386, 0.5
    %v5393 = vmul.f32 %v5387, 0.5
    %v5394 = vmul.f32 %v5388, 0.5
    %v5395 = vadd.f32 %v5389, 0.5
    %v5396 = vadd.f32 %v5390, 0.5
    %v5397 = vadd.f32 %v5391, 0.5
    %v5398 = vadd.f32 %v5392, 0.5
    %v5399 = vadd.f32 %v5393, 0.5
    %v5400 = vadd.f32 %v5394, 0.5
    %v5401 = vtanh.pop %v5375
    %v5402 = vtanh.pop %v5376
    %v5403 = vmul.f32 %v5397, %v4694
    %v5404 = vmul.f32 %v5398, %v4695
    %v5405 = vmul.f32 %v5395, %v5401
    %v5406 = vmul.f32 %v5396, %v5402
    %v5407 = vadd.f32 %v5403, %v5405
    %v5408 = vadd.f32 %v5404, %v5406
    %v5409 = vtanh.pop %v5407
    %v5410 = vtanh.pop %v5408
    %v5411 = vmul.f32 %v5399, %v5409
    %v5412 = vmul.f32 %v5400, %v5410
    %5413 = vmatprep.subr.mxu0 %v1270
    %5414 = vmatpush1.msra.mxu0 %v1269
    %5415 = vmatprep.subr.mxu0 %v1274
    %5416 = vmatpush1.msra.mxu0 %v1273
    %5417 = vmatprep.subr.mxu0 %v1278
    %5418 = vmatpush1.msra.mxu0 %v1277
    %5419 = vmatprep.subr.mxu0 %v1282
    %5420 = vmatpush1.msra.mxu0 %v1281
    %5421 = vmatprep.subr.mxu0 %v1286
    %5422 = vmatpush1.msra.mxu0 %v1285
    %5423 = vmatprep.subr.mxu0 %v1290
    %5424 = vmatpush1.msra.mxu0 %v1289
    %5425 = vmatprep.subr.mxu0 %v1294
    %5426 = vmatpush1.msra.mxu0 %v1293
    %5427 = vmatprep.subr.mxu0 %v1298
    %5428 = vmatpush1.msra.mxu0 %v1297
    %5429 = vmatprep.subr.mxu0 %v1302
    %5430 = vmatpush1.msra.mxu0 %v1301
    %5431 = vmatprep.subr.mxu0 %v1306
    %5432 = vmatpush1.msra.mxu0 %v1305
    %5433 = vmatprep.subr.mxu0 %v1310
    %5434 = vmatpush1.msra.mxu0 %v1309
    %5435 = vmatprep.subr.mxu0 %v1314
    %5436 = vmatpush1.msra.mxu0 %v1313
    %5437 = vmatprep.subr.mxu0 %v1318
    %5438 = vmatpush1.msra.mxu0 %v1317
    %5439 = vmatprep.subr.mxu0 %v1322
    %5440 = vmatpush1.msra.mxu0 %v1321
    %5441 = vmatprep.subr.mxu0 %v1326
    %5442 = vmatpush1.msra.mxu0 %v1325
    %5443 = vmatprep.subr.mxu0 %v1330
    %5444 = vmatpush1.msra.mxu0 %v1329
    %5445 = vmatprep.subr.mxu0 0.0
    %5446 = vmatpush1.msra.mxu0 0.0
    %5447 = vmatprep.subr.mxu0 0.0
    %5448 = vmatpush1.msra.mxu0 0.0
    %5449 = vmatprep.subr.mxu0 0.0
    %5450 = vmatpush1.msra.mxu0 0.0
    %5451 = vmatprep.subr.mxu0 0.0
    %5452 = vmatpush1.msra.mxu0 0.0
    %5453 = vmatprep.subr.mxu0 0.0
    %5454 = vmatpush1.msra.mxu0 0.0
    %5455 = vmatprep.subr.mxu0 0.0
    %5456 = vmatpush1.msra.mxu0 0.0
    %5457 = vmatprep.subr.mxu0 0.0
    %5458 = vmatpush1.msra.mxu0 0.0
    %5459 = vmatprep.subr.mxu0 0.0
    %5460 = vmatpush1.msra.mxu0 0.0
    %5461 = vmatprep.subr.mxu0 0.0
    %5462 = vmatpush1.msra.mxu0 0.0
    %5463 = vmatprep.subr.mxu0 0.0
    %5464 = vmatpush1.msra.mxu0 0.0
    %5465 = vmatprep.subr.mxu0 0.0
    %5466 = vmatpush1.msra.mxu0 0.0
    %5467 = vmatprep.subr.mxu0 0.0
    %5468 = vmatpush1.msra.mxu0 0.0
    %5469 = vmatprep.subr.mxu0 0.0
    %5470 = vmatpush1.msra.mxu0 0.0
    %5471 = vmatprep.subr.mxu0 0.0
    %5472 = vmatpush1.msra.mxu0 0.0
    %5473 = vmatprep.subr.mxu0 0.0
    %5474 = vmatpush1.msra.mxu0 0.0
    %5475 = vmatprep.subr.mxu0 0.0
    %5476 = vmatpush1.msra.mxu0 0.0
    %5477 = vmatprep.mubr.f32.mxu0 0.0
    %5478 = vmatmul.mubr.f32.gmra.mrb[0].mxu0 %v5005
    %v5479 = vpop.f32.mrb[0].mxu0
    %v5480 = vadd.f32 0.0, %v5479
    %v5481 = vpop.f32.mrb[0].mxu0
    %v5482 = vadd.f32 0.0, %v5481
    %5483 = vdwg.mxu0
    %5484 = vmatprep.subr.mxu0 %v1272
    %5485 = vmatpush1.msra.mxu0 %v1271
    %5486 = vmatprep.subr.mxu0 %v1276
    %5487 = vmatpush1.msra.mxu0 %v1275
    %5488 = vmatprep.subr.mxu0 %v1280
    %5489 = vmatpush1.msra.mxu0 %v1279
    %5490 = vmatprep.subr.mxu0 %v1284
    %5491 = vmatpush1.msra.mxu0 %v1283
    %5492 = vmatprep.subr.mxu0 %v1288
    %5493 = vmatpush1.msra.mxu0 %v1287
    %5494 = vmatprep.subr.mxu0 %v1292
    %5495 = vmatpush1.msra.mxu0 %v1291
    %5496 = vmatprep.subr.mxu0 %v1296
    %5497 = vmatpush1.msra.mxu0 %v1295
    %5498 = vmatprep.subr.mxu0 %v1300
    %5499 = vmatpush1.msra.mxu0 %v1299
    %5500 = vmatprep.subr.mxu0 %v1304
    %5501 = vmatpush1.msra.mxu0 %v1303
    %5502 = vmatprep.subr.mxu0 %v1308
    %5503 = vmatpush1.msra.mxu0 %v1307
    %5504 = vmatprep.subr.mxu0 %v1312
    %5505 = vmatpush1.msra.mxu0 %v1311
    %5506 = vmatprep.subr.mxu0 %v1316
    %5507 = vmatpush1.msra.mxu0 %v1315
    %5508 = vmatprep.subr.mxu0 %v1320
    %5509 = vmatpush1.msra.mxu0 %v1319
    %5510 = vmatprep.subr.mxu0 %v1324
    %5511 = vmatpush1.msra.mxu0 %v1323
    %5512 = vmatprep.subr.mxu0 %v1328
    %5513 = vmatpush1.msra.mxu0 %v1327
    %5514 = vmatprep.subr.mxu0 %v1332
    %5515 = vmatpush1.msra.mxu0 %v1331
    %5516 = vmatprep.subr.mxu0 0.0
    %5517 = vmatpush1.msra.mxu0 0.0
    %5518 = vmatprep.subr.mxu0 0.0
    %5519 = vmatpush1.msra.mxu0 0.0
    %5520 = vmatprep.subr.mxu0 0.0
    %5521 = vmatpush1.msra.mxu0 0.0
    %5522 = vmatprep.subr.mxu0 0.0
    %5523 = vmatpush1.msra.mxu0 0.0
    %5524 = vmatprep.subr.mxu0 0.0
    %5525 = vmatpush1.msra.mxu0 0.0
    %5526 = vmatprep.subr.mxu0 0.0
    %5527 = vmatpush1.msra.mxu0 0.0
    %5528 = vmatprep.subr.mxu0 0.0
    %5529 = vmatpush1.msra.mxu0 0.0
    %5530 = vmatprep.subr.mxu0 0.0
    %5531 = vmatpush1.msra.mxu0 0.0
    %5532 = vmatprep.subr.mxu0 0.0
    %5533 = vmatpush1.msra.mxu0 0.0
    %5534 = vmatprep.subr.mxu0 0.0
    %5535 = vmatpush1.msra.mxu0 0.0
    %5536 = vmatprep.subr.mxu0 0.0
    %5537 = vmatpush1.msra.mxu0 0.0
    %5538 = vmatprep.subr.mxu0 0.0
    %5539 = vmatpush1.msra.mxu0 0.0
    %5540 = vmatprep.subr.mxu0 0.0
    %5541 = vmatpush1.msra.mxu0 0.0
    %5542 = vmatprep.subr.mxu0 0.0
    %5543 = vmatpush1.msra.mxu0 0.0
    %5544 = vmatprep.subr.mxu0 0.0
    %5545 = vmatpush1.msra.mxu0 0.0
    %5546 = vmatprep.subr.mxu0 0.0
    %5547 = vmatpush1.msra.mxu0 0.0
    %5548 = vmatprep.mubr.f32.mxu0 0.0
    %5549 = vmatmul.mubr.f32.gmra.mrb[0].mxu0 %v5005
    %v5550 = vpop.f32.mrb[0].mxu0
    %v5551 = vadd.f32 0.0, %v5550
    %v5552 = vpop.f32.mrb[0].mxu0
    %v5553 = vadd.f32 0.0, %v5552
    %5554 = vdwg.mxu0
    %5555 = vmatprep.subr.mxu0 %v1334
    %5556 = vmatpush1.msra.mxu0 %v1333
    %5557 = vmatprep.subr.mxu0 %v1338
    %5558 = vmatpush1.msra.mxu0 %v1337
    %5559 = vmatprep.subr.mxu0 %v1342
    %5560 = vmatpush1.msra.mxu0 %v1341
    %5561 = vmatprep.subr.mxu0 %v1346
    %5562 = vmatpush1.msra.mxu0 %v1345
    %5563 = vmatprep.subr.mxu0 %v1350
    %5564 = vmatpush1.msra.mxu0 %v1349
    %5565 = vmatprep.subr.mxu0 %v1354
    %5566 = vmatpush1.msra.mxu0 %v1353
    %5567 = vmatprep.subr.mxu0 %v1358
    %5568 = vmatpush1.msra.mxu0 %v1357
    %5569 = vmatprep.subr.mxu0 %v1362
    %5570 = vmatpush1.msra.mxu0 %v1361
    %5571 = vmatprep.subr.mxu0 %v1366
    %5572 = vmatpush1.msra.mxu0 %v1365
    %5573 = vmatprep.subr.mxu0 %v1370
    %5574 = vmatpush1.msra.mxu0 %v1369
    %5575 = vmatprep.subr.mxu0 %v1374
    %5576 = vmatpush1.msra.mxu0 %v1373
    %5577 = vmatprep.subr.mxu0 %v1378
    %5578 = vmatpush1.msra.mxu0 %v1377
    %5579 = vmatprep.subr.mxu0 %v1382
    %5580 = vmatpush1.msra.mxu0 %v1381
    %5581 = vmatprep.subr.mxu0 %v1386
    %5582 = vmatpush1.msra.mxu0 %v1385
    %5583 = vmatprep.subr.mxu0 %v1390
    %5584 = vmatpush1.msra.mxu0 %v1389
    %5585 = vmatprep.subr.mxu0 %v1394
    %5586 = vmatpush1.msra.mxu0 %v1393
    %5587 = vmatprep.subr.mxu0 %v1398
    %5588 = vmatpush1.msra.mxu0 %v1397
    %5589 = vmatprep.subr.mxu0 %v1402
    %5590 = vmatpush1.msra.mxu0 %v1401
    %5591 = vmatprep.subr.mxu0 %v1406
    %5592 = vmatpush1.msra.mxu0 %v1405
    %5593 = vmatprep.subr.mxu0 %v1410
    %5594 = vmatpush1.msra.mxu0 %v1409
    %5595 = vmatprep.subr.mxu0 %v1414
    %5596 = vmatpush1.msra.mxu0 %v1413
    %5597 = vmatprep.subr.mxu0 %v1418
    %5598 = vmatpush1.msra.mxu0 %v1417
    %5599 = vmatprep.subr.mxu0 %v1422
    %5600 = vmatpush1.msra.mxu0 %v1421
    %5601 = vmatprep.subr.mxu0 %v1426
    %5602 = vmatpush1.msra.mxu0 %v1425
    %5603 = vmatprep.subr.mxu0 %v1430
    %5604 = vmatpush1.msra.mxu0 %v1429
    %5605 = vmatprep.subr.mxu0 %v1434
    %5606 = vmatpush1.msra.mxu0 %v1433
    %5607 = vmatprep.subr.mxu0 %v1438
    %5608 = vmatpush1.msra.mxu0 %v1437
    %5609 = vmatprep.subr.mxu0 %v1442
    %5610 = vmatpush1.msra.mxu0 %v1441
    %5611 = vmatprep.subr.mxu0 %v1446
    %5612 = vmatpush1.msra.mxu0 %v1445
    %5613 = vmatprep.subr.mxu0 %v1450
    %5614 = vmatpush1.msra.mxu0 %v1449
    %5615 = vmatprep.subr.mxu0 %v1454
    %5616 = vmatpush1.msra.mxu0 %v1453
    %5617 = vmatprep.subr.mxu0 %v1458
    %5618 = vmatpush1.msra.mxu0 %v1457
    %5619 = vmatprep.mubr.f32.mxu0 %v5412
    %5620 = vmatmul.mubr.f32.gmra.mrb[0].mxu0 %v5411
    %v5621 = vpop.f32.mrb[0].mxu0
    %v5622 = vadd.f32 %v1967, %v5621
    %v5623 = vpop.f32.mrb[0].mxu0
    %v5624 = vadd.f32 %v1971, %v5623
    %5625 = vdwg.mxu0
    %5626 = vmatprep.subr.mxu0 %v1336
    %5627 = vmatpush1.msra.mxu0 %v1335
    %5628 = vmatprep.subr.mxu0 %v1340
    %5629 = vmatpush1.msra.mxu0 %v1339
    %5630 = vmatprep.subr.mxu0 %v1344
    %5631 = vmatpush1.msra.mxu0 %v1343
    %5632 = vmatprep.subr.mxu0 %v1348
    %5633 = vmatpush1.msra.mxu0 %v1347
    %5634 = vmatprep.subr.mxu0 %v1352
    %5635 = vmatpush1.msra.mxu0 %v1351
    %5636 = vmatprep.subr.mxu0 %v1356
    %5637 = vmatpush1.msra.mxu0 %v1355
    %5638 = vmatprep.subr.mxu0 %v1360
    %5639 = vmatpush1.msra.mxu0 %v1359
    %5640 = vmatprep.subr.mxu0 %v1364
    %5641 = vmatpush1.msra.mxu0 %v1363
    %5642 = vmatprep.subr.mxu0 %v1368
    %5643 = vmatpush1.msra.mxu0 %v1367
    %5644 = vmatprep.subr.mxu0 %v1372
    %5645 = vmatpush1.msra.mxu0 %v1371
    %5646 = vmatprep.subr.mxu0 %v1376
    %5647 = vmatpush1.msra.mxu0 %v1375
    %5648 = vmatprep.subr.mxu0 %v1380
    %5649 = vmatpush1.msra.mxu0 %v1379
    %5650 = vmatprep.subr.mxu0 %v1384
    %5651 = vmatpush1.msra.mxu0 %v1383
    %5652 = vmatprep.subr.mxu0 %v1388
    %5653 = vmatpush1.msra.mxu0 %v1387
    %5654 = vmatprep.subr.mxu0 %v1392
    %5655 = vmatpush1.msra.mxu0 %v1391
    %5656 = vmatprep.subr.mxu0 %v1396
    %5657 = vmatpush1.msra.mxu0 %v1395
    %5658 = vmatprep.subr.mxu0 %v1400
    %5659 = vmatpush1.msra.mxu0 %v1399
    %5660 = vmatprep.subr.mxu0 %v1404
    %5661 = vmatpush1.msra.mxu0 %v1403
    %5662 = vmatprep.subr.mxu0 %v1408
    %5663 = vmatpush1.msra.mxu0 %v1407
    %5664 = vmatprep.subr.mxu0 %v1412
    %5665 = vmatpush1.msra.mxu0 %v1411
    %5666 = vmatprep.subr.mxu0 %v1416
    %5667 = vmatpush1.msra.mxu0 %v1415
    %5668 = vmatprep.subr.mxu0 %v1420
    %5669 = vmatpush1.msra.mxu0 %v1419
    %5670 = vmatprep.subr.mxu0 %v1424
    %5671 = vmatpush1.msra.mxu0 %v1423
    %5672 = vmatprep.subr.mxu0 %v1428
    %5673 = vmatpush1.msra.mxu0 %v1427
    %5674 = vmatprep.subr.mxu0 %v1432
    %5675 = vmatpush1.msra.mxu0 %v1431
    %5676 = vmatprep.subr.mxu0 %v1436
    %5677 = vmatpush1.msra.mxu0 %v1435
    %5678 = vmatprep.subr.mxu0 %v1440
    %5679 = vmatpush1.msra.mxu0 %v1439
    %5680 = vmatprep.subr.mxu0 %v1444
    %5681 = vmatpush1.msra.mxu0 %v1443
    %5682 = vmatprep.subr.mxu0 %v1448
    %5683 = vmatpush1.msra.mxu0 %v1447
    %5684 = vmatprep.subr.mxu0 %v1452
    %5685 = vmatpush1.msra.mxu0 %v1451
    %5686 = vmatprep.subr.mxu0 %v1456
    %5687 = vmatpush1.msra.mxu0 %v1455
    %5688 = vmatprep.subr.mxu0 %v1460
    %5689 = vmatpush1.msra.mxu0 %v1459
    %5690 = vmatprep.mubr.f32.mxu0 %v5412
    %5691 = vmatmul.mubr.f32.gmra.mrb[0].mxu0 %v5411
    %v5692 = vpop.f32.mrb[0].mxu0
    %v5693 = vadd.f32 %v1975, %v5692
    %v5694 = vpop.f32.mrb[0].mxu0
    %v5695 = vadd.f32 %v1979, %v5694
    %5696 = vdwg.mxu0
    %v5697 = vadd.f32 %v5622, %v5480
    %v5698 = vadd.f32 %v5624, %v5482
    %v5699 = vadd.f32 %v5693, %v5551
    %v5700 = vadd.f32 %v5695, %v5553
    %v5701 = vmul.f32 %v5697, 0.5
    %v5702 = vmul.f32 %v5698, 0.5
    %v5703 = vmul.f32 %v5699, 0.5
    %v5704 = vtanh.pop %v5701
    %v5705 = vtanh.pop %v5702
    %v5706 = vtanh.pop %v5703
    %v5707 = vmul.f32 %v5704, 0.5
    %v5708 = vmul.f32 %v5705, 0.5
    %v5709 = vmul.f32 %v5706, 0.5
    %v5710 = vadd.f32 %v5707, 0.5
    %v5711 = vadd.f32 %v5708, 0.5
    %v5712 = vadd.f32 %v5709, 0.5
    %v5713 = vtanh.pop %v5700
    %v5714 = vmul.f32 %v5711, %v5003
    %v5715 = vmul.f32 %v5710, %v5713
    %v5716 = vadd.f32 %v5714, %v5715
    %v5717 = vtanh.pop %v5716
    %v5718 = vmul.f32 %v5712, %v5717
    %5719 = vmatprep.subr.mxu0 0.0
    %5720 = vmatpush1.msra.mxu0 %v1462
    %5721 = vmatprep.subr.mxu0 0.0
    %5722 = vmatpush1.msra.mxu0 %v1463
    %5723 = vmatprep.subr.mxu0 0.0
    %5724 = vmatpush1.msra.mxu0 %v1464
    %5725 = vmatprep.subr.mxu0 0.0
    %5726 = vmatpush1.msra.mxu0 %v1465
    %5727 = vmatprep.subr.mxu0 0.0
    %5728 = vmatpush1.msra.mxu0 %v1466
    %5729 = vmatprep.subr.mxu0 0.0
    %5730 = vmatpush1.msra.mxu0 %v1467
    %5731 = vmatprep.subr.mxu0 0.0
    %5732 = vmatpush1.msra.mxu0 %v1468
    %5733 = vmatprep.subr.mxu0 0.0
    %5734 = vmatpush1.msra.mxu0 %v1469
    %5735 = vmatprep.subr.mxu0 0.0
    %5736 = vmatpush1.msra.mxu0 %v1470
    %5737 = vmatprep.subr.mxu0 0.0
    %5738 = vmatpush1.msra.mxu0 %v1471
    %5739 = vmatprep.subr.mxu0 0.0
    %5740 = vmatpush1.msra.mxu0 %v1472
    %5741 = vmatprep.subr.mxu0 0.0
    %5742 = vmatpush1.msra.mxu0 %v1473
    %5743 = vmatprep.subr.mxu0 0.0
    %5744 = vmatpush1.msra.mxu0 %v1474
    %5745 = vmatprep.subr.mxu0 0.0
    %5746 = vmatpush1.msra.mxu0 %v1475
    %5747 = vmatprep.subr.mxu0 0.0
    %5748 = vmatpush1.msra.mxu0 %v1476
    %5749 = vmatprep.subr.mxu0 0.0
    %5750 = vmatpush1.msra.mxu0 %v1477
    %5751 = vmatprep.subr.mxu0 0.0
    %5752 = vmatpush1.msra.mxu0 0.0
    %5753 = vmatprep.subr.mxu0 0.0
    %5754 = vmatpush1.msra.mxu0 0.0
    %5755 = vmatprep.subr.mxu0 0.0
    %5756 = vmatpush1.msra.mxu0 0.0
    %5757 = vmatprep.subr.mxu0 0.0
    %5758 = vmatpush1.msra.mxu0 0.0
    %5759 = vmatprep.subr.mxu0 0.0
    %5760 = vmatpush1.msra.mxu0 0.0
    %5761 = vmatprep.subr.mxu0 0.0
    %5762 = vmatpush1.msra.mxu0 0.0
    %5763 = vmatprep.subr.mxu0 0.0
    %5764 = vmatpush1.msra.mxu0 0.0
    %5765 = vmatprep.subr.mxu0 0.0
    %5766 = vmatpush1.msra.mxu0 0.0
    %5767 = vmatprep.subr.mxu0 0.0
    %5768 = vmatpush1.msra.mxu0 0.0
    %5769 = vmatprep.subr.mxu0 0.0
    %5770 = vmatpush1.msra.mxu0 0.0
    %5771 = vmatprep.subr.mxu0 0.0
    %5772 = vmatpush1.msra.mxu0 0.0
    %5773 = vmatprep.subr.mxu0 0.0
    %5774 = vmatpush1.msra.mxu0 0.0
    %5775 = vmatprep.subr.mxu0 0.0
    %5776 = vmatpush1.msra.mxu0 0.0
    %5777 = vmatprep.subr.mxu0 0.0
    %5778 = vmatpush1.msra.mxu0 0.0
    %5779 = vmatprep.subr.mxu0 0.0
    %5780 = vmatpush1.msra.mxu0 0.0
    %5781 = vmatprep.subr.mxu0 0.0
    %5782 = vmatpush1.msra.mxu0 0.0
    %5783 = vmatprep.mubr.f32.mxu0 0.0
    %5784 = vmatmul.mubr.f32.gmra.mrb[0].mxu0 %v5718
    %v5785 = vpop.f32.mrb[0].mxu0
    %v5786 = vadd.f32 %v2152, %v5785
    %v5787 = vpop.f32.mrb[0].mxu0
    %5788 = vdwg.mxu0
    %5789 = vst [vmem:[%s14 + $0x28] sm:$0xff] %v5786
    %5790 = vmatprep.subr.mxu0 %v1014
    %5791 = vmatpush1.msra.mxu0 %v1013
    %5792 = vmatprep.subr.mxu0 %v1022
    %5793 = vmatpush1.msra.mxu0 %v1021
    %5794 = vmatprep.subr.mxu0 %v1030
    %5795 = vmatpush1.msra.mxu0 %v1029
    %5796 = vmatprep.subr.mxu0 %v1038
    %5797 = vmatpush1.msra.mxu0 %v1037
    %5798 = vmatprep.subr.mxu0 %v1046
    %5799 = vmatpush1.msra.mxu0 %v1045
    %5800 = vmatprep.subr.mxu0 %v1054
    %5801 = vmatpush1.msra.mxu0 %v1053
    %5802 = vmatprep.subr.mxu0 %v1062
    %5803 = vmatpush1.msra.mxu0 %v1061
    %5804 = vmatprep.subr.mxu0 %v1070
    %5805 = vmatpush1.msra.mxu0 %v1069
    %5806 = vmatprep.subr.mxu0 %v1078
    %5807 = vmatpush1.msra.mxu0 %v1077
    %5808 = vmatprep.subr.mxu0 %v1086
    %5809 = vmatpush1.msra.mxu0 %v1085
    %5810 = vmatprep.subr.mxu0 %v1094
    %5811 = vmatpush1.msra.mxu0 %v1093
    %5812 = vmatprep.subr.mxu0 %v1102
    %5813 = vmatpush1.msra.mxu0 %v1101
    %5814 = vmatprep.subr.mxu0 %v1110
    %5815 = vmatpush1.msra.mxu0 %v1109
    %5816 = vmatprep.subr.mxu0 %v1118
    %5817 = vmatpush1.msra.mxu0 %v1117
    %5818 = vmatprep.subr.mxu0 %v1126
    %5819 = vmatpush1.msra.mxu0 %v1125
    %5820 = vmatprep.subr.mxu0 %v1134
    %5821 = vmatpush1.msra.mxu0 %v1133
    %5822 = vmatprep.subr.mxu0 %v1142
    %5823 = vmatpush1.msra.mxu0 %v1141
    %5824 = vmatprep.subr.mxu0 %v1150
    %5825 = vmatpush1.msra.mxu0 %v1149
    %5826 = vmatprep.subr.mxu0 %v1158
    %5827 = vmatpush1.msra.mxu0 %v1157
    %5828 = vmatprep.subr.mxu0 %v1166
    %5829 = vmatpush1.msra.mxu0 %v1165
    %5830 = vmatprep.subr.mxu0 %v1174
    %5831 = vmatpush1.msra.mxu0 %v1173
    %5832 = vmatprep.subr.mxu0 %v1182
    %5833 = vmatpush1.msra.mxu0 %v1181
    %5834 = vmatprep.subr.mxu0 %v1190
    %5835 = vmatpush1.msra.mxu0 %v1189
    %5836 = vmatprep.subr.mxu0 %v1198
    %5837 = vmatpush1.msra.mxu0 %v1197
    %5838 = vmatprep.subr.mxu0 %v1206
    %5839 = vmatpush1.msra.mxu0 %v1205
    %5840 = vmatprep.subr.mxu0 %v1214
    %5841 = vmatpush1.msra.mxu0 %v1213
    %5842 = vmatprep.subr.mxu0 %v1222
    %5843 = vmatpush1.msra.mxu0 %v1221
    %5844 = vmatprep.subr.mxu0 %v1230
    %5845 = vmatpush1.msra.mxu0 %v1229
    %5846 = vmatprep.subr.mxu0 %v1238
    %5847 = vmatpush1.msra.mxu0 %v1237
    %5848 = vmatprep.subr.mxu0 %v1246
    %5849 = vmatpush1.msra.mxu0 %v1245
    %5850 = vmatprep.subr.mxu0 %v1254
    %5851 = vmatpush1.msra.mxu0 %v1253
    %5852 = vmatprep.subr.mxu0 %v1262
    %5853 = vmatpush1.msra.mxu0 %v1261
    %5854 = vmatprep.mubr.f32.mxu0 %v5412
    %5855 = vmatmul.mubr.f32.gmra.mrb[0].mxu0 %v5411
    %v5856 = vpop.f32.mrb[0].mxu0
    %v5857 = vadd.f32 0.0, %v5856
    %v5858 = vpop.f32.mrb[0].mxu0
    %v5859 = vadd.f32 0.0, %v5858
    %5860 = vdwg.mxu0
    %5861 = vmatprep.subr.mxu0 %v1016
    %5862 = vmatpush1.msra.mxu0 %v1015
    %5863 = vmatprep.subr.mxu0 %v1024
    %5864 = vmatpush1.msra.mxu0 %v1023
    %5865 = vmatprep.subr.mxu0 %v1032
    %5866 = vmatpush1.msra.mxu0 %v1031
    %5867 = vmatprep.subr.mxu0 %v1040
    %5868 = vmatpush1.msra.mxu0 %v1039
    %5869 = vmatprep.subr.mxu0 %v1048
    %5870 = vmatpush1.msra.mxu0 %v1047
    %5871 = vmatprep.subr.mxu0 %v1056
    %5872 = vmatpush1.msra.mxu0 %v1055
    %5873 = vmatprep.subr.mxu0 %v1064
    %5874 = vmatpush1.msra.mxu0 %v1063
    %5875 = vmatprep.subr.mxu0 %v1072
    %5876 = vmatpush1.msra.mxu0 %v1071
    %5877 = vmatprep.subr.mxu0 %v1080
    %5878 = vmatpush1.msra.mxu0 %v1079
    %5879 = vmatprep.subr.mxu0 %v1088
    %5880 = vmatpush1.msra.mxu0 %v1087
    %5881 = vmatprep.subr.mxu0 %v1096
    %5882 = vmatpush1.msra.mxu0 %v1095
    %5883 = vmatprep.subr.mxu0 %v1104
    %5884 = vmatpush1.msra.mxu0 %v1103
    %5885 = vmatprep.subr.mxu0 %v1112
    %5886 = vmatpush1.msra.mxu0 %v1111
    %5887 = vmatprep.subr.mxu0 %v1120
    %5888 = vmatpush1.msra.mxu0 %v1119
    %5889 = vmatprep.subr.mxu0 %v1128
    %5890 = vmatpush1.msra.mxu0 %v1127
    %5891 = vmatprep.subr.mxu0 %v1136
    %5892 = vmatpush1.msra.mxu0 %v1135
    %5893 = vmatprep.subr.mxu0 %v1144
    %5894 = vmatpush1.msra.mxu0 %v1143
    %5895 = vmatprep.subr.mxu0 %v1152
    %5896 = vmatpush1.msra.mxu0 %v1151
    %5897 = vmatprep.subr.mxu0 %v1160
    %5898 = vmatpush1.msra.mxu0 %v1159
    %5899 = vmatprep.subr.mxu0 %v1168
    %5900 = vmatpush1.msra.mxu0 %v1167
    %5901 = vmatprep.subr.mxu0 %v1176
    %5902 = vmatpush1.msra.mxu0 %v1175
    %5903 = vmatprep.subr.mxu0 %v1184
    %5904 = vmatpush1.msra.mxu0 %v1183
    %5905 = vmatprep.subr.mxu0 %v1192
    %5906 = vmatpush1.msra.mxu0 %v1191
    %5907 = vmatprep.subr.mxu0 %v1200
    %5908 = vmatpush1.msra.mxu0 %v1199
    %5909 = vmatprep.subr.mxu0 %v1208
    %5910 = vmatpush1.msra.mxu0 %v1207
    %5911 = vmatprep.subr.mxu0 %v1216
    %5912 = vmatpush1.msra.mxu0 %v1215
    %5913 = vmatprep.subr.mxu0 %v1224
    %5914 = vmatpush1.msra.mxu0 %v1223
    %5915 = vmatprep.subr.mxu0 %v1232
    %5916 = vmatpush1.msra.mxu0 %v1231
    %5917 = vmatprep.subr.mxu0 %v1240
    %5918 = vmatpush1.msra.mxu0 %v1239
    %5919 = vmatprep.subr.mxu0 %v1248
    %5920 = vmatpush1.msra.mxu0 %v1247
    %5921 = vmatprep.subr.mxu0 %v1256
    %5922 = vmatpush1.msra.mxu0 %v1255
    %5923 = vmatprep.subr.mxu0 %v1264
    %5924 = vmatpush1.msra.mxu0 %v1263
    %5925 = vmatprep.mubr.f32.mxu0 %v5412
    %5926 = vmatmul.mubr.f32.gmra.mrb[0].mxu0 %v5411
    %v5927 = vpop.f32.mrb[0].mxu0
    %v5928 = vadd.f32 0.0, %v5927
    %v5929 = vpop.f32.mrb[0].mxu0
    %v5930 = vadd.f32 0.0, %v5929
    %5931 = vdwg.mxu0
    %5932 = vmatprep.subr.mxu0 %v1018
    %5933 = vmatpush1.msra.mxu0 %v1017
    %5934 = vmatprep.subr.mxu0 %v1026
    %5935 = vmatpush1.msra.mxu0 %v1025
    %5936 = vmatprep.subr.mxu0 %v1034
    %5937 = vmatpush1.msra.mxu0 %v1033
    %5938 = vmatprep.subr.mxu0 %v1042
    %5939 = vmatpush1.msra.mxu0 %v1041
    %5940 = vmatprep.subr.mxu0 %v1050
    %5941 = vmatpush1.msra.mxu0 %v1049
    %5942 = vmatprep.subr.mxu0 %v1058
    %5943 = vmatpush1.msra.mxu0 %v1057
    %5944 = vmatprep.subr.mxu0 %v1066
    %5945 = vmatpush1.msra.mxu0 %v1065
    %5946 = vmatprep.subr.mxu0 %v1074
    %5947 = vmatpush1.msra.mxu0 %v1073
    %5948 = vmatprep.subr.mxu0 %v1082
    %5949 = vmatpush1.msra.mxu0 %v1081
    %5950 = vmatprep.subr.mxu0 %v1090
    %5951 = vmatpush1.msra.mxu0 %v1089
    %5952 = vmatprep.subr.mxu0 %v1098
    %5953 = vmatpush1.msra.mxu0 %v1097
    %5954 = vmatprep.subr.mxu0 %v1106
    %5955 = vmatpush1.msra.mxu0 %v1105
    %5956 = vmatprep.subr.mxu0 %v1114
    %5957 = vmatpush1.msra.mxu0 %v1113
    %5958 = vmatprep.subr.mxu0 %v1122
    %5959 = vmatpush1.msra.mxu0 %v1121
    %5960 = vmatprep.subr.mxu0 %v1130
    %5961 = vmatpush1.msra.mxu0 %v1129
    %5962 = vmatprep.subr.mxu0 %v1138
    %5963 = vmatpush1.msra.mxu0 %v1137
    %5964 = vmatprep.subr.mxu0 %v1146
    %5965 = vmatpush1.msra.mxu0 %v1145
    %5966 = vmatprep.subr.mxu0 %v1154
    %5967 = vmatpush1.msra.mxu0 %v1153
    %5968 = vmatprep.subr.mxu0 %v1162
    %5969 = vmatpush1.msra.mxu0 %v1161
    %5970 = vmatprep.subr.mxu0 %v1170
    %5971 = vmatpush1.msra.mxu0 %v1169
    %5972 = vmatprep.subr.mxu0 %v1178
    %5973 = vmatpush1.msra.mxu0 %v1177
    %5974 = vmatprep.subr.mxu0 %v1186
    %5975 = vmatpush1.msra.mxu0 %v1185
    %5976 = vmatprep.subr.mxu0 %v1194
    %5977 = vmatpush1.msra.mxu0 %v1193
    %5978 = vmatprep.subr.mxu0 %v1202
    %5979 = vmatpush1.msra.mxu0 %v1201
    %5980 = vmatprep.subr.mxu0 %v1210
    %5981 = vmatpush1.msra.mxu0 %v1209
    %5982 = vmatprep.subr.mxu0 %v1218
    %5983 = vmatpush1.msra.mxu0 %v1217
    %5984 = vmatprep.subr.mxu0 %v1226
    %5985 = vmatpush1.msra.mxu0 %v1225
    %5986 = vmatprep.subr.mxu0 %v1234
    %5987 = vmatpush1.msra.mxu0 %v1233
    %5988 = vmatprep.subr.mxu0 %v1242
    %5989 = vmatpush1.msra.mxu0 %v1241
    %5990 = vmatprep.subr.mxu0 %v1250
    %5991 = vmatpush1.msra.mxu0 %v1249
    %5992 = vmatprep.subr.mxu0 %v1258
    %5993 = vmatpush1.msra.mxu0 %v1257
    %5994 = vmatprep.subr.mxu0 %v1266
    %5995 = vmatpush1.msra.mxu0 %v1265
    %5996 = vmatprep.mubr.f32.mxu0 %v5412
    %5997 = vmatmul.mubr.f32.gmra.mrb[0].mxu0 %v5411
    %v5998 = vpop.f32.mrb[0].mxu0
    %v5999 = vadd.f32 0.0, %v5998
    %v6000 = vpop.f32.mrb[0].mxu0
    %v6001 = vadd.f32 0.0, %v6000
    %6002 = vdwg.mxu0
    %6003 = vmatprep.subr.mxu0 %v1020
    %6004 = vmatpush1.msra.mxu0 %v1019
    %6005 = vmatprep.subr.mxu0 %v1028
    %6006 = vmatpush1.msra.mxu0 %v1027
    %6007 = vmatprep.subr.mxu0 %v1036
    %6008 = vmatpush1.msra.mxu0 %v1035
    %6009 = vmatprep.subr.mxu0 %v1044
    %6010 = vmatpush1.msra.mxu0 %v1043
    %6011 = vmatprep.subr.mxu0 %v1052
    %6012 = vmatpush1.msra.mxu0 %v1051
    %6013 = vmatprep.subr.mxu0 %v1060
    %6014 = vmatpush1.msra.mxu0 %v1059
    %6015 = vmatprep.subr.mxu0 %v1068
    %6016 = vmatpush1.msra.mxu0 %v1067
    %6017 = vmatprep.subr.mxu0 %v1076
    %6018 = vmatpush1.msra.mxu0 %v1075
    %6019 = vmatprep.subr.mxu0 %v1084
    %6020 = vmatpush1.msra.mxu0 %v1083
    %6021 = vmatprep.subr.mxu0 %v1092
    %6022 = vmatpush1.msra.mxu0 %v1091
    %6023 = vmatprep.subr.mxu0 %v1100
    %6024 = vmatpush1.msra.mxu0 %v1099
    %6025 = vmatprep.subr.mxu0 %v1108
    %6026 = vmatpush1.msra.mxu0 %v1107
    %6027 = vmatprep.subr.mxu0 %v1116
    %6028 = vmatpush1.msra.mxu0 %v1115
    %6029 = vmatprep.subr.mxu0 %v1124
    %6030 = vmatpush1.msra.mxu0 %v1123
    %6031 = vmatprep.subr.mxu0 %v1132
    %6032 = vmatpush1.msra.mxu0 %v1131
    %6033 = vmatprep.subr.mxu0 %v1140
    %6034 = vmatpush1.msra.mxu0 %v1139
    %6035 = vmatprep.subr.mxu0 %v1148
    %6036 = vmatpush1.msra.mxu0 %v1147
    %6037 = vmatprep.subr.mxu0 %v1156
    %6038 = vmatpush1.msra.mxu0 %v1155
    %6039 = vmatprep.subr.mxu0 %v1164
    %6040 = vmatpush1.msra.mxu0 %v1163
    %6041 = vmatprep.subr.mxu0 %v1172
    %6042 = vmatpush1.msra.mxu0 %v1171
    %6043 = vmatprep.subr.mxu0 %v1180
    %6044 = vmatpush1.msra.mxu0 %v1179
    %6045 = vmatprep.subr.mxu0 %v1188
    %6046 = vmatpush1.msra.mxu0 %v1187
    %6047 = vmatprep.subr.mxu0 %v1196
    %6048 = vmatpush1.msra.mxu0 %v1195
    %6049 = vmatprep.subr.mxu0 %v1204
    %6050 = vmatpush1.msra.mxu0 %v1203
    %6051 = vmatprep.subr.mxu0 %v1212
    %6052 = vmatpush1.msra.mxu0 %v1211
    %6053 = vmatprep.subr.mxu0 %v1220
    %6054 = vmatpush1.msra.mxu0 %v1219
    %6055 = vmatprep.subr.mxu0 %v1228
    %6056 = vmatpush1.msra.mxu0 %v1227
    %6057 = vmatprep.subr.mxu0 %v1236
    %6058 = vmatpush1.msra.mxu0 %v1235
    %6059 = vmatprep.subr.mxu0 %v1244
    %6060 = vmatpush1.msra.mxu0 %v1243
    %6061 = vmatprep.subr.mxu0 %v1252
    %6062 = vmatpush1.msra.mxu0 %v1251
    %6063 = vmatprep.subr.mxu0 %v1260
    %6064 = vmatpush1.msra.mxu0 %v1259
    %6065 = vmatprep.subr.mxu0 %v1268
    %6066 = vmatpush1.msra.mxu0 %v1267
    %6067 = vmatprep.mubr.f32.mxu0 %v5412
    %6068 = vmatmul.mubr.f32.gmra.mrb[0].mxu0 %v5411
    %v6069 = vpop.f32.mrb[0].mxu0
    %v6070 = vadd.f32 0.0, %v6069
    %v6071 = vpop.f32.mrb[0].mxu0
    %v6072 = vadd.f32 0.0, %v6071
    %6073 = vdwg.mxu0
    %v6074 = vld [vmem:[#allocation2 + $0x180] sm:$0xff]
    %v6075 = vld [vmem:[#allocation2 + $0x188] sm:$0xff]
    %v6076 = vld [vmem:[#allocation2 + $0x190] sm:$0xff]
    %v6077 = vld [vmem:[#allocation2 + $0x198] sm:$0xff]
    %v6078 = vld [vmem:[#allocation2 + $0x1a0] sm:$0xff]
    %v6079 = vld [vmem:[#allocation2 + $0x1a8] sm:$0xff]
    %v6080 = vld [vmem:[#allocation2 + $0x1b0] sm:$0xff]
    %v6081 = vld [vmem:[#allocation2 + $0x1b8] sm:$0xff]
    %v6082 = vadd.f32 %v6074, %v5857
    %v6083 = vadd.f32 %v6075, %v5859
    %v6084 = vadd.f32 %v6076, %v5928
    %v6085 = vadd.f32 %v6077, %v5930
    %v6086 = vadd.f32 %v6078, %v5999
    %v6087 = vadd.f32 %v6079, %v6001
    %v6088 = vadd.f32 %v6080, %v6070
    %v6089 = vadd.f32 %v6081, %v6072
    %v6090 = vmul.f32 %v6082, 0.5
    %v6091 = vmul.f32 %v6083, 0.5
    %v6092 = vmul.f32 %v6084, 0.5
    %v6093 = vmul.f32 %v6085, 0.5
    %v6094 = vmul.f32 %v6086, 0.5
    %v6095 = vmul.f32 %v6087, 0.5
    %v6096 = vtanh.pop %v6090
    %v6097 = vtanh.pop %v6091
    %v6098 = vtanh.pop %v6092
    %v6099 = vtanh.pop %v6093
    %v6100 = vtanh.pop %v6094
    %v6101 = vtanh.pop %v6095
    %v6102 = vmul.f32 %v6096, 0.5
    %v6103 = vmul.f32 %v6097, 0.5
    %v6104 = vmul.f32 %v6098, 0.5
    %v6105 = vmul.f32 %v6099, 0.5
    %v6106 = vmul.f32 %v6100, 0.5
    %v6107 = vmul.f32 %v6101, 0.5
    %v6108 = vadd.f32 %v6102, 0.5
    %v6109 = vadd.f32 %v6103, 0.5
    %v6110 = vadd.f32 %v6104, 0.5
    %v6111 = vadd.f32 %v6105, 0.5
    %v6112 = vadd.f32 %v6106, 0.5
    %v6113 = vadd.f32 %v6107, 0.5
    %v6114 = vtanh.pop %v6088
    %v6115 = vtanh.pop %v6089
    %v6116 = vmul.f32 %v6110, %v5407
    %v6117 = vmul.f32 %v6111, %v5408
    %v6118 = vmul.f32 %v6108, %v6114
    %v6119 = vmul.f32 %v6109, %v6115
    %v6120 = vadd.f32 %v6116, %v6118
    %v6121 = vadd.f32 %v6117, %v6119
    %v6122 = vtanh.pop %v6120
    %v6123 = vtanh.pop %v6121
    %v6124 = vmul.f32 %v6112, %v6122
    %v6125 = vmul.f32 %v6113, %v6123
    %6126 = vmatprep.subr.mxu0 %v1270
    %6127 = vmatpush1.msra.mxu0 %v1269
    %6128 = vmatprep.subr.mxu0 %v1274
    %6129 = vmatpush1.msra.mxu0 %v1273
    %6130 = vmatprep.subr.mxu0 %v1278
    %6131 = vmatpush1.msra.mxu0 %v1277
    %6132 = vmatprep.subr.mxu0 %v1282
    %6133 = vmatpush1.msra.mxu0 %v1281
    %6134 = vmatprep.subr.mxu0 %v1286
    %6135 = vmatpush1.msra.mxu0 %v1285
    %6136 = vmatprep.subr.mxu0 %v1290
    %6137 = vmatpush1.msra.mxu0 %v1289
    %6138 = vmatprep.subr.mxu0 %v1294
    %6139 = vmatpush1.msra.mxu0 %v1293
    %6140 = vmatprep.subr.mxu0 %v1298
    %6141 = vmatpush1.msra.mxu0 %v1297
    %6142 = vmatprep.subr.mxu0 %v1302
    %6143 = vmatpush1.msra.mxu0 %v1301
    %6144 = vmatprep.subr.mxu0 %v1306
    %6145 = vmatpush1.msra.mxu0 %v1305
    %6146 = vmatprep.subr.mxu0 %v1310
    %6147 = vmatpush1.msra.mxu0 %v1309
    %6148 = vmatprep.subr.mxu0 %v1314
    %6149 = vmatpush1.msra.mxu0 %v1313
    %6150 = vmatprep.subr.mxu0 %v1318
    %6151 = vmatpush1.msra.mxu0 %v1317
    %6152 = vmatprep.subr.mxu0 %v1322
    %6153 = vmatpush1.msra.mxu0 %v1321
    %6154 = vmatprep.subr.mxu0 %v1326
    %6155 = vmatpush1.msra.mxu0 %v1325
    %6156 = vmatprep.subr.mxu0 %v1330
    %6157 = vmatpush1.msra.mxu0 %v1329
    %6158 = vmatprep.subr.mxu0 0.0
    %6159 = vmatpush1.msra.mxu0 0.0
    %6160 = vmatprep.subr.mxu0 0.0
    %6161 = vmatpush1.msra.mxu0 0.0
    %6162 = vmatprep.subr.mxu0 0.0
    %6163 = vmatpush1.msra.mxu0 0.0
    %6164 = vmatprep.subr.mxu0 0.0
    %6165 = vmatpush1.msra.mxu0 0.0
    %6166 = vmatprep.subr.mxu0 0.0
    %6167 = vmatpush1.msra.mxu0 0.0
    %6168 = vmatprep.subr.mxu0 0.0
    %6169 = vmatpush1.msra.mxu0 0.0
    %6170 = vmatprep.subr.mxu0 0.0
    %6171 = vmatpush1.msra.mxu0 0.0
    %6172 = vmatprep.subr.mxu0 0.0
    %6173 = vmatpush1.msra.mxu0 0.0
    %6174 = vmatprep.subr.mxu0 0.0
    %6175 = vmatpush1.msra.mxu0 0.0
    %6176 = vmatprep.subr.mxu0 0.0
    %6177 = vmatpush1.msra.mxu0 0.0
    %6178 = vmatprep.subr.mxu0 0.0
    %6179 = vmatpush1.msra.mxu0 0.0
    %6180 = vmatprep.subr.mxu0 0.0
    %6181 = vmatpush1.msra.mxu0 0.0
    %6182 = vmatprep.subr.mxu0 0.0
    %6183 = vmatpush1.msra.mxu0 0.0
    %6184 = vmatprep.subr.mxu0 0.0
    %6185 = vmatpush1.msra.mxu0 0.0
    %6186 = vmatprep.subr.mxu0 0.0
    %6187 = vmatpush1.msra.mxu0 0.0
    %6188 = vmatprep.subr.mxu0 0.0
    %6189 = vmatpush1.msra.mxu0 0.0
    %6190 = vmatprep.mubr.f32.mxu0 0.0
    %6191 = vmatmul.mubr.f32.gmra.mrb[0].mxu0 %v5718
    %v6192 = vpop.f32.mrb[0].mxu0
    %v6193 = vadd.f32 0.0, %v6192
    %v6194 = vpop.f32.mrb[0].mxu0
    %v6195 = vadd.f32 0.0, %v6194
    %6196 = vdwg.mxu0
    %6197 = vmatprep.subr.mxu0 %v1272
    %6198 = vmatpush1.msra.mxu0 %v1271
    %6199 = vmatprep.subr.mxu0 %v1276
    %6200 = vmatpush1.msra.mxu0 %v1275
    %6201 = vmatprep.subr.mxu0 %v1280
    %6202 = vmatpush1.msra.mxu0 %v1279
    %6203 = vmatprep.subr.mxu0 %v1284
    %6204 = vmatpush1.msra.mxu0 %v1283
    %6205 = vmatprep.subr.mxu0 %v1288
    %6206 = vmatpush1.msra.mxu0 %v1287
    %6207 = vmatprep.subr.mxu0 %v1292
    %6208 = vmatpush1.msra.mxu0 %v1291
    %6209 = vmatprep.subr.mxu0 %v1296
    %6210 = vmatpush1.msra.mxu0 %v1295
    %6211 = vmatprep.subr.mxu0 %v1300
    %6212 = vmatpush1.msra.mxu0 %v1299
    %6213 = vmatprep.subr.mxu0 %v1304
    %6214 = vmatpush1.msra.mxu0 %v1303
    %6215 = vmatprep.subr.mxu0 %v1308
    %6216 = vmatpush1.msra.mxu0 %v1307
    %6217 = vmatprep.subr.mxu0 %v1312
    %6218 = vmatpush1.msra.mxu0 %v1311
    %6219 = vmatprep.subr.mxu0 %v1316
    %6220 = vmatpush1.msra.mxu0 %v1315
    %6221 = vmatprep.subr.mxu0 %v1320
    %6222 = vmatpush1.msra.mxu0 %v1319
    %6223 = vmatprep.subr.mxu0 %v1324
    %6224 = vmatpush1.msra.mxu0 %v1323
    %6225 = vmatprep.subr.mxu0 %v1328
    %6226 = vmatpush1.msra.mxu0 %v1327
    %6227 = vmatprep.subr.mxu0 %v1332
    %6228 = vmatpush1.msra.mxu0 %v1331
    %6229 = vmatprep.subr.mxu0 0.0
    %6230 = vmatpush1.msra.mxu0 0.0
    %6231 = vmatprep.subr.mxu0 0.0
    %6232 = vmatpush1.msra.mxu0 0.0
    %6233 = vmatprep.subr.mxu0 0.0
    %6234 = vmatpush1.msra.mxu0 0.0
    %6235 = vmatprep.subr.mxu0 0.0
    %6236 = vmatpush1.msra.mxu0 0.0
    %6237 = vmatprep.subr.mxu0 0.0
    %6238 = vmatpush1.msra.mxu0 0.0
    %6239 = vmatprep.subr.mxu0 0.0
    %6240 = vmatpush1.msra.mxu0 0.0
    %6241 = vmatprep.subr.mxu0 0.0
    %6242 = vmatpush1.msra.mxu0 0.0
    %6243 = vmatprep.subr.mxu0 0.0
    %6244 = vmatpush1.msra.mxu0 0.0
    %6245 = vmatprep.subr.mxu0 0.0
    %6246 = vmatpush1.msra.mxu0 0.0
    %6247 = vmatprep.subr.mxu0 0.0
    %6248 = vmatpush1.msra.mxu0 0.0
    %6249 = vmatprep.subr.mxu0 0.0
    %6250 = vmatpush1.msra.mxu0 0.0
    %6251 = vmatprep.subr.mxu0 0.0
    %6252 = vmatpush1.msra.mxu0 0.0
    %6253 = vmatprep.subr.mxu0 0.0
    %6254 = vmatpush1.msra.mxu0 0.0
    %6255 = vmatprep.subr.mxu0 0.0
    %6256 = vmatpush1.msra.mxu0 0.0
    %6257 = vmatprep.subr.mxu0 0.0
    %6258 = vmatpush1.msra.mxu0 0.0
    %6259 = vmatprep.subr.mxu0 0.0
    %6260 = vmatpush1.msra.mxu0 0.0
    %6261 = vmatprep.mubr.f32.mxu0 0.0
    %6262 = vmatmul.mubr.f32.gmra.mrb[0].mxu0 %v5718
    %v6263 = vpop.f32.mrb[0].mxu0
    %v6264 = vadd.f32 0.0, %v6263
    %v6265 = vpop.f32.mrb[0].mxu0
    %v6266 = vadd.f32 0.0, %v6265
    %6267 = vdwg.mxu0
    %6268 = vmatprep.subr.mxu0 %v1334
    %6269 = vmatpush1.msra.mxu0 %v1333
    %6270 = vmatprep.subr.mxu0 %v1338
    %6271 = vmatpush1.msra.mxu0 %v1337
    %6272 = vmatprep.subr.mxu0 %v1342
    %6273 = vmatpush1.msra.mxu0 %v1341
    %6274 = vmatprep.subr.mxu0 %v1346
    %6275 = vmatpush1.msra.mxu0 %v1345
    %6276 = vmatprep.subr.mxu0 %v1350
    %6277 = vmatpush1.msra.mxu0 %v1349
    %6278 = vmatprep.subr.mxu0 %v1354
    %6279 = vmatpush1.msra.mxu0 %v1353
    %6280 = vmatprep.subr.mxu0 %v1358
    %6281 = vmatpush1.msra.mxu0 %v1357
    %6282 = vmatprep.subr.mxu0 %v1362
    %6283 = vmatpush1.msra.mxu0 %v1361
    %6284 = vmatprep.subr.mxu0 %v1366
    %6285 = vmatpush1.msra.mxu0 %v1365
    %6286 = vmatprep.subr.mxu0 %v1370
    %6287 = vmatpush1.msra.mxu0 %v1369
    %6288 = vmatprep.subr.mxu0 %v1374
    %6289 = vmatpush1.msra.mxu0 %v1373
    %6290 = vmatprep.subr.mxu0 %v1378
    %6291 = vmatpush1.msra.mxu0 %v1377
    %6292 = vmatprep.subr.mxu0 %v1382
    %6293 = vmatpush1.msra.mxu0 %v1381
    %6294 = vmatprep.subr.mxu0 %v1386
    %6295 = vmatpush1.msra.mxu0 %v1385
    %6296 = vmatprep.subr.mxu0 %v1390
    %6297 = vmatpush1.msra.mxu0 %v1389
    %6298 = vmatprep.subr.mxu0 %v1394
    %6299 = vmatpush1.msra.mxu0 %v1393
    %6300 = vmatprep.subr.mxu0 %v1398
    %6301 = vmatpush1.msra.mxu0 %v1397
    %6302 = vmatprep.subr.mxu0 %v1402
    %6303 = vmatpush1.msra.mxu0 %v1401
    %6304 = vmatprep.subr.mxu0 %v1406
    %6305 = vmatpush1.msra.mxu0 %v1405
    %6306 = vmatprep.subr.mxu0 %v1410
    %6307 = vmatpush1.msra.mxu0 %v1409
    %6308 = vmatprep.subr.mxu0 %v1414
    %6309 = vmatpush1.msra.mxu0 %v1413
    %6310 = vmatprep.subr.mxu0 %v1418
    %6311 = vmatpush1.msra.mxu0 %v1417
    %6312 = vmatprep.subr.mxu0 %v1422
    %6313 = vmatpush1.msra.mxu0 %v1421
    %6314 = vmatprep.subr.mxu0 %v1426
    %6315 = vmatpush1.msra.mxu0 %v1425
    %6316 = vmatprep.subr.mxu0 %v1430
    %6317 = vmatpush1.msra.mxu0 %v1429
    %6318 = vmatprep.subr.mxu0 %v1434
    %6319 = vmatpush1.msra.mxu0 %v1433
    %6320 = vmatprep.subr.mxu0 %v1438
    %6321 = vmatpush1.msra.mxu0 %v1437
    %6322 = vmatprep.subr.mxu0 %v1442
    %6323 = vmatpush1.msra.mxu0 %v1441
    %6324 = vmatprep.subr.mxu0 %v1446
    %6325 = vmatpush1.msra.mxu0 %v1445
    %6326 = vmatprep.subr.mxu0 %v1450
    %6327 = vmatpush1.msra.mxu0 %v1449
    %6328 = vmatprep.subr.mxu0 %v1454
    %6329 = vmatpush1.msra.mxu0 %v1453
    %6330 = vmatprep.subr.mxu0 %v1458
    %6331 = vmatpush1.msra.mxu0 %v1457
    %6332 = vmatprep.mubr.f32.mxu0 %v6125
    %6333 = vmatmul.mubr.f32.gmra.mrb[0].mxu0 %v6124
    %v6334 = vpop.f32.mrb[0].mxu0
    %v6335 = vadd.f32 %v1967, %v6334
    %v6336 = vpop.f32.mrb[0].mxu0
    %v6337 = vadd.f32 %v1971, %v6336
    %6338 = vdwg.mxu0
    %6339 = vmatprep.subr.mxu0 %v1336
    %6340 = vmatpush1.msra.mxu0 %v1335
    %6341 = vmatprep.subr.mxu0 %v1340
    %6342 = vmatpush1.msra.mxu0 %v1339
    %6343 = vmatprep.subr.mxu0 %v1344
    %6344 = vmatpush1.msra.mxu0 %v1343
    %6345 = vmatprep.subr.mxu0 %v1348
    %6346 = vmatpush1.msra.mxu0 %v1347
    %6347 = vmatprep.subr.mxu0 %v1352
    %6348 = vmatpush1.msra.mxu0 %v1351
    %6349 = vmatprep.subr.mxu0 %v1356
    %6350 = vmatpush1.msra.mxu0 %v1355
    %6351 = vmatprep.subr.mxu0 %v1360
    %6352 = vmatpush1.msra.mxu0 %v1359
    %6353 = vmatprep.subr.mxu0 %v1364
    %6354 = vmatpush1.msra.mxu0 %v1363
    %6355 = vmatprep.subr.mxu0 %v1368
    %6356 = vmatpush1.msra.mxu0 %v1367
    %6357 = vmatprep.subr.mxu0 %v1372
    %6358 = vmatpush1.msra.mxu0 %v1371
    %6359 = vmatprep.subr.mxu0 %v1376
    %6360 = vmatpush1.msra.mxu0 %v1375
    %6361 = vmatprep.subr.mxu0 %v1380
    %6362 = vmatpush1.msra.mxu0 %v1379
    %6363 = vmatprep.subr.mxu0 %v1384
    %6364 = vmatpush1.msra.mxu0 %v1383
    %6365 = vmatprep.subr.mxu0 %v1388
    %6366 = vmatpush1.msra.mxu0 %v1387
    %6367 = vmatprep.subr.mxu0 %v1392
    %6368 = vmatpush1.msra.mxu0 %v1391
    %6369 = vmatprep.subr.mxu0 %v1396
    %6370 = vmatpush1.msra.mxu0 %v1395
    %6371 = vmatprep.subr.mxu0 %v1400
    %6372 = vmatpush1.msra.mxu0 %v1399
    %6373 = vmatprep.subr.mxu0 %v1404
    %6374 = vmatpush1.msra.mxu0 %v1403
    %6375 = vmatprep.subr.mxu0 %v1408
    %6376 = vmatpush1.msra.mxu0 %v1407
    %6377 = vmatprep.subr.mxu0 %v1412
    %6378 = vmatpush1.msra.mxu0 %v1411
    %6379 = vmatprep.subr.mxu0 %v1416
    %6380 = vmatpush1.msra.mxu0 %v1415
    %6381 = vmatprep.subr.mxu0 %v1420
    %6382 = vmatpush1.msra.mxu0 %v1419
    %6383 = vmatprep.subr.mxu0 %v1424
    %6384 = vmatpush1.msra.mxu0 %v1423
    %6385 = vmatprep.subr.mxu0 %v1428
    %6386 = vmatpush1.msra.mxu0 %v1427
    %6387 = vmatprep.subr.mxu0 %v1432
    %6388 = vmatpush1.msra.mxu0 %v1431
    %6389 = vmatprep.subr.mxu0 %v1436
    %6390 = vmatpush1.msra.mxu0 %v1435
    %6391 = vmatprep.subr.mxu0 %v1440
    %6392 = vmatpush1.msra.mxu0 %v1439
    %6393 = vmatprep.subr.mxu0 %v1444
    %6394 = vmatpush1.msra.mxu0 %v1443
    %6395 = vmatprep.subr.mxu0 %v1448
    %6396 = vmatpush1.msra.mxu0 %v1447
    %6397 = vmatprep.subr.mxu0 %v1452
    %6398 = vmatpush1.msra.mxu0 %v1451
    %6399 = vmatprep.subr.mxu0 %v1456
    %6400 = vmatpush1.msra.mxu0 %v1455
    %6401 = vmatprep.subr.mxu0 %v1460
    %6402 = vmatpush1.msra.mxu0 %v1459
    %6403 = vmatprep.mubr.f32.mxu0 %v6125
    %6404 = vmatmul.mubr.f32.gmra.mrb[0].mxu0 %v6124
    %v6405 = vpop.f32.mrb[0].mxu0
    %v6406 = vadd.f32 %v1975, %v6405
    %v6407 = vpop.f32.mrb[0].mxu0
    %v6408 = vadd.f32 %v1979, %v6407
    %6409 = vdwg.mxu0
    %v6410 = vadd.f32 %v6335, %v6193
    %v6411 = vadd.f32 %v6337, %v6195
    %v6412 = vadd.f32 %v6406, %v6264
    %v6413 = vadd.f32 %v6408, %v6266
    %v6414 = vmul.f32 %v6410, 0.5
    %v6415 = vmul.f32 %v6411, 0.5
    %v6416 = vmul.f32 %v6412, 0.5
    %v6417 = vtanh.pop %v6414
    %v6418 = vtanh.pop %v6415
    %v6419 = vtanh.pop %v6416
    %v6420 = vmul.f32 %v6417, 0.5
    %v6421 = vmul.f32 %v6418, 0.5
    %v6422 = vmul.f32 %v6419, 0.5
    %v6423 = vadd.f32 %v6420, 0.5
    %v6424 = vadd.f32 %v6421, 0.5
    %v6425 = vadd.f32 %v6422, 0.5
    %v6426 = vtanh.pop %v6413
    %v6427 = vmul.f32 %v6424, %v5716
    %v6428 = vmul.f32 %v6423, %v6426
    %v6429 = vadd.f32 %v6427, %v6428
    %v6430 = vtanh.pop %v6429
    %v6431 = vmul.f32 %v6425, %v6430
    %6432 = vmatprep.subr.mxu0 0.0
    %6433 = vmatpush1.msra.mxu0 %v1462
    %6434 = vmatprep.subr.mxu0 0.0
    %6435 = vmatpush1.msra.mxu0 %v1463
    %6436 = vmatprep.subr.mxu0 0.0
    %6437 = vmatpush1.msra.mxu0 %v1464
    %6438 = vmatprep.subr.mxu0 0.0
    %6439 = vmatpush1.msra.mxu0 %v1465
    %6440 = vmatprep.subr.mxu0 0.0
    %6441 = vmatpush1.msra.mxu0 %v1466
    %6442 = vmatprep.subr.mxu0 0.0
    %6443 = vmatpush1.msra.mxu0 %v1467
    %6444 = vmatprep.subr.mxu0 0.0
    %6445 = vmatpush1.msra.mxu0 %v1468
    %6446 = vmatprep.subr.mxu0 0.0
    %6447 = vmatpush1.msra.mxu0 %v1469
    %6448 = vmatprep.subr.mxu0 0.0
    %6449 = vmatpush1.msra.mxu0 %v1470
    %6450 = vmatprep.subr.mxu0 0.0
    %6451 = vmatpush1.msra.mxu0 %v1471
    %6452 = vmatprep.subr.mxu0 0.0
    %6453 = vmatpush1.msra.mxu0 %v1472
    %6454 = vmatprep.subr.mxu0 0.0
    %6455 = vmatpush1.msra.mxu0 %v1473
    %6456 = vmatprep.subr.mxu0 0.0
    %6457 = vmatpush1.msra.mxu0 %v1474
    %6458 = vmatprep.subr.mxu0 0.0
    %6459 = vmatpush1.msra.mxu0 %v1475
    %6460 = vmatprep.subr.mxu0 0.0
    %6461 = vmatpush1.msra.mxu0 %v1476
    %6462 = vmatprep.subr.mxu0 0.0
    %6463 = vmatpush1.msra.mxu0 %v1477
    %6464 = vmatprep.subr.mxu0 0.0
    %6465 = vmatpush1.msra.mxu0 0.0
    %6466 = vmatprep.subr.mxu0 0.0
    %6467 = vmatpush1.msra.mxu0 0.0
    %6468 = vmatprep.subr.mxu0 0.0
    %6469 = vmatpush1.msra.mxu0 0.0
    %6470 = vmatprep.subr.mxu0 0.0
    %6471 = vmatpush1.msra.mxu0 0.0
    %6472 = vmatprep.subr.mxu0 0.0
    %6473 = vmatpush1.msra.mxu0 0.0
    %6474 = vmatprep.subr.mxu0 0.0
    %6475 = vmatpush1.msra.mxu0 0.0
    %6476 = vmatprep.subr.mxu0 0.0
    %6477 = vmatpush1.msra.mxu0 0.0
    %6478 = vmatprep.subr.mxu0 0.0
    %6479 = vmatpush1.msra.mxu0 0.0
    %6480 = vmatprep.subr.mxu0 0.0
    %6481 = vmatpush1.msra.mxu0 0.0
    %6482 = vmatprep.subr.mxu0 0.0
    %6483 = vmatpush1.msra.mxu0 0.0
    %6484 = vmatprep.subr.mxu0 0.0
    %6485 = vmatpush1.msra.mxu0 0.0
    %6486 = vmatprep.subr.mxu0 0.0
    %6487 = vmatpush1.msra.mxu0 0.0
    %6488 = vmatprep.subr.mxu0 0.0
    %6489 = vmatpush1.msra.mxu0 0.0
    %6490 = vmatprep.subr.mxu0 0.0
    %6491 = vmatpush1.msra.mxu0 0.0
    %6492 = vmatprep.subr.mxu0 0.0
    %6493 = vmatpush1.msra.mxu0 0.0
    %6494 = vmatprep.subr.mxu0 0.0
    %6495 = vmatpush1.msra.mxu0 0.0
    %6496 = vmatprep.mubr.f32.mxu0 0.0
    %6497 = vmatmul.mubr.f32.gmra.mrb[0].mxu0 %v6431
    %v6498 = vpop.f32.mrb[0].mxu0
    %v6499 = vadd.f32 %v2152, %v6498
    %v6500 = vpop.f32.mrb[0].mxu0
    %6501 = vdwg.mxu0
    %6502 = vst [vmem:[%s14 + $0x30] sm:$0xff] %v6499
    %6503 = vmatprep.subr.mxu0 %v1014
    %6504 = vmatpush1.msra.mxu0 %v1013
    %6505 = vmatprep.subr.mxu0 %v1022
    %6506 = vmatpush1.msra.mxu0 %v1021
    %6507 = vmatprep.subr.mxu0 %v1030
    %6508 = vmatpush1.msra.mxu0 %v1029
    %6509 = vmatprep.subr.mxu0 %v1038
    %6510 = vmatpush1.msra.mxu0 %v1037
    %6511 = vmatprep.subr.mxu0 %v1046
    %6512 = vmatpush1.msra.mxu0 %v1045
    %6513 = vmatprep.subr.mxu0 %v1054
    %6514 = vmatpush1.msra.mxu0 %v1053
    %6515 = vmatprep.subr.mxu0 %v1062
    %6516 = vmatpush1.msra.mxu0 %v1061
    %6517 = vmatprep.subr.mxu0 %v1070
    %6518 = vmatpush1.msra.mxu0 %v1069
    %6519 = vmatprep.subr.mxu0 %v1078
    %6520 = vmatpush1.msra.mxu0 %v1077
    %6521 = vmatprep.subr.mxu0 %v1086
    %6522 = vmatpush1.msra.mxu0 %v1085
    %6523 = vmatprep.subr.mxu0 %v1094
    %6524 = vmatpush1.msra.mxu0 %v1093
    %6525 = vmatprep.subr.mxu0 %v1102
    %6526 = vmatpush1.msra.mxu0 %v1101
    %6527 = vmatprep.subr.mxu0 %v1110
    %6528 = vmatpush1.msra.mxu0 %v1109
    %6529 = vmatprep.subr.mxu0 %v1118
    %6530 = vmatpush1.msra.mxu0 %v1117
    %6531 = vmatprep.subr.mxu0 %v1126
    %6532 = vmatpush1.msra.mxu0 %v1125
    %6533 = vmatprep.subr.mxu0 %v1134
    %6534 = vmatpush1.msra.mxu0 %v1133
    %6535 = vmatprep.subr.mxu0 %v1142
    %6536 = vmatpush1.msra.mxu0 %v1141
    %6537 = vmatprep.subr.mxu0 %v1150
    %6538 = vmatpush1.msra.mxu0 %v1149
    %6539 = vmatprep.subr.mxu0 %v1158
    %6540 = vmatpush1.msra.mxu0 %v1157
    %6541 = vmatprep.subr.mxu0 %v1166
    %6542 = vmatpush1.msra.mxu0 %v1165
    %6543 = vmatprep.subr.mxu0 %v1174
    %6544 = vmatpush1.msra.mxu0 %v1173
    %6545 = vmatprep.subr.mxu0 %v1182
    %6546 = vmatpush1.msra.mxu0 %v1181
    %6547 = vmatprep.subr.mxu0 %v1190
    %6548 = vmatpush1.msra.mxu0 %v1189
    %6549 = vmatprep.subr.mxu0 %v1198
    %6550 = vmatpush1.msra.mxu0 %v1197
    %6551 = vmatprep.subr.mxu0 %v1206
    %6552 = vmatpush1.msra.mxu0 %v1205
    %6553 = vmatprep.subr.mxu0 %v1214
    %6554 = vmatpush1.msra.mxu0 %v1213
    %6555 = vmatprep.subr.mxu0 %v1222
    %6556 = vmatpush1.msra.mxu0 %v1221
    %6557 = vmatprep.subr.mxu0 %v1230
    %6558 = vmatpush1.msra.mxu0 %v1229
    %6559 = vmatprep.subr.mxu0 %v1238
    %6560 = vmatpush1.msra.mxu0 %v1237
    %6561 = vmatprep.subr.mxu0 %v1246
    %6562 = vmatpush1.msra.mxu0 %v1245
    %6563 = vmatprep.subr.mxu0 %v1254
    %6564 = vmatpush1.msra.mxu0 %v1253
    %6565 = vmatprep.subr.mxu0 %v1262
    %6566 = vmatpush1.msra.mxu0 %v1261
    %6567 = vmatprep.mubr.f32.mxu0 %v6125
    %6568 = vmatmul.mubr.f32.gmra.mrb[0].mxu0 %v6124
    %v6569 = vpop.f32.mrb[0].mxu0
    %v6570 = vadd.f32 0.0, %v6569
    %v6571 = vpop.f32.mrb[0].mxu0
    %v6572 = vadd.f32 0.0, %v6571
    %6573 = vdwg.mxu0
    %6574 = vmatprep.subr.mxu0 %v1016
    %6575 = vmatpush1.msra.mxu0 %v1015
    %6576 = vmatprep.subr.mxu0 %v1024
    %6577 = vmatpush1.msra.mxu0 %v1023
    %6578 = vmatprep.subr.mxu0 %v1032
    %6579 = vmatpush1.msra.mxu0 %v1031
    %6580 = vmatprep.subr.mxu0 %v1040
    %6581 = vmatpush1.msra.mxu0 %v1039
    %6582 = vmatprep.subr.mxu0 %v1048
    %6583 = vmatpush1.msra.mxu0 %v1047
    %6584 = vmatprep.subr.mxu0 %v1056
    %6585 = vmatpush1.msra.mxu0 %v1055
    %6586 = vmatprep.subr.mxu0 %v1064
    %6587 = vmatpush1.msra.mxu0 %v1063
    %6588 = vmatprep.subr.mxu0 %v1072
    %6589 = vmatpush1.msra.mxu0 %v1071
    %6590 = vmatprep.subr.mxu0 %v1080
    %6591 = vmatpush1.msra.mxu0 %v1079
    %6592 = vmatprep.subr.mxu0 %v1088
    %6593 = vmatpush1.msra.mxu0 %v1087
    %6594 = vmatprep.subr.mxu0 %v1096
    %6595 = vmatpush1.msra.mxu0 %v1095
    %6596 = vmatprep.subr.mxu0 %v1104
    %6597 = vmatpush1.msra.mxu0 %v1103
    %6598 = vmatprep.subr.mxu0 %v1112
    %6599 = vmatpush1.msra.mxu0 %v1111
    %6600 = vmatprep.subr.mxu0 %v1120
    %6601 = vmatpush1.msra.mxu0 %v1119
    %6602 = vmatprep.subr.mxu0 %v1128
    %6603 = vmatpush1.msra.mxu0 %v1127
    %6604 = vmatprep.subr.mxu0 %v1136
    %6605 = vmatpush1.msra.mxu0 %v1135
    %6606 = vmatprep.subr.mxu0 %v1144
    %6607 = vmatpush1.msra.mxu0 %v1143
    %6608 = vmatprep.subr.mxu0 %v1152
    %6609 = vmatpush1.msra.mxu0 %v1151
    %6610 = vmatprep.subr.mxu0 %v1160
    %6611 = vmatpush1.msra.mxu0 %v1159
    %6612 = vmatprep.subr.mxu0 %v1168
    %6613 = vmatpush1.msra.mxu0 %v1167
    %6614 = vmatprep.subr.mxu0 %v1176
    %6615 = vmatpush1.msra.mxu0 %v1175
    %6616 = vmatprep.subr.mxu0 %v1184
    %6617 = vmatpush1.msra.mxu0 %v1183
    %6618 = vmatprep.subr.mxu0 %v1192
    %6619 = vmatpush1.msra.mxu0 %v1191
    %6620 = vmatprep.subr.mxu0 %v1200
    %6621 = vmatpush1.msra.mxu0 %v1199
    %6622 = vmatprep.subr.mxu0 %v1208
    %6623 = vmatpush1.msra.mxu0 %v1207
    %6624 = vmatprep.subr.mxu0 %v1216
    %6625 = vmatpush1.msra.mxu0 %v1215
    %6626 = vmatprep.subr.mxu0 %v1224
    %6627 = vmatpush1.msra.mxu0 %v1223
    %6628 = vmatprep.subr.mxu0 %v1232
    %6629 = vmatpush1.msra.mxu0 %v1231
    %6630 = vmatprep.subr.mxu0 %v1240
    %6631 = vmatpush1.msra.mxu0 %v1239
    %6632 = vmatprep.subr.mxu0 %v1248
    %6633 = vmatpush1.msra.mxu0 %v1247
    %6634 = vmatprep.subr.mxu0 %v1256
    %6635 = vmatpush1.msra.mxu0 %v1255
    %6636 = vmatprep.subr.mxu0 %v1264
    %6637 = vmatpush1.msra.mxu0 %v1263
    %6638 = vmatprep.mubr.f32.mxu0 %v6125
    %6639 = vmatmul.mubr.f32.gmra.mrb[0].mxu0 %v6124
    %v6640 = vpop.f32.mrb[0].mxu0
    %v6641 = vadd.f32 0.0, %v6640
    %v6642 = vpop.f32.mrb[0].mxu0
    %v6643 = vadd.f32 0.0, %v6642
    %6644 = vdwg.mxu0
    %6645 = vmatprep.subr.mxu0 %v1018
    %6646 = vmatpush1.msra.mxu0 %v1017
    %6647 = vmatprep.subr.mxu0 %v1026
    %6648 = vmatpush1.msra.mxu0 %v1025
    %6649 = vmatprep.subr.mxu0 %v1034
    %6650 = vmatpush1.msra.mxu0 %v1033
    %6651 = vmatprep.subr.mxu0 %v1042
    %6652 = vmatpush1.msra.mxu0 %v1041
    %6653 = vmatprep.subr.mxu0 %v1050
    %6654 = vmatpush1.msra.mxu0 %v1049
    %6655 = vmatprep.subr.mxu0 %v1058
    %6656 = vmatpush1.msra.mxu0 %v1057
    %6657 = vmatprep.subr.mxu0 %v1066
    %6658 = vmatpush1.msra.mxu0 %v1065
    %6659 = vmatprep.subr.mxu0 %v1074
    %6660 = vmatpush1.msra.mxu0 %v1073
    %6661 = vmatprep.subr.mxu0 %v1082
    %6662 = vmatpush1.msra.mxu0 %v1081
    %6663 = vmatprep.subr.mxu0 %v1090
    %6664 = vmatpush1.msra.mxu0 %v1089
    %6665 = vmatprep.subr.mxu0 %v1098
    %6666 = vmatpush1.msra.mxu0 %v1097
    %6667 = vmatprep.subr.mxu0 %v1106
    %6668 = vmatpush1.msra.mxu0 %v1105
    %6669 = vmatprep.subr.mxu0 %v1114
    %6670 = vmatpush1.msra.mxu0 %v1113
    %6671 = vmatprep.subr.mxu0 %v1122
    %6672 = vmatpush1.msra.mxu0 %v1121
    %6673 = vmatprep.subr.mxu0 %v1130
    %6674 = vmatpush1.msra.mxu0 %v1129
    %6675 = vmatprep.subr.mxu0 %v1138
    %6676 = vmatpush1.msra.mxu0 %v1137
    %6677 = vmatprep.subr.mxu0 %v1146
    %6678 = vmatpush1.msra.mxu0 %v1145
    %6679 = vmatprep.subr.mxu0 %v1154
    %6680 = vmatpush1.msra.mxu0 %v1153
    %6681 = vmatprep.subr.mxu0 %v1162
    %6682 = vmatpush1.msra.mxu0 %v1161
    %6683 = vmatprep.subr.mxu0 %v1170
    %6684 = vmatpush1.msra.mxu0 %v1169
    %6685 = vmatprep.subr.mxu0 %v1178
    %6686 = vmatpush1.msra.mxu0 %v1177
    %6687 = vmatprep.subr.mxu0 %v1186
    %6688 = vmatpush1.msra.mxu0 %v1185
    %6689 = vmatprep.subr.mxu0 %v1194
    %6690 = vmatpush1.msra.mxu0 %v1193
    %6691 = vmatprep.subr.mxu0 %v1202
    %6692 = vmatpush1.msra.mxu0 %v1201
    %6693 = vmatprep.subr.mxu0 %v1210
    %6694 = vmatpush1.msra.mxu0 %v1209
    %6695 = vmatprep.subr.mxu0 %v1218
    %6696 = vmatpush1.msra.mxu0 %v1217
    %6697 = vmatprep.subr.mxu0 %v1226
    %6698 = vmatpush1.msra.mxu0 %v1225
    %6699 = vmatprep.subr.mxu0 %v1234
    %6700 = vmatpush1.msra.mxu0 %v1233
    %6701 = vmatprep.subr.mxu0 %v1242
    %6702 = vmatpush1.msra.mxu0 %v1241
    %6703 = vmatprep.subr.mxu0 %v1250
    %6704 = vmatpush1.msra.mxu0 %v1249
    %6705 = vmatprep.subr.mxu0 %v1258
    %6706 = vmatpush1.msra.mxu0 %v1257
    %6707 = vmatprep.subr.mxu0 %v1266
    %6708 = vmatpush1.msra.mxu0 %v1265
    %6709 = vmatprep.mubr.f32.mxu0 %v6125
    %6710 = vmatmul.mubr.f32.gmra.mrb[0].mxu0 %v6124
    %v6711 = vpop.f32.mrb[0].mxu0
    %v6712 = vadd.f32 0.0, %v6711
    %v6713 = vpop.f32.mrb[0].mxu0
    %v6714 = vadd.f32 0.0, %v6713
    %6715 = vdwg.mxu0
    %6716 = vmatprep.subr.mxu0 %v1020
    %6717 = vmatpush1.msra.mxu0 %v1019
    %6718 = vmatprep.subr.mxu0 %v1028
    %6719 = vmatpush1.msra.mxu0 %v1027
    %6720 = vmatprep.subr.mxu0 %v1036
    %6721 = vmatpush1.msra.mxu0 %v1035
    %6722 = vmatprep.subr.mxu0 %v1044
    %6723 = vmatpush1.msra.mxu0 %v1043
    %6724 = vmatprep.subr.mxu0 %v1052
    %6725 = vmatpush1.msra.mxu0 %v1051
    %6726 = vmatprep.subr.mxu0 %v1060
    %6727 = vmatpush1.msra.mxu0 %v1059
    %6728 = vmatprep.subr.mxu0 %v1068
    %6729 = vmatpush1.msra.mxu0 %v1067
    %6730 = vmatprep.subr.mxu0 %v1076
    %6731 = vmatpush1.msra.mxu0 %v1075
    %6732 = vmatprep.subr.mxu0 %v1084
    %6733 = vmatpush1.msra.mxu0 %v1083
    %6734 = vmatprep.subr.mxu0 %v1092
    %6735 = vmatpush1.msra.mxu0 %v1091
    %6736 = vmatprep.subr.mxu0 %v1100
    %6737 = vmatpush1.msra.mxu0 %v1099
    %6738 = vmatprep.subr.mxu0 %v1108
    %6739 = vmatpush1.msra.mxu0 %v1107
    %6740 = vmatprep.subr.mxu0 %v1116
    %6741 = vmatpush1.msra.mxu0 %v1115
    %6742 = vmatprep.subr.mxu0 %v1124
    %6743 = vmatpush1.msra.mxu0 %v1123
    %6744 = vmatprep.subr.mxu0 %v1132
    %6745 = vmatpush1.msra.mxu0 %v1131
    %6746 = vmatprep.subr.mxu0 %v1140
    %6747 = vmatpush1.msra.mxu0 %v1139
    %6748 = vmatprep.subr.mxu0 %v1148
    %6749 = vmatpush1.msra.mxu0 %v1147
    %6750 = vmatprep.subr.mxu0 %v1156
    %6751 = vmatpush1.msra.mxu0 %v1155
    %6752 = vmatprep.subr.mxu0 %v1164
    %6753 = vmatpush1.msra.mxu0 %v1163
    %6754 = vmatprep.subr.mxu0 %v1172
    %6755 = vmatpush1.msra.mxu0 %v1171
    %6756 = vmatprep.subr.mxu0 %v1180
    %6757 = vmatpush1.msra.mxu0 %v1179
    %6758 = vmatprep.subr.mxu0 %v1188
    %6759 = vmatpush1.msra.mxu0 %v1187
    %6760 = vmatprep.subr.mxu0 %v1196
    %6761 = vmatpush1.msra.mxu0 %v1195
    %6762 = vmatprep.subr.mxu0 %v1204
    %6763 = vmatpush1.msra.mxu0 %v1203
    %6764 = vmatprep.subr.mxu0 %v1212
    %6765 = vmatpush1.msra.mxu0 %v1211
    %6766 = vmatprep.subr.mxu0 %v1220
    %6767 = vmatpush1.msra.mxu0 %v1219
    %6768 = vmatprep.subr.mxu0 %v1228
    %6769 = vmatpush1.msra.mxu0 %v1227
    %6770 = vmatprep.subr.mxu0 %v1236
    %6771 = vmatpush1.msra.mxu0 %v1235
    %6772 = vmatprep.subr.mxu0 %v1244
    %6773 = vmatpush1.msra.mxu0 %v1243
    %6774 = vmatprep.subr.mxu0 %v1252
    %6775 = vmatpush1.msra.mxu0 %v1251
    %6776 = vmatprep.subr.mxu0 %v1260
    %6777 = vmatpush1.msra.mxu0 %v1259
    %6778 = vmatprep.subr.mxu0 %v1268
    %6779 = vmatpush1.msra.mxu0 %v1267
    %6780 = vmatprep.mubr.f32.mxu0 %v6125
    %6781 = vmatmul.mubr.f32.gmra.mrb[0].mxu0 %v6124
    %v6782 = vpop.f32.mrb[0].mxu0
    %v6783 = vadd.f32 0.0, %v6782
    %v6784 = vpop.f32.mrb[0].mxu0
    %v6785 = vadd.f32 0.0, %v6784
    %6786 = vdwg.mxu0
    %v6787 = vld [vmem:[#allocation2 + $0x1c0] sm:$0xff]
    %v6788 = vld [vmem:[#allocation2 + $0x1c8] sm:$0xff]
    %v6789 = vld [vmem:[#allocation2 + $0x1d0] sm:$0xff]
    %v6790 = vld [vmem:[#allocation2 + $0x1d8] sm:$0xff]
    %v6791 = vld [vmem:[#allocation2 + $0x1e0] sm:$0xff]
    %v6792 = vld [vmem:[#allocation2 + $0x1e8] sm:$0xff]
    %v6793 = vld [vmem:[#allocation2 + $0x1f0] sm:$0xff]
    %v6794 = vld [vmem:[#allocation2 + $0x1f8] sm:$0xff]
    %v6795 = vadd.f32 %v6787, %v6570
    %v6796 = vadd.f32 %v6788, %v6572
    %v6797 = vadd.f32 %v6789, %v6641
    %v6798 = vadd.f32 %v6790, %v6643
    %v6799 = vadd.f32 %v6791, %v6712
    %v6800 = vadd.f32 %v6792, %v6714
    %v6801 = vadd.f32 %v6793, %v6783
    %v6802 = vadd.f32 %v6794, %v6785
    %v6803 = vmul.f32 %v6795, 0.5
    %v6804 = vmul.f32 %v6796, 0.5
    %v6805 = vmul.f32 %v6797, 0.5
    %v6806 = vmul.f32 %v6798, 0.5
    %v6807 = vmul.f32 %v6799, 0.5
    %v6808 = vmul.f32 %v6800, 0.5
    %v6809 = vtanh.pop %v6803
    %v6810 = vtanh.pop %v6804
    %v6811 = vtanh.pop %v6805
    %v6812 = vtanh.pop %v6806
    %v6813 = vtanh.pop %v6807
    %v6814 = vtanh.pop %v6808
    %v6815 = vmul.f32 %v6809, 0.5
    %v6816 = vmul.f32 %v6810, 0.5
    %v6817 = vmul.f32 %v6811, 0.5
    %v6818 = vmul.f32 %v6812, 0.5
    %v6819 = vmul.f32 %v6813, 0.5
    %v6820 = vmul.f32 %v6814, 0.5
    %v6821 = vadd.f32 %v6815, 0.5
    %v6822 = vadd.f32 %v6816, 0.5
    %v6823 = vadd.f32 %v6817, 0.5
    %v6824 = vadd.f32 %v6818, 0.5
    %v6825 = vadd.f32 %v6819, 0.5
    %v6826 = vadd.f32 %v6820, 0.5
    %v6827 = vtanh.pop %v6801
    %v6828 = vtanh.pop %v6802
    %v6829 = vmul.f32 %v6823, %v6120
    %v6830 = vmul.f32 %v6824, %v6121
    %v6831 = vmul.f32 %v6821, %v6827
    %v6832 = vmul.f32 %v6822, %v6828
    %v6833 = vadd.f32 %v6829, %v6831
    %v6834 = vadd.f32 %v6830, %v6832
    %v6835 = vtanh.pop %v6833
    %v6836 = vtanh.pop %v6834
    %v6837 = vmul.f32 %v6825, %v6835
    %v6838 = vmul.f32 %v6826, %v6836
    %6839 = vmatprep.subr.mxu0 %v1270
    %6840 = vmatpush1.msra.mxu0 %v1269
    %6841 = vmatprep.subr.mxu0 %v1274
    %6842 = vmatpush1.msra.mxu0 %v1273
    %6843 = vmatprep.subr.mxu0 %v1278
    %6844 = vmatpush1.msra.mxu0 %v1277
    %6845 = vmatprep.subr.mxu0 %v1282
    %6846 = vmatpush1.msra.mxu0 %v1281
    %6847 = vmatprep.subr.mxu0 %v1286
    %6848 = vmatpush1.msra.mxu0 %v1285
    %6849 = vmatprep.subr.mxu0 %v1290
    %6850 = vmatpush1.msra.mxu0 %v1289
    %6851 = vmatprep.subr.mxu0 %v1294
    %6852 = vmatpush1.msra.mxu0 %v1293
    %6853 = vmatprep.subr.mxu0 %v1298
    %6854 = vmatpush1.msra.mxu0 %v1297
    %6855 = vmatprep.subr.mxu0 %v1302
    %6856 = vmatpush1.msra.mxu0 %v1301
    %6857 = vmatprep.subr.mxu0 %v1306
    %6858 = vmatpush1.msra.mxu0 %v1305
    %6859 = vmatprep.subr.mxu0 %v1310
    %6860 = vmatpush1.msra.mxu0 %v1309
    %6861 = vmatprep.subr.mxu0 %v1314
    %6862 = vmatpush1.msra.mxu0 %v1313
    %6863 = vmatprep.subr.mxu0 %v1318
    %6864 = vmatpush1.msra.mxu0 %v1317
    %6865 = vmatprep.subr.mxu0 %v1322
    %6866 = vmatpush1.msra.mxu0 %v1321
    %6867 = vmatprep.subr.mxu0 %v1326
    %6868 = vmatpush1.msra.mxu0 %v1325
    %6869 = vmatprep.subr.mxu0 %v1330
    %6870 = vmatpush1.msra.mxu0 %v1329
    %6871 = vmatprep.subr.mxu0 0.0
    %6872 = vmatpush1.msra.mxu0 0.0
    %6873 = vmatprep.subr.mxu0 0.0
    %6874 = vmatpush1.msra.mxu0 0.0
    %6875 = vmatprep.subr.mxu0 0.0
    %6876 = vmatpush1.msra.mxu0 0.0
    %6877 = vmatprep.subr.mxu0 0.0
    %6878 = vmatpush1.msra.mxu0 0.0
    %6879 = vmatprep.subr.mxu0 0.0
    %6880 = vmatpush1.msra.mxu0 0.0
    %6881 = vmatprep.subr.mxu0 0.0
    %6882 = vmatpush1.msra.mxu0 0.0
    %6883 = vmatprep.subr.mxu0 0.0
    %6884 = vmatpush1.msra.mxu0 0.0
    %6885 = vmatprep.subr.mxu0 0.0
    %6886 = vmatpush1.msra.mxu0 0.0
    %6887 = vmatprep.subr.mxu0 0.0
    %6888 = vmatpush1.msra.mxu0 0.0
    %6889 = vmatprep.subr.mxu0 0.0
    %6890 = vmatpush1.msra.mxu0 0.0
    %6891 = vmatprep.subr.mxu0 0.0
    %6892 = vmatpush1.msra.mxu0 0.0
    %6893 = vmatprep.subr.mxu0 0.0
    %6894 = vmatpush1.msra.mxu0 0.0
    %6895 = vmatprep.subr.mxu0 0.0
    %6896 = vmatpush1.msra.mxu0 0.0
    %6897 = vmatprep.subr.mxu0 0.0
    %6898 = vmatpush1.msra.mxu0 0.0
    %6899 = vmatprep.subr.mxu0 0.0
    %6900 = vmatpush1.msra.mxu0 0.0
    %6901 = vmatprep.subr.mxu0 0.0
    %6902 = vmatpush1.msra.mxu0 0.0
    %6903 = vmatprep.mubr.f32.mxu0 0.0
    %6904 = vmatmul.mubr.f32.gmra.mrb[0].mxu0 %v6431
    %v6905 = vpop.f32.mrb[0].mxu0
    %v6906 = vadd.f32 0.0, %v6905
    %v6907 = vpop.f32.mrb[0].mxu0
    %v6908 = vadd.f32 0.0, %v6907
    %6909 = vdwg.mxu0
    %6910 = vmatprep.subr.mxu0 %v1272
    %6911 = vmatpush1.msra.mxu0 %v1271
    %6912 = vmatprep.subr.mxu0 %v1276
    %6913 = vmatpush1.msra.mxu0 %v1275
    %6914 = vmatprep.subr.mxu0 %v1280
    %6915 = vmatpush1.msra.mxu0 %v1279
    %6916 = vmatprep.subr.mxu0 %v1284
    %6917 = vmatpush1.msra.mxu0 %v1283
    %6918 = vmatprep.subr.mxu0 %v1288
    %6919 = vmatpush1.msra.mxu0 %v1287
    %6920 = vmatprep.subr.mxu0 %v1292
    %6921 = vmatpush1.msra.mxu0 %v1291
    %6922 = vmatprep.subr.mxu0 %v1296
    %6923 = vmatpush1.msra.mxu0 %v1295
    %6924 = vmatprep.subr.mxu0 %v1300
    %6925 = vmatpush1.msra.mxu0 %v1299
    %6926 = vmatprep.subr.mxu0 %v1304
    %6927 = vmatpush1.msra.mxu0 %v1303
    %6928 = vmatprep.subr.mxu0 %v1308
    %6929 = vmatpush1.msra.mxu0 %v1307
    %6930 = vmatprep.subr.mxu0 %v1312
    %6931 = vmatpush1.msra.mxu0 %v1311
    %6932 = vmatprep.subr.mxu0 %v1316
    %6933 = vmatpush1.msra.mxu0 %v1315
    %6934 = vmatprep.subr.mxu0 %v1320
    %6935 = vmatpush1.msra.mxu0 %v1319
    %6936 = vmatprep.subr.mxu0 %v1324
    %6937 = vmatpush1.msra.mxu0 %v1323
    %6938 = vmatprep.subr.mxu0 %v1328
    %6939 = vmatpush1.msra.mxu0 %v1327
    %6940 = vmatprep.subr.mxu0 %v1332
    %6941 = vmatpush1.msra.mxu0 %v1331
    %6942 = vmatprep.subr.mxu0 0.0
    %6943 = vmatpush1.msra.mxu0 0.0
    %6944 = vmatprep.subr.mxu0 0.0
    %6945 = vmatpush1.msra.mxu0 0.0
    %6946 = vmatprep.subr.mxu0 0.0
    %6947 = vmatpush1.msra.mxu0 0.0
    %6948 = vmatprep.subr.mxu0 0.0
    %6949 = vmatpush1.msra.mxu0 0.0
    %6950 = vmatprep.subr.mxu0 0.0
    %6951 = vmatpush1.msra.mxu0 0.0
    %6952 = vmatprep.subr.mxu0 0.0
    %6953 = vmatpush1.msra.mxu0 0.0
    %6954 = vmatprep.subr.mxu0 0.0
    %6955 = vmatpush1.msra.mxu0 0.0
    %6956 = vmatprep.subr.mxu0 0.0
    %6957 = vmatpush1.msra.mxu0 0.0
    %6958 = vmatprep.subr.mxu0 0.0
    %6959 = vmatpush1.msra.mxu0 0.0
    %6960 = vmatprep.subr.mxu0 0.0
    %6961 = vmatpush1.msra.mxu0 0.0
    %6962 = vmatprep.subr.mxu0 0.0
    %6963 = vmatpush1.msra.mxu0 0.0
    %6964 = vmatprep.subr.mxu0 0.0
    %6965 = vmatpush1.msra.mxu0 0.0
    %6966 = vmatprep.subr.mxu0 0.0
    %6967 = vmatpush1.msra.mxu0 0.0
    %6968 = vmatprep.subr.mxu0 0.0
    %6969 = vmatpush1.msra.mxu0 0.0
    %6970 = vmatprep.subr.mxu0 0.0
    %6971 = vmatpush1.msra.mxu0 0.0
    %6972 = vmatprep.subr.mxu0 0.0
    %6973 = vmatpush1.msra.mxu0 0.0
    %6974 = vmatprep.mubr.f32.mxu0 0.0
    %6975 = vmatmul.mubr.f32.gmra.mrb[0].mxu0 %v6431
    %v6976 = vpop.f32.mrb[0].mxu0
    %v6977 = vadd.f32 0.0, %v6976
    %v6978 = vpop.f32.mrb[0].mxu0
    %v6979 = vadd.f32 0.0, %v6978
    %6980 = vdwg.mxu0
    %6981 = vmatprep.subr.mxu0 %v1334
    %6982 = vmatpush1.msra.mxu0 %v1333
    %6983 = vmatprep.subr.mxu0 %v1338
    %6984 = vmatpush1.msra.mxu0 %v1337
    %6985 = vmatprep.subr.mxu0 %v1342
    %6986 = vmatpush1.msra.mxu0 %v1341
    %6987 = vmatprep.subr.mxu0 %v1346
    %6988 = vmatpush1.msra.mxu0 %v1345
    %6989 = vmatprep.subr.mxu0 %v1350
    %6990 = vmatpush1.msra.mxu0 %v1349
    %6991 = vmatprep.subr.mxu0 %v1354
    %6992 = vmatpush1.msra.mxu0 %v1353
    %6993 = vmatprep.subr.mxu0 %v1358
    %6994 = vmatpush1.msra.mxu0 %v1357
    %6995 = vmatprep.subr.mxu0 %v1362
    %6996 = vmatpush1.msra.mxu0 %v1361
    %6997 = vmatprep.subr.mxu0 %v1366
    %6998 = vmatpush1.msra.mxu0 %v1365
    %6999 = vmatprep.subr.mxu0 %v1370
    %7000 = vmatpush1.msra.mxu0 %v1369
    %7001 = vmatprep.subr.mxu0 %v1374
    %7002 = vmatpush1.msra.mxu0 %v1373
    %7003 = vmatprep.subr.mxu0 %v1378
    %7004 = vmatpush1.msra.mxu0 %v1377
    %7005 = vmatprep.subr.mxu0 %v1382
    %7006 = vmatpush1.msra.mxu0 %v1381
    %7007 = vmatprep.subr.mxu0 %v1386
    %7008 = vmatpush1.msra.mxu0 %v1385
    %7009 = vmatprep.subr.mxu0 %v1390
    %7010 = vmatpush1.msra.mxu0 %v1389
    %7011 = vmatprep.subr.mxu0 %v1394
    %7012 = vmatpush1.msra.mxu0 %v1393
    %7013 = vmatprep.subr.mxu0 %v1398
    %7014 = vmatpush1.msra.mxu0 %v1397
    %7015 = vmatprep.subr.mxu0 %v1402
    %7016 = vmatpush1.msra.mxu0 %v1401
    %7017 = vmatprep.subr.mxu0 %v1406
    %7018 = vmatpush1.msra.mxu0 %v1405
    %7019 = vmatprep.subr.mxu0 %v1410
    %7020 = vmatpush1.msra.mxu0 %v1409
    %7021 = vmatprep.subr.mxu0 %v1414
    %7022 = vmatpush1.msra.mxu0 %v1413
    %7023 = vmatprep.subr.mxu0 %v1418
    %7024 = vmatpush1.msra.mxu0 %v1417
    %7025 = vmatprep.subr.mxu0 %v1422
    %7026 = vmatpush1.msra.mxu0 %v1421
    %7027 = vmatprep.subr.mxu0 %v1426
    %7028 = vmatpush1.msra.mxu0 %v1425
    %7029 = vmatprep.subr.mxu0 %v1430
    %7030 = vmatpush1.msra.mxu0 %v1429
    %7031 = vmatprep.subr.mxu0 %v1434
    %7032 = vmatpush1.msra.mxu0 %v1433
    %7033 = vmatprep.subr.mxu0 %v1438
    %7034 = vmatpush1.msra.mxu0 %v1437
    %7035 = vmatprep.subr.mxu0 %v1442
    %7036 = vmatpush1.msra.mxu0 %v1441
    %7037 = vmatprep.subr.mxu0 %v1446
    %7038 = vmatpush1.msra.mxu0 %v1445
    %7039 = vmatprep.subr.mxu0 %v1450
    %7040 = vmatpush1.msra.mxu0 %v1449
    %7041 = vmatprep.subr.mxu0 %v1454
    %7042 = vmatpush1.msra.mxu0 %v1453
    %7043 = vmatprep.subr.mxu0 %v1458
    %7044 = vmatpush1.msra.mxu0 %v1457
    %7045 = vmatprep.mubr.f32.mxu0 %v6838
    %7046 = vmatmul.mubr.f32.gmra.mrb[0].mxu0 %v6837
    %v7047 = vpop.f32.mrb[0].mxu0
    %v7048 = vadd.f32 %v1967, %v7047
    %v7049 = vpop.f32.mrb[0].mxu0
    %v7050 = vadd.f32 %v1971, %v7049
    %7051 = vdwg.mxu0
    %7052 = vmatprep.subr.mxu0 %v1336
    %7053 = vmatpush1.msra.mxu0 %v1335
    %7054 = vmatprep.subr.mxu0 %v1340
    %7055 = vmatpush1.msra.mxu0 %v1339
    %7056 = vmatprep.subr.mxu0 %v1344
    %7057 = vmatpush1.msra.mxu0 %v1343
    %7058 = vmatprep.subr.mxu0 %v1348
    %7059 = vmatpush1.msra.mxu0 %v1347
    %7060 = vmatprep.subr.mxu0 %v1352
    %7061 = vmatpush1.msra.mxu0 %v1351
    %7062 = vmatprep.subr.mxu0 %v1356
    %7063 = vmatpush1.msra.mxu0 %v1355
    %7064 = vmatprep.subr.mxu0 %v1360
    %7065 = vmatpush1.msra.mxu0 %v1359
    %7066 = vmatprep.subr.mxu0 %v1364
    %7067 = vmatpush1.msra.mxu0 %v1363
    %7068 = vmatprep.subr.mxu0 %v1368
    %7069 = vmatpush1.msra.mxu0 %v1367
    %7070 = vmatprep.subr.mxu0 %v1372
    %7071 = vmatpush1.msra.mxu0 %v1371
    %7072 = vmatprep.subr.mxu0 %v1376
    %7073 = vmatpush1.msra.mxu0 %v1375
    %7074 = vmatprep.subr.mxu0 %v1380
    %7075 = vmatpush1.msra.mxu0 %v1379
    %7076 = vmatprep.subr.mxu0 %v1384
    %7077 = vmatpush1.msra.mxu0 %v1383
    %7078 = vmatprep.subr.mxu0 %v1388
    %7079 = vmatpush1.msra.mxu0 %v1387
    %7080 = vmatprep.subr.mxu0 %v1392
    %7081 = vmatpush1.msra.mxu0 %v1391
    %7082 = vmatprep.subr.mxu0 %v1396
    %7083 = vmatpush1.msra.mxu0 %v1395
    %7084 = vmatprep.subr.mxu0 %v1400
    %7085 = vmatpush1.msra.mxu0 %v1399
    %7086 = vmatprep.subr.mxu0 %v1404
    %7087 = vmatpush1.msra.mxu0 %v1403
    %7088 = vmatprep.subr.mxu0 %v1408
    %7089 = vmatpush1.msra.mxu0 %v1407
    %7090 = vmatprep.subr.mxu0 %v1412
    %7091 = vmatpush1.msra.mxu0 %v1411
    %7092 = vmatprep.subr.mxu0 %v1416
    %7093 = vmatpush1.msra.mxu0 %v1415
    %7094 = vmatprep.subr.mxu0 %v1420
    %7095 = vmatpush1.msra.mxu0 %v1419
    %7096 = vmatprep.subr.mxu0 %v1424
    %7097 = vmatpush1.msra.mxu0 %v1423
    %7098 = vmatprep.subr.mxu0 %v1428
    %7099 = vmatpush1.msra.mxu0 %v1427
    %7100 = vmatprep.subr.mxu0 %v1432
    %7101 = vmatpush1.msra.mxu0 %v1431
    %7102 = vmatprep.subr.mxu0 %v1436
    %7103 = vmatpush1.msra.mxu0 %v1435
    %7104 = vmatprep.subr.mxu0 %v1440
    %7105 = vmatpush1.msra.mxu0 %v1439
    %7106 = vmatprep.subr.mxu0 %v1444
    %7107 = vmatpush1.msra.mxu0 %v1443
    %7108 = vmatprep.subr.mxu0 %v1448
    %7109 = vmatpush1.msra.mxu0 %v1447
    %7110 = vmatprep.subr.mxu0 %v1452
    %7111 = vmatpush1.msra.mxu0 %v1451
    %7112 = vmatprep.subr.mxu0 %v1456
    %7113 = vmatpush1.msra.mxu0 %v1455
    %7114 = vmatprep.subr.mxu0 %v1460
    %7115 = vmatpush1.msra.mxu0 %v1459
    %7116 = vmatprep.mubr.f32.mxu0 %v6838
    %7117 = vmatmul.mubr.f32.gmra.mrb[0].mxu0 %v6837
    %v7118 = vpop.f32.mrb[0].mxu0
    %v7119 = vadd.f32 %v1975, %v7118
    %v7120 = vpop.f32.mrb[0].mxu0
    %v7121 = vadd.f32 %v1979, %v7120
    %7122 = vdwg.mxu0
    %v7123 = vadd.f32 %v7048, %v6906
    %v7124 = vadd.f32 %v7050, %v6908
    %v7125 = vadd.f32 %v7119, %v6977
    %v7126 = vadd.f32 %v7121, %v6979
    %v7127 = vmul.f32 %v7123, 0.5
    %v7128 = vmul.f32 %v7124, 0.5
    %v7129 = vmul.f32 %v7125, 0.5
    %v7130 = vtanh.pop %v7127
    %v7131 = vtanh.pop %v7128
    %v7132 = vtanh.pop %v7129
    %v7133 = vmul.f32 %v7130, 0.5
    %v7134 = vmul.f32 %v7131, 0.5
    %v7135 = vmul.f32 %v7132, 0.5
    %v7136 = vadd.f32 %v7133, 0.5
    %v7137 = vadd.f32 %v7134, 0.5
    %v7138 = vadd.f32 %v7135, 0.5
    %v7139 = vtanh.pop %v7126
    %v7140 = vmul.f32 %v7137, %v6429
    %v7141 = vmul.f32 %v7136, %v7139
    %v7142 = vadd.f32 %v7140, %v7141
    %v7143 = vtanh.pop %v7142
    %v7144 = vmul.f32 %v7138, %v7143
    %7145 = vmatprep.subr.mxu0 0.0
    %7146 = vmatpush1.msra.mxu0 %v1462
    %7147 = vmatprep.subr.mxu0 0.0
    %7148 = vmatpush1.msra.mxu0 %v1463
    %7149 = vmatprep.subr.mxu0 0.0
    %7150 = vmatpush1.msra.mxu0 %v1464
    %7151 = vmatprep.subr.mxu0 0.0
    %7152 = vmatpush1.msra.mxu0 %v1465
    %7153 = vmatprep.subr.mxu0 0.0
    %7154 = vmatpush1.msra.mxu0 %v1466
    %7155 = vmatprep.subr.mxu0 0.0
    %7156 = vmatpush1.msra.mxu0 %v1467
    %7157 = vmatprep.subr.mxu0 0.0
    %7158 = vmatpush1.msra.mxu0 %v1468
    %7159 = vmatprep.subr.mxu0 0.0
    %7160 = vmatpush1.msra.mxu0 %v1469
    %7161 = vmatprep.subr.mxu0 0.0
    %7162 = vmatpush1.msra.mxu0 %v1470
    %7163 = vmatprep.subr.mxu0 0.0
    %7164 = vmatpush1.msra.mxu0 %v1471
    %7165 = vmatprep.subr.mxu0 0.0
    %7166 = vmatpush1.msra.mxu0 %v1472
    %7167 = vmatprep.subr.mxu0 0.0
    %7168 = vmatpush1.msra.mxu0 %v1473
    %7169 = vmatprep.subr.mxu0 0.0
    %7170 = vmatpush1.msra.mxu0 %v1474
    %7171 = vmatprep.subr.mxu0 0.0
    %7172 = vmatpush1.msra.mxu0 %v1475
    %7173 = vmatprep.subr.mxu0 0.0
    %7174 = vmatpush1.msra.mxu0 %v1476
    %7175 = vmatprep.subr.mxu0 0.0
    %7176 = vmatpush1.msra.mxu0 %v1477
    %7177 = vmatprep.subr.mxu0 0.0
    %7178 = vmatpush1.msra.mxu0 0.0
    %7179 = vmatprep.subr.mxu0 0.0
    %7180 = vmatpush1.msra.mxu0 0.0
    %7181 = vmatprep.subr.mxu0 0.0
    %7182 = vmatpush1.msra.mxu0 0.0
    %7183 = vmatprep.subr.mxu0 0.0
    %7184 = vmatpush1.msra.mxu0 0.0
    %7185 = vmatprep.subr.mxu0 0.0
    %7186 = vmatpush1.msra.mxu0 0.0
    %7187 = vmatprep.subr.mxu0 0.0
    %7188 = vmatpush1.msra.mxu0 0.0
    %7189 = vmatprep.subr.mxu0 0.0
    %7190 = vmatpush1.msra.mxu0 0.0
    %7191 = vmatprep.subr.mxu0 0.0
    %7192 = vmatpush1.msra.mxu0 0.0
    %7193 = vmatprep.subr.mxu0 0.0
    %7194 = vmatpush1.msra.mxu0 0.0
    %7195 = vmatprep.subr.mxu0 0.0
    %7196 = vmatpush1.msra.mxu0 0.0
    %7197 = vmatprep.subr.mxu0 0.0
    %7198 = vmatpush1.msra.mxu0 0.0
    %7199 = vmatprep.subr.mxu0 0.0
    %7200 = vmatpush1.msra.mxu0 0.0
    %7201 = vmatprep.subr.mxu0 0.0
    %7202 = vmatpush1.msra.mxu0 0.0
    %7203 = vmatprep.subr.mxu0 0.0
    %7204 = vmatpush1.msra.mxu0 0.0
    %7205 = vmatprep.subr.mxu0 0.0
    %7206 = vmatpush1.msra.mxu0 0.0
    %7207 = vmatprep.subr.mxu0 0.0
    %7208 = vmatpush1.msra.mxu0 0.0
    %7209 = vmatprep.mubr.f32.mxu0 0.0
    %7210 = vmatmul.mubr.f32.gmra.mrb[0].mxu0 %v7144
    %v7211 = vpop.f32.mrb[0].mxu0
    %v7212 = vadd.f32 %v2152, %v7211
    %v7213 = vpop.f32.mrb[0].mxu0
    %7214 = vdwg.mxu0
    %7215 = vst [vmem:[%s14 + $0x38] sm:$0xff] %v7212
    %7216 = vst [vmem:[#allocation14] sm:$0xff] %v6837
    %7217 = vst [vmem:[#allocation14 + $0x8] sm:$0xff] %v6838
    %7218 = vst [vmem:[#allocation15] sm:$0xff] %v6833
    %7219 = vst [vmem:[#allocation15 + $0x8] sm:$0xff] %v6834
    %7220 = vst [vmem:[#allocation17] sm:$0xff] %v7144
    %7221 = vst [vmem:[#allocation18] sm:$0xff] %v7142
    // Predicated region
    $region82: #{model_forward.1} parent=1 // pred_check
      _
    $region83: #{model_forward.1} parent=1 // pred_check_branch
      %7223 = sbr.rel (0) target = $region85
    $region84: #{model_forward.1} parent=1 // pred_region
      _
    $region85: #{model_forward.1} parent=1 // pred_fallthru
      _
    // Predicated region
    $region86: #{model_forward.1} parent=1 // pred_check
      _
    $region87: #{model_forward.1} parent=1 // pred_check_branch
      %7225 = sbr.rel (0) target = $region89
    $region88: #{model_forward.1} parent=1 // pred_region
      %s7227 = ssub.s32 256, 256
      %7228 = vsyncadd [#allocation5], %s7227
      %s7230 = sshll.u32 [#allocation14], 4
      %s7231 = int_to_ptr.vmem [resolvable:$true] %s7230
      %7233 = dma.vmem_to_hbm [thread:$0]  %s7231, 256, %s15, [#allocation5]
    $region89: #{model_forward.1} parent=1 // pred_fallthru
      _
    // Predicated region
    $region90: #{model_forward.1} parent=1 // pred_check
      _
    $region91: #{model_forward.1} parent=1 // pred_check_branch
      %7235 = sbr.rel (0) target = $region93
    $region92: #{model_forward.1} parent=1 // pred_region
      %s7237 = ssub.s32 256, 256
      %7238 = vsyncadd [#allocation16], %s7237
      %s7240 = sshll.u32 [#allocation15], 4
      %s7241 = int_to_ptr.vmem [resolvable:$true] %s7240
      %7243 = dma.vmem_to_hbm [thread:$0]  %s7241, 256, %s16, [#allocation16]
    $region93: #{model_forward.1} parent=1 // pred_fallthru
      _
    // Predicated region
    $region94: #{model_forward.1} parent=1 // pred_check
      _
    $region95: #{model_forward.1} parent=1 // pred_check_branch
      %7245 = sbr.rel (0) target = $region97
    $region96: #{model_forward.1} parent=1 // pred_region
      %s7247 = ssub.s32 128, 128
      %7248 = vsyncadd [#allocation16], %s7247
      %s7250 = sshll.u32 [#allocation17], 4
      %s7251 = int_to_ptr.vmem [resolvable:$true] %s7250
      %7253 = dma.vmem_to_hbm [thread:$0]  %s7251, 128, %s17, [#allocation16]
    $region97: #{model_forward.1} parent=1 // pred_fallthru
      _
    // Predicated region
    $region98: #{model_forward.1} parent=1 // pred_check
      _
    $region99: #{model_forward.1} parent=1 // pred_check_branch
      %7255 = sbr.rel (0) target = $region101
    $region100: #{model_forward.1} parent=1 // pred_region
      %s7257 = ssub.s32 128, 128
      %7258 = vsyncadd [#allocation19], %s7257
      %s7260 = sshll.u32 [#allocation18], 4
      %s7261 = int_to_ptr.vmem [resolvable:$true] %s7260
      %7263 = dma.vmem_to_hbm [thread:$0]  %s7261, 128, %s18, [#allocation19]
    $region101: #{model_forward.1} parent=1 // pred_fallthru
      _
    // Predicated region
    $region102: #{model_forward.1} parent=1 // pred_check
      _
    $region103: #{model_forward.1} parent=1 // pred_check_branch
      %7265 = sbr.rel (0) target = $region105
    $region104: #{model_forward.1} parent=1 // pred_region
      _
    $region105: #{model_forward.1} parent=1 // pred_fallthru
      _
    // Predicated region
    $region106: #{model_forward.1} parent=1 // pred_check
      _
    $region107: #{model_forward.1} parent=1 // pred_check_branch
      %7267 = sbr.rel (0) target = $region109
    $region108: #{model_forward.1} parent=1 // pred_region
      %7268 = dma.done [#allocation5], 256
    $region109: #{model_forward.1} parent=1 // pred_fallthru
      _
    // Predicated region
    $region110: #{model_forward.1} parent=1 // pred_check
      _
    $region111: #{model_forward.1} parent=1 // pred_check_branch
      %7270 = sbr.rel (0) target = $region113
    $region112: #{model_forward.1} parent=1 // pred_region
      %7271 = dma.done [#allocation16], 256
    $region113: #{model_forward.1} parent=1 // pred_fallthru
      _
    // Predicated region
    $region114: #{model_forward.1} parent=1 // pred_check
      _
    $region115: #{model_forward.1} parent=1 // pred_check_branch
      %7273 = sbr.rel (0) target = $region117
    $region116: #{model_forward.1} parent=1 // pred_region
      %7274 = dma.done [#allocation16], 128
    $region117: #{model_forward.1} parent=1 // pred_fallthru
      _
    // Predicated region
    $region118: #{model_forward.1} parent=1 // pred_check
      _
    $region119: #{model_forward.1} parent=1 // pred_check_branch
      %7276 = sbr.rel (0) target = $region121
    $region120: #{model_forward.1} parent=1 // pred_region
      %7277 = dma.done [#allocation19], 128
    $region121: #{model_forward.1} parent=1 // pred_fallthru
      _
    %7278 = vsyncpa [#allocation4], 1
    %7279 = vsyncpa [#allocation7], 1
    %7280 = vsyncpa [#allocation10], 1
    %7281 = vsyncpa [#allocation13], 1
    %7282 = vsyncpa [#allocation5], 1
    %7283 = vsyncpa [#allocation16], 1
    %7284 = vsyncpa [#allocation19], 1

</llo_original>
